<compile_context>
chip_gen: v7x
topology: tpu7x:2x2x1
jax: 0.10.0
libtpu: 0.0.40
codegen_flags: <defaults>
</compile_context>

<pallas_src>
import math

import jax
import jax.numpy as jnp
import numpy as np
from jax.experimental import pallas as pl
from jax.experimental.pallas import tpu as pltpu

NUM_HEADS = 12  # hard-coded in the torch module (view(..., 12))


def _gelu(z):
    # matches the torch `gelu` (tanh approximation) exactly
    c = math.sqrt(2.0 / math.pi)
    return 0.5 * z * (1.0 + jnp.tanh(c * (z + 0.044715 * z * z * z)))


def _norm_lastdim(z):
    # matches `Norm`: mean/var over hidden, torch.var is UNBIASED (ddof=1); gamma=1, beta=0.
    n = z.shape[-1]
    mu = jnp.mean(z, axis=-1, keepdims=True)
    d = z - mu
    var = jnp.sum(d * d, axis=-1, keepdims=True) * (1.0 / (n - 1))
    return d * jax.lax.rsqrt(var + 1e-8)          # rsqrt -> EUP slot instead of a VPU divide


def encoder_layer_kernel(x_ref, mask_ref, npm_ref,
                         wq_ref, bq_ref, wk_ref, bk_ref, wv_ref, bv_ref,
                         wo_ref, bo_ref, w1_ref, b1_ref, w2_ref, b2_ref,
                         out_ref, kc_ref, vc_ref, ctx_ref):
    cd = wq_ref.dtype                       # matmul operand dtype: bf16 (fast) or f32 (exact)
    fast = bool(np.dtype(cd).itemsize < 4)  # static flag, known at trace time

    qi = pl.program_id(1)
    TQ = out_ref.shape[1]
    H_ = wq_ref.shape[1]
    dh = H_ // NUM_HEADS
    neg = jnp.float32(-1e10)                # masked_fill value in the torch code

    # ---- K/V projections: computed ONCE per batch row (qi == 0) into persistent VMEM scratch,
    #      reused by every query tile.  Legal because the qi axis is "arbitrary" (sequential). ----
    @pl.when(qi == 0)
    def _():
        xkv = x_ref[0].astype(cd)                                            # (L, H)
        kc_ref[...] = (jnp.dot(xkv, wk_ref[...], preferred_element_type=jnp.float32)
                       + bk_ref[...]).astype(cd)
        vc_ref[...] = (jnp.dot(xkv, wv_ref[...], preferred_element_type=jnp.float32)
                       + bv_ref[...]).astype(cd)

    # ---- query tile sliced from the resident full row (no duplicate x input / extra DMA) ----
    row0 = pl.multiple_of(qi * TQ, TQ)
    x_res = x_ref[0, pl.ds(row0, TQ), :]     # (TQ, H) f32 — kept in f32 for the residual adds
    xq = x_res.astype(cd)
    npm = npm_ref[0]                         # (TQ, 1) f32, 1.0 where the query token is kept

    # hoisted additive key-padding bias, shared by all 12 heads (one jnp.where, not twelve)
    bias = jnp.where(mask_ref[0] > 0.5, neg, jnp.float32(0.0))               # (1, L)

    # ---- fused Q projection (the 1/sqrt(hidden_dim) scale is pre-folded into wq/bq) ----
    q_c = (jnp.dot(xq, wq_ref[...], preferred_element_type=jnp.float32)
           + bq_ref[...]).astype(cd)         # (TQ, H_)
    k_c = kc_ref[...]                        # (L,  H_) cached
    v_c = vc_ref[...]                        # (L,  H_) cached

    nt = (((1,), (1,)), ((), ()))            # contract last dims: q @ k^T without materializing k^T

    # ---- per-head attention; contexts written in place into the (TQ, H_) scratch slab ----
    for h in range(NUM_HEADS):
        sl = slice(h * dh, (h + 1) * dh)
        e = jax.lax.dot_general(q_c[:, sl], k_c[:, sl], nt,
                                preferred_element_type=jnp.float32)          # (TQ, L)
        e = e + bias
        e = e - jnp.max(e, axis=-1, keepdims=True)
        p = jnp.exp(e)
        inv = pl.reciprocal(jnp.sum(p, axis=-1, keepdims=True), approx=fast)  # EUP reciprocal
        alpha = (p * inv).astype(cd)                                          # softmax(-1)
        ctx_ref[:, sl] = jnp.dot(alpha, v_c[:, sl],
                                 preferred_element_type=jnp.float32)          # (TQ, dh)

    # concat-of-heads == the natural column order of ctx_ref; single fused output projection
    attn = jnp.dot(ctx_ref[...].astype(cd), wo_ref[...],
                   preferred_element_type=jnp.float32) + bo_ref[...]
    attn = _norm_lastdim(attn + x_res)        # residual + Norm
    attn = attn * npm                         # masked_fill(non_pad_mask == 0, 0)

    # ---- FFN ----
    h1 = _gelu(jnp.dot(attn.astype(cd), w1_ref[...], preferred_element_type=jnp.float32)
               + b1_ref[...])
    h2 = jnp.dot(h1.astype(cd), w2_ref[...], preferred_element_type=jnp.float32) + b2_ref[...]
    out = _norm_lastdim(h2 + attn)            # residual + Norm
    out_ref[0] = out * npm                    # masked_fill(non_pad_mask == 0, 0)


# ----------------------------- hardware-aware defaults -----------------------------

def _vmem_limit_bytes():
    # ~112 MiB on 128-MiB parts (v5e/v6e), ~48 MiB on v7x's 64-MiB VMEM.
    try:
        phys = pltpu.get_tpu_info().vmem_capacity_bytes
        if not phys:
            phys = 128 * 1024 * 1024
    except Exception:
        phys = 128 * 1024 * 1024
    return max(32 * 1024 * 1024, min(phys - 16 * 1024 * 1024, 112 * 1024 * 1024))


def _default_q_tile():
    # v6e/v7x MXUs are 256 wide/deep -> TQ=256; v5e (and older) are matched at 128.
    try:
        kind = jax.devices()[0].device_kind.lower()
    except Exception:
        return 128
    for old in ("v2", "v3", "v4", "v5"):
        if old in kind:
            return 128
    return 256


# ----------------------------- wrapper -----------------------------

def encoder_layer(x, key_mask, non_pad_mask, kparams, *, q_tile=None):
    """x: (B, L, H) f32.
    key_mask: (B, L) f32, 1.0 where the KEY position is padding (the torch module's (B,L,L)
              encoder self-attention mask is this key-padding mask broadcast over queries).
    non_pad_mask: (B, L) f32, 1.0 where the token is kept.
    kparams: output of `to_kernel_params` (weights may be bf16 for the fast MXU path)."""
    B, L, H = x.shape
    (Wq, bq, Wk, bk, Wv, bv, Wo, bo, W1, b1, W2, b2) = kparams
    H_ = Wq.shape[1]
    H4 = W1.shape[1]
    cd = Wq.dtype

    if q_tile is None:
        q_tile = _default_q_tile()
    TQ = L if L <= q_tile else q_tile
    assert L % TQ == 0, "sequence length must be a multiple of the query tile"
    nq = L // TQ

    # tiny (B,1,L) / (B,L,1) masks instead of materializing (B,L,L) / (B,L,H) in HBM
    key_mask3 = key_mask.reshape(B, 1, L).astype(jnp.float32)
    npm3 = non_pad_mask.reshape(B, L, 1).astype(jnp.float32)
    operands = (x, key_mask3, npm3, Wq, bq, Wk, bk, Wv, bv, Wo, bo, W1, b1, W2, b2)

    weight_bytes = sum(int(np.prod(w.shape)) * w.dtype.itemsize for w in kparams)
    cost = pl.CostEstimate(
        flops=int(B * L * (8 * H * H_ + 4 * L * H_ + 4 * H * H4)),
        transcendentals=int(B * L * (NUM_HEADS * L + H4 + 2)),
        bytes_accessed=int(8 * B * L * H + 8 * B * L + weight_bytes),
    )

    def build(single_buffer_weights):
        if single_buffer_weights:
            # resident weights: constant index map + single buffering (halves weight VMEM)
            wspec = lambda s: pl.BlockSpec(s, lambda b, qi: (0, 0),
                                           pipeline_mode=pl.Buffered(1))
        else:
            wspec = lambda s: pl.BlockSpec(s, lambda b, qi: (0, 0))
        return pl.pallas_call(
            encoder_layer_kernel,
            out_shape=jax.ShapeDtypeStruct((B, L, H), jnp.float32),
            grid=(B, nq),
            in_specs=[
                pl.BlockSpec((1, L, H), lambda b, qi: (b, 0, 0)),    # x full row (K/V + query tiles)
                pl.BlockSpec((1, 1, L), lambda b, qi: (b, 0, 0)),    # key-padding mask
                pl.BlockSpec((1, TQ, 1), lambda b, qi: (b, qi, 0)),  # non-pad mask (query rows)
                wspec((H, H_)), wspec((1, H_)),                      # Wq, bq (head-permuted, scale folded)
                wspec((H, H_)), wspec((1, H_)),                      # Wk, bk
                wspec((H, H_)), wspec((1, H_)),                      # Wv, bv
                wspec((H_, H)), wspec((1, H)),                       # Wo, bo
                wspec((H, H4)), wspec((1, H4)),                      # fc1
                wspec((H4, H)), wspec((1, H)),                       # fc2
            ],
            out_specs=pl.BlockSpec((1, TQ, H), lambda b, qi: (b, qi, 0)),
            scratch_shapes=[
                pltpu.VMEM((L, H_), cd),              # cached K projection (one batch row)
                pltpu.VMEM((L, H_), cd),              # cached V projection
                pltpu.VMEM((TQ, H_), jnp.float32),    # per-head context slab
            ],
            compiler_params=pltpu.CompilerParams(
                # B parallel (feeds v7x megacore); qi carries K/V scratch state -> arbitrary.
                dimension_semantics=("parallel", "arbitrary"),
                vmem_limit_bytes=_vmem_limit_bytes(),
            ),
            cost_estimate=cost,
        )

    try:
        return build(True)(*operands)
    except Exception:
        # pl.Buffered(1) not supported by this jax version -> fall back to default
        # double-buffered weight blocks (identical numerics, just more weight VMEM).
        return build(False)(*operands)


# ----------------------------- parameters -----------------------------

def init_torch_params(key, H, H_):
    """Deterministic parameters with torch Linear conventions: weight (out, in), bias (out,)."""
    ks = jax.random.split(key, 12)
    sd_qkv = math.sqrt(2.0 / H)
    Wq = sd_qkv * jax.random.normal(ks[0], (H_, H), jnp.float32)
    Wk = sd_qkv * jax.random.normal(ks[1], (H_, H), jnp.float32)
    Wv = sd_qkv * jax.random.normal(ks[2], (H_, H), jnp.float32)
    Wo = math.sqrt(2.0 / (H + H_)) * jax.random.normal(ks[3], (H, H_), jnp.float32)
    W1 = math.sqrt(2.0 / (5 * H)) * jax.random.normal(ks[4], (4 * H, H), jnp.float32)
    W2 = math.sqrt(2.0 / (5 * H)) * jax.random.normal(ks[5], (H, 4 * H), jnp.float32)
    bq = 0.1 * jax.random.normal(ks[6], (H_,), jnp.float32)
    bk = 0.1 * jax.random.normal(ks[7], (H_,), jnp.float32)
    bv = 0.1 * jax.random.normal(ks[8], (H_,), jnp.float32)
    bo = 0.1 * jax.random.normal(ks[9], (H,), jnp.float32)
    b1 = 0.1 * jax.random.normal(ks[10], (4 * H,), jnp.float32)
    b2 = 0.1 * jax.random.normal(ks[11], (H,), jnp.float32)
    return (Wq, bq, Wk, bk, Wv, bv, Wo, bo, W1, b1, W2, b2)


def to_kernel_params(tparams, H, H_, compute_dtype=jnp.float32):
    """Rearrange torch-convention params into the fused kernel layout.

    torch's head split (view(B,L,-1,12).permute(3,...)) means projection channel c = j*12 + h
    belongs to head h, within-head dim j.  We re-order the projection COLUMNS so that head h
    occupies the contiguous block [h*dh, (h+1)*dh); then torch's cat-of-heads equals the natural
    column order of the kernel's context slab, and w_os needs no permutation.  The attention
    scale 1/sqrt(hidden_dim) is pre-folded into Wq/bq."""
    Wq, bq, Wk, bk, Wv, bv, Wo, bo, W1, b1, W2, b2 = tparams
    dh = H_ // NUM_HEADS
    perm = np.arange(H_).reshape(dh, NUM_HEADS).T.reshape(-1)     # perm[h*dh+j] = j*12 + h
    scale = 1.0 / math.sqrt(H)   # torch uses 1/sqrt(d_k) with d_k = hidden_dim (intentional)

    def fuse(W, b, s=1.0):
        return ((W.T[:, perm] * s).astype(compute_dtype),
                (b[perm] * s).reshape(1, H_).astype(jnp.float32))

    Wq2, bq2 = fuse(Wq, bq, scale)
    Wk2, bk2 = fuse(Wk, bk)
    Wv2, bv2 = fuse(Wv, bv)
    return (Wq2, bq2, Wk2, bk2, Wv2, bv2,
            Wo.T.astype(compute_dtype), bo.reshape(1, H).astype(jnp.float32),
            W1.T.astype(compute_dtype), b1.reshape(1, 4 * H).astype(jnp.float32),
            W2.T.astype(compute_dtype), b2.reshape(1, H).astype(jnp.float32))


# ------------------ pure-JAX reference (mirrors the torch code) ------------------

def reference_encoder_layer(x, key_mask, non_pad_mask, tparams):
    Wq, bq, Wk, bk, Wv, bv, Wo, bo, W1, b1, W2, b2 = tparams
    B, L, H = x.shape
    H_ = Wq.shape[0]
    dh = H_ // NUM_HEADS

    lin = lambda a, W, b: a @ W.T + b

    def norm(X):
        mu = jnp.mean(X, axis=2, keepdims=True)
        var = jnp.var(X, axis=2, ddof=1, keepdims=True)
        return (X - mu) / jnp.sqrt(var + 1e-8)

    mask_bll = jnp.broadcast_to(key_mask[:, None, :] > 0.5, (B, L, L))      # torch (B,L,L) mask

    q = lin(x, Wq, bq).reshape(B, L, dh, NUM_HEADS).transpose(3, 0, 1, 2)   # (h,B,L,dh)
    k = lin(x, Wk, bk).reshape(B, L, dh, NUM_HEADS).transpose(3, 0, 2, 1)   # (h,B,dh,L)
    v = lin(x, Wv, bv).reshape(B, L, dh, NUM_HEADS).transpose(3, 0, 1, 2)   # (h,B,L,dh)
    e = jnp.matmul(q, k) / math.sqrt(H)
    e = jnp.where(mask_bll[None], -1e10, e)
    alpha = jax.nn.softmax(e, axis=-1)
    head3 = jnp.matmul(alpha, v)                                            # (h,B,L,dh)
    a = jnp.concatenate([head3[i] for i in range(NUM_HEADS)], axis=2)       # (B,L,H_)
    result = norm(lin(a, Wo, bo) + x)
    result = result * non_pad_mask[:, :, None]
    ffn = lin(_gelu(lin(result, W1, b1)), W2, b2)
    ffn = norm(ffn + result)
    return ffn * non_pad_mask[:, :, None]


if __name__ == "__main__":
    B, L, H, H_ = 2, 8, 32, 48        # H_ must be divisible by 12

    key = jax.random.PRNGKey(0)
    kx, kp, kx2 = jax.random.split(key, 3)
    x = jax.random.normal(kx, (B, L, H), dtype=jnp.float32)

    # padding structure: batch 0 has 6 valid tokens, batch 1 has 5
    valid = jnp.array([6, 5])
    pos = jnp.arange(L)
    non_pad_mask = (pos[None, :] < valid[:, None]).astype(jnp.float32)      # (B, L), 1 = keep
    key_mask = 1.0 - non_pad_mask                                            # (B, L), 1 = masked key

    tparams = init_torch_params(kp, H, H_)
    ref = jax.block_until_ready(reference_encoder_layer(x, key_mask, non_pad_mask, tparams))

    # exact path: f32 matmul operands — tight check against the torch-faithful reference
    kparams_f32 = to_kernel_params(tparams, H, H_, jnp.float32)
    out_f32 = jax.block_until_ready(encoder_layer(x, key_mask, non_pad_mask, kparams_f32))
    assert out_f32.shape == (B, L, H)
    assert np.allclose(np.asarray(out_f32), np.asarray(ref), rtol=2e-3, atol=2e-3), (
        "Pallas kernel (f32 path) does not match reference")

    # fast path: bf16 matmul operands (f32 accumulation) — looser tolerance due to bf16 rounding
    kparams_bf16 = to_kernel_params(tparams, H, H_, jnp.bfloat16)
    out_bf16 = jax.block_until_ready(encoder_layer(x, key_mask, non_pad_mask, kparams_bf16))
    assert np.allclose(np.asarray(out_bf16), np.asarray(ref), rtol=1e-1, atol=1e-1), (
        "Pallas kernel (bf16 path) does not match reference")

    # multi-tile sequence: exercises the K/V-in-scratch carry across query tiles (nq = 2)
    L2 = 256
    x2 = jax.random.normal(kx2, (B, L2, H), dtype=jnp.float32)
    valid2 = jnp.array([200, 131])
    npm2 = (jnp.arange(L2)[None, :] < valid2[:, None]).astype(jnp.float32)
    km2 = 1.0 - npm2
    ref2 = jax.block_until_ready(reference_encoder_layer(x2, km2, npm2, tparams))
    out2 = jax.block_until_ready(encoder_layer(x2, km2, npm2, kparams_f32, q_tile=128))
    assert np.allclose(np.asarray(out2), np.asarray(ref2), rtol=2e-3, atol=2e-3), (
        "Pallas kernel (multi-tile K/V-cache path) does not match reference")

    print("KERNEL_OK")
</pallas_src>

<mosaic_0001>
module attributes {stable_mosaic.version = 11 : i64} {
  func.func @encoder_layer_kernel(%arg0: i32, %arg1: i32, %arg2: memref<1x8x32xf32, #tpu.memory_space<vmem>>, %arg3: memref<1x1x8xf32, #tpu.memory_space<vmem>>, %arg4: memref<1x8x1xf32, #tpu.memory_space<vmem>>, %arg5: memref<32x48xf32, #tpu.memory_space<vmem>>, %arg6: memref<1x48xf32, #tpu.memory_space<vmem>>, %arg7: memref<32x48xf32, #tpu.memory_space<vmem>>, %arg8: memref<1x48xf32, #tpu.memory_space<vmem>>, %arg9: memref<32x48xf32, #tpu.memory_space<vmem>>, %arg10: memref<1x48xf32, #tpu.memory_space<vmem>>, %arg11: memref<48x32xf32, #tpu.memory_space<vmem>>, %arg12: memref<1x32xf32, #tpu.memory_space<vmem>>, %arg13: memref<32x128xf32, #tpu.memory_space<vmem>>, %arg14: memref<1x128xf32, #tpu.memory_space<vmem>>, %arg15: memref<128x32xf32, #tpu.memory_space<vmem>>, %arg16: memref<1x32xf32, #tpu.memory_space<vmem>>, %arg17: memref<1x8x32xf32, #tpu.memory_space<vmem>>, %arg18: memref<8x48xf32, #tpu.memory_space<vmem>>, %arg19: memref<8x48xf32, #tpu.memory_space<vmem>>, %arg20: memref<8x48xf32, #tpu.memory_space<vmem>>) attributes {dimension_semantics = [#tpu.dimension_semantics<parallel>, #tpu.dimension_semantics<arbitrary>], iteration_bounds = array<i64: 2, 1>, scalar_prefetch = 0 : i64, scratch_operands = 3 : i64, tpu.core_type = #tpu.core_type<tc>, window_params = [{transform_indices = @transform_0, window_bounds = array<i64: 1, 8, 32>}, {transform_indices = @transform_1, window_bounds = array<i64: 1, 1, 8>}, {transform_indices = @transform_2, window_bounds = array<i64: 1, 8, 1>}, {pipeline_mode = #tpu.pipeline_mode<synchronous>, transform_indices = @transform_3, window_bounds = array<i64: 32, 48>}, {pipeline_mode = #tpu.pipeline_mode<synchronous>, transform_indices = @transform_4, window_bounds = array<i64: 1, 48>}, {pipeline_mode = #tpu.pipeline_mode<synchronous>, transform_indices = @transform_5, window_bounds = array<i64: 32, 48>}, {pipeline_mode = #tpu.pipeline_mode<synchronous>, transform_indices = @transform_6, window_bounds = array<i64: 1, 48>}, {pipeline_mode = #tpu.pipeline_mode<synchronous>, transform_indices = @transform_7, window_bounds = array<i64: 32, 48>}, {pipeline_mode = #tpu.pipeline_mode<synchronous>, transform_indices = @transform_8, window_bounds = array<i64: 1, 48>}, {pipeline_mode = #tpu.pipeline_mode<synchronous>, transform_indices = @transform_9, window_bounds = array<i64: 48, 32>}, {pipeline_mode = #tpu.pipeline_mode<synchronous>, transform_indices = @transform_10, window_bounds = array<i64: 1, 32>}, {pipeline_mode = #tpu.pipeline_mode<synchronous>, transform_indices = @transform_11, window_bounds = array<i64: 32, 128>}, {pipeline_mode = #tpu.pipeline_mode<synchronous>, transform_indices = @transform_12, window_bounds = array<i64: 1, 128>}, {pipeline_mode = #tpu.pipeline_mode<synchronous>, transform_indices = @transform_13, window_bounds = array<i64: 128, 32>}, {pipeline_mode = #tpu.pipeline_mode<synchronous>, transform_indices = @transform_14, window_bounds = array<i64: 1, 32>}, {transform_indices = @transform_15, window_bounds = array<i64: 1, 8, 32>}]} {
    %c0_i32 = arith.constant 0 : i32
    %0 = arith.cmpi eq, %arg1, %c0_i32 : i32
    %1 = arith.extui %0 : i1 to i32
    %c0_i32_0 = arith.constant 0 : i32
    %2 = arith.cmpi ne, %1, %c0_i32_0 : i32
    scf.if %2 {
      %c0_114 = arith.constant 0 : index
      %c0_115 = arith.constant 0 : index
      %c0_116 = arith.constant 0 : index
      %310 = vector.load %arg2[%c0_114, %c0_115, %c0_116] : memref<1x8x32xf32, #tpu.memory_space<vmem>>, vector<1x8x32xf32>
      %311 = vector.shape_cast %310 : vector<1x8x32xf32> to vector<8x32xf32>
      %c0_117 = arith.constant 0 : index
      %c0_118 = arith.constant 0 : index
      %312 = vector.load %arg7[%c0_117, %c0_118] : memref<32x48xf32, #tpu.memory_space<vmem>>, vector<32x48xf32>
      %cst_119 = arith.constant dense<0.000000e+00> : vector<8x48xf32>
      %313 = tpu.matmul %311, %312, %cst_119 {dimension_numbers = #tpu.dot_dimension_numbers<[1], [0], [0], [1], [0, 0, 1, 1], [], []>} : vector<8x32xf32>, vector<32x48xf32>, vector<8x48xf32> -> vector<8x48xf32>
      %c0_120 = arith.constant 0 : index
      %c0_121 = arith.constant 0 : index
      %314 = vector.load %arg8[%c0_120, %c0_121] : memref<1x48xf32, #tpu.memory_space<vmem>>, vector<1x48xf32>
      %315 = vector.broadcast %314 : vector<1x48xf32> to vector<8x48xf32>
      %316 = arith.addf %313, %315 : vector<8x48xf32>
      %c0_122 = arith.constant 0 : index
      %c0_123 = arith.constant 0 : index
      %317 = vector.load %arg18[%c0_122, %c0_123] : memref<8x48xf32, #tpu.memory_space<vmem>>, vector<8x48xf32>
      tpu.vector_store %arg18[%c0_122, %c0_123], %316 {strides = array<i32>} : memref<8x48xf32, #tpu.memory_space<vmem>>, vector<8x48xf32>,
      %c0_124 = arith.constant 0 : index
      %c0_125 = arith.constant 0 : index
      %318 = vector.load %arg9[%c0_124, %c0_125] : memref<32x48xf32, #tpu.memory_space<vmem>>, vector<32x48xf32>
      %cst_126 = arith.constant dense<0.000000e+00> : vector<8x48xf32>
      %319 = tpu.matmul %311, %318, %cst_126 {dimension_numbers = #tpu.dot_dimension_numbers<[1], [0], [0], [1], [0, 0, 1, 1], [], []>} : vector<8x32xf32>, vector<32x48xf32>, vector<8x48xf32> -> vector<8x48xf32>
      %c0_127 = arith.constant 0 : index
      %c0_128 = arith.constant 0 : index
      %320 = vector.load %arg10[%c0_127, %c0_128] : memref<1x48xf32, #tpu.memory_space<vmem>>, vector<1x48xf32>
      %321 = vector.broadcast %320 : vector<1x48xf32> to vector<8x48xf32>
      %322 = arith.addf %319, %321 : vector<8x48xf32>
      %c0_129 = arith.constant 0 : index
      %c0_130 = arith.constant 0 : index
      %323 = vector.load %arg19[%c0_129, %c0_130] : memref<8x48xf32, #tpu.memory_space<vmem>>, vector<8x48xf32>
      tpu.vector_store %arg19[%c0_129, %c0_130], %322 {strides = array<i32>} : memref<8x48xf32, #tpu.memory_space<vmem>>, vector<8x48xf32>,
    } else {
    }
    %c8_i32 = arith.constant 8 : i32
    %3 = arith.muli %arg1, %c8_i32 : i32
    %4 = tpu.assume_multiple %3, 8 : i32
    %c0 = arith.constant 0 : index
    %5 = arith.index_cast %4 : i32 to index
    %c0_1 = arith.constant 0 : index
    %6 = vector.load %arg2[%c0, %5, %c0_1] : memref<1x8x32xf32, #tpu.memory_space<vmem>>, vector<1x8x32xf32>
    %7 = vector.shape_cast %6 : vector<1x8x32xf32> to vector<8x32xf32>
    %c0_2 = arith.constant 0 : index
    %c0_3 = arith.constant 0 : index
    %c0_4 = arith.constant 0 : index
    %8 = vector.load %arg4[%c0_2, %c0_3, %c0_4] : memref<1x8x1xf32, #tpu.memory_space<vmem>>, vector<1x8x1xf32>
    %9 = vector.shape_cast %8 : vector<1x8x1xf32> to vector<8x1xf32>
    %c0_5 = arith.constant 0 : index
    %c0_6 = arith.constant 0 : index
    %c0_7 = arith.constant 0 : index
    %10 = vector.load %arg3[%c0_5, %c0_6, %c0_7] : memref<1x1x8xf32, #tpu.memory_space<vmem>>, vector<1x1x8xf32>
    %11 = vector.shape_cast %10 : vector<1x1x8xf32> to vector<1x8xf32>
    %cst = arith.constant 5.000000e-01 : f32
    %12 = vector.broadcast %cst : f32 to vector<1x8xf32>
    %13 = arith.cmpf ogt, %11, %12 : vector<1x8xf32>
    %cst_8 = arith.constant -1.000000e+10 : f32
    %cst_9 = arith.constant 0.000000e+00 : f32
    %14 = vector.broadcast %cst_8 : f32 to vector<1x8xf32>
    %15 = vector.broadcast %cst_9 : f32 to vector<1x8xf32>
    %16 = arith.select %13, %14, %15 : vector<1x8xi1>, vector<1x8xf32>
    %c0_10 = arith.constant 0 : index
    %c0_11 = arith.constant 0 : index
    %17 = vector.load %arg5[%c0_10, %c0_11] : memref<32x48xf32, #tpu.memory_space<vmem>>, vector<32x48xf32>
    %cst_12 = arith.constant dense<0.000000e+00> : vector<8x48xf32>
    %18 = tpu.matmul %7, %17, %cst_12 {dimension_numbers = #tpu.dot_dimension_numbers<[1], [0], [0], [1], [0, 0, 1, 1], [], []>} : vector<8x32xf32>, vector<32x48xf32>, vector<8x48xf32> -> vector<8x48xf32>
    %c0_13 = arith.constant 0 : index
    %c0_14 = arith.constant 0 : index
    %19 = vector.load %arg6[%c0_13, %c0_14] : memref<1x48xf32, #tpu.memory_space<vmem>>, vector<1x48xf32>
    %20 = vector.broadcast %19 : vector<1x48xf32> to vector<8x48xf32>
    %21 = arith.addf %18, %20 : vector<8x48xf32>
    %c0_15 = arith.constant 0 : index
    %c0_16 = arith.constant 0 : index
    %22 = vector.load %arg18[%c0_15, %c0_16] : memref<8x48xf32, #tpu.memory_space<vmem>>, vector<8x48xf32>
    %c0_17 = arith.constant 0 : index
    %c0_18 = arith.constant 0 : index
    %23 = vector.load %arg19[%c0_17, %c0_18] : memref<8x48xf32, #tpu.memory_space<vmem>>, vector<8x48xf32>
    %24 = vector.extract_strided_slice %21 {offsets = [0, 0], sizes = [8, 4], strides = [1, 1]} : vector<8x48xf32> to vector<8x4xf32>
    %25 = vector.extract_strided_slice %22 {offsets = [0, 0], sizes = [8, 4], strides = [1, 1]} : vector<8x48xf32> to vector<8x4xf32>
    %cst_19 = arith.constant dense<0.000000e+00> : vector<8x8xf32>
    %26 = tpu.matmul %24, %25, %cst_19 {dimension_numbers = #tpu.dot_dimension_numbers<[1], [1], [0], [0], [0, 0, 1, 0], [], []>} : vector<8x4xf32>, vector<8x4xf32>, vector<8x8xf32> -> vector<8x8xf32>
    %27 = vector.broadcast %16 : vector<1x8xf32> to vector<8x8xf32>
    %28 = arith.addf %26, %27 : vector<8x8xf32>
    %cst_20 = arith.constant dense<0xFF800000> : vector<8xf32>
    %29 = vector.multi_reduction <maximumf>, %28, %cst_20 [1] : vector<8x8xf32> to vector<8xf32>
    %30 = vector.shape_cast %29 : vector<8xf32> to vector<8x1xf32>
    %31 = vector.broadcast %30 : vector<8x1xf32> to vector<8x8xf32>
    %32 = arith.subf %28, %31 : vector<8x8xf32>
    %33 = math.exp %32 : vector<8x8xf32>
    %cst_21 = arith.constant dense<0.000000e+00> : vector<8xf32>
    %34 = vector.multi_reduction <add>, %33, %cst_21 [1] : vector<8x8xf32> to vector<8xf32>
    %35 = vector.shape_cast %34 : vector<8xf32> to vector<8x1xf32>
    %36 = tpu.reciprocal %35 : vector<8x1xf32> -> vector<8x1xf32>
    %37 = vector.broadcast %36 : vector<8x1xf32> to vector<8x8xf32>
    %38 = arith.mulf %33, %37 : vector<8x8xf32>
    %39 = vector.extract_strided_slice %23 {offsets = [0, 0], sizes = [8, 4], strides = [1, 1]} : vector<8x48xf32> to vector<8x4xf32>
    %cst_22 = arith.constant dense<0.000000e+00> : vector<8x4xf32>
    %40 = tpu.matmul %38, %39, %cst_22 {dimension_numbers = #tpu.dot_dimension_numbers<[1], [0], [0], [1], [0, 0, 1, 1], [], []>} : vector<8x8xf32>, vector<8x4xf32>, vector<8x4xf32> -> vector<8x4xf32>
    %c0_23 = arith.constant 0 : index
    %c0_24 = arith.constant 0 : index
    %41 = vector.load %arg20[%c0_23, %c0_24] : memref<8x48xf32, #tpu.memory_space<vmem>>, vector<8x4xf32>
    tpu.vector_store %arg20[%c0_23, %c0_24], %40 {strides = array<i32>} : memref<8x48xf32, #tpu.memory_space<vmem>>, vector<8x4xf32>,
    %42 = vector.extract_strided_slice %21 {offsets = [0, 4], sizes = [8, 4], strides = [1, 1]} : vector<8x48xf32> to vector<8x4xf32>
    %43 = vector.extract_strided_slice %22 {offsets = [0, 4], sizes = [8, 4], strides = [1, 1]} : vector<8x48xf32> to vector<8x4xf32>
    %cst_25 = arith.constant dense<0.000000e+00> : vector<8x8xf32>
    %44 = tpu.matmul %42, %43, %cst_25 {dimension_numbers = #tpu.dot_dimension_numbers<[1], [1], [0], [0], [0, 0, 1, 0], [], []>} : vector<8x4xf32>, vector<8x4xf32>, vector<8x8xf32> -> vector<8x8xf32>
    %45 = vector.broadcast %16 : vector<1x8xf32> to vector<8x8xf32>
    %46 = arith.addf %44, %45 : vector<8x8xf32>
    %cst_26 = arith.constant dense<0xFF800000> : vector<8xf32>
    %47 = vector.multi_reduction <maximumf>, %46, %cst_26 [1] : vector<8x8xf32> to vector<8xf32>
    %48 = vector.shape_cast %47 : vector<8xf32> to vector<8x1xf32>
    %49 = vector.broadcast %48 : vector<8x1xf32> to vector<8x8xf32>
    %50 = arith.subf %46, %49 : vector<8x8xf32>
    %51 = math.exp %50 : vector<8x8xf32>
    %cst_27 = arith.constant dense<0.000000e+00> : vector<8xf32>
    %52 = vector.multi_reduction <add>, %51, %cst_27 [1] : vector<8x8xf32> to vector<8xf32>
    %53 = vector.shape_cast %52 : vector<8xf32> to vector<8x1xf32>
    %54 = tpu.reciprocal %53 : vector<8x1xf32> -> vector<8x1xf32>
    %55 = vector.broadcast %54 : vector<8x1xf32> to vector<8x8xf32>
    %56 = arith.mulf %51, %55 : vector<8x8xf32>
    %57 = vector.extract_strided_slice %23 {offsets = [0, 4], sizes = [8, 4], strides = [1, 1]} : vector<8x48xf32> to vector<8x4xf32>
    %cst_28 = arith.constant dense<0.000000e+00> : vector<8x4xf32>
    %58 = tpu.matmul %56, %57, %cst_28 {dimension_numbers = #tpu.dot_dimension_numbers<[1], [0], [0], [1], [0, 0, 1, 1], [], []>} : vector<8x8xf32>, vector<8x4xf32>, vector<8x4xf32> -> vector<8x4xf32>
    %c0_29 = arith.constant 0 : index
    %c4 = arith.constant 4 : index
    %59 = vector.load %arg20[%c0_29, %c4] : memref<8x48xf32, #tpu.memory_space<vmem>>, vector<8x4xf32>
    tpu.vector_store %arg20[%c0_29, %c4], %58 {strides = array<i32>} : memref<8x48xf32, #tpu.memory_space<vmem>>, vector<8x4xf32>,
    %60 = vector.extract_strided_slice %21 {offsets = [0, 8], sizes = [8, 4], strides = [1, 1]} : vector<8x48xf32> to vector<8x4xf32>
    %61 = vector.extract_strided_slice %22 {offsets = [0, 8], sizes = [8, 4], strides = [1, 1]} : vector<8x48xf32> to vector<8x4xf32>
    %cst_30 = arith.constant dense<0.000000e+00> : vector<8x8xf32>
    %62 = tpu.matmul %60, %61, %cst_30 {dimension_numbers = #tpu.dot_dimension_numbers<[1], [1], [0], [0], [0, 0, 1, 0], [], []>} : vector<8x4xf32>, vector<8x4xf32>, vector<8x8xf32> -> vector<8x8xf32>
    %63 = vector.broadcast %16 : vector<1x8xf32> to vector<8x8xf32>
    %64 = arith.addf %62, %63 : vector<8x8xf32>
    %cst_31 = arith.constant dense<0xFF800000> : vector<8xf32>
    %65 = vector.multi_reduction <maximumf>, %64, %cst_31 [1] : vector<8x8xf32> to vector<8xf32>
    %66 = vector.shape_cast %65 : vector<8xf32> to vector<8x1xf32>
    %67 = vector.broadcast %66 : vector<8x1xf32> to vector<8x8xf32>
    %68 = arith.subf %64, %67 : vector<8x8xf32>
    %69 = math.exp %68 : vector<8x8xf32>
    %cst_32 = arith.constant dense<0.000000e+00> : vector<8xf32>
    %70 = vector.multi_reduction <add>, %69, %cst_32 [1] : vector<8x8xf32> to vector<8xf32>
    %71 = vector.shape_cast %70 : vector<8xf32> to vector<8x1xf32>
    %72 = tpu.reciprocal %71 : vector<8x1xf32> -> vector<8x1xf32>
    %73 = vector.broadcast %72 : vector<8x1xf32> to vector<8x8xf32>
    %74 = arith.mulf %69, %73 : vector<8x8xf32>
    %75 = vector.extract_strided_slice %23 {offsets = [0, 8], sizes = [8, 4], strides = [1, 1]} : vector<8x48xf32> to vector<8x4xf32>
    %cst_33 = arith.constant dense<0.000000e+00> : vector<8x4xf32>
    %76 = tpu.matmul %74, %75, %cst_33 {dimension_numbers = #tpu.dot_dimension_numbers<[1], [0], [0], [1], [0, 0, 1, 1], [], []>} : vector<8x8xf32>, vector<8x4xf32>, vector<8x4xf32> -> vector<8x4xf32>
    %c0_34 = arith.constant 0 : index
    %c8 = arith.constant 8 : index
    %77 = vector.load %arg20[%c0_34, %c8] : memref<8x48xf32, #tpu.memory_space<vmem>>, vector<8x4xf32>
    tpu.vector_store %arg20[%c0_34, %c8], %76 {strides = array<i32>} : memref<8x48xf32, #tpu.memory_space<vmem>>, vector<8x4xf32>,
    %78 = vector.extract_strided_slice %21 {offsets = [0, 12], sizes = [8, 4], strides = [1, 1]} : vector<8x48xf32> to vector<8x4xf32>
    %79 = vector.extract_strided_slice %22 {offsets = [0, 12], sizes = [8, 4], strides = [1, 1]} : vector<8x48xf32> to vector<8x4xf32>
    %cst_35 = arith.constant dense<0.000000e+00> : vector<8x8xf32>
    %80 = tpu.matmul %78, %79, %cst_35 {dimension_numbers = #tpu.dot_dimension_numbers<[1], [1], [0], [0], [0, 0, 1, 0], [], []>} : vector<8x4xf32>, vector<8x4xf32>, vector<8x8xf32> -> vector<8x8xf32>
    %81 = vector.broadcast %16 : vector<1x8xf32> to vector<8x8xf32>
    %82 = arith.addf %80, %81 : vector<8x8xf32>
    %cst_36 = arith.constant dense<0xFF800000> : vector<8xf32>
    %83 = vector.multi_reduction <maximumf>, %82, %cst_36 [1] : vector<8x8xf32> to vector<8xf32>
    %84 = vector.shape_cast %83 : vector<8xf32> to vector<8x1xf32>
    %85 = vector.broadcast %84 : vector<8x1xf32> to vector<8x8xf32>
    %86 = arith.subf %82, %85 : vector<8x8xf32>
    %87 = math.exp %86 : vector<8x8xf32>
    %cst_37 = arith.constant dense<0.000000e+00> : vector<8xf32>
    %88 = vector.multi_reduction <add>, %87, %cst_37 [1] : vector<8x8xf32> to vector<8xf32>
    %89 = vector.shape_cast %88 : vector<8xf32> to vector<8x1xf32>
    %90 = tpu.reciprocal %89 : vector<8x1xf32> -> vector<8x1xf32>
    %91 = vector.broadcast %90 : vector<8x1xf32> to vector<8x8xf32>
    %92 = arith.mulf %87, %91 : vector<8x8xf32>
    %93 = vector.extract_strided_slice %23 {offsets = [0, 12], sizes = [8, 4], strides = [1, 1]} : vector<8x48xf32> to vector<8x4xf32>
    %cst_38 = arith.constant dense<0.000000e+00> : vector<8x4xf32>
    %94 = tpu.matmul %92, %93, %cst_38 {dimension_numbers = #tpu.dot_dimension_numbers<[1], [0], [0], [1], [0, 0, 1, 1], [], []>} : vector<8x8xf32>, vector<8x4xf32>, vector<8x4xf32> -> vector<8x4xf32>
    %c0_39 = arith.constant 0 : index
    %c12 = arith.constant 12 : index
    %95 = vector.load %arg20[%c0_39, %c12] : memref<8x48xf32, #tpu.memory_space<vmem>>, vector<8x4xf32>
    tpu.vector_store %arg20[%c0_39, %c12], %94 {strides = array<i32>} : memref<8x48xf32, #tpu.memory_space<vmem>>, vector<8x4xf32>,
    %96 = vector.extract_strided_slice %21 {offsets = [0, 16], sizes = [8, 4], strides = [1, 1]} : vector<8x48xf32> to vector<8x4xf32>
    %97 = vector.extract_strided_slice %22 {offsets = [0, 16], sizes = [8, 4], strides = [1, 1]} : vector<8x48xf32> to vector<8x4xf32>
    %cst_40 = arith.constant dense<0.000000e+00> : vector<8x8xf32>
    %98 = tpu.matmul %96, %97, %cst_40 {dimension_numbers = #tpu.dot_dimension_numbers<[1], [1], [0], [0], [0, 0, 1, 0], [], []>} : vector<8x4xf32>, vector<8x4xf32>, vector<8x8xf32> -> vector<8x8xf32>
    %99 = vector.broadcast %16 : vector<1x8xf32> to vector<8x8xf32>
    %100 = arith.addf %98, %99 : vector<8x8xf32>
    %cst_41 = arith.constant dense<0xFF800000> : vector<8xf32>
    %101 = vector.multi_reduction <maximumf>, %100, %cst_41 [1] : vector<8x8xf32> to vector<8xf32>
    %102 = vector.shape_cast %101 : vector<8xf32> to vector<8x1xf32>
    %103 = vector.broadcast %102 : vector<8x1xf32> to vector<8x8xf32>
    %104 = arith.subf %100, %103 : vector<8x8xf32>
    %105 = math.exp %104 : vector<8x8xf32>
    %cst_42 = arith.constant dense<0.000000e+00> : vector<8xf32>
    %106 = vector.multi_reduction <add>, %105, %cst_42 [1] : vector<8x8xf32> to vector<8xf32>
    %107 = vector.shape_cast %106 : vector<8xf32> to vector<8x1xf32>
    %108 = tpu.reciprocal %107 : vector<8x1xf32> -> vector<8x1xf32>
    %109 = vector.broadcast %108 : vector<8x1xf32> to vector<8x8xf32>
    %110 = arith.mulf %105, %109 : vector<8x8xf32>
    %111 = vector.extract_strided_slice %23 {offsets = [0, 16], sizes = [8, 4], strides = [1, 1]} : vector<8x48xf32> to vector<8x4xf32>
    %cst_43 = arith.constant dense<0.000000e+00> : vector<8x4xf32>
    %112 = tpu.matmul %110, %111, %cst_43 {dimension_numbers = #tpu.dot_dimension_numbers<[1], [0], [0], [1], [0, 0, 1, 1], [], []>} : vector<8x8xf32>, vector<8x4xf32>, vector<8x4xf32> -> vector<8x4xf32>
    %c0_44 = arith.constant 0 : index
    %c16 = arith.constant 16 : index
    %113 = vector.load %arg20[%c0_44, %c16] : memref<8x48xf32, #tpu.memory_space<vmem>>, vector<8x4xf32>
    tpu.vector_store %arg20[%c0_44, %c16], %112 {strides = array<i32>} : memref<8x48xf32, #tpu.memory_space<vmem>>, vector<8x4xf32>,
    %114 = vector.extract_strided_slice %21 {offsets = [0, 20], sizes = [8, 4], strides = [1, 1]} : vector<8x48xf32> to vector<8x4xf32>
    %115 = vector.extract_strided_slice %22 {offsets = [0, 20], sizes = [8, 4], strides = [1, 1]} : vector<8x48xf32> to vector<8x4xf32>
    %cst_45 = arith.constant dense<0.000000e+00> : vector<8x8xf32>
    %116 = tpu.matmul %114, %115, %cst_45 {dimension_numbers = #tpu.dot_dimension_numbers<[1], [1], [0], [0], [0, 0, 1, 0], [], []>} : vector<8x4xf32>, vector<8x4xf32>, vector<8x8xf32> -> vector<8x8xf32>
    %117 = vector.broadcast %16 : vector<1x8xf32> to vector<8x8xf32>
    %118 = arith.addf %116, %117 : vector<8x8xf32>
    %cst_46 = arith.constant dense<0xFF800000> : vector<8xf32>
    %119 = vector.multi_reduction <maximumf>, %118, %cst_46 [1] : vector<8x8xf32> to vector<8xf32>
    %120 = vector.shape_cast %119 : vector<8xf32> to vector<8x1xf32>
    %121 = vector.broadcast %120 : vector<8x1xf32> to vector<8x8xf32>
    %122 = arith.subf %118, %121 : vector<8x8xf32>
    %123 = math.exp %122 : vector<8x8xf32>
    %cst_47 = arith.constant dense<0.000000e+00> : vector<8xf32>
    %124 = vector.multi_reduction <add>, %123, %cst_47 [1] : vector<8x8xf32> to vector<8xf32>
    %125 = vector.shape_cast %124 : vector<8xf32> to vector<8x1xf32>
    %126 = tpu.reciprocal %125 : vector<8x1xf32> -> vector<8x1xf32>
    %127 = vector.broadcast %126 : vector<8x1xf32> to vector<8x8xf32>
    %128 = arith.mulf %123, %127 : vector<8x8xf32>
    %129 = vector.extract_strided_slice %23 {offsets = [0, 20], sizes = [8, 4], strides = [1, 1]} : vector<8x48xf32> to vector<8x4xf32>
    %cst_48 = arith.constant dense<0.000000e+00> : vector<8x4xf32>
    %130 = tpu.matmul %128, %129, %cst_48 {dimension_numbers = #tpu.dot_dimension_numbers<[1], [0], [0], [1], [0, 0, 1, 1], [], []>} : vector<8x8xf32>, vector<8x4xf32>, vector<8x4xf32> -> vector<8x4xf32>
    %c0_49 = arith.constant 0 : index
    %c20 = arith.constant 20 : index
    %131 = vector.load %arg20[%c0_49, %c20] : memref<8x48xf32, #tpu.memory_space<vmem>>, vector<8x4xf32>
    tpu.vector_store %arg20[%c0_49, %c20], %130 {strides = array<i32>} : memref<8x48xf32, #tpu.memory_space<vmem>>, vector<8x4xf32>,
    %132 = vector.extract_strided_slice %21 {offsets = [0, 24], sizes = [8, 4], strides = [1, 1]} : vector<8x48xf32> to vector<8x4xf32>
    %133 = vector.extract_strided_slice %22 {offsets = [0, 24], sizes = [8, 4], strides = [1, 1]} : vector<8x48xf32> to vector<8x4xf32>
    %cst_50 = arith.constant dense<0.000000e+00> : vector<8x8xf32>
    %134 = tpu.matmul %132, %133, %cst_50 {dimension_numbers = #tpu.dot_dimension_numbers<[1], [1], [0], [0], [0, 0, 1, 0], [], []>} : vector<8x4xf32>, vector<8x4xf32>, vector<8x8xf32> -> vector<8x8xf32>
    %135 = vector.broadcast %16 : vector<1x8xf32> to vector<8x8xf32>
    %136 = arith.addf %134, %135 : vector<8x8xf32>
    %cst_51 = arith.constant dense<0xFF800000> : vector<8xf32>
    %137 = vector.multi_reduction <maximumf>, %136, %cst_51 [1] : vector<8x8xf32> to vector<8xf32>
    %138 = vector.shape_cast %137 : vector<8xf32> to vector<8x1xf32>
    %139 = vector.broadcast %138 : vector<8x1xf32> to vector<8x8xf32>
    %140 = arith.subf %136, %139 : vector<8x8xf32>
    %141 = math.exp %140 : vector<8x8xf32>
    %cst_52 = arith.constant dense<0.000000e+00> : vector<8xf32>
    %142 = vector.multi_reduction <add>, %141, %cst_52 [1] : vector<8x8xf32> to vector<8xf32>
    %143 = vector.shape_cast %142 : vector<8xf32> to vector<8x1xf32>
    %144 = tpu.reciprocal %143 : vector<8x1xf32> -> vector<8x1xf32>
    %145 = vector.broadcast %144 : vector<8x1xf32> to vector<8x8xf32>
    %146 = arith.mulf %141, %145 : vector<8x8xf32>
    %147 = vector.extract_strided_slice %23 {offsets = [0, 24], sizes = [8, 4], strides = [1, 1]} : vector<8x48xf32> to vector<8x4xf32>
    %cst_53 = arith.constant dense<0.000000e+00> : vector<8x4xf32>
    %148 = tpu.matmul %146, %147, %cst_53 {dimension_numbers = #tpu.dot_dimension_numbers<[1], [0], [0], [1], [0, 0, 1, 1], [], []>} : vector<8x8xf32>, vector<8x4xf32>, vector<8x4xf32> -> vector<8x4xf32>
    %c0_54 = arith.constant 0 : index
    %c24 = arith.constant 24 : index
    %149 = vector.load %arg20[%c0_54, %c24] : memref<8x48xf32, #tpu.memory_space<vmem>>, vector<8x4xf32>
    tpu.vector_store %arg20[%c0_54, %c24], %148 {strides = array<i32>} : memref<8x48xf32, #tpu.memory_space<vmem>>, vector<8x4xf32>,
    %150 = vector.extract_strided_slice %21 {offsets = [0, 28], sizes = [8, 4], strides = [1, 1]} : vector<8x48xf32> to vector<8x4xf32>
    %151 = vector.extract_strided_slice %22 {offsets = [0, 28], sizes = [8, 4], strides = [1, 1]} : vector<8x48xf32> to vector<8x4xf32>
    %cst_55 = arith.constant dense<0.000000e+00> : vector<8x8xf32>
    %152 = tpu.matmul %150, %151, %cst_55 {dimension_numbers = #tpu.dot_dimension_numbers<[1], [1], [0], [0], [0, 0, 1, 0], [], []>} : vector<8x4xf32>, vector<8x4xf32>, vector<8x8xf32> -> vector<8x8xf32>
    %153 = vector.broadcast %16 : vector<1x8xf32> to vector<8x8xf32>
    %154 = arith.addf %152, %153 : vector<8x8xf32>
    %cst_56 = arith.constant dense<0xFF800000> : vector<8xf32>
    %155 = vector.multi_reduction <maximumf>, %154, %cst_56 [1] : vector<8x8xf32> to vector<8xf32>
    %156 = vector.shape_cast %155 : vector<8xf32> to vector<8x1xf32>
    %157 = vector.broadcast %156 : vector<8x1xf32> to vector<8x8xf32>
    %158 = arith.subf %154, %157 : vector<8x8xf32>
    %159 = math.exp %158 : vector<8x8xf32>
    %cst_57 = arith.constant dense<0.000000e+00> : vector<8xf32>
    %160 = vector.multi_reduction <add>, %159, %cst_57 [1] : vector<8x8xf32> to vector<8xf32>
    %161 = vector.shape_cast %160 : vector<8xf32> to vector<8x1xf32>
    %162 = tpu.reciprocal %161 : vector<8x1xf32> -> vector<8x1xf32>
    %163 = vector.broadcast %162 : vector<8x1xf32> to vector<8x8xf32>
    %164 = arith.mulf %159, %163 : vector<8x8xf32>
    %165 = vector.extract_strided_slice %23 {offsets = [0, 28], sizes = [8, 4], strides = [1, 1]} : vector<8x48xf32> to vector<8x4xf32>
    %cst_58 = arith.constant dense<0.000000e+00> : vector<8x4xf32>
    %166 = tpu.matmul %164, %165, %cst_58 {dimension_numbers = #tpu.dot_dimension_numbers<[1], [0], [0], [1], [0, 0, 1, 1], [], []>} : vector<8x8xf32>, vector<8x4xf32>, vector<8x4xf32> -> vector<8x4xf32>
    %c0_59 = arith.constant 0 : index
    %c28 = arith.constant 28 : index
    %167 = vector.load %arg20[%c0_59, %c28] : memref<8x48xf32, #tpu.memory_space<vmem>>, vector<8x4xf32>
    tpu.vector_store %arg20[%c0_59, %c28], %166 {strides = array<i32>} : memref<8x48xf32, #tpu.memory_space<vmem>>, vector<8x4xf32>,
    %168 = vector.extract_strided_slice %21 {offsets = [0, 32], sizes = [8, 4], strides = [1, 1]} : vector<8x48xf32> to vector<8x4xf32>
    %169 = vector.extract_strided_slice %22 {offsets = [0, 32], sizes = [8, 4], strides = [1, 1]} : vector<8x48xf32> to vector<8x4xf32>
    %cst_60 = arith.constant dense<0.000000e+00> : vector<8x8xf32>
    %170 = tpu.matmul %168, %169, %cst_60 {dimension_numbers = #tpu.dot_dimension_numbers<[1], [1], [0], [0], [0, 0, 1, 0], [], []>} : vector<8x4xf32>, vector<8x4xf32>, vector<8x8xf32> -> vector<8x8xf32>
    %171 = vector.broadcast %16 : vector<1x8xf32> to vector<8x8xf32>
    %172 = arith.addf %170, %171 : vector<8x8xf32>
    %cst_61 = arith.constant dense<0xFF800000> : vector<8xf32>
    %173 = vector.multi_reduction <maximumf>, %172, %cst_61 [1] : vector<8x8xf32> to vector<8xf32>
    %174 = vector.shape_cast %173 : vector<8xf32> to vector<8x1xf32>
    %175 = vector.broadcast %174 : vector<8x1xf32> to vector<8x8xf32>
    %176 = arith.subf %172, %175 : vector<8x8xf32>
    %177 = math.exp %176 : vector<8x8xf32>
    %cst_62 = arith.constant dense<0.000000e+00> : vector<8xf32>
    %178 = vector.multi_reduction <add>, %177, %cst_62 [1] : vector<8x8xf32> to vector<8xf32>
    %179 = vector.shape_cast %178 : vector<8xf32> to vector<8x1xf32>
    %180 = tpu.reciprocal %179 : vector<8x1xf32> -> vector<8x1xf32>
    %181 = vector.broadcast %180 : vector<8x1xf32> to vector<8x8xf32>
    %182 = arith.mulf %177, %181 : vector<8x8xf32>
    %183 = vector.extract_strided_slice %23 {offsets = [0, 32], sizes = [8, 4], strides = [1, 1]} : vector<8x48xf32> to vector<8x4xf32>
    %cst_63 = arith.constant dense<0.000000e+00> : vector<8x4xf32>
    %184 = tpu.matmul %182, %183, %cst_63 {dimension_numbers = #tpu.dot_dimension_numbers<[1], [0], [0], [1], [0, 0, 1, 1], [], []>} : vector<8x8xf32>, vector<8x4xf32>, vector<8x4xf32> -> vector<8x4xf32>
    %c0_64 = arith.constant 0 : index
    %c32 = arith.constant 32 : index
    %185 = vector.load %arg20[%c0_64, %c32] : memref<8x48xf32, #tpu.memory_space<vmem>>, vector<8x4xf32>
    tpu.vector_store %arg20[%c0_64, %c32], %184 {strides = array<i32>} : memref<8x48xf32, #tpu.memory_space<vmem>>, vector<8x4xf32>,
    %186 = vector.extract_strided_slice %21 {offsets = [0, 36], sizes = [8, 4], strides = [1, 1]} : vector<8x48xf32> to vector<8x4xf32>
    %187 = vector.extract_strided_slice %22 {offsets = [0, 36], sizes = [8, 4], strides = [1, 1]} : vector<8x48xf32> to vector<8x4xf32>
    %cst_65 = arith.constant dense<0.000000e+00> : vector<8x8xf32>
    %188 = tpu.matmul %186, %187, %cst_65 {dimension_numbers = #tpu.dot_dimension_numbers<[1], [1], [0], [0], [0, 0, 1, 0], [], []>} : vector<8x4xf32>, vector<8x4xf32>, vector<8x8xf32> -> vector<8x8xf32>
    %189 = vector.broadcast %16 : vector<1x8xf32> to vector<8x8xf32>
    %190 = arith.addf %188, %189 : vector<8x8xf32>
    %cst_66 = arith.constant dense<0xFF800000> : vector<8xf32>
    %191 = vector.multi_reduction <maximumf>, %190, %cst_66 [1] : vector<8x8xf32> to vector<8xf32>
    %192 = vector.shape_cast %191 : vector<8xf32> to vector<8x1xf32>
    %193 = vector.broadcast %192 : vector<8x1xf32> to vector<8x8xf32>
    %194 = arith.subf %190, %193 : vector<8x8xf32>
    %195 = math.exp %194 : vector<8x8xf32>
    %cst_67 = arith.constant dense<0.000000e+00> : vector<8xf32>
    %196 = vector.multi_reduction <add>, %195, %cst_67 [1] : vector<8x8xf32> to vector<8xf32>
    %197 = vector.shape_cast %196 : vector<8xf32> to vector<8x1xf32>
    %198 = tpu.reciprocal %197 : vector<8x1xf32> -> vector<8x1xf32>
    %199 = vector.broadcast %198 : vector<8x1xf32> to vector<8x8xf32>
    %200 = arith.mulf %195, %199 : vector<8x8xf32>
    %201 = vector.extract_strided_slice %23 {offsets = [0, 36], sizes = [8, 4], strides = [1, 1]} : vector<8x48xf32> to vector<8x4xf32>
    %cst_68 = arith.constant dense<0.000000e+00> : vector<8x4xf32>
    %202 = tpu.matmul %200, %201, %cst_68 {dimension_numbers = #tpu.dot_dimension_numbers<[1], [0], [0], [1], [0, 0, 1, 1], [], []>} : vector<8x8xf32>, vector<8x4xf32>, vector<8x4xf32> -> vector<8x4xf32>
    %c0_69 = arith.constant 0 : index
    %c36 = arith.constant 36 : index
    %203 = vector.load %arg20[%c0_69, %c36] : memref<8x48xf32, #tpu.memory_space<vmem>>, vector<8x4xf32>
    tpu.vector_store %arg20[%c0_69, %c36], %202 {strides = array<i32>} : memref<8x48xf32, #tpu.memory_space<vmem>>, vector<8x4xf32>,
    %204 = vector.extract_strided_slice %21 {offsets = [0, 40], sizes = [8, 4], strides = [1, 1]} : vector<8x48xf32> to vector<8x4xf32>
    %205 = vector.extract_strided_slice %22 {offsets = [0, 40], sizes = [8, 4], strides = [1, 1]} : vector<8x48xf32> to vector<8x4xf32>
    %cst_70 = arith.constant dense<0.000000e+00> : vector<8x8xf32>
    %206 = tpu.matmul %204, %205, %cst_70 {dimension_numbers = #tpu.dot_dimension_numbers<[1], [1], [0], [0], [0, 0, 1, 0], [], []>} : vector<8x4xf32>, vector<8x4xf32>, vector<8x8xf32> -> vector<8x8xf32>
    %207 = vector.broadcast %16 : vector<1x8xf32> to vector<8x8xf32>
    %208 = arith.addf %206, %207 : vector<8x8xf32>
    %cst_71 = arith.constant dense<0xFF800000> : vector<8xf32>
    %209 = vector.multi_reduction <maximumf>, %208, %cst_71 [1] : vector<8x8xf32> to vector<8xf32>
    %210 = vector.shape_cast %209 : vector<8xf32> to vector<8x1xf32>
    %211 = vector.broadcast %210 : vector<8x1xf32> to vector<8x8xf32>
    %212 = arith.subf %208, %211 : vector<8x8xf32>
    %213 = math.exp %212 : vector<8x8xf32>
    %cst_72 = arith.constant dense<0.000000e+00> : vector<8xf32>
    %214 = vector.multi_reduction <add>, %213, %cst_72 [1] : vector<8x8xf32> to vector<8xf32>
    %215 = vector.shape_cast %214 : vector<8xf32> to vector<8x1xf32>
    %216 = tpu.reciprocal %215 : vector<8x1xf32> -> vector<8x1xf32>
    %217 = vector.broadcast %216 : vector<8x1xf32> to vector<8x8xf32>
    %218 = arith.mulf %213, %217 : vector<8x8xf32>
    %219 = vector.extract_strided_slice %23 {offsets = [0, 40], sizes = [8, 4], strides = [1, 1]} : vector<8x48xf32> to vector<8x4xf32>
    %cst_73 = arith.constant dense<0.000000e+00> : vector<8x4xf32>
    %220 = tpu.matmul %218, %219, %cst_73 {dimension_numbers = #tpu.dot_dimension_numbers<[1], [0], [0], [1], [0, 0, 1, 1], [], []>} : vector<8x8xf32>, vector<8x4xf32>, vector<8x4xf32> -> vector<8x4xf32>
    %c0_74 = arith.constant 0 : index
    %c40 = arith.constant 40 : index
    %221 = vector.load %arg20[%c0_74, %c40] : memref<8x48xf32, #tpu.memory_space<vmem>>, vector<8x4xf32>
    tpu.vector_store %arg20[%c0_74, %c40], %220 {strides = array<i32>} : memref<8x48xf32, #tpu.memory_space<vmem>>, vector<8x4xf32>,
    %222 = vector.extract_strided_slice %21 {offsets = [0, 44], sizes = [8, 4], strides = [1, 1]} : vector<8x48xf32> to vector<8x4xf32>
    %223 = vector.extract_strided_slice %22 {offsets = [0, 44], sizes = [8, 4], strides = [1, 1]} : vector<8x48xf32> to vector<8x4xf32>
    %cst_75 = arith.constant dense<0.000000e+00> : vector<8x8xf32>
    %224 = tpu.matmul %222, %223, %cst_75 {dimension_numbers = #tpu.dot_dimension_numbers<[1], [1], [0], [0], [0, 0, 1, 0], [], []>} : vector<8x4xf32>, vector<8x4xf32>, vector<8x8xf32> -> vector<8x8xf32>
    %225 = vector.broadcast %16 : vector<1x8xf32> to vector<8x8xf32>
    %226 = arith.addf %224, %225 : vector<8x8xf32>
    %cst_76 = arith.constant dense<0xFF800000> : vector<8xf32>
    %227 = vector.multi_reduction <maximumf>, %226, %cst_76 [1] : vector<8x8xf32> to vector<8xf32>
    %228 = vector.shape_cast %227 : vector<8xf32> to vector<8x1xf32>
    %229 = vector.broadcast %228 : vector<8x1xf32> to vector<8x8xf32>
    %230 = arith.subf %226, %229 : vector<8x8xf32>
    %231 = math.exp %230 : vector<8x8xf32>
    %cst_77 = arith.constant dense<0.000000e+00> : vector<8xf32>
    %232 = vector.multi_reduction <add>, %231, %cst_77 [1] : vector<8x8xf32> to vector<8xf32>
    %233 = vector.shape_cast %232 : vector<8xf32> to vector<8x1xf32>
    %234 = tpu.reciprocal %233 : vector<8x1xf32> -> vector<8x1xf32>
    %235 = vector.broadcast %234 : vector<8x1xf32> to vector<8x8xf32>
    %236 = arith.mulf %231, %235 : vector<8x8xf32>
    %237 = vector.extract_strided_slice %23 {offsets = [0, 44], sizes = [8, 4], strides = [1, 1]} : vector<8x48xf32> to vector<8x4xf32>
    %cst_78 = arith.constant dense<0.000000e+00> : vector<8x4xf32>
    %238 = tpu.matmul %236, %237, %cst_78 {dimension_numbers = #tpu.dot_dimension_numbers<[1], [0], [0], [1], [0, 0, 1, 1], [], []>} : vector<8x8xf32>, vector<8x4xf32>, vector<8x4xf32> -> vector<8x4xf32>
    %c0_79 = arith.constant 0 : index
    %c44 = arith.constant 44 : index
    %239 = vector.load %arg20[%c0_79, %c44] : memref<8x48xf32, #tpu.memory_space<vmem>>, vector<8x4xf32>
    tpu.vector_store %arg20[%c0_79, %c44], %238 {strides = array<i32>} : memref<8x48xf32, #tpu.memory_space<vmem>>, vector<8x4xf32>,
    %c0_80 = arith.constant 0 : index
    %c0_81 = arith.constant 0 : index
    %240 = vector.load %arg20[%c0_80, %c0_81] : memref<8x48xf32, #tpu.memory_space<vmem>>, vector<8x48xf32>
    %c0_82 = arith.constant 0 : index
    %c0_83 = arith.constant 0 : index
    %241 = vector.load %arg11[%c0_82, %c0_83] : memref<48x32xf32, #tpu.memory_space<vmem>>, vector<48x32xf32>
    %cst_84 = arith.constant dense<0.000000e+00> : vector<8x32xf32>
    %242 = tpu.matmul %240, %241, %cst_84 {dimension_numbers = #tpu.dot_dimension_numbers<[1], [0], [0], [1], [0, 0, 1, 1], [], []>} : vector<8x48xf32>, vector<48x32xf32>, vector<8x32xf32> -> vector<8x32xf32>
    %c0_85 = arith.constant 0 : index
    %c0_86 = arith.constant 0 : index
    %243 = vector.load %arg12[%c0_85, %c0_86] : memref<1x32xf32, #tpu.memory_space<vmem>>, vector<1x32xf32>
    %244 = vector.broadcast %243 : vector<1x32xf32> to vector<8x32xf32>
    %245 = arith.addf %242, %244 : vector<8x32xf32>
    %246 = arith.addf %245, %7 : vector<8x32xf32>
    %cst_87 = arith.constant dense<0.000000e+00> : vector<8xf32>
    %247 = vector.multi_reduction <add>, %246, %cst_87 [1] : vector<8x32xf32> to vector<8xf32>
    %248 = vector.shape_cast %247 : vector<8xf32> to vector<8x1xf32>
    %cst_88 = arith.constant 3.200000e+01 : f32
    %249 = vector.broadcast %cst_88 : f32 to vector<8x1xf32>
    %250 = arith.divf %248, %249 : vector<8x1xf32>
    %251 = vector.broadcast %250 : vector<8x1xf32> to vector<8x32xf32>
    %252 = arith.subf %246, %251 : vector<8x32xf32>
    %253 = arith.mulf %252, %252 : vector<8x32xf32>
    %cst_89 = arith.constant dense<0.000000e+00> : vector<8xf32>
    %254 = vector.multi_reduction <add>, %253, %cst_89 [1] : vector<8x32xf32> to vector<8xf32>
    %255 = vector.shape_cast %254 : vector<8xf32> to vector<8x1xf32>
    %cst_90 = arith.constant 0.0322580636 : f32
    %256 = vector.broadcast %cst_90 : f32 to vector<8x1xf32>
    %257 = arith.mulf %255, %256 : vector<8x1xf32>
    %cst_91 = arith.constant 9.99999993E-9 : f32
    %258 = vector.broadcast %cst_91 : f32 to vector<8x1xf32>
    %259 = arith.addf %257, %258 : vector<8x1xf32>
    %260 = math.rsqrt %259 : vector<8x1xf32>
    %261 = vector.broadcast %260 : vector<8x1xf32> to vector<8x32xf32>
    %262 = arith.mulf %252, %261 : vector<8x32xf32>
    %263 = vector.broadcast %9 : vector<8x1xf32> to vector<8x32xf32>
    %264 = arith.mulf %262, %263 : vector<8x32xf32>
    %c0_92 = arith.constant 0 : index
    %c0_93 = arith.constant 0 : index
    %265 = vector.load %arg13[%c0_92, %c0_93] : memref<32x128xf32, #tpu.memory_space<vmem>>, vector<32x128xf32>
    %cst_94 = arith.constant dense<0.000000e+00> : vector<8x128xf32>
    %266 = tpu.matmul %264, %265, %cst_94 {dimension_numbers = #tpu.dot_dimension_numbers<[1], [0], [0], [1], [0, 0, 1, 1], [], []>} : vector<8x32xf32>, vector<32x128xf32>, vector<8x128xf32> -> vector<8x128xf32>
    %c0_95 = arith.constant 0 : index
    %c0_96 = arith.constant 0 : index
    %267 = vector.load %arg14[%c0_95, %c0_96] : memref<1x128xf32, #tpu.memory_space<vmem>>, vector<1x128xf32>
    %268 = vector.broadcast %267 : vector<1x128xf32> to vector<8x128xf32>
    %269 = arith.addf %266, %268 : vector<8x128xf32>
    %cst_97 = arith.constant 5.000000e-01 : f32
    %270 = vector.broadcast %cst_97 : f32 to vector<8x128xf32>
    %271 = arith.mulf %270, %269 : vector<8x128xf32>
    %cst_98 = arith.constant 4.471500e-02 : f32
    %272 = vector.broadcast %cst_98 : f32 to vector<8x128xf32>
    %273 = arith.mulf %272, %269 : vector<8x128xf32>
    %274 = arith.mulf %273, %269 : vector<8x128xf32>
    %275 = arith.mulf %274, %269 : vector<8x128xf32>
    %276 = arith.addf %269, %275 : vector<8x128xf32>
    %cst_99 = arith.constant 0.797884583 : f32
    %277 = vector.broadcast %cst_99 : f32 to vector<8x128xf32>
    %278 = arith.mulf %277, %276 : vector<8x128xf32>
    %279 = math.tanh %278 : vector<8x128xf32>
    %cst_100 = arith.constant 1.000000e+00 : f32
    %280 = vector.broadcast %cst_100 : f32 to vector<8x128xf32>
    %281 = arith.addf %280, %279 : vector<8x128xf32>
    %282 = arith.mulf %271, %281 : vector<8x128xf32>
    %c0_101 = arith.constant 0 : index
    %c0_102 = arith.constant 0 : index
    %283 = vector.load %arg15[%c0_101, %c0_102] : memref<128x32xf32, #tpu.memory_space<vmem>>, vector<128x32xf32>
    %cst_103 = arith.constant dense<0.000000e+00> : vector<8x32xf32>
    %284 = tpu.matmul %282, %283, %cst_103 {dimension_numbers = #tpu.dot_dimension_numbers<[1], [0], [0], [1], [0, 0, 1, 1], [], []>} : vector<8x128xf32>, vector<128x32xf32>, vector<8x32xf32> -> vector<8x32xf32>
    %c0_104 = arith.constant 0 : index
    %c0_105 = arith.constant 0 : index
    %285 = vector.load %arg16[%c0_104, %c0_105] : memref<1x32xf32, #tpu.memory_space<vmem>>, vector<1x32xf32>
    %286 = vector.broadcast %285 : vector<1x32xf32> to vector<8x32xf32>
    %287 = arith.addf %284, %286 : vector<8x32xf32>
    %288 = arith.addf %287, %264 : vector<8x32xf32>
    %cst_106 = arith.constant dense<0.000000e+00> : vector<8xf32>
    %289 = vector.multi_reduction <add>, %288, %cst_106 [1] : vector<8x32xf32> to vector<8xf32>
    %290 = vector.shape_cast %289 : vector<8xf32> to vector<8x1xf32>
    %cst_107 = arith.constant 3.200000e+01 : f32
    %291 = vector.broadcast %cst_107 : f32 to vector<8x1xf32>
    %292 = arith.divf %290, %291 : vector<8x1xf32>
    %293 = vector.broadcast %292 : vector<8x1xf32> to vector<8x32xf32>
    %294 = arith.subf %288, %293 : vector<8x32xf32>
    %295 = arith.mulf %294, %294 : vector<8x32xf32>
    %cst_108 = arith.constant dense<0.000000e+00> : vector<8xf32>
    %296 = vector.multi_reduction <add>, %295, %cst_108 [1] : vector<8x32xf32> to vector<8xf32>
    %297 = vector.shape_cast %296 : vector<8xf32> to vector<8x1xf32>
    %cst_109 = arith.constant 0.0322580636 : f32
    %298 = vector.broadcast %cst_109 : f32 to vector<8x1xf32>
    %299 = arith.mulf %297, %298 : vector<8x1xf32>
    %cst_110 = arith.constant 9.99999993E-9 : f32
    %300 = vector.broadcast %cst_110 : f32 to vector<8x1xf32>
    %301 = arith.addf %299, %300 : vector<8x1xf32>
    %302 = math.rsqrt %301 : vector<8x1xf32>
    %303 = vector.broadcast %302 : vector<8x1xf32> to vector<8x32xf32>
    %304 = arith.mulf %294, %303 : vector<8x32xf32>
    %305 = vector.broadcast %9 : vector<8x1xf32> to vector<8x32xf32>
    %306 = arith.mulf %304, %305 : vector<8x32xf32>
    %c0_111 = arith.constant 0 : index
    %c0_112 = arith.constant 0 : index
    %c0_113 = arith.constant 0 : index
    %307 = vector.load %arg17[%c0_111, %c0_112, %c0_113] : memref<1x8x32xf32, #tpu.memory_space<vmem>>, vector<1x8x32xf32>
    %308 = vector.shape_cast %307 : vector<1x8x32xf32> to vector<8x32xf32>
    %309 = vector.shape_cast %306 : vector<8x32xf32> to vector<1x8x32xf32>
    tpu.vector_store %arg17[%c0_111, %c0_112, %c0_113], %309 {strides = array<i32>} : memref<1x8x32xf32, #tpu.memory_space<vmem>>, vector<1x8x32xf32>,
    return
  }
  func.func @transform_0(%arg0: i32, %arg1: i32) -> (i32, i32, i32) {
    %c0_i32 = arith.constant 0 : i32
    %c0_i32_0 = arith.constant 0 : i32
    %c0_i32_1 = arith.constant 0 : i32
    return %arg0, %c0_i32, %c0_i32_0 : i32, i32, i32
  }
  func.func @transform_1(%arg0: i32, %arg1: i32) -> (i32, i32, i32) {
    %c0_i32 = arith.constant 0 : i32
    %c0_i32_0 = arith.constant 0 : i32
    %c0_i32_1 = arith.constant 0 : i32
    return %arg0, %c0_i32, %c0_i32_0 : i32, i32, i32
  }
  func.func @transform_2(%arg0: i32, %arg1: i32) -> (i32, i32, i32) {
    %c0_i32 = arith.constant 0 : i32
    %c0_i32_0 = arith.constant 0 : i32
    return %arg0, %arg1, %c0_i32 : i32, i32, i32
  }
  func.func @transform_3(%arg0: i32, %arg1: i32) -> (i32, i32) {
    %c0_i32 = arith.constant 0 : i32
    %c0_i32_0 = arith.constant 0 : i32
    %c0_i32_1 = arith.constant 0 : i32
    return %c0_i32, %c0_i32_0 : i32, i32
  }
  func.func @transform_4(%arg0: i32, %arg1: i32) -> (i32, i32) {
    %c0_i32 = arith.constant 0 : i32
    %c0_i32_0 = arith.constant 0 : i32
    %c0_i32_1 = arith.constant 0 : i32
    return %c0_i32, %c0_i32_0 : i32, i32
  }
  func.func @transform_5(%arg0: i32, %arg1: i32) -> (i32, i32) {
    %c0_i32 = arith.constant 0 : i32
    %c0_i32_0 = arith.constant 0 : i32
    %c0_i32_1 = arith.constant 0 : i32
    return %c0_i32, %c0_i32_0 : i32, i32
  }
  func.func @transform_6(%arg0: i32, %arg1: i32) -> (i32, i32) {
    %c0_i32 = arith.constant 0 : i32
    %c0_i32_0 = arith.constant 0 : i32
    %c0_i32_1 = arith.constant 0 : i32
    return %c0_i32, %c0_i32_0 : i32, i32
  }
  func.func @transform_7(%arg0: i32, %arg1: i32) -> (i32, i32) {
    %c0_i32 = arith.constant 0 : i32
    %c0_i32_0 = arith.constant 0 : i32
    %c0_i32_1 = arith.constant 0 : i32
    return %c0_i32, %c0_i32_0 : i32, i32
  }
  func.func @transform_8(%arg0: i32, %arg1: i32) -> (i32, i32) {
    %c0_i32 = arith.constant 0 : i32
    %c0_i32_0 = arith.constant 0 : i32
    %c0_i32_1 = arith.constant 0 : i32
    return %c0_i32, %c0_i32_0 : i32, i32
  }
  func.func @transform_9(%arg0: i32, %arg1: i32) -> (i32, i32) {
    %c0_i32 = arith.constant 0 : i32
    %c0_i32_0 = arith.constant 0 : i32
    %c0_i32_1 = arith.constant 0 : i32
    return %c0_i32, %c0_i32_0 : i32, i32
  }
  func.func @transform_10(%arg0: i32, %arg1: i32) -> (i32, i32) {
    %c0_i32 = arith.constant 0 : i32
    %c0_i32_0 = arith.constant 0 : i32
    %c0_i32_1 = arith.constant 0 : i32
    return %c0_i32, %c0_i32_0 : i32, i32
  }
  func.func @transform_11(%arg0: i32, %arg1: i32) -> (i32, i32) {
    %c0_i32 = arith.constant 0 : i32
    %c0_i32_0 = arith.constant 0 : i32
    %c0_i32_1 = arith.constant 0 : i32
    return %c0_i32, %c0_i32_0 : i32, i32
  }
  func.func @transform_12(%arg0: i32, %arg1: i32) -> (i32, i32) {
    %c0_i32 = arith.constant 0 : i32
    %c0_i32_0 = arith.constant 0 : i32
    %c0_i32_1 = arith.constant 0 : i32
    return %c0_i32, %c0_i32_0 : i32, i32
  }
  func.func @transform_13(%arg0: i32, %arg1: i32) -> (i32, i32) {
    %c0_i32 = arith.constant 0 : i32
    %c0_i32_0 = arith.constant 0 : i32
    %c0_i32_1 = arith.constant 0 : i32
    return %c0_i32, %c0_i32_0 : i32, i32
  }
  func.func @transform_14(%arg0: i32, %arg1: i32) -> (i32, i32) {
    %c0_i32 = arith.constant 0 : i32
    %c0_i32_0 = arith.constant 0 : i32
    %c0_i32_1 = arith.constant 0 : i32
    return %c0_i32, %c0_i32_0 : i32, i32
  }
  func.func @transform_15(%arg0: i32, %arg1: i32) -> (i32, i32, i32) {
    %c0_i32 = arith.constant 0 : i32
    %c0_i32_0 = arith.constant 0 : i32
    return %arg0, %arg1, %c0_i32 : i32, i32, i32
  }
}

module attributes {stable_mosaic.version = 11 : i64} {
  func.func @encoder_layer_kernel(%arg0: i32, %arg1: i32, %arg2: memref<1x8x32xf32, #tpu.memory_space<vmem>>, %arg3: memref<1x1x8xf32, #tpu.memory_space<vmem>>, %arg4: memref<1x8x1xf32, #tpu.memory_space<vmem>>, %arg5: memref<32x48xf32, #tpu.memory_space<vmem>>, %arg6: memref<1x48xf32, #tpu.memory_space<vmem>>, %arg7: memref<32x48xf32, #tpu.memory_space<vmem>>, %arg8: memref<1x48xf32, #tpu.memory_space<vmem>>, %arg9: memref<32x48xf32, #tpu.memory_space<vmem>>, %arg10: memref<1x48xf32, #tpu.memory_space<vmem>>, %arg11: memref<48x32xf32, #tpu.memory_space<vmem>>, %arg12: memref<1x32xf32, #tpu.memory_space<vmem>>, %arg13: memref<32x128xf32, #tpu.memory_space<vmem>>, %arg14: memref<1x128xf32, #tpu.memory_space<vmem>>, %arg15: memref<128x32xf32, #tpu.memory_space<vmem>>, %arg16: memref<1x32xf32, #tpu.memory_space<vmem>>, %arg17: memref<1x8x32xf32, #tpu.memory_space<vmem>>, %arg18: memref<8x48xf32, #tpu.memory_space<vmem>>, %arg19: memref<8x48xf32, #tpu.memory_space<vmem>>, %arg20: memref<8x48xf32, #tpu.memory_space<vmem>>) attributes {dimension_semantics = [#tpu.dimension_semantics<parallel>, #tpu.dimension_semantics<arbitrary>], iteration_bounds = array<i64: 2, 1>, scalar_prefetch = 0 : i64, scratch_operands = 3 : i64, tpu.core_type = #tpu.core_type<tc>, window_params = [{transform_indices = @transform_0, window_bounds = array<i64: 1, 8, 32>}, {transform_indices = @transform_1, window_bounds = array<i64: 1, 1, 8>}, {transform_indices = @transform_2, window_bounds = array<i64: 1, 8, 1>}, {pipeline_mode = #tpu.pipeline_mode<synchronous>, transform_indices = @transform_3, window_bounds = array<i64: 32, 48>}, {pipeline_mode = #tpu.pipeline_mode<synchronous>, transform_indices = @transform_4, window_bounds = array<i64: 1, 48>}, {pipeline_mode = #tpu.pipeline_mode<synchronous>, transform_indices = @transform_5, window_bounds = array<i64: 32, 48>}, {pipeline_mode = #tpu.pipeline_mode<synchronous>, transform_indices = @transform_6, window_bounds = array<i64: 1, 48>}, {pipeline_mode = #tpu.pipeline_mode<synchronous>, transform_indices = @transform_7, window_bounds = array<i64: 32, 48>}, {pipeline_mode = #tpu.pipeline_mode<synchronous>, transform_indices = @transform_8, window_bounds = array<i64: 1, 48>}, {pipeline_mode = #tpu.pipeline_mode<synchronous>, transform_indices = @transform_9, window_bounds = array<i64: 48, 32>}, {pipeline_mode = #tpu.pipeline_mode<synchronous>, transform_indices = @transform_10, window_bounds = array<i64: 1, 32>}, {pipeline_mode = #tpu.pipeline_mode<synchronous>, transform_indices = @transform_11, window_bounds = array<i64: 32, 128>}, {pipeline_mode = #tpu.pipeline_mode<synchronous>, transform_indices = @transform_12, window_bounds = array<i64: 1, 128>}, {pipeline_mode = #tpu.pipeline_mode<synchronous>, transform_indices = @transform_13, window_bounds = array<i64: 128, 32>}, {pipeline_mode = #tpu.pipeline_mode<synchronous>, transform_indices = @transform_14, window_bounds = array<i64: 1, 32>}, {transform_indices = @transform_15, window_bounds = array<i64: 1, 8, 32>}]} {
    %c0_i32 = arith.constant 0 : i32
    %0 = arith.cmpi eq, %arg1, %c0_i32 : i32
    %1 = arith.extui %0 : i1 to i32
    %c0_i32_0 = arith.constant 0 : i32
    %2 = arith.cmpi ne, %1, %c0_i32_0 : i32
    scf.if %2 {
      %c0_114 = arith.constant 0 : index
      %c0_115 = arith.constant 0 : index
      %c0_116 = arith.constant 0 : index
      %310 = vector.load %arg2[%c0_114, %c0_115, %c0_116] : memref<1x8x32xf32, #tpu.memory_space<vmem>>, vector<1x8x32xf32>
      %311 = vector.shape_cast %310 : vector<1x8x32xf32> to vector<8x32xf32>
      %c0_117 = arith.constant 0 : index
      %c0_118 = arith.constant 0 : index
      %312 = vector.load %arg7[%c0_117, %c0_118] : memref<32x48xf32, #tpu.memory_space<vmem>>, vector<32x48xf32>
      %cst_119 = arith.constant dense<0.000000e+00> : vector<8x48xf32>
      %313 = tpu.matmul %311, %312, %cst_119 {dimension_numbers = #tpu.dot_dimension_numbers<[1], [0], [0], [1], [0, 0, 1, 1], [], []>} : vector<8x32xf32>, vector<32x48xf32>, vector<8x48xf32> -> vector<8x48xf32>
      %c0_120 = arith.constant 0 : index
      %c0_121 = arith.constant 0 : index
      %314 = vector.load %arg8[%c0_120, %c0_121] : memref<1x48xf32, #tpu.memory_space<vmem>>, vector<1x48xf32>
      %315 = vector.broadcast %314 : vector<1x48xf32> to vector<8x48xf32>
      %316 = arith.addf %313, %315 : vector<8x48xf32>
      %c0_122 = arith.constant 0 : index
      %c0_123 = arith.constant 0 : index
      %317 = vector.load %arg18[%c0_122, %c0_123] : memref<8x48xf32, #tpu.memory_space<vmem>>, vector<8x48xf32>
      tpu.vector_store %arg18[%c0_122, %c0_123], %316 {strides = array<i32>} : memref<8x48xf32, #tpu.memory_space<vmem>>, vector<8x48xf32>,
      %c0_124 = arith.constant 0 : index
      %c0_125 = arith.constant 0 : index
      %318 = vector.load %arg9[%c0_124, %c0_125] : memref<32x48xf32, #tpu.memory_space<vmem>>, vector<32x48xf32>
      %cst_126 = arith.constant dense<0.000000e+00> : vector<8x48xf32>
      %319 = tpu.matmul %311, %318, %cst_126 {dimension_numbers = #tpu.dot_dimension_numbers<[1], [0], [0], [1], [0, 0, 1, 1], [], []>} : vector<8x32xf32>, vector<32x48xf32>, vector<8x48xf32> -> vector<8x48xf32>
      %c0_127 = arith.constant 0 : index
      %c0_128 = arith.constant 0 : index
      %320 = vector.load %arg10[%c0_127, %c0_128] : memref<1x48xf32, #tpu.memory_space<vmem>>, vector<1x48xf32>
      %321 = vector.broadcast %320 : vector<1x48xf32> to vector<8x48xf32>
      %322 = arith.addf %319, %321 : vector<8x48xf32>
      %c0_129 = arith.constant 0 : index
      %c0_130 = arith.constant 0 : index
      %323 = vector.load %arg19[%c0_129, %c0_130] : memref<8x48xf32, #tpu.memory_space<vmem>>, vector<8x48xf32>
      tpu.vector_store %arg19[%c0_129, %c0_130], %322 {strides = array<i32>} : memref<8x48xf32, #tpu.memory_space<vmem>>, vector<8x48xf32>,
    } else {
    }
    %c8_i32 = arith.constant 8 : i32
    %3 = arith.muli %arg1, %c8_i32 : i32
    %4 = tpu.assume_multiple %3, 8 : i32
    %c0 = arith.constant 0 : index
    %5 = arith.index_cast %4 : i32 to index
    %c0_1 = arith.constant 0 : index
    %6 = vector.load %arg2[%c0, %5, %c0_1] : memref<1x8x32xf32, #tpu.memory_space<vmem>>, vector<1x8x32xf32>
    %7 = vector.shape_cast %6 : vector<1x8x32xf32> to vector<8x32xf32>
    %c0_2 = arith.constant 0 : index
    %c0_3 = arith.constant 0 : index
    %c0_4 = arith.constant 0 : index
    %8 = vector.load %arg4[%c0_2, %c0_3, %c0_4] : memref<1x8x1xf32, #tpu.memory_space<vmem>>, vector<1x8x1xf32>
    %9 = vector.shape_cast %8 : vector<1x8x1xf32> to vector<8x1xf32>
    %c0_5 = arith.constant 0 : index
    %c0_6 = arith.constant 0 : index
    %c0_7 = arith.constant 0 : index
    %10 = vector.load %arg3[%c0_5, %c0_6, %c0_7] : memref<1x1x8xf32, #tpu.memory_space<vmem>>, vector<1x1x8xf32>
    %11 = vector.shape_cast %10 : vector<1x1x8xf32> to vector<1x8xf32>
    %cst = arith.constant 5.000000e-01 : f32
    %12 = vector.broadcast %cst : f32 to vector<1x8xf32>
    %13 = arith.cmpf ogt, %11, %12 : vector<1x8xf32>
    %cst_8 = arith.constant -1.000000e+10 : f32
    %cst_9 = arith.constant 0.000000e+00 : f32
    %14 = vector.broadcast %cst_8 : f32 to vector<1x8xf32>
    %15 = vector.broadcast %cst_9 : f32 to vector<1x8xf32>
    %16 = arith.select %13, %14, %15 : vector<1x8xi1>, vector<1x8xf32>
    %c0_10 = arith.constant 0 : index
    %c0_11 = arith.constant 0 : index
    %17 = vector.load %arg5[%c0_10, %c0_11] : memref<32x48xf32, #tpu.memory_space<vmem>>, vector<32x48xf32>
    %cst_12 = arith.constant dense<0.000000e+00> : vector<8x48xf32>
    %18 = tpu.matmul %7, %17, %cst_12 {dimension_numbers = #tpu.dot_dimension_numbers<[1], [0], [0], [1], [0, 0, 1, 1], [], []>} : vector<8x32xf32>, vector<32x48xf32>, vector<8x48xf32> -> vector<8x48xf32>
    %c0_13 = arith.constant 0 : index
    %c0_14 = arith.constant 0 : index
    %19 = vector.load %arg6[%c0_13, %c0_14] : memref<1x48xf32, #tpu.memory_space<vmem>>, vector<1x48xf32>
    %20 = vector.broadcast %19 : vector<1x48xf32> to vector<8x48xf32>
    %21 = arith.addf %18, %20 : vector<8x48xf32>
    %c0_15 = arith.constant 0 : index
    %c0_16 = arith.constant 0 : index
    %22 = vector.load %arg18[%c0_15, %c0_16] : memref<8x48xf32, #tpu.memory_space<vmem>>, vector<8x48xf32>
    %c0_17 = arith.constant 0 : index
    %c0_18 = arith.constant 0 : index
    %23 = vector.load %arg19[%c0_17, %c0_18] : memref<8x48xf32, #tpu.memory_space<vmem>>, vector<8x48xf32>
    %24 = vector.extract_strided_slice %21 {offsets = [0, 0], sizes = [8, 4], strides = [1, 1]} : vector<8x48xf32> to vector<8x4xf32>
    %25 = vector.extract_strided_slice %22 {offsets = [0, 0], sizes = [8, 4], strides = [1, 1]} : vector<8x48xf32> to vector<8x4xf32>
    %cst_19 = arith.constant dense<0.000000e+00> : vector<8x8xf32>
    %26 = tpu.matmul %24, %25, %cst_19 {dimension_numbers = #tpu.dot_dimension_numbers<[1], [1], [0], [0], [0, 0, 1, 0], [], []>} : vector<8x4xf32>, vector<8x4xf32>, vector<8x8xf32> -> vector<8x8xf32>
    %27 = vector.broadcast %16 : vector<1x8xf32> to vector<8x8xf32>
    %28 = arith.addf %26, %27 : vector<8x8xf32>
    %cst_20 = arith.constant dense<0xFF800000> : vector<8xf32>
    %29 = vector.multi_reduction <maximumf>, %28, %cst_20 [1] : vector<8x8xf32> to vector<8xf32>
    %30 = vector.shape_cast %29 : vector<8xf32> to vector<8x1xf32>
    %31 = vector.broadcast %30 : vector<8x1xf32> to vector<8x8xf32>
    %32 = arith.subf %28, %31 : vector<8x8xf32>
    %33 = math.exp %32 : vector<8x8xf32>
    %cst_21 = arith.constant dense<0.000000e+00> : vector<8xf32>
    %34 = vector.multi_reduction <add>, %33, %cst_21 [1] : vector<8x8xf32> to vector<8xf32>
    %35 = vector.shape_cast %34 : vector<8xf32> to vector<8x1xf32>
    %36 = tpu.reciprocal %35 : vector<8x1xf32> -> vector<8x1xf32>
    %37 = vector.broadcast %36 : vector<8x1xf32> to vector<8x8xf32>
    %38 = arith.mulf %33, %37 : vector<8x8xf32>
    %39 = vector.extract_strided_slice %23 {offsets = [0, 0], sizes = [8, 4], strides = [1, 1]} : vector<8x48xf32> to vector<8x4xf32>
    %cst_22 = arith.constant dense<0.000000e+00> : vector<8x4xf32>
    %40 = tpu.matmul %38, %39, %cst_22 {dimension_numbers = #tpu.dot_dimension_numbers<[1], [0], [0], [1], [0, 0, 1, 1], [], []>} : vector<8x8xf32>, vector<8x4xf32>, vector<8x4xf32> -> vector<8x4xf32>
    %c0_23 = arith.constant 0 : index
    %c0_24 = arith.constant 0 : index
    %41 = vector.load %arg20[%c0_23, %c0_24] : memref<8x48xf32, #tpu.memory_space<vmem>>, vector<8x4xf32>
    tpu.vector_store %arg20[%c0_23, %c0_24], %40 {strides = array<i32>} : memref<8x48xf32, #tpu.memory_space<vmem>>, vector<8x4xf32>,
    %42 = vector.extract_strided_slice %21 {offsets = [0, 4], sizes = [8, 4], strides = [1, 1]} : vector<8x48xf32> to vector<8x4xf32>
    %43 = vector.extract_strided_slice %22 {offsets = [0, 4], sizes = [8, 4], strides = [1, 1]} : vector<8x48xf32> to vector<8x4xf32>
    %cst_25 = arith.constant dense<0.000000e+00> : vector<8x8xf32>
    %44 = tpu.matmul %42, %43, %cst_25 {dimension_numbers = #tpu.dot_dimension_numbers<[1], [1], [0], [0], [0, 0, 1, 0], [], []>} : vector<8x4xf32>, vector<8x4xf32>, vector<8x8xf32> -> vector<8x8xf32>
    %45 = vector.broadcast %16 : vector<1x8xf32> to vector<8x8xf32>
    %46 = arith.addf %44, %45 : vector<8x8xf32>
    %cst_26 = arith.constant dense<0xFF800000> : vector<8xf32>
    %47 = vector.multi_reduction <maximumf>, %46, %cst_26 [1] : vector<8x8xf32> to vector<8xf32>
    %48 = vector.shape_cast %47 : vector<8xf32> to vector<8x1xf32>
    %49 = vector.broadcast %48 : vector<8x1xf32> to vector<8x8xf32>
    %50 = arith.subf %46, %49 : vector<8x8xf32>
    %51 = math.exp %50 : vector<8x8xf32>
    %cst_27 = arith.constant dense<0.000000e+00> : vector<8xf32>
    %52 = vector.multi_reduction <add>, %51, %cst_27 [1] : vector<8x8xf32> to vector<8xf32>
    %53 = vector.shape_cast %52 : vector<8xf32> to vector<8x1xf32>
    %54 = tpu.reciprocal %53 : vector<8x1xf32> -> vector<8x1xf32>
    %55 = vector.broadcast %54 : vector<8x1xf32> to vector<8x8xf32>
    %56 = arith.mulf %51, %55 : vector<8x8xf32>
    %57 = vector.extract_strided_slice %23 {offsets = [0, 4], sizes = [8, 4], strides = [1, 1]} : vector<8x48xf32> to vector<8x4xf32>
    %cst_28 = arith.constant dense<0.000000e+00> : vector<8x4xf32>
    %58 = tpu.matmul %56, %57, %cst_28 {dimension_numbers = #tpu.dot_dimension_numbers<[1], [0], [0], [1], [0, 0, 1, 1], [], []>} : vector<8x8xf32>, vector<8x4xf32>, vector<8x4xf32> -> vector<8x4xf32>
    %c0_29 = arith.constant 0 : index
    %c4 = arith.constant 4 : index
    %59 = vector.load %arg20[%c0_29, %c4] : memref<8x48xf32, #tpu.memory_space<vmem>>, vector<8x4xf32>
    tpu.vector_store %arg20[%c0_29, %c4], %58 {strides = array<i32>} : memref<8x48xf32, #tpu.memory_space<vmem>>, vector<8x4xf32>,
    %60 = vector.extract_strided_slice %21 {offsets = [0, 8], sizes = [8, 4], strides = [1, 1]} : vector<8x48xf32> to vector<8x4xf32>
    %61 = vector.extract_strided_slice %22 {offsets = [0, 8], sizes = [8, 4], strides = [1, 1]} : vector<8x48xf32> to vector<8x4xf32>
    %cst_30 = arith.constant dense<0.000000e+00> : vector<8x8xf32>
    %62 = tpu.matmul %60, %61, %cst_30 {dimension_numbers = #tpu.dot_dimension_numbers<[1], [1], [0], [0], [0, 0, 1, 0], [], []>} : vector<8x4xf32>, vector<8x4xf32>, vector<8x8xf32> -> vector<8x8xf32>
    %63 = vector.broadcast %16 : vector<1x8xf32> to vector<8x8xf32>
    %64 = arith.addf %62, %63 : vector<8x8xf32>
    %cst_31 = arith.constant dense<0xFF800000> : vector<8xf32>
    %65 = vector.multi_reduction <maximumf>, %64, %cst_31 [1] : vector<8x8xf32> to vector<8xf32>
    %66 = vector.shape_cast %65 : vector<8xf32> to vector<8x1xf32>
    %67 = vector.broadcast %66 : vector<8x1xf32> to vector<8x8xf32>
    %68 = arith.subf %64, %67 : vector<8x8xf32>
    %69 = math.exp %68 : vector<8x8xf32>
    %cst_32 = arith.constant dense<0.000000e+00> : vector<8xf32>
    %70 = vector.multi_reduction <add>, %69, %cst_32 [1] : vector<8x8xf32> to vector<8xf32>
    %71 = vector.shape_cast %70 : vector<8xf32> to vector<8x1xf32>
    %72 = tpu.reciprocal %71 : vector<8x1xf32> -> vector<8x1xf32>
    %73 = vector.broadcast %72 : vector<8x1xf32> to vector<8x8xf32>
    %74 = arith.mulf %69, %73 : vector<8x8xf32>
    %75 = vector.extract_strided_slice %23 {offsets = [0, 8], sizes = [8, 4], strides = [1, 1]} : vector<8x48xf32> to vector<8x4xf32>
    %cst_33 = arith.constant dense<0.000000e+00> : vector<8x4xf32>
    %76 = tpu.matmul %74, %75, %cst_33 {dimension_numbers = #tpu.dot_dimension_numbers<[1], [0], [0], [1], [0, 0, 1, 1], [], []>} : vector<8x8xf32>, vector<8x4xf32>, vector<8x4xf32> -> vector<8x4xf32>
    %c0_34 = arith.constant 0 : index
    %c8 = arith.constant 8 : index
    %77 = vector.load %arg20[%c0_34, %c8] : memref<8x48xf32, #tpu.memory_space<vmem>>, vector<8x4xf32>
    tpu.vector_store %arg20[%c0_34, %c8], %76 {strides = array<i32>} : memref<8x48xf32, #tpu.memory_space<vmem>>, vector<8x4xf32>,
    %78 = vector.extract_strided_slice %21 {offsets = [0, 12], sizes = [8, 4], strides = [1, 1]} : vector<8x48xf32> to vector<8x4xf32>
    %79 = vector.extract_strided_slice %22 {offsets = [0, 12], sizes = [8, 4], strides = [1, 1]} : vector<8x48xf32> to vector<8x4xf32>
    %cst_35 = arith.constant dense<0.000000e+00> : vector<8x8xf32>
    %80 = tpu.matmul %78, %79, %cst_35 {dimension_numbers = #tpu.dot_dimension_numbers<[1], [1], [0], [0], [0, 0, 1, 0], [], []>} : vector<8x4xf32>, vector<8x4xf32>, vector<8x8xf32> -> vector<8x8xf32>
    %81 = vector.broadcast %16 : vector<1x8xf32> to vector<8x8xf32>
    %82 = arith.addf %80, %81 : vector<8x8xf32>
    %cst_36 = arith.constant dense<0xFF800000> : vector<8xf32>
    %83 = vector.multi_reduction <maximumf>, %82, %cst_36 [1] : vector<8x8xf32> to vector<8xf32>
    %84 = vector.shape_cast %83 : vector<8xf32> to vector<8x1xf32>
    %85 = vector.broadcast %84 : vector<8x1xf32> to vector<8x8xf32>
    %86 = arith.subf %82, %85 : vector<8x8xf32>
    %87 = math.exp %86 : vector<8x8xf32>
    %cst_37 = arith.constant dense<0.000000e+00> : vector<8xf32>
    %88 = vector.multi_reduction <add>, %87, %cst_37 [1] : vector<8x8xf32> to vector<8xf32>
    %89 = vector.shape_cast %88 : vector<8xf32> to vector<8x1xf32>
    %90 = tpu.reciprocal %89 : vector<8x1xf32> -> vector<8x1xf32>
    %91 = vector.broadcast %90 : vector<8x1xf32> to vector<8x8xf32>
    %92 = arith.mulf %87, %91 : vector<8x8xf32>
    %93 = vector.extract_strided_slice %23 {offsets = [0, 12], sizes = [8, 4], strides = [1, 1]} : vector<8x48xf32> to vector<8x4xf32>
    %cst_38 = arith.constant dense<0.000000e+00> : vector<8x4xf32>
    %94 = tpu.matmul %92, %93, %cst_38 {dimension_numbers = #tpu.dot_dimension_numbers<[1], [0], [0], [1], [0, 0, 1, 1], [], []>} : vector<8x8xf32>, vector<8x4xf32>, vector<8x4xf32> -> vector<8x4xf32>
    %c0_39 = arith.constant 0 : index
    %c12 = arith.constant 12 : index
    %95 = vector.load %arg20[%c0_39, %c12] : memref<8x48xf32, #tpu.memory_space<vmem>>, vector<8x4xf32>
    tpu.vector_store %arg20[%c0_39, %c12], %94 {strides = array<i32>} : memref<8x48xf32, #tpu.memory_space<vmem>>, vector<8x4xf32>,
    %96 = vector.extract_strided_slice %21 {offsets = [0, 16], sizes = [8, 4], strides = [1, 1]} : vector<8x48xf32> to vector<8x4xf32>
    %97 = vector.extract_strided_slice %22 {offsets = [0, 16], sizes = [8, 4], strides = [1, 1]} : vector<8x48xf32> to vector<8x4xf32>
    %cst_40 = arith.constant dense<0.000000e+00> : vector<8x8xf32>
    %98 = tpu.matmul %96, %97, %cst_40 {dimension_numbers = #tpu.dot_dimension_numbers<[1], [1], [0], [0], [0, 0, 1, 0], [], []>} : vector<8x4xf32>, vector<8x4xf32>, vector<8x8xf32> -> vector<8x8xf32>
    %99 = vector.broadcast %16 : vector<1x8xf32> to vector<8x8xf32>
    %100 = arith.addf %98, %99 : vector<8x8xf32>
    %cst_41 = arith.constant dense<0xFF800000> : vector<8xf32>
    %101 = vector.multi_reduction <maximumf>, %100, %cst_41 [1] : vector<8x8xf32> to vector<8xf32>
    %102 = vector.shape_cast %101 : vector<8xf32> to vector<8x1xf32>
    %103 = vector.broadcast %102 : vector<8x1xf32> to vector<8x8xf32>
    %104 = arith.subf %100, %103 : vector<8x8xf32>
    %105 = math.exp %104 : vector<8x8xf32>
    %cst_42 = arith.constant dense<0.000000e+00> : vector<8xf32>
    %106 = vector.multi_reduction <add>, %105, %cst_42 [1] : vector<8x8xf32> to vector<8xf32>
    %107 = vector.shape_cast %106 : vector<8xf32> to vector<8x1xf32>
    %108 = tpu.reciprocal %107 : vector<8x1xf32> -> vector<8x1xf32>
    %109 = vector.broadcast %108 : vector<8x1xf32> to vector<8x8xf32>
    %110 = arith.mulf %105, %109 : vector<8x8xf32>
    %111 = vector.extract_strided_slice %23 {offsets = [0, 16], sizes = [8, 4], strides = [1, 1]} : vector<8x48xf32> to vector<8x4xf32>
    %cst_43 = arith.constant dense<0.000000e+00> : vector<8x4xf32>
    %112 = tpu.matmul %110, %111, %cst_43 {dimension_numbers = #tpu.dot_dimension_numbers<[1], [0], [0], [1], [0, 0, 1, 1], [], []>} : vector<8x8xf32>, vector<8x4xf32>, vector<8x4xf32> -> vector<8x4xf32>
    %c0_44 = arith.constant 0 : index
    %c16 = arith.constant 16 : index
    %113 = vector.load %arg20[%c0_44, %c16] : memref<8x48xf32, #tpu.memory_space<vmem>>, vector<8x4xf32>
    tpu.vector_store %arg20[%c0_44, %c16], %112 {strides = array<i32>} : memref<8x48xf32, #tpu.memory_space<vmem>>, vector<8x4xf32>,
    %114 = vector.extract_strided_slice %21 {offsets = [0, 20], sizes = [8, 4], strides = [1, 1]} : vector<8x48xf32> to vector<8x4xf32>
    %115 = vector.extract_strided_slice %22 {offsets = [0, 20], sizes = [8, 4], strides = [1, 1]} : vector<8x48xf32> to vector<8x4xf32>
    %cst_45 = arith.constant dense<0.000000e+00> : vector<8x8xf32>
    %116 = tpu.matmul %114, %115, %cst_45 {dimension_numbers = #tpu.dot_dimension_numbers<[1], [1], [0], [0], [0, 0, 1, 0], [], []>} : vector<8x4xf32>, vector<8x4xf32>, vector<8x8xf32> -> vector<8x8xf32>
    %117 = vector.broadcast %16 : vector<1x8xf32> to vector<8x8xf32>
    %118 = arith.addf %116, %117 : vector<8x8xf32>
    %cst_46 = arith.constant dense<0xFF800000> : vector<8xf32>
    %119 = vector.multi_reduction <maximumf>, %118, %cst_46 [1] : vector<8x8xf32> to vector<8xf32>
    %120 = vector.shape_cast %119 : vector<8xf32> to vector<8x1xf32>
    %121 = vector.broadcast %120 : vector<8x1xf32> to vector<8x8xf32>
    %122 = arith.subf %118, %121 : vector<8x8xf32>
    %123 = math.exp %122 : vector<8x8xf32>
    %cst_47 = arith.constant dense<0.000000e+00> : vector<8xf32>
    %124 = vector.multi_reduction <add>, %123, %cst_47 [1] : vector<8x8xf32> to vector<8xf32>
    %125 = vector.shape_cast %124 : vector<8xf32> to vector<8x1xf32>
    %126 = tpu.reciprocal %125 : vector<8x1xf32> -> vector<8x1xf32>
    %127 = vector.broadcast %126 : vector<8x1xf32> to vector<8x8xf32>
    %128 = arith.mulf %123, %127 : vector<8x8xf32>
    %129 = vector.extract_strided_slice %23 {offsets = [0, 20], sizes = [8, 4], strides = [1, 1]} : vector<8x48xf32> to vector<8x4xf32>
    %cst_48 = arith.constant dense<0.000000e+00> : vector<8x4xf32>
    %130 = tpu.matmul %128, %129, %cst_48 {dimension_numbers = #tpu.dot_dimension_numbers<[1], [0], [0], [1], [0, 0, 1, 1], [], []>} : vector<8x8xf32>, vector<8x4xf32>, vector<8x4xf32> -> vector<8x4xf32>
    %c0_49 = arith.constant 0 : index
    %c20 = arith.constant 20 : index
    %131 = vector.load %arg20[%c0_49, %c20] : memref<8x48xf32, #tpu.memory_space<vmem>>, vector<8x4xf32>
    tpu.vector_store %arg20[%c0_49, %c20], %130 {strides = array<i32>} : memref<8x48xf32, #tpu.memory_space<vmem>>, vector<8x4xf32>,
    %132 = vector.extract_strided_slice %21 {offsets = [0, 24], sizes = [8, 4], strides = [1, 1]} : vector<8x48xf32> to vector<8x4xf32>
    %133 = vector.extract_strided_slice %22 {offsets = [0, 24], sizes = [8, 4], strides = [1, 1]} : vector<8x48xf32> to vector<8x4xf32>
    %cst_50 = arith.constant dense<0.000000e+00> : vector<8x8xf32>
    %134 = tpu.matmul %132, %133, %cst_50 {dimension_numbers = #tpu.dot_dimension_numbers<[1], [1], [0], [0], [0, 0, 1, 0], [], []>} : vector<8x4xf32>, vector<8x4xf32>, vector<8x8xf32> -> vector<8x8xf32>
    %135 = vector.broadcast %16 : vector<1x8xf32> to vector<8x8xf32>
    %136 = arith.addf %134, %135 : vector<8x8xf32>
    %cst_51 = arith.constant dense<0xFF800000> : vector<8xf32>
    %137 = vector.multi_reduction <maximumf>, %136, %cst_51 [1] : vector<8x8xf32> to vector<8xf32>
    %138 = vector.shape_cast %137 : vector<8xf32> to vector<8x1xf32>
    %139 = vector.broadcast %138 : vector<8x1xf32> to vector<8x8xf32>
    %140 = arith.subf %136, %139 : vector<8x8xf32>
    %141 = math.exp %140 : vector<8x8xf32>
    %cst_52 = arith.constant dense<0.000000e+00> : vector<8xf32>
    %142 = vector.multi_reduction <add>, %141, %cst_52 [1] : vector<8x8xf32> to vector<8xf32>
    %143 = vector.shape_cast %142 : vector<8xf32> to vector<8x1xf32>
    %144 = tpu.reciprocal %143 : vector<8x1xf32> -> vector<8x1xf32>
    %145 = vector.broadcast %144 : vector<8x1xf32> to vector<8x8xf32>
    %146 = arith.mulf %141, %145 : vector<8x8xf32>
    %147 = vector.extract_strided_slice %23 {offsets = [0, 24], sizes = [8, 4], strides = [1, 1]} : vector<8x48xf32> to vector<8x4xf32>
    %cst_53 = arith.constant dense<0.000000e+00> : vector<8x4xf32>
    %148 = tpu.matmul %146, %147, %cst_53 {dimension_numbers = #tpu.dot_dimension_numbers<[1], [0], [0], [1], [0, 0, 1, 1], [], []>} : vector<8x8xf32>, vector<8x4xf32>, vector<8x4xf32> -> vector<8x4xf32>
    %c0_54 = arith.constant 0 : index
    %c24 = arith.constant 24 : index
    %149 = vector.load %arg20[%c0_54, %c24] : memref<8x48xf32, #tpu.memory_space<vmem>>, vector<8x4xf32>
    tpu.vector_store %arg20[%c0_54, %c24], %148 {strides = array<i32>} : memref<8x48xf32, #tpu.memory_space<vmem>>, vector<8x4xf32>,
    %150 = vector.extract_strided_slice %21 {offsets = [0, 28], sizes = [8, 4], strides = [1, 1]} : vector<8x48xf32> to vector<8x4xf32>
    %151 = vector.extract_strided_slice %22 {offsets = [0, 28], sizes = [8, 4], strides = [1, 1]} : vector<8x48xf32> to vector<8x4xf32>
    %cst_55 = arith.constant dense<0.000000e+00> : vector<8x8xf32>
    %152 = tpu.matmul %150, %151, %cst_55 {dimension_numbers = #tpu.dot_dimension_numbers<[1], [1], [0], [0], [0, 0, 1, 0], [], []>} : vector<8x4xf32>, vector<8x4xf32>, vector<8x8xf32> -> vector<8x8xf32>
    %153 = vector.broadcast %16 : vector<1x8xf32> to vector<8x8xf32>
    %154 = arith.addf %152, %153 : vector<8x8xf32>
    %cst_56 = arith.constant dense<0xFF800000> : vector<8xf32>
    %155 = vector.multi_reduction <maximumf>, %154, %cst_56 [1] : vector<8x8xf32> to vector<8xf32>
    %156 = vector.shape_cast %155 : vector<8xf32> to vector<8x1xf32>
    %157 = vector.broadcast %156 : vector<8x1xf32> to vector<8x8xf32>
    %158 = arith.subf %154, %157 : vector<8x8xf32>
    %159 = math.exp %158 : vector<8x8xf32>
    %cst_57 = arith.constant dense<0.000000e+00> : vector<8xf32>
    %160 = vector.multi_reduction <add>, %159, %cst_57 [1] : vector<8x8xf32> to vector<8xf32>
    %161 = vector.shape_cast %160 : vector<8xf32> to vector<8x1xf32>
    %162 = tpu.reciprocal %161 : vector<8x1xf32> -> vector<8x1xf32>
    %163 = vector.broadcast %162 : vector<8x1xf32> to vector<8x8xf32>
    %164 = arith.mulf %159, %163 : vector<8x8xf32>
    %165 = vector.extract_strided_slice %23 {offsets = [0, 28], sizes = [8, 4], strides = [1, 1]} : vector<8x48xf32> to vector<8x4xf32>
    %cst_58 = arith.constant dense<0.000000e+00> : vector<8x4xf32>
    %166 = tpu.matmul %164, %165, %cst_58 {dimension_numbers = #tpu.dot_dimension_numbers<[1], [0], [0], [1], [0, 0, 1, 1], [], []>} : vector<8x8xf32>, vector<8x4xf32>, vector<8x4xf32> -> vector<8x4xf32>
    %c0_59 = arith.constant 0 : index
    %c28 = arith.constant 28 : index
    %167 = vector.load %arg20[%c0_59, %c28] : memref<8x48xf32, #tpu.memory_space<vmem>>, vector<8x4xf32>
    tpu.vector_store %arg20[%c0_59, %c28], %166 {strides = array<i32>} : memref<8x48xf32, #tpu.memory_space<vmem>>, vector<8x4xf32>,
    %168 = vector.extract_strided_slice %21 {offsets = [0, 32], sizes = [8, 4], strides = [1, 1]} : vector<8x48xf32> to vector<8x4xf32>
    %169 = vector.extract_strided_slice %22 {offsets = [0, 32], sizes = [8, 4], strides = [1, 1]} : vector<8x48xf32> to vector<8x4xf32>
    %cst_60 = arith.constant dense<0.000000e+00> : vector<8x8xf32>
    %170 = tpu.matmul %168, %169, %cst_60 {dimension_numbers = #tpu.dot_dimension_numbers<[1], [1], [0], [0], [0, 0, 1, 0], [], []>} : vector<8x4xf32>, vector<8x4xf32>, vector<8x8xf32> -> vector<8x8xf32>
    %171 = vector.broadcast %16 : vector<1x8xf32> to vector<8x8xf32>
    %172 = arith.addf %170, %171 : vector<8x8xf32>
    %cst_61 = arith.constant dense<0xFF800000> : vector<8xf32>
    %173 = vector.multi_reduction <maximumf>, %172, %cst_61 [1] : vector<8x8xf32> to vector<8xf32>
    %174 = vector.shape_cast %173 : vector<8xf32> to vector<8x1xf32>
    %175 = vector.broadcast %174 : vector<8x1xf32> to vector<8x8xf32>
    %176 = arith.subf %172, %175 : vector<8x8xf32>
    %177 = math.exp %176 : vector<8x8xf32>
    %cst_62 = arith.constant dense<0.000000e+00> : vector<8xf32>
    %178 = vector.multi_reduction <add>, %177, %cst_62 [1] : vector<8x8xf32> to vector<8xf32>
    %179 = vector.shape_cast %178 : vector<8xf32> to vector<8x1xf32>
    %180 = tpu.reciprocal %179 : vector<8x1xf32> -> vector<8x1xf32>
    %181 = vector.broadcast %180 : vector<8x1xf32> to vector<8x8xf32>
    %182 = arith.mulf %177, %181 : vector<8x8xf32>
    %183 = vector.extract_strided_slice %23 {offsets = [0, 32], sizes = [8, 4], strides = [1, 1]} : vector<8x48xf32> to vector<8x4xf32>
    %cst_63 = arith.constant dense<0.000000e+00> : vector<8x4xf32>
    %184 = tpu.matmul %182, %183, %cst_63 {dimension_numbers = #tpu.dot_dimension_numbers<[1], [0], [0], [1], [0, 0, 1, 1], [], []>} : vector<8x8xf32>, vector<8x4xf32>, vector<8x4xf32> -> vector<8x4xf32>
    %c0_64 = arith.constant 0 : index
    %c32 = arith.constant 32 : index
    %185 = vector.load %arg20[%c0_64, %c32] : memref<8x48xf32, #tpu.memory_space<vmem>>, vector<8x4xf32>
    tpu.vector_store %arg20[%c0_64, %c32], %184 {strides = array<i32>} : memref<8x48xf32, #tpu.memory_space<vmem>>, vector<8x4xf32>,
    %186 = vector.extract_strided_slice %21 {offsets = [0, 36], sizes = [8, 4], strides = [1, 1]} : vector<8x48xf32> to vector<8x4xf32>
    %187 = vector.extract_strided_slice %22 {offsets = [0, 36], sizes = [8, 4], strides = [1, 1]} : vector<8x48xf32> to vector<8x4xf32>
    %cst_65 = arith.constant dense<0.000000e+00> : vector<8x8xf32>
    %188 = tpu.matmul %186, %187, %cst_65 {dimension_numbers = #tpu.dot_dimension_numbers<[1], [1], [0], [0], [0, 0, 1, 0], [], []>} : vector<8x4xf32>, vector<8x4xf32>, vector<8x8xf32> -> vector<8x8xf32>
    %189 = vector.broadcast %16 : vector<1x8xf32> to vector<8x8xf32>
    %190 = arith.addf %188, %189 : vector<8x8xf32>
    %cst_66 = arith.constant dense<0xFF800000> : vector<8xf32>
    %191 = vector.multi_reduction <maximumf>, %190, %cst_66 [1] : vector<8x8xf32> to vector<8xf32>
    %192 = vector.shape_cast %191 : vector<8xf32> to vector<8x1xf32>
    %193 = vector.broadcast %192 : vector<8x1xf32> to vector<8x8xf32>
    %194 = arith.subf %190, %193 : vector<8x8xf32>
    %195 = math.exp %194 : vector<8x8xf32>
    %cst_67 = arith.constant dense<0.000000e+00> : vector<8xf32>
    %196 = vector.multi_reduction <add>, %195, %cst_67 [1] : vector<8x8xf32> to vector<8xf32>
    %197 = vector.shape_cast %196 : vector<8xf32> to vector<8x1xf32>
    %198 = tpu.reciprocal %197 : vector<8x1xf32> -> vector<8x1xf32>
    %199 = vector.broadcast %198 : vector<8x1xf32> to vector<8x8xf32>
    %200 = arith.mulf %195, %199 : vector<8x8xf32>
    %201 = vector.extract_strided_slice %23 {offsets = [0, 36], sizes = [8, 4], strides = [1, 1]} : vector<8x48xf32> to vector<8x4xf32>
    %cst_68 = arith.constant dense<0.000000e+00> : vector<8x4xf32>
    %202 = tpu.matmul %200, %201, %cst_68 {dimension_numbers = #tpu.dot_dimension_numbers<[1], [0], [0], [1], [0, 0, 1, 1], [], []>} : vector<8x8xf32>, vector<8x4xf32>, vector<8x4xf32> -> vector<8x4xf32>
    %c0_69 = arith.constant 0 : index
    %c36 = arith.constant 36 : index
    %203 = vector.load %arg20[%c0_69, %c36] : memref<8x48xf32, #tpu.memory_space<vmem>>, vector<8x4xf32>
    tpu.vector_store %arg20[%c0_69, %c36], %202 {strides = array<i32>} : memref<8x48xf32, #tpu.memory_space<vmem>>, vector<8x4xf32>,
    %204 = vector.extract_strided_slice %21 {offsets = [0, 40], sizes = [8, 4], strides = [1, 1]} : vector<8x48xf32> to vector<8x4xf32>
    %205 = vector.extract_strided_slice %22 {offsets = [0, 40], sizes = [8, 4], strides = [1, 1]} : vector<8x48xf32> to vector<8x4xf32>
    %cst_70 = arith.constant dense<0.000000e+00> : vector<8x8xf32>
    %206 = tpu.matmul %204, %205, %cst_70 {dimension_numbers = #tpu.dot_dimension_numbers<[1], [1], [0], [0], [0, 0, 1, 0], [], []>} : vector<8x4xf32>, vector<8x4xf32>, vector<8x8xf32> -> vector<8x8xf32>
    %207 = vector.broadcast %16 : vector<1x8xf32> to vector<8x8xf32>
    %208 = arith.addf %206, %207 : vector<8x8xf32>
    %cst_71 = arith.constant dense<0xFF800000> : vector<8xf32>
    %209 = vector.multi_reduction <maximumf>, %208, %cst_71 [1] : vector<8x8xf32> to vector<8xf32>
    %210 = vector.shape_cast %209 : vector<8xf32> to vector<8x1xf32>
    %211 = vector.broadcast %210 : vector<8x1xf32> to vector<8x8xf32>
    %212 = arith.subf %208, %211 : vector<8x8xf32>
    %213 = math.exp %212 : vector<8x8xf32>
    %cst_72 = arith.constant dense<0.000000e+00> : vector<8xf32>
    %214 = vector.multi_reduction <add>, %213, %cst_72 [1] : vector<8x8xf32> to vector<8xf32>
    %215 = vector.shape_cast %214 : vector<8xf32> to vector<8x1xf32>
    %216 = tpu.reciprocal %215 : vector<8x1xf32> -> vector<8x1xf32>
    %217 = vector.broadcast %216 : vector<8x1xf32> to vector<8x8xf32>
    %218 = arith.mulf %213, %217 : vector<8x8xf32>
    %219 = vector.extract_strided_slice %23 {offsets = [0, 40], sizes = [8, 4], strides = [1, 1]} : vector<8x48xf32> to vector<8x4xf32>
    %cst_73 = arith.constant dense<0.000000e+00> : vector<8x4xf32>
    %220 = tpu.matmul %218, %219, %cst_73 {dimension_numbers = #tpu.dot_dimension_numbers<[1], [0], [0], [1], [0, 0, 1, 1], [], []>} : vector<8x8xf32>, vector<8x4xf32>, vector<8x4xf32> -> vector<8x4xf32>
    %c0_74 = arith.constant 0 : index
    %c40 = arith.constant 40 : index
    %221 = vector.load %arg20[%c0_74, %c40] : memref<8x48xf32, #tpu.memory_space<vmem>>, vector<8x4xf32>
    tpu.vector_store %arg20[%c0_74, %c40], %220 {strides = array<i32>} : memref<8x48xf32, #tpu.memory_space<vmem>>, vector<8x4xf32>,
    %222 = vector.extract_strided_slice %21 {offsets = [0, 44], sizes = [8, 4], strides = [1, 1]} : vector<8x48xf32> to vector<8x4xf32>
    %223 = vector.extract_strided_slice %22 {offsets = [0, 44], sizes = [8, 4], strides = [1, 1]} : vector<8x48xf32> to vector<8x4xf32>
    %cst_75 = arith.constant dense<0.000000e+00> : vector<8x8xf32>
    %224 = tpu.matmul %222, %223, %cst_75 {dimension_numbers = #tpu.dot_dimension_numbers<[1], [1], [0], [0], [0, 0, 1, 0], [], []>} : vector<8x4xf32>, vector<8x4xf32>, vector<8x8xf32> -> vector<8x8xf32>
    %225 = vector.broadcast %16 : vector<1x8xf32> to vector<8x8xf32>
    %226 = arith.addf %224, %225 : vector<8x8xf32>
    %cst_76 = arith.constant dense<0xFF800000> : vector<8xf32>
    %227 = vector.multi_reduction <maximumf>, %226, %cst_76 [1] : vector<8x8xf32> to vector<8xf32>
    %228 = vector.shape_cast %227 : vector<8xf32> to vector<8x1xf32>
    %229 = vector.broadcast %228 : vector<8x1xf32> to vector<8x8xf32>
    %230 = arith.subf %226, %229 : vector<8x8xf32>
    %231 = math.exp %230 : vector<8x8xf32>
    %cst_77 = arith.constant dense<0.000000e+00> : vector<8xf32>
    %232 = vector.multi_reduction <add>, %231, %cst_77 [1] : vector<8x8xf32> to vector<8xf32>
    %233 = vector.shape_cast %232 : vector<8xf32> to vector<8x1xf32>
    %234 = tpu.reciprocal %233 : vector<8x1xf32> -> vector<8x1xf32>
    %235 = vector.broadcast %234 : vector<8x1xf32> to vector<8x8xf32>
    %236 = arith.mulf %231, %235 : vector<8x8xf32>
    %237 = vector.extract_strided_slice %23 {offsets = [0, 44], sizes = [8, 4], strides = [1, 1]} : vector<8x48xf32> to vector<8x4xf32>
    %cst_78 = arith.constant dense<0.000000e+00> : vector<8x4xf32>
    %238 = tpu.matmul %236, %237, %cst_78 {dimension_numbers = #tpu.dot_dimension_numbers<[1], [0], [0], [1], [0, 0, 1, 1], [], []>} : vector<8x8xf32>, vector<8x4xf32>, vector<8x4xf32> -> vector<8x4xf32>
    %c0_79 = arith.constant 0 : index
    %c44 = arith.constant 44 : index
    %239 = vector.load %arg20[%c0_79, %c44] : memref<8x48xf32, #tpu.memory_space<vmem>>, vector<8x4xf32>
    tpu.vector_store %arg20[%c0_79, %c44], %238 {strides = array<i32>} : memref<8x48xf32, #tpu.memory_space<vmem>>, vector<8x4xf32>,
    %c0_80 = arith.constant 0 : index
    %c0_81 = arith.constant 0 : index
    %240 = vector.load %arg20[%c0_80, %c0_81] : memref<8x48xf32, #tpu.memory_space<vmem>>, vector<8x48xf32>
    %c0_82 = arith.constant 0 : index
    %c0_83 = arith.constant 0 : index
    %241 = vector.load %arg11[%c0_82, %c0_83] : memref<48x32xf32, #tpu.memory_space<vmem>>, vector<48x32xf32>
    %cst_84 = arith.constant dense<0.000000e+00> : vector<8x32xf32>
    %242 = tpu.matmul %240, %241, %cst_84 {dimension_numbers = #tpu.dot_dimension_numbers<[1], [0], [0], [1], [0, 0, 1, 1], [], []>} : vector<8x48xf32>, vector<48x32xf32>, vector<8x32xf32> -> vector<8x32xf32>
    %c0_85 = arith.constant 0 : index
    %c0_86 = arith.constant 0 : index
    %243 = vector.load %arg12[%c0_85, %c0_86] : memref<1x32xf32, #tpu.memory_space<vmem>>, vector<1x32xf32>
    %244 = vector.broadcast %243 : vector<1x32xf32> to vector<8x32xf32>
    %245 = arith.addf %242, %244 : vector<8x32xf32>
    %246 = arith.addf %245, %7 : vector<8x32xf32>
    %cst_87 = arith.constant dense<0.000000e+00> : vector<8xf32>
    %247 = vector.multi_reduction <add>, %246, %cst_87 [1] : vector<8x32xf32> to vector<8xf32>
    %248 = vector.shape_cast %247 : vector<8xf32> to vector<8x1xf32>
    %cst_88 = arith.constant 3.200000e+01 : f32
    %249 = vector.broadcast %cst_88 : f32 to vector<8x1xf32>
    %250 = arith.divf %248, %249 : vector<8x1xf32>
    %251 = vector.broadcast %250 : vector<8x1xf32> to vector<8x32xf32>
    %252 = arith.subf %246, %251 : vector<8x32xf32>
    %253 = arith.mulf %252, %252 : vector<8x32xf32>
    %cst_89 = arith.constant dense<0.000000e+00> : vector<8xf32>
    %254 = vector.multi_reduction <add>, %253, %cst_89 [1] : vector<8x32xf32> to vector<8xf32>
    %255 = vector.shape_cast %254 : vector<8xf32> to vector<8x1xf32>
    %cst_90 = arith.constant 0.0322580636 : f32
    %256 = vector.broadcast %cst_90 : f32 to vector<8x1xf32>
    %257 = arith.mulf %255, %256 : vector<8x1xf32>
    %cst_91 = arith.constant 9.99999993E-9 : f32
    %258 = vector.broadcast %cst_91 : f32 to vector<8x1xf32>
    %259 = arith.addf %257, %258 : vector<8x1xf32>
    %260 = math.rsqrt %259 : vector<8x1xf32>
    %261 = vector.broadcast %260 : vector<8x1xf32> to vector<8x32xf32>
    %262 = arith.mulf %252, %261 : vector<8x32xf32>
    %263 = vector.broadcast %9 : vector<8x1xf32> to vector<8x32xf32>
    %264 = arith.mulf %262, %263 : vector<8x32xf32>
    %c0_92 = arith.constant 0 : index
    %c0_93 = arith.constant 0 : index
    %265 = vector.load %arg13[%c0_92, %c0_93] : memref<32x128xf32, #tpu.memory_space<vmem>>, vector<32x128xf32>
    %cst_94 = arith.constant dense<0.000000e+00> : vector<8x128xf32>
    %266 = tpu.matmul %264, %265, %cst_94 {dimension_numbers = #tpu.dot_dimension_numbers<[1], [0], [0], [1], [0, 0, 1, 1], [], []>} : vector<8x32xf32>, vector<32x128xf32>, vector<8x128xf32> -> vector<8x128xf32>
    %c0_95 = arith.constant 0 : index
    %c0_96 = arith.constant 0 : index
    %267 = vector.load %arg14[%c0_95, %c0_96] : memref<1x128xf32, #tpu.memory_space<vmem>>, vector<1x128xf32>
    %268 = vector.broadcast %267 : vector<1x128xf32> to vector<8x128xf32>
    %269 = arith.addf %266, %268 : vector<8x128xf32>
    %cst_97 = arith.constant 5.000000e-01 : f32
    %270 = vector.broadcast %cst_97 : f32 to vector<8x128xf32>
    %271 = arith.mulf %270, %269 : vector<8x128xf32>
    %cst_98 = arith.constant 4.471500e-02 : f32
    %272 = vector.broadcast %cst_98 : f32 to vector<8x128xf32>
    %273 = arith.mulf %272, %269 : vector<8x128xf32>
    %274 = arith.mulf %273, %269 : vector<8x128xf32>
    %275 = arith.mulf %274, %269 : vector<8x128xf32>
    %276 = arith.addf %269, %275 : vector<8x128xf32>
    %cst_99 = arith.constant 0.797884583 : f32
    %277 = vector.broadcast %cst_99 : f32 to vector<8x128xf32>
    %278 = arith.mulf %277, %276 : vector<8x128xf32>
    %279 = math.tanh %278 : vector<8x128xf32>
    %cst_100 = arith.constant 1.000000e+00 : f32
    %280 = vector.broadcast %cst_100 : f32 to vector<8x128xf32>
    %281 = arith.addf %280, %279 : vector<8x128xf32>
    %282 = arith.mulf %271, %281 : vector<8x128xf32>
    %c0_101 = arith.constant 0 : index
    %c0_102 = arith.constant 0 : index
    %283 = vector.load %arg15[%c0_101, %c0_102] : memref<128x32xf32, #tpu.memory_space<vmem>>, vector<128x32xf32>
    %cst_103 = arith.constant dense<0.000000e+00> : vector<8x32xf32>
    %284 = tpu.matmul %282, %283, %cst_103 {dimension_numbers = #tpu.dot_dimension_numbers<[1], [0], [0], [1], [0, 0, 1, 1], [], []>} : vector<8x128xf32>, vector<128x32xf32>, vector<8x32xf32> -> vector<8x32xf32>
    %c0_104 = arith.constant 0 : index
    %c0_105 = arith.constant 0 : index
    %285 = vector.load %arg16[%c0_104, %c0_105] : memref<1x32xf32, #tpu.memory_space<vmem>>, vector<1x32xf32>
    %286 = vector.broadcast %285 : vector<1x32xf32> to vector<8x32xf32>
    %287 = arith.addf %284, %286 : vector<8x32xf32>
    %288 = arith.addf %287, %264 : vector<8x32xf32>
    %cst_106 = arith.constant dense<0.000000e+00> : vector<8xf32>
    %289 = vector.multi_reduction <add>, %288, %cst_106 [1] : vector<8x32xf32> to vector<8xf32>
    %290 = vector.shape_cast %289 : vector<8xf32> to vector<8x1xf32>
    %cst_107 = arith.constant 3.200000e+01 : f32
    %291 = vector.broadcast %cst_107 : f32 to vector<8x1xf32>
    %292 = arith.divf %290, %291 : vector<8x1xf32>
    %293 = vector.broadcast %292 : vector<8x1xf32> to vector<8x32xf32>
    %294 = arith.subf %288, %293 : vector<8x32xf32>
    %295 = arith.mulf %294, %294 : vector<8x32xf32>
    %cst_108 = arith.constant dense<0.000000e+00> : vector<8xf32>
    %296 = vector.multi_reduction <add>, %295, %cst_108 [1] : vector<8x32xf32> to vector<8xf32>
    %297 = vector.shape_cast %296 : vector<8xf32> to vector<8x1xf32>
    %cst_109 = arith.constant 0.0322580636 : f32
    %298 = vector.broadcast %cst_109 : f32 to vector<8x1xf32>
    %299 = arith.mulf %297, %298 : vector<8x1xf32>
    %cst_110 = arith.constant 9.99999993E-9 : f32
    %300 = vector.broadcast %cst_110 : f32 to vector<8x1xf32>
    %301 = arith.addf %299, %300 : vector<8x1xf32>
    %302 = math.rsqrt %301 : vector<8x1xf32>
    %303 = vector.broadcast %302 : vector<8x1xf32> to vector<8x32xf32>
    %304 = arith.mulf %294, %303 : vector<8x32xf32>
    %305 = vector.broadcast %9 : vector<8x1xf32> to vector<8x32xf32>
    %306 = arith.mulf %304, %305 : vector<8x32xf32>
    %c0_111 = arith.constant 0 : index
    %c0_112 = arith.constant 0 : index
    %c0_113 = arith.constant 0 : index
    %307 = vector.load %arg17[%c0_111, %c0_112, %c0_113] : memref<1x8x32xf32, #tpu.memory_space<vmem>>, vector<1x8x32xf32>
    %308 = vector.shape_cast %307 : vector<1x8x32xf32> to vector<8x32xf32>
    %309 = vector.shape_cast %306 : vector<8x32xf32> to vector<1x8x32xf32>
    tpu.vector_store %arg17[%c0_111, %c0_112, %c0_113], %309 {strides = array<i32>} : memref<1x8x32xf32, #tpu.memory_space<vmem>>, vector<1x8x32xf32>,
    return
  }
  func.func @transform_0(%arg0: i32, %arg1: i32) -> (i32, i32, i32) {
    %c0_i32 = arith.constant 0 : i32
    %c0_i32_0 = arith.constant 0 : i32
    %c0_i32_1 = arith.constant 0 : i32
    return %arg0, %c0_i32, %c0_i32_0 : i32, i32, i32
  }
  func.func @transform_1(%arg0: i32, %arg1: i32) -> (i32, i32, i32) {
    %c0_i32 = arith.constant 0 : i32
    %c0_i32_0 = arith.constant 0 : i32
    %c0_i32_1 = arith.constant 0 : i32
    return %arg0, %c0_i32, %c0_i32_0 : i32, i32, i32
  }
  func.func @transform_2(%arg0: i32, %arg1: i32) -> (i32, i32, i32) {
    %c0_i32 = arith.constant 0 : i32
    %c0_i32_0 = arith.constant 0 : i32
    return %arg0, %arg1, %c0_i32 : i32, i32, i32
  }
  func.func @transform_3(%arg0: i32, %arg1: i32) -> (i32, i32) {
    %c0_i32 = arith.constant 0 : i32
    %c0_i32_0 = arith.constant 0 : i32
    %c0_i32_1 = arith.constant 0 : i32
    return %c0_i32, %c0_i32_0 : i32, i32
  }
  func.func @transform_4(%arg0: i32, %arg1: i32) -> (i32, i32) {
    %c0_i32 = arith.constant 0 : i32
    %c0_i32_0 = arith.constant 0 : i32
    %c0_i32_1 = arith.constant 0 : i32
    return %c0_i32, %c0_i32_0 : i32, i32
  }
  func.func @transform_5(%arg0: i32, %arg1: i32) -> (i32, i32) {
    %c0_i32 = arith.constant 0 : i32
    %c0_i32_0 = arith.constant 0 : i32
    %c0_i32_1 = arith.constant 0 : i32
    return %c0_i32, %c0_i32_0 : i32, i32
  }
  func.func @transform_6(%arg0: i32, %arg1: i32) -> (i32, i32) {
    %c0_i32 = arith.constant 0 : i32
    %c0_i32_0 = arith.constant 0 : i32
    %c0_i32_1 = arith.constant 0 : i32
    return %c0_i32, %c0_i32_0 : i32, i32
  }
  func.func @transform_7(%arg0: i32, %arg1: i32) -> (i32, i32) {
    %c0_i32 = arith.constant 0 : i32
    %c0_i32_0 = arith.constant 0 : i32
    %c0_i32_1 = arith.constant 0 : i32
    return %c0_i32, %c0_i32_0 : i32, i32
  }
  func.func @transform_8(%arg0: i32, %arg1: i32) -> (i32, i32) {
    %c0_i32 = arith.constant 0 : i32
    %c0_i32_0 = arith.constant 0 : i32
    %c0_i32_1 = arith.constant 0 : i32
    return %c0_i32, %c0_i32_0 : i32, i32
  }
  func.func @transform_9(%arg0: i32, %arg1: i32) -> (i32, i32) {
    %c0_i32 = arith.constant 0 : i32
    %c0_i32_0 = arith.constant 0 : i32
    %c0_i32_1 = arith.constant 0 : i32
    return %c0_i32, %c0_i32_0 : i32, i32
  }
  func.func @transform_10(%arg0: i32, %arg1: i32) -> (i32, i32) {
    %c0_i32 = arith.constant 0 : i32
    %c0_i32_0 = arith.constant 0 : i32
    %c0_i32_1 = arith.constant 0 : i32
    return %c0_i32, %c0_i32_0 : i32, i32
  }
  func.func @transform_11(%arg0: i32, %arg1: i32) -> (i32, i32) {
    %c0_i32 = arith.constant 0 : i32
    %c0_i32_0 = arith.constant 0 : i32
    %c0_i32_1 = arith.constant 0 : i32
    return %c0_i32, %c0_i32_0 : i32, i32
  }
  func.func @transform_12(%arg0: i32, %arg1: i32) -> (i32, i32) {
    %c0_i32 = arith.constant 0 : i32
    %c0_i32_0 = arith.constant 0 : i32
    %c0_i32_1 = arith.constant 0 : i32
    return %c0_i32, %c0_i32_0 : i32, i32
  }
  func.func @transform_13(%arg0: i32, %arg1: i32) -> (i32, i32) {
    %c0_i32 = arith.constant 0 : i32
    %c0_i32_0 = arith.constant 0 : i32
    %c0_i32_1 = arith.constant 0 : i32
    return %c0_i32, %c0_i32_0 : i32, i32
  }
  func.func @transform_14(%arg0: i32, %arg1: i32) -> (i32, i32) {
    %c0_i32 = arith.constant 0 : i32
    %c0_i32_0 = arith.constant 0 : i32
    %c0_i32_1 = arith.constant 0 : i32
    return %c0_i32, %c0_i32_0 : i32, i32
  }
  func.func @transform_15(%arg0: i32, %arg1: i32) -> (i32, i32, i32) {
    %c0_i32 = arith.constant 0 : i32
    %c0_i32_0 = arith.constant 0 : i32
    return %arg0, %arg1, %c0_i32 : i32, i32, i32
  }
}

</mosaic_0001>

<llo_original>
// kernel: tpu_custom_call.1
$region0: #{tpu_custom_call.1}
  #allocation0 [shape = 'u32[]', space=smem, size = 0x4, offset = 0x4, fixed_abs, tag = 'smem constant byte address 0x4 - core index']
  #allocation1 [shape = 'u32[144,128]{1,0:T(1,128)}', space=vmem, size = 0x12000, scoped, tag = 'internal scratch']
  #allocation2 [shape = 'f32[8,48]{1,0:T(8,128)}', space=vmem, size = 0x1000, scoped, tag = 'scratch operand']
  #allocation3 [shape = 'f32[8,48]{1,0:T(8,128)}', space=vmem, size = 0x1000, scoped, tag = 'scratch operand']
  #allocation4 [shape = 'f32[8,48]{1,0:T(8,128)}', space=vmem, size = 0x1000, scoped, tag = 'scratch operand']
  %s0 = inlined_call_operand.hbm [shape: f32[2,8,32], index: 0, kind: input, shape index: {}]
  %s1 = inlined_call_operand.hbm [shape: f32[2,1,8], index: 1, kind: input, shape index: {}]
  %s2 = inlined_call_operand.hbm [shape: f32[2,8,1], index: 2, kind: input, shape index: {}]
  %s3 = inlined_call_operand.hbm [shape: f32[32,48], index: 3, kind: input, shape index: {}]
  %s4 = inlined_call_operand.hbm [shape: f32[1,48], index: 4, kind: input, shape index: {}]
  %s5 = inlined_call_operand.hbm [shape: f32[32,48], index: 5, kind: input, shape index: {}]
  %s6 = inlined_call_operand.hbm [shape: f32[1,48], index: 6, kind: input, shape index: {}]
  %s7 = inlined_call_operand.hbm [shape: f32[32,48], index: 7, kind: input, shape index: {}]
  %s8 = inlined_call_operand.hbm [shape: f32[1,48], index: 8, kind: input, shape index: {}]
  %s9 = inlined_call_operand.hbm [shape: f32[48,32], index: 9, kind: input, shape index: {}]
  %s10 = inlined_call_operand.hbm [shape: f32[1,32], index: 10, kind: input, shape index: {}]
  %s11 = inlined_call_operand.hbm [shape: f32[32,128], index: 11, kind: input, shape index: {}]
  %s12 = inlined_call_operand.hbm [shape: f32[1,128], index: 12, kind: input, shape index: {}]
  %s13 = inlined_call_operand.hbm [shape: f32[128,32], index: 13, kind: input, shape index: {}]
  %s14 = inlined_call_operand.hbm [shape: f32[1,32], index: 14, kind: input, shape index: {}]
  %s15 = inlined_call_operand.hbm [shape: f32[2,8,32], index: 15, kind: output, shape index: {}]
  %s16 = sld [smem:[#allocation0]]
  $region157: #{tpu_custom_call.1} parent=0
    _
  %s18 = ssub.s32 1, %s16
  %s19 = scalar_select 0, %s18, %s16
  $region1: #{tpu_custom_call.1} parent=0
    #allocation5 [shape = 'u8[8192]{0}', space=vmem, size = 0x2000, scoped, tag = 'input window, operand 0']
    #allocation6 [shape = 's32[2]{0}', space=sflag, size = 0x8, scoped, tag = 'scoped memory for tpu_custom_call.1']
    #allocation7 [shape = 's32[2]{0}', space=sflag, size = 0x8, scoped, tag = 'scoped memory for tpu_custom_call.1']
    #allocation8 [shape = 'u8[1024]{0}', space=vmem, size = 0x400, scoped, tag = 'input window, operand 1']
    #allocation9 [shape = 's32[2]{0}', space=sflag, size = 0x8, scoped, tag = 'scoped memory for tpu_custom_call.1']
    #allocation10 [shape = 'u8[8192]{0}', space=vmem, size = 0x2000, scoped, tag = 'input window, operand 2']
    #allocation11 [shape = 'u8[16384]{0}', space=vmem, size = 0x4000, scoped, tag = 'input window, operand 3, single buffered']
    #allocation12 [shape = 's32[1]{0}', space=sflag, size = 0x4, scoped, tag = 'scoped memory for tpu_custom_call.1']
    #allocation13 [shape = 'u8[512]{0}', space=vmem, size = 0x400, scoped, tag = 'input window, operand 4, single buffered']
    #allocation14 [shape = 'u8[16384]{0}', space=vmem, size = 0x4000, scoped, tag = 'input window, operand 5, single buffered']
    #allocation15 [shape = 's32[1]{0}', space=sflag, size = 0x4, scoped, tag = 'scoped memory for tpu_custom_call.1']
    #allocation16 [shape = 'u8[512]{0}', space=vmem, size = 0x400, scoped, tag = 'input window, operand 6, single buffered']
    #allocation17 [shape = 'u8[16384]{0}', space=vmem, size = 0x4000, scoped, tag = 'input window, operand 7, single buffered']
    #allocation18 [shape = 's32[1]{0}', space=sflag, size = 0x4, scoped, tag = 'scoped memory for tpu_custom_call.1']
    #allocation19 [shape = 'u8[512]{0}', space=vmem, size = 0x400, scoped, tag = 'input window, operand 8, single buffered']
    #allocation20 [shape = 'u8[24576]{0}', space=vmem, size = 0x6000, scoped, tag = 'input window, operand 9, single buffered']
    #allocation21 [shape = 's32[1]{0}', space=sflag, size = 0x4, scoped, tag = 'scoped memory for tpu_custom_call.1']
    #allocation22 [shape = 'u8[512]{0}', space=vmem, size = 0x400, scoped, tag = 'input window, operand 10, single buffered']
    #allocation23 [shape = 'u8[16384]{0}', space=vmem, size = 0x4000, scoped, tag = 'input window, operand 11, single buffered']
    #allocation24 [shape = 's32[1]{0}', space=sflag, size = 0x4, scoped, tag = 'scoped memory for tpu_custom_call.1']
    #allocation25 [shape = 'u8[512]{0}', space=vmem, size = 0x400, scoped, tag = 'input window, operand 12, single buffered']
    #allocation26 [shape = 'u8[65536]{0}', space=vmem, size = 0x10000, scoped, tag = 'input window, operand 13, single buffered']
    #allocation27 [shape = 's32[1]{0}', space=sflag, size = 0x4, scoped, tag = 'scoped memory for tpu_custom_call.1']
    #allocation28 [shape = 'u8[512]{0}', space=vmem, size = 0x400, scoped, tag = 'input window, operand 14, single buffered']
    #allocation29 [shape = 'u8[8192]{0}', space=vmem, size = 0x2000, scoped, tag = 'output window, operand 0']
    %20 = vsyncpa [#allocation6], 0
    %s21 = scalar_lea.sflag [#allocation6], 1
    %22 = vsyncpa %s21, 0
    %23 = vsyncpa [#allocation9], 0
    %s24 = scalar_lea.sflag [#allocation9], 1
    %25 = vsyncpa %s24, 0
    %26 = vsyncpa [#allocation12], 0
    %27 = vsyncpa [#allocation15], 0
    %28 = vsyncpa [#allocation18], 0
    %29 = vsyncpa [#allocation21], 0
    %30 = vsyncpa [#allocation24], 0
    %31 = vsyncpa [#allocation27], 0
    %32 = vsyncpa [#allocation7], 0
    %s33 = scalar_lea.sflag [#allocation7], 1
    %34 = vsyncpa %s33, 0
    loop: start=0, step=1, limit=4
    $region2: #{tpu_custom_call.1} parent=1 // loop_pre_header
      _
    $region3: #{tpu_custom_call.1} parent=1 // loop_header
      %s36 = sphi 0, %s40
      %p37 = scmp.ge.s32.totalorder %s36, 4
      %s43 = sphi 0, %s55
      %s44 = sphi 0, %s51
      %s45 = sphi 0, %s43
      %s46 = sphi 0, %s44
      %s47 = sphi 0, %s45
      %s48 = sphi 0, %s46
      %s58 = sphi 0, %s60
      %s61 = sphi 0, %s58
      %s62 = sphi 0, %s61
      %s78 = sphi 0, %s62
      %s84 = sphi 0, %s86
      %s87 = sphi 0, %s84
      %s88 = sphi 0, %s87
      %s104 = sphi 0, %s88
      %s112 = sphi 0, %s114
      %s115 = sphi 0, %s112
      %s116 = sphi 0, %s115
      %s132 = sphi 0, %s116
      %s136 = sphi 0, %s136
      %s138 = sphi 0, %s136
      %s139 = sphi 0, %s138
      %s153 = sphi 0, %s139
      %s157 = sphi 0, %s157
      %s159 = sphi 0, %s157
      %s160 = sphi 0, %s159
      %s174 = sphi 0, %s160
      %s178 = sphi 0, %s178
      %s180 = sphi 0, %s178
      %s181 = sphi 0, %s180
      %s195 = sphi 0, %s181
      %s199 = sphi 0, %s199
      %s201 = sphi 0, %s199
      %s202 = sphi 0, %s201
      %s216 = sphi 0, %s202
      %s220 = sphi 0, %s220
      %s222 = sphi 0, %s220
      %s223 = sphi 0, %s222
      %s237 = sphi 0, %s223
      %s241 = sphi 0, %s241
      %s243 = sphi 0, %s241
      %s244 = sphi 0, %s243
      %s258 = sphi 0, %s244
      %s262 = sphi 0, %s262
      %s264 = sphi 0, %s262
      %s265 = sphi 0, %s264
      %s279 = sphi 0, %s265
      %s283 = sphi 0, %s283
      %s285 = sphi 0, %s283
      %s286 = sphi 0, %s285
      %s300 = sphi 0, %s286
      %s304 = sphi 0, %s304
      %s306 = sphi 0, %s304
      %s307 = sphi 0, %s306
      %s321 = sphi 0, %s307
      %s325 = sphi 0, %s325
      %s327 = sphi 0, %s325
      %s328 = sphi 0, %s327
      %s342 = sphi 0, %s328
      %s346 = sphi 0, %s346
      %s348 = sphi 0, %s346
      %s349 = sphi 0, %s348
      %s363 = sphi 0, %s349
      %s367 = sphi 0, %s367
      %s369 = sphi 0, %s367
      %s370 = sphi 0, %s369
      %s384 = sphi 0, %s370
      %s392 = sphi 0, %s394
      %s395 = sphi 0, %s392
      %s396 = sphi 0, %s395
      %s412 = sphi 0, %s396
    $region4: #{tpu_custom_call.1} parent=1 // loop_header_branch
      %39 = sbr.rel (%p37) target = $region8
    $region5: #{tpu_custom_call.1} parent=1 // loop_body
      %s41 = ssub.s32 %s36, 1
      %s42 = ssub.s32 %s36, 2
      %s49 = sadd.s32 1, %s44
      %p50 = scmp.ge.s32.totalorder %s49, 1
      %s51 = scalar_select %p50, 0, %s49
      %s52 = sadd.s32 1, %s43
      %s53 = scalar_select %p50, %s52, %s43
      %p54 = scmp.ge.s32.totalorder %s53, 2
      %s55 = scalar_select %p54, 0, %s53
      %s56 = ssub.s32 %s43, %s55
      %p57 = scmp.eq.s32.totalorder %s56, 0
      %s59 = sadd.s32 %s58, 1
      %s60 = scalar_select %p57, %s58, %s59
      %p63 = pneg %p57
      %p64 = scmp.eq.s32.totalorder %s36, 1
      %p65 = por %p63, %p64
      %p66 = scmp.ne.s32.totalorder %s58, %s61
      %p67 = scmp.eq.s32.totalorder %s36, 0
      %p68 = por %p66, %p67
      %p69 = scmp.ne.s32.totalorder %s58, %s61
      %p70 = scmp.eq.s32.totalorder %s41, 1
      %p71 = por %p69, %p70
      %p72 = scmp.ne.s32.totalorder %s61, %s62
      %p73 = scmp.eq.s32.totalorder %s41, 0
      %p74 = por %p72, %p73
      %p75 = scmp.ne.s32.totalorder %s61, %s62
      %p76 = scmp.eq.s32.totalorder %s42, 1
      %p77 = por %p75, %p76
      %p79 = scmp.ne.s32.totalorder %s62, %s78
      %p80 = scmp.eq.s32.totalorder %s42, 0
      %p81 = por %p79, %p80
      %s82 = ssub.s32 %s43, %s55
      %p83 = scmp.eq.s32.totalorder %s82, 0
      %s85 = sadd.s32 %s84, 1
      %s86 = scalar_select %p83, %s84, %s85
      %p89 = pneg %p83
      %p90 = scmp.eq.s32.totalorder %s36, 1
      %p91 = por %p89, %p90
      %p92 = scmp.ne.s32.totalorder %s84, %s87
      %p93 = scmp.eq.s32.totalorder %s36, 0
      %p94 = por %p92, %p93
      %p95 = scmp.ne.s32.totalorder %s84, %s87
      %p96 = scmp.eq.s32.totalorder %s41, 1
      %p97 = por %p95, %p96
      %p98 = scmp.ne.s32.totalorder %s87, %s88
      %p99 = scmp.eq.s32.totalorder %s41, 0
      %p100 = por %p98, %p99
      %p101 = scmp.ne.s32.totalorder %s87, %s88
      %p102 = scmp.eq.s32.totalorder %s42, 1
      %p103 = por %p101, %p102
      %p105 = scmp.ne.s32.totalorder %s88, %s104
      %p106 = scmp.eq.s32.totalorder %s42, 0
      %p107 = por %p105, %p106
      %s108 = ssub.s32 %s43, %s55
      %s109 = ssub.s32 %s44, %s51
      %s110 = sor.u32 %s108, %s109
      %p111 = scmp.eq.s32.totalorder %s110, 0
      %s113 = sadd.s32 %s112, 1
      %s114 = scalar_select %p111, %s112, %s113
      %p117 = pneg %p111
      %p118 = scmp.eq.s32.totalorder %s36, 1
      %p119 = por %p117, %p118
      %p120 = scmp.ne.s32.totalorder %s112, %s115
      %p121 = scmp.eq.s32.totalorder %s36, 0
      %p122 = por %p120, %p121
      %p123 = scmp.ne.s32.totalorder %s112, %s115
      %p124 = scmp.eq.s32.totalorder %s41, 1
      %p125 = por %p123, %p124
      %p126 = scmp.ne.s32.totalorder %s115, %s116
      %p127 = scmp.eq.s32.totalorder %s41, 0
      %p128 = por %p126, %p127
      %p129 = scmp.ne.s32.totalorder %s115, %s116
      %p130 = scmp.eq.s32.totalorder %s42, 1
      %p131 = por %p129, %p130
      %p133 = scmp.ne.s32.totalorder %s116, %s132
      %p134 = scmp.eq.s32.totalorder %s42, 0
      %p135 = por %p133, %p134
      %s137 = sadd.s32 %s136, 1
      %p140 = scmp.eq.s32.totalorder %s36, 1
      %p141 = scmp.ne.s32.totalorder %s136, %s138
      %p142 = scmp.eq.s32.totalorder %s36, 0
      %p143 = por %p141, %p142
      %p144 = scmp.ne.s32.totalorder %s136, %s138
      %p145 = scmp.eq.s32.totalorder %s41, 1
      %p146 = por %p144, %p145
      %p147 = scmp.ne.s32.totalorder %s138, %s139
      %p148 = scmp.eq.s32.totalorder %s41, 0
      %p149 = por %p147, %p148
      %p150 = scmp.ne.s32.totalorder %s138, %s139
      %p151 = scmp.eq.s32.totalorder %s42, 1
      %p152 = por %p150, %p151
      %p154 = scmp.ne.s32.totalorder %s139, %s153
      %p155 = scmp.eq.s32.totalorder %s42, 0
      %p156 = por %p154, %p155
      %s158 = sadd.s32 %s157, 1
      %p161 = scmp.eq.s32.totalorder %s36, 1
      %p162 = scmp.ne.s32.totalorder %s157, %s159
      %p163 = scmp.eq.s32.totalorder %s36, 0
      %p164 = por %p162, %p163
      %p165 = scmp.ne.s32.totalorder %s157, %s159
      %p166 = scmp.eq.s32.totalorder %s41, 1
      %p167 = por %p165, %p166
      %p168 = scmp.ne.s32.totalorder %s159, %s160
      %p169 = scmp.eq.s32.totalorder %s41, 0
      %p170 = por %p168, %p169
      %p171 = scmp.ne.s32.totalorder %s159, %s160
      %p172 = scmp.eq.s32.totalorder %s42, 1
      %p173 = por %p171, %p172
      %p175 = scmp.ne.s32.totalorder %s160, %s174
      %p176 = scmp.eq.s32.totalorder %s42, 0
      %p177 = por %p175, %p176
      %s179 = sadd.s32 %s178, 1
      %p182 = scmp.eq.s32.totalorder %s36, 1
      %p183 = scmp.ne.s32.totalorder %s178, %s180
      %p184 = scmp.eq.s32.totalorder %s36, 0
      %p185 = por %p183, %p184
      %p186 = scmp.ne.s32.totalorder %s178, %s180
      %p187 = scmp.eq.s32.totalorder %s41, 1
      %p188 = por %p186, %p187
      %p189 = scmp.ne.s32.totalorder %s180, %s181
      %p190 = scmp.eq.s32.totalorder %s41, 0
      %p191 = por %p189, %p190
      %p192 = scmp.ne.s32.totalorder %s180, %s181
      %p193 = scmp.eq.s32.totalorder %s42, 1
      %p194 = por %p192, %p193
      %p196 = scmp.ne.s32.totalorder %s181, %s195
      %p197 = scmp.eq.s32.totalorder %s42, 0
      %p198 = por %p196, %p197
      %s200 = sadd.s32 %s199, 1
      %p203 = scmp.eq.s32.totalorder %s36, 1
      %p204 = scmp.ne.s32.totalorder %s199, %s201
      %p205 = scmp.eq.s32.totalorder %s36, 0
      %p206 = por %p204, %p205
      %p207 = scmp.ne.s32.totalorder %s199, %s201
      %p208 = scmp.eq.s32.totalorder %s41, 1
      %p209 = por %p207, %p208
      %p210 = scmp.ne.s32.totalorder %s201, %s202
      %p211 = scmp.eq.s32.totalorder %s41, 0
      %p212 = por %p210, %p211
      %p213 = scmp.ne.s32.totalorder %s201, %s202
      %p214 = scmp.eq.s32.totalorder %s42, 1
      %p215 = por %p213, %p214
      %p217 = scmp.ne.s32.totalorder %s202, %s216
      %p218 = scmp.eq.s32.totalorder %s42, 0
      %p219 = por %p217, %p218
      %s221 = sadd.s32 %s220, 1
      %p224 = scmp.eq.s32.totalorder %s36, 1
      %p225 = scmp.ne.s32.totalorder %s220, %s222
      %p226 = scmp.eq.s32.totalorder %s36, 0
      %p227 = por %p225, %p226
      %p228 = scmp.ne.s32.totalorder %s220, %s222
      %p229 = scmp.eq.s32.totalorder %s41, 1
      %p230 = por %p228, %p229
      %p231 = scmp.ne.s32.totalorder %s222, %s223
      %p232 = scmp.eq.s32.totalorder %s41, 0
      %p233 = por %p231, %p232
      %p234 = scmp.ne.s32.totalorder %s222, %s223
      %p235 = scmp.eq.s32.totalorder %s42, 1
      %p236 = por %p234, %p235
      %p238 = scmp.ne.s32.totalorder %s223, %s237
      %p239 = scmp.eq.s32.totalorder %s42, 0
      %p240 = por %p238, %p239
      %s242 = sadd.s32 %s241, 1
      %p245 = scmp.eq.s32.totalorder %s36, 1
      %p246 = scmp.ne.s32.totalorder %s241, %s243
      %p247 = scmp.eq.s32.totalorder %s36, 0
      %p248 = por %p246, %p247
      %p249 = scmp.ne.s32.totalorder %s241, %s243
      %p250 = scmp.eq.s32.totalorder %s41, 1
      %p251 = por %p249, %p250
      %p252 = scmp.ne.s32.totalorder %s243, %s244
      %p253 = scmp.eq.s32.totalorder %s41, 0
      %p254 = por %p252, %p253
      %p255 = scmp.ne.s32.totalorder %s243, %s244
      %p256 = scmp.eq.s32.totalorder %s42, 1
      %p257 = por %p255, %p256
      %p259 = scmp.ne.s32.totalorder %s244, %s258
      %p260 = scmp.eq.s32.totalorder %s42, 0
      %p261 = por %p259, %p260
      %s263 = sadd.s32 %s262, 1
      %p266 = scmp.eq.s32.totalorder %s36, 1
      %p267 = scmp.ne.s32.totalorder %s262, %s264
      %p268 = scmp.eq.s32.totalorder %s36, 0
      %p269 = por %p267, %p268
      %p270 = scmp.ne.s32.totalorder %s262, %s264
      %p271 = scmp.eq.s32.totalorder %s41, 1
      %p272 = por %p270, %p271
      %p273 = scmp.ne.s32.totalorder %s264, %s265
      %p274 = scmp.eq.s32.totalorder %s41, 0
      %p275 = por %p273, %p274
      %p276 = scmp.ne.s32.totalorder %s264, %s265
      %p277 = scmp.eq.s32.totalorder %s42, 1
      %p278 = por %p276, %p277
      %p280 = scmp.ne.s32.totalorder %s265, %s279
      %p281 = scmp.eq.s32.totalorder %s42, 0
      %p282 = por %p280, %p281
      %s284 = sadd.s32 %s283, 1
      %p287 = scmp.eq.s32.totalorder %s36, 1
      %p288 = scmp.ne.s32.totalorder %s283, %s285
      %p289 = scmp.eq.s32.totalorder %s36, 0
      %p290 = por %p288, %p289
      %p291 = scmp.ne.s32.totalorder %s283, %s285
      %p292 = scmp.eq.s32.totalorder %s41, 1
      %p293 = por %p291, %p292
      %p294 = scmp.ne.s32.totalorder %s285, %s286
      %p295 = scmp.eq.s32.totalorder %s41, 0
      %p296 = por %p294, %p295
      %p297 = scmp.ne.s32.totalorder %s285, %s286
      %p298 = scmp.eq.s32.totalorder %s42, 1
      %p299 = por %p297, %p298
      %p301 = scmp.ne.s32.totalorder %s286, %s300
      %p302 = scmp.eq.s32.totalorder %s42, 0
      %p303 = por %p301, %p302
      %s305 = sadd.s32 %s304, 1
      %p308 = scmp.eq.s32.totalorder %s36, 1
      %p309 = scmp.ne.s32.totalorder %s304, %s306
      %p310 = scmp.eq.s32.totalorder %s36, 0
      %p311 = por %p309, %p310
      %p312 = scmp.ne.s32.totalorder %s304, %s306
      %p313 = scmp.eq.s32.totalorder %s41, 1
      %p314 = por %p312, %p313
      %p315 = scmp.ne.s32.totalorder %s306, %s307
      %p316 = scmp.eq.s32.totalorder %s41, 0
      %p317 = por %p315, %p316
      %p318 = scmp.ne.s32.totalorder %s306, %s307
      %p319 = scmp.eq.s32.totalorder %s42, 1
      %p320 = por %p318, %p319
      %p322 = scmp.ne.s32.totalorder %s307, %s321
      %p323 = scmp.eq.s32.totalorder %s42, 0
      %p324 = por %p322, %p323
      %s326 = sadd.s32 %s325, 1
      %p329 = scmp.eq.s32.totalorder %s36, 1
      %p330 = scmp.ne.s32.totalorder %s325, %s327
      %p331 = scmp.eq.s32.totalorder %s36, 0
      %p332 = por %p330, %p331
      %p333 = scmp.ne.s32.totalorder %s325, %s327
      %p334 = scmp.eq.s32.totalorder %s41, 1
      %p335 = por %p333, %p334
      %p336 = scmp.ne.s32.totalorder %s327, %s328
      %p337 = scmp.eq.s32.totalorder %s41, 0
      %p338 = por %p336, %p337
      %p339 = scmp.ne.s32.totalorder %s327, %s328
      %p340 = scmp.eq.s32.totalorder %s42, 1
      %p341 = por %p339, %p340
      %p343 = scmp.ne.s32.totalorder %s328, %s342
      %p344 = scmp.eq.s32.totalorder %s42, 0
      %p345 = por %p343, %p344
      %s347 = sadd.s32 %s346, 1
      %p350 = scmp.eq.s32.totalorder %s36, 1
      %p351 = scmp.ne.s32.totalorder %s346, %s348
      %p352 = scmp.eq.s32.totalorder %s36, 0
      %p353 = por %p351, %p352
      %p354 = scmp.ne.s32.totalorder %s346, %s348
      %p355 = scmp.eq.s32.totalorder %s41, 1
      %p356 = por %p354, %p355
      %p357 = scmp.ne.s32.totalorder %s348, %s349
      %p358 = scmp.eq.s32.totalorder %s41, 0
      %p359 = por %p357, %p358
      %p360 = scmp.ne.s32.totalorder %s348, %s349
      %p361 = scmp.eq.s32.totalorder %s42, 1
      %p362 = por %p360, %p361
      %p364 = scmp.ne.s32.totalorder %s349, %s363
      %p365 = scmp.eq.s32.totalorder %s42, 0
      %p366 = por %p364, %p365
      %s368 = sadd.s32 %s367, 1
      %p371 = scmp.eq.s32.totalorder %s36, 1
      %p372 = scmp.ne.s32.totalorder %s367, %s369
      %p373 = scmp.eq.s32.totalorder %s36, 0
      %p374 = por %p372, %p373
      %p375 = scmp.ne.s32.totalorder %s367, %s369
      %p376 = scmp.eq.s32.totalorder %s41, 1
      %p377 = por %p375, %p376
      %p378 = scmp.ne.s32.totalorder %s369, %s370
      %p379 = scmp.eq.s32.totalorder %s41, 0
      %p380 = por %p378, %p379
      %p381 = scmp.ne.s32.totalorder %s369, %s370
      %p382 = scmp.eq.s32.totalorder %s42, 1
      %p383 = por %p381, %p382
      %p385 = scmp.ne.s32.totalorder %s370, %s384
      %p386 = scmp.eq.s32.totalorder %s42, 0
      %p387 = por %p385, %p386
      %s388 = ssub.s32 %s43, %s55
      %s389 = ssub.s32 %s44, %s51
      %s390 = sor.u32 %s388, %s389
      %p391 = scmp.eq.s32.totalorder %s390, 0
      %s393 = sadd.s32 %s392, 1
      %s394 = scalar_select %p391, %s392, %s393
      %p397 = pneg %p391
      %p398 = scmp.eq.s32.totalorder %s36, 1
      %p399 = por %p397, %p398
      %p400 = scmp.ne.s32.totalorder %s392, %s395
      %p401 = scmp.eq.s32.totalorder %s36, 0
      %p402 = por %p400, %p401
      %p403 = scmp.ne.s32.totalorder %s392, %s395
      %p404 = scmp.eq.s32.totalorder %s41, 1
      %p405 = por %p403, %p404
      %p406 = scmp.ne.s32.totalorder %s395, %s396
      %p407 = scmp.eq.s32.totalorder %s41, 0
      %p408 = por %p406, %p407
      %p409 = scmp.ne.s32.totalorder %s395, %s396
      %p410 = scmp.eq.s32.totalorder %s42, 1
      %p411 = por %p409, %p410
      %p413 = scmp.ne.s32.totalorder %s396, %s412
      %p414 = scmp.eq.s32.totalorder %s42, 0
      %p415 = por %p413, %p414
      %p416 = scmp.le.s32.totalorder 1, %s36
      %p417 = scmp.lt.s32.totalorder %s36, 3
      %p418 = pnand %p416, %p417
      %p419 = pneg %p418
      // Predicated region
      $region9: #{tpu_custom_call.1} parent=5 // pred_check
        _
      $region10: #{tpu_custom_call.1} parent=5 // pred_check_branch
        %421 = sbr.rel (%p418) target = $region12
      $region11: #{tpu_custom_call.1} parent=5 // pred_region
        %s422 = ssub.s32 %s36, 1
        // Predicated region
        $region13: #{tpu_custom_call.1} parent=11 // pred_check
          %p423 = pneg %p149
        $region14: #{tpu_custom_call.1} parent=11 // pred_check_branch
          %425 = sbr.rel (%p423) target = $region16
        $region15: #{tpu_custom_call.1} parent=11 // pred_region
          %s427 = ssub.s32 512, 512
          %428 = vsyncadd [#allocation12], %s427
          %s429 = sshll.u32 [#allocation11], 4
          %s430 = int_to_ptr.vmem [resolvable:$true] %s429
          %435 = dma.hbm_to_vmem [thread:$0]  %s3, 512, %s430, [#allocation12], 128, 128, 8
        $region16: #{tpu_custom_call.1} parent=11 // pred_fallthru
          _
        // Predicated region
        $region17: #{tpu_custom_call.1} parent=11 // pred_check
          %p436 = pneg %p170
        $region18: #{tpu_custom_call.1} parent=11 // pred_check_branch
          %438 = sbr.rel (%p436) target = $region20
        $region19: #{tpu_custom_call.1} parent=11 // pred_region
          %s440 = ssub.s32 16, 16
          %441 = vsyncadd [#allocation12], %s440
          %s443 = sshll.u32 [#allocation13], 4
          %s444 = int_to_ptr.vmem [resolvable:$true] %s443
          %446 = dma.hbm_to_vmem [thread:$0]  %s4, 16, %s444, [#allocation12]
        $region20: #{tpu_custom_call.1} parent=11 // pred_fallthru
          _
        // Predicated region
        $region21: #{tpu_custom_call.1} parent=11 // pred_check
          %p447 = pneg %p191
        $region22: #{tpu_custom_call.1} parent=11 // pred_check_branch
          %449 = sbr.rel (%p447) target = $region24
        $region23: #{tpu_custom_call.1} parent=11 // pred_region
          %s451 = ssub.s32 512, 512
          %452 = vsyncadd [#allocation15], %s451
          %s453 = sshll.u32 [#allocation14], 4
          %s454 = int_to_ptr.vmem [resolvable:$true] %s453
          %459 = dma.hbm_to_vmem [thread:$0]  %s5, 512, %s454, [#allocation15], 128, 128, 8
        $region24: #{tpu_custom_call.1} parent=11 // pred_fallthru
          _
        // Predicated region
        $region25: #{tpu_custom_call.1} parent=11 // pred_check
          %p460 = pneg %p212
        $region26: #{tpu_custom_call.1} parent=11 // pred_check_branch
          %462 = sbr.rel (%p460) target = $region28
        $region27: #{tpu_custom_call.1} parent=11 // pred_region
          %s464 = ssub.s32 16, 16
          %465 = vsyncadd [#allocation15], %s464
          %s467 = sshll.u32 [#allocation16], 4
          %s468 = int_to_ptr.vmem [resolvable:$true] %s467
          %470 = dma.hbm_to_vmem [thread:$0]  %s6, 16, %s468, [#allocation15]
        $region28: #{tpu_custom_call.1} parent=11 // pred_fallthru
          _
        // Predicated region
        $region29: #{tpu_custom_call.1} parent=11 // pred_check
          %p471 = pneg %p233
        $region30: #{tpu_custom_call.1} parent=11 // pred_check_branch
          %473 = sbr.rel (%p471) target = $region32
        $region31: #{tpu_custom_call.1} parent=11 // pred_region
          %s475 = ssub.s32 512, 512
          %476 = vsyncadd [#allocation18], %s475
          %s477 = sshll.u32 [#allocation17], 4
          %s478 = int_to_ptr.vmem [resolvable:$true] %s477
          %483 = dma.hbm_to_vmem [thread:$0]  %s7, 512, %s478, [#allocation18], 128, 128, 8
        $region32: #{tpu_custom_call.1} parent=11 // pred_fallthru
          _
        // Predicated region
        $region33: #{tpu_custom_call.1} parent=11 // pred_check
          %p484 = pneg %p254
        $region34: #{tpu_custom_call.1} parent=11 // pred_check_branch
          %486 = sbr.rel (%p484) target = $region36
        $region35: #{tpu_custom_call.1} parent=11 // pred_region
          %s488 = ssub.s32 16, 16
          %489 = vsyncadd [#allocation18], %s488
          %s491 = sshll.u32 [#allocation19], 4
          %s492 = int_to_ptr.vmem [resolvable:$true] %s491
          %494 = dma.hbm_to_vmem [thread:$0]  %s8, 16, %s492, [#allocation18]
        $region36: #{tpu_custom_call.1} parent=11 // pred_fallthru
          _
        // Predicated region
        $region37: #{tpu_custom_call.1} parent=11 // pred_check
          %p495 = pneg %p275
        $region38: #{tpu_custom_call.1} parent=11 // pred_check_branch
          %497 = sbr.rel (%p495) target = $region40
        $region39: #{tpu_custom_call.1} parent=11 // pred_region
          %s499 = ssub.s32 768, 768
          %500 = vsyncadd [#allocation21], %s499
          %s501 = sshll.u32 [#allocation20], 4
          %s502 = int_to_ptr.vmem [resolvable:$true] %s501
          %507 = dma.hbm_to_vmem [thread:$0]  %s9, 768, %s502, [#allocation21], 128, 128, 8
        $region40: #{tpu_custom_call.1} parent=11 // pred_fallthru
          _
        // Predicated region
        $region41: #{tpu_custom_call.1} parent=11 // pred_check
          %p508 = pneg %p296
        $region42: #{tpu_custom_call.1} parent=11 // pred_check_branch
          %510 = sbr.rel (%p508) target = $region44
        $region43: #{tpu_custom_call.1} parent=11 // pred_region
          %s512 = ssub.s32 16, 16
          %513 = vsyncadd [#allocation21], %s512
          %s515 = sshll.u32 [#allocation22], 4
          %s516 = int_to_ptr.vmem [resolvable:$true] %s515
          %518 = dma.hbm_to_vmem [thread:$0]  %s10, 16, %s516, [#allocation21]
        $region44: #{tpu_custom_call.1} parent=11 // pred_fallthru
          _
        // Predicated region
        $region45: #{tpu_custom_call.1} parent=11 // pred_check
          %p519 = pneg %p317
        $region46: #{tpu_custom_call.1} parent=11 // pred_check_branch
          %521 = sbr.rel (%p519) target = $region48
        $region47: #{tpu_custom_call.1} parent=11 // pred_region
          %s523 = ssub.s32 512, 512
          %524 = vsyncadd [#allocation24], %s523
          %s525 = sshll.u32 [#allocation23], 4
          %s526 = int_to_ptr.vmem [resolvable:$true] %s525
          %531 = dma.hbm_to_vmem [thread:$0]  %s11, 512, %s526, [#allocation24], 128, 128, 8
        $region48: #{tpu_custom_call.1} parent=11 // pred_fallthru
          _
        // Predicated region
        $region49: #{tpu_custom_call.1} parent=11 // pred_check
          %p532 = pneg %p338
        $region50: #{tpu_custom_call.1} parent=11 // pred_check_branch
          %534 = sbr.rel (%p532) target = $region52
        $region51: #{tpu_custom_call.1} parent=11 // pred_region
          %s536 = ssub.s32 16, 16
          %537 = vsyncadd [#allocation24], %s536
          %s539 = sshll.u32 [#allocation25], 4
          %s540 = int_to_ptr.vmem [resolvable:$true] %s539
          %542 = dma.hbm_to_vmem [thread:$0]  %s12, 16, %s540, [#allocation24]
        $region52: #{tpu_custom_call.1} parent=11 // pred_fallthru
          _
        // Predicated region
        $region53: #{tpu_custom_call.1} parent=11 // pred_check
          %p543 = pneg %p359
        $region54: #{tpu_custom_call.1} parent=11 // pred_check_branch
          %545 = sbr.rel (%p543) target = $region56
        $region55: #{tpu_custom_call.1} parent=11 // pred_region
          %s547 = ssub.s32 2048, 2048
          %548 = vsyncadd [#allocation27], %s547
          %s549 = sshll.u32 [#allocation26], 4
          %s550 = int_to_ptr.vmem [resolvable:$true] %s549
          %555 = dma.hbm_to_vmem [thread:$0]  %s13, 2048, %s550, [#allocation27], 128, 128, 8
        $region56: #{tpu_custom_call.1} parent=11 // pred_fallthru
          _
        // Predicated region
        $region57: #{tpu_custom_call.1} parent=11 // pred_check
          %p556 = pneg %p380
        $region58: #{tpu_custom_call.1} parent=11 // pred_check_branch
          %558 = sbr.rel (%p556) target = $region60
        $region59: #{tpu_custom_call.1} parent=11 // pred_region
          %s560 = ssub.s32 16, 16
          %561 = vsyncadd [#allocation27], %s560
          %s563 = sshll.u32 [#allocation28], 4
          %s564 = int_to_ptr.vmem [resolvable:$true] %s563
          %566 = dma.hbm_to_vmem [thread:$0]  %s14, 16, %s564, [#allocation27]
        $region60: #{tpu_custom_call.1} parent=11 // pred_fallthru
          _
      $region12: #{tpu_custom_call.1} parent=5 // pred_fallthru
        _
      %p567 = scmp.lt.s32.totalorder %s36, 2
      // Predicated region
      $region61: #{tpu_custom_call.1} parent=5 // pred_check
        %p568 = pneg %p567
      $region62: #{tpu_custom_call.1} parent=5 // pred_check_branch
        %570 = sbr.rel (%p568) target = $region64
      $region63: #{tpu_custom_call.1} parent=5 // pred_region
        // Predicated region
        $region65: #{tpu_custom_call.1} parent=63 // pred_check
          %p571 = pneg %p68
        $region66: #{tpu_custom_call.1} parent=63 // pred_check_branch
          %573 = sbr.rel (%p571) target = $region68
        $region67: #{tpu_custom_call.1} parent=63 // pred_region
          %s574 = sand.u32 %s58, 1
          %s575 = scalar_lea.sflag [#allocation6], %s574
          %s576 = sand.u32 %s58, 1
          %s577 = smul.addr %s576, 8
          %s578 = scalar_lea.vmem [#allocation5], %s577
          %s580 = ssub.s32 128, 128
          %581 = vsyncadd %s575, %s580
          %s582 = smul.addr %s43, 128
          %s583 = scalar_lea.hbm %s0, %s582
          %s585 = sshll.u32 %s578, 4
          %s586 = int_to_ptr.vmem [resolvable:$true] %s585
          %588 = dma.hbm_to_vmem [thread:$0]  %s583, 128, %s586, %s575
        $region68: #{tpu_custom_call.1} parent=63 // pred_fallthru
          _
        // Predicated region
        $region69: #{tpu_custom_call.1} parent=63 // pred_check
          %p589 = pneg %p94
        $region70: #{tpu_custom_call.1} parent=63 // pred_check_branch
          %591 = sbr.rel (%p589) target = $region72
        $region71: #{tpu_custom_call.1} parent=63 // pred_region
          %s592 = sand.u32 %s36, 1
          %s593 = scalar_lea.sflag [#allocation9], %s592
          %s594 = sand.u32 %s84, 1
          %s595 = scalar_lea.vmem [#allocation8], %s594
          %s597 = ssub.s32 16, 16
          %598 = vsyncadd %s593, %s597
          %s599 = smul.addr %s43, 16
          %s600 = scalar_lea.hbm %s1, %s599
          %s602 = sshll.u32 %s595, 4
          %s603 = int_to_ptr.vmem [resolvable:$true] %s602
          %605 = dma.hbm_to_vmem [thread:$0]  %s600, 16, %s603, %s593
        $region72: #{tpu_custom_call.1} parent=63 // pred_fallthru
          _
        // Predicated region
        $region73: #{tpu_custom_call.1} parent=63 // pred_check
          %p606 = pneg %p122
        $region74: #{tpu_custom_call.1} parent=63 // pred_check_branch
          %608 = sbr.rel (%p606) target = $region76
        $region75: #{tpu_custom_call.1} parent=63 // pred_region
          %s609 = sand.u32 %s36, 1
          %s610 = scalar_lea.sflag [#allocation9], %s609
          %s611 = sand.u32 %s112, 1
          %s612 = smul.addr %s611, 8
          %s613 = scalar_lea.vmem [#allocation10], %s612
          %s615 = ssub.s32 128, 128
          %616 = vsyncadd %s610, %s615
          %s617 = sadd.s32 %s44, %s43
          %s618 = smul.addr %s617, 128
          %s619 = scalar_lea.hbm %s2, %s618
          %s621 = sshll.u32 %s613, 4
          %s622 = int_to_ptr.vmem [resolvable:$true] %s621
          %624 = dma.hbm_to_vmem [thread:$0]  %s619, 128, %s622, %s610
        $region76: #{tpu_custom_call.1} parent=63 // pred_fallthru
          _
      $region64: #{tpu_custom_call.1} parent=5 // pred_fallthru
        _
      %p625 = scmp.le.s32.totalorder 1, %s36
      %p626 = scmp.lt.s32.totalorder %s36, 3
      %p627 = pnand %p625, %p626
      %p628 = pneg %p627
      // Predicated region
      $region77: #{tpu_custom_call.1} parent=5 // pred_check
        _
      $region78: #{tpu_custom_call.1} parent=5 // pred_check_branch
        %630 = sbr.rel (%p627) target = $region80
      $region79: #{tpu_custom_call.1} parent=5 // pred_region
        %s631 = ssub.s32 %s36, 1
        %s632 = sand.u32 %s61, 1
        %s633 = scalar_lea.sflag [#allocation6], %s632
        %s634 = sand.u32 %s61, 1
        %s635 = smul.addr %s634, 8
        %s636 = scalar_lea.vmem [#allocation5], %s635
        // Predicated region
        $region81: #{tpu_custom_call.1} parent=79 // pred_check
          %p637 = pneg %p74
        $region82: #{tpu_custom_call.1} parent=79 // pred_check_branch
          %639 = sbr.rel (%p637) target = $region84
        $region83: #{tpu_custom_call.1} parent=79 // pred_region
          %640 = dma.done %s633, 128
        $region84: #{tpu_custom_call.1} parent=79 // pred_fallthru
          _
        %s641 = sand.u32 %s41, 1
        %s642 = scalar_lea.sflag [#allocation9], %s641
        %s643 = sand.u32 %s87, 1
        %s644 = scalar_lea.vmem [#allocation8], %s643
        // Predicated region
        $region85: #{tpu_custom_call.1} parent=79 // pred_check
          %p645 = pneg %p100
        $region86: #{tpu_custom_call.1} parent=79 // pred_check_branch
          %647 = sbr.rel (%p645) target = $region88
        $region87: #{tpu_custom_call.1} parent=79 // pred_region
          %648 = dma.done %s642, 16
        $region88: #{tpu_custom_call.1} parent=79 // pred_fallthru
          _
        %s649 = sand.u32 %s41, 1
        %s650 = scalar_lea.sflag [#allocation9], %s649
        %s651 = sand.u32 %s115, 1
        %s652 = smul.addr %s651, 8
        %s653 = scalar_lea.vmem [#allocation10], %s652
        // Predicated region
        $region89: #{tpu_custom_call.1} parent=79 // pred_check
          %p654 = pneg %p128
        $region90: #{tpu_custom_call.1} parent=79 // pred_check_branch
          %656 = sbr.rel (%p654) target = $region92
        $region91: #{tpu_custom_call.1} parent=79 // pred_region
          %657 = dma.done %s650, 128
        $region92: #{tpu_custom_call.1} parent=79 // pred_fallthru
          _
        // Predicated region
        $region93: #{tpu_custom_call.1} parent=79 // pred_check
          %p658 = pneg %p149
        $region94: #{tpu_custom_call.1} parent=79 // pred_check_branch
          %660 = sbr.rel (%p658) target = $region96
        $region95: #{tpu_custom_call.1} parent=79 // pred_region
          %661 = dma.done [#allocation12], 512
        $region96: #{tpu_custom_call.1} parent=79 // pred_fallthru
          _
        // Predicated region
        $region97: #{tpu_custom_call.1} parent=79 // pred_check
          %p662 = pneg %p170
        $region98: #{tpu_custom_call.1} parent=79 // pred_check_branch
          %664 = sbr.rel (%p662) target = $region100
        $region99: #{tpu_custom_call.1} parent=79 // pred_region
          %665 = dma.done [#allocation12], 16
        $region100: #{tpu_custom_call.1} parent=79 // pred_fallthru
          _
        // Predicated region
        $region101: #{tpu_custom_call.1} parent=79 // pred_check
          %p666 = pneg %p191
        $region102: #{tpu_custom_call.1} parent=79 // pred_check_branch
          %668 = sbr.rel (%p666) target = $region104
        $region103: #{tpu_custom_call.1} parent=79 // pred_region
          %669 = dma.done [#allocation15], 512
        $region104: #{tpu_custom_call.1} parent=79 // pred_fallthru
          _
        // Predicated region
        $region105: #{tpu_custom_call.1} parent=79 // pred_check
          %p670 = pneg %p212
        $region106: #{tpu_custom_call.1} parent=79 // pred_check_branch
          %672 = sbr.rel (%p670) target = $region108
        $region107: #{tpu_custom_call.1} parent=79 // pred_region
          %673 = dma.done [#allocation15], 16
        $region108: #{tpu_custom_call.1} parent=79 // pred_fallthru
          _
        // Predicated region
        $region109: #{tpu_custom_call.1} parent=79 // pred_check
          %p674 = pneg %p233
        $region110: #{tpu_custom_call.1} parent=79 // pred_check_branch
          %676 = sbr.rel (%p674) target = $region112
        $region111: #{tpu_custom_call.1} parent=79 // pred_region
          %677 = dma.done [#allocation18], 512
        $region112: #{tpu_custom_call.1} parent=79 // pred_fallthru
          _
        // Predicated region
        $region113: #{tpu_custom_call.1} parent=79 // pred_check
          %p678 = pneg %p254
        $region114: #{tpu_custom_call.1} parent=79 // pred_check_branch
          %680 = sbr.rel (%p678) target = $region116
        $region115: #{tpu_custom_call.1} parent=79 // pred_region
          %681 = dma.done [#allocation18], 16
        $region116: #{tpu_custom_call.1} parent=79 // pred_fallthru
          _
        // Predicated region
        $region117: #{tpu_custom_call.1} parent=79 // pred_check
          %p682 = pneg %p275
        $region118: #{tpu_custom_call.1} parent=79 // pred_check_branch
          %684 = sbr.rel (%p682) target = $region120
        $region119: #{tpu_custom_call.1} parent=79 // pred_region
          %685 = dma.done [#allocation21], 768
        $region120: #{tpu_custom_call.1} parent=79 // pred_fallthru
          _
        // Predicated region
        $region121: #{tpu_custom_call.1} parent=79 // pred_check
          %p686 = pneg %p296
        $region122: #{tpu_custom_call.1} parent=79 // pred_check_branch
          %688 = sbr.rel (%p686) target = $region124
        $region123: #{tpu_custom_call.1} parent=79 // pred_region
          %689 = dma.done [#allocation21], 16
        $region124: #{tpu_custom_call.1} parent=79 // pred_fallthru
          _
        // Predicated region
        $region125: #{tpu_custom_call.1} parent=79 // pred_check
          %p690 = pneg %p317
        $region126: #{tpu_custom_call.1} parent=79 // pred_check_branch
          %692 = sbr.rel (%p690) target = $region128
        $region127: #{tpu_custom_call.1} parent=79 // pred_region
          %693 = dma.done [#allocation24], 512
        $region128: #{tpu_custom_call.1} parent=79 // pred_fallthru
          _
        // Predicated region
        $region129: #{tpu_custom_call.1} parent=79 // pred_check
          %p694 = pneg %p338
        $region130: #{tpu_custom_call.1} parent=79 // pred_check_branch
          %696 = sbr.rel (%p694) target = $region132
        $region131: #{tpu_custom_call.1} parent=79 // pred_region
          %697 = dma.done [#allocation24], 16
        $region132: #{tpu_custom_call.1} parent=79 // pred_fallthru
          _
        // Predicated region
        $region133: #{tpu_custom_call.1} parent=79 // pred_check
          %p698 = pneg %p359
        $region134: #{tpu_custom_call.1} parent=79 // pred_check_branch
          %700 = sbr.rel (%p698) target = $region136
        $region135: #{tpu_custom_call.1} parent=79 // pred_region
          %701 = dma.done [#allocation27], 2048
        $region136: #{tpu_custom_call.1} parent=79 // pred_fallthru
          _
        // Predicated region
        $region137: #{tpu_custom_call.1} parent=79 // pred_check
          %p702 = pneg %p380
        $region138: #{tpu_custom_call.1} parent=79 // pred_check_branch
          %704 = sbr.rel (%p702) target = $region140
        $region139: #{tpu_custom_call.1} parent=79 // pred_region
          %705 = dma.done [#allocation27], 16
        $region140: #{tpu_custom_call.1} parent=79 // pred_fallthru
          _
        %s706 = sand.u32 %s61, 1
        %s707 = scalar_lea.sflag [#allocation6], %s706
        %s708 = sand.u32 %s61, 1
        %s709 = smul.addr %s708, 8
        %s710 = scalar_lea.vmem [#allocation5], %s709
        %p711 = pneg %p74
        %p712 = pneg %p71
        %s713 = sand.u32 %s41, 1
        %s714 = scalar_lea.sflag [#allocation9], %s713
        %s715 = sand.u32 %s87, 1
        %s716 = scalar_lea.vmem [#allocation8], %s715
        %p717 = pneg %p100
        %p718 = pneg %p97
        %s719 = sand.u32 %s41, 1
        %s720 = scalar_lea.sflag [#allocation9], %s719
        %s721 = sand.u32 %s115, 1
        %s722 = smul.addr %s721, 8
        %s723 = scalar_lea.vmem [#allocation10], %s722
        %p724 = pneg %p128
        %p725 = pneg %p125
        %p726 = pneg %p149
        %p727 = pneg %p146
        %p728 = pneg %p170
        %p729 = pneg %p167
        %p730 = pneg %p191
        %p731 = pneg %p188
        %p732 = pneg %p212
        %p733 = pneg %p209
        %p734 = pneg %p233
        %p735 = pneg %p230
        %p736 = pneg %p254
        %p737 = pneg %p251
        %p738 = pneg %p275
        %p739 = pneg %p272
        %p740 = pneg %p296
        %p741 = pneg %p293
        %p742 = pneg %p317
        %p743 = pneg %p314
        %p744 = pneg %p338
        %p745 = pneg %p335
        %p746 = pneg %p359
        %p747 = pneg %p356
        %p748 = pneg %p380
        %p749 = pneg %p377
        %p750 = pneg %p408
        %p751 = pneg %p405
        %s752 = sand.u32 %s395, 1
        %s753 = scalar_lea.sflag [#allocation7], %s752
        %s754 = sand.u32 %s395, 1
        %s755 = smul.addr %s754, 8
        %s756 = scalar_lea.vmem [#allocation29], %s755
        %p757 = scmp.eq.s32.totalorder %s46, 0
        // Predicated region
        $region141: #{tpu_custom_call.1} parent=79 // pred_check
          %p758 = pneg %p757
        $region142: #{tpu_custom_call.1} parent=79 // pred_check_branch
          %760 = sbr.rel (%p758) target = $region144
        $region143: #{tpu_custom_call.1} parent=79 // pred_region
          %v761 = vld [vmem:[%s636] sm:$0xff]
          %v762 = vld [vmem:[#allocation14] sm:$0xff]
          %v763 = vld [vmem:[#allocation14 + $0x8] sm:$0xff]
          %v764 = vld [vmem:[#allocation14 + $0x10] sm:$0xff]
          %v765 = vld [vmem:[#allocation14 + $0x18] sm:$0xff]
          %v766 = vld [vmem:[#allocation16] sm:$0x1]
          %v768 = vlaneseq
          %v769 = vshrl.u32 %v768, 7
          %v770 = vsub.s32 0, %v769
          %v771 = vrot.slane %v766, %v770
          %vm773 = vcmask 261120
          %v775 = vsel %vm773, %v761, 0
          %777 = vmatprep.subr.mxu0 0.0
          %778 = vmatpush1.msra.mxu0 %v762
          %779 = vmatprep.subr.mxu0 0.0
          %780 = vmatpush1.msra.mxu0 %v763
          %781 = vmatprep.subr.mxu0 0.0
          %782 = vmatpush1.msra.mxu0 %v764
          %783 = vmatprep.subr.mxu0 0.0
          %784 = vmatpush1.msra.mxu0 %v765
          %785 = vmatprep.subr.mxu0 0.0
          %786 = vmatpush1.msra.mxu0 0.0
          %787 = vmatprep.subr.mxu0 0.0
          %788 = vmatpush1.msra.mxu0 0.0
          %789 = vmatprep.subr.mxu0 0.0
          %790 = vmatpush1.msra.mxu0 0.0
          %791 = vmatprep.subr.mxu0 0.0
          %792 = vmatpush1.msra.mxu0 0.0
          %793 = vmatprep.subr.mxu0 0.0
          %794 = vmatpush1.msra.mxu0 0.0
          %795 = vmatprep.subr.mxu0 0.0
          %796 = vmatpush1.msra.mxu0 0.0
          %797 = vmatprep.subr.mxu0 0.0
          %798 = vmatpush1.msra.mxu0 0.0
          %799 = vmatprep.subr.mxu0 0.0
          %800 = vmatpush1.msra.mxu0 0.0
          %801 = vmatprep.subr.mxu0 0.0
          %802 = vmatpush1.msra.mxu0 0.0
          %803 = vmatprep.subr.mxu0 0.0
          %804 = vmatpush1.msra.mxu0 0.0
          %805 = vmatprep.subr.mxu0 0.0
          %806 = vmatpush1.msra.mxu0 0.0
          %807 = vmatprep.subr.mxu0 0.0
          %808 = vmatpush1.msra.mxu0 0.0
          %809 = vmatprep.subr.mxu0 0.0
          %810 = vmatpush1.msra.mxu0 0.0
          %811 = vmatprep.subr.mxu0 0.0
          %812 = vmatpush1.msra.mxu0 0.0
          %813 = vmatprep.subr.mxu0 0.0
          %814 = vmatpush1.msra.mxu0 0.0
          %815 = vmatprep.subr.mxu0 0.0
          %816 = vmatpush1.msra.mxu0 0.0
          %817 = vmatprep.subr.mxu0 0.0
          %818 = vmatpush1.msra.mxu0 0.0
          %819 = vmatprep.subr.mxu0 0.0
          %820 = vmatpush1.msra.mxu0 0.0
          %821 = vmatprep.subr.mxu0 0.0
          %822 = vmatpush1.msra.mxu0 0.0
          %823 = vmatprep.subr.mxu0 0.0
          %824 = vmatpush1.msra.mxu0 0.0
          %825 = vmatprep.subr.mxu0 0.0
          %826 = vmatpush1.msra.mxu0 0.0
          %827 = vmatprep.subr.mxu0 0.0
          %828 = vmatpush1.msra.mxu0 0.0
          %829 = vmatprep.subr.mxu0 0.0
          %830 = vmatpush1.msra.mxu0 0.0
          %831 = vmatprep.subr.mxu0 0.0
          %832 = vmatpush1.msra.mxu0 0.0
          %833 = vmatprep.subr.mxu0 0.0
          %834 = vmatpush1.msra.mxu0 0.0
          %835 = vmatprep.subr.mxu0 0.0
          %836 = vmatpush1.msra.mxu0 0.0
          %837 = vmatprep.subr.mxu0 0.0
          %838 = vmatpush1.msra.mxu0 0.0
          %839 = vmatprep.subr.mxu0 0.0
          %840 = vmatpush1.msra.mxu0 0.0
          %841 = vmatprep.mubr.f32.mxu0 0.0
          %842 = vmatmul.mubr.f32.gmra.mrb[0].mxu0 %v775
          %v843 = vpop.f32.mrb[0].mxu0
          %v844 = vadd.f32 %v771, %v843
          %v845 = vpop.f32.mrb[0].mxu0
          %846 = vdwg.mxu0
          %vm847 = vcmask 392192
          %848 = vst.msk [vmem:[#allocation2] sm:$0xff] %vm847, %v844
          %v849 = vld [vmem:[#allocation17] sm:$0xff]
          %v850 = vld [vmem:[#allocation17 + $0x8] sm:$0xff]
          %v851 = vld [vmem:[#allocation17 + $0x10] sm:$0xff]
          %v852 = vld [vmem:[#allocation17 + $0x18] sm:$0xff]
          %v853 = vld [vmem:[#allocation19] sm:$0x1]
          %v855 = vlaneseq
          %v856 = vshrl.u32 %v855, 7
          %v857 = vsub.s32 0, %v856
          %v858 = vrot.slane %v853, %v857
          %860 = vmatprep.subr.mxu0 0.0
          %861 = vmatpush1.msra.mxu0 %v849
          %862 = vmatprep.subr.mxu0 0.0
          %863 = vmatpush1.msra.mxu0 %v850
          %864 = vmatprep.subr.mxu0 0.0
          %865 = vmatpush1.msra.mxu0 %v851
          %866 = vmatprep.subr.mxu0 0.0
          %867 = vmatpush1.msra.mxu0 %v852
          %868 = vmatprep.subr.mxu0 0.0
          %869 = vmatpush1.msra.mxu0 0.0
          %870 = vmatprep.subr.mxu0 0.0
          %871 = vmatpush1.msra.mxu0 0.0
          %872 = vmatprep.subr.mxu0 0.0
          %873 = vmatpush1.msra.mxu0 0.0
          %874 = vmatprep.subr.mxu0 0.0
          %875 = vmatpush1.msra.mxu0 0.0
          %876 = vmatprep.subr.mxu0 0.0
          %877 = vmatpush1.msra.mxu0 0.0
          %878 = vmatprep.subr.mxu0 0.0
          %879 = vmatpush1.msra.mxu0 0.0
          %880 = vmatprep.subr.mxu0 0.0
          %881 = vmatpush1.msra.mxu0 0.0
          %882 = vmatprep.subr.mxu0 0.0
          %883 = vmatpush1.msra.mxu0 0.0
          %884 = vmatprep.subr.mxu0 0.0
          %885 = vmatpush1.msra.mxu0 0.0
          %886 = vmatprep.subr.mxu0 0.0
          %887 = vmatpush1.msra.mxu0 0.0
          %888 = vmatprep.subr.mxu0 0.0
          %889 = vmatpush1.msra.mxu0 0.0
          %890 = vmatprep.subr.mxu0 0.0
          %891 = vmatpush1.msra.mxu0 0.0
          %892 = vmatprep.subr.mxu0 0.0
          %893 = vmatpush1.msra.mxu0 0.0
          %894 = vmatprep.subr.mxu0 0.0
          %895 = vmatpush1.msra.mxu0 0.0
          %896 = vmatprep.subr.mxu0 0.0
          %897 = vmatpush1.msra.mxu0 0.0
          %898 = vmatprep.subr.mxu0 0.0
          %899 = vmatpush1.msra.mxu0 0.0
          %900 = vmatprep.subr.mxu0 0.0
          %901 = vmatpush1.msra.mxu0 0.0
          %902 = vmatprep.subr.mxu0 0.0
          %903 = vmatpush1.msra.mxu0 0.0
          %904 = vmatprep.subr.mxu0 0.0
          %905 = vmatpush1.msra.mxu0 0.0
          %906 = vmatprep.subr.mxu0 0.0
          %907 = vmatpush1.msra.mxu0 0.0
          %908 = vmatprep.subr.mxu0 0.0
          %909 = vmatpush1.msra.mxu0 0.0
          %910 = vmatprep.subr.mxu0 0.0
          %911 = vmatpush1.msra.mxu0 0.0
          %912 = vmatprep.subr.mxu0 0.0
          %913 = vmatpush1.msra.mxu0 0.0
          %914 = vmatprep.subr.mxu0 0.0
          %915 = vmatpush1.msra.mxu0 0.0
          %916 = vmatprep.subr.mxu0 0.0
          %917 = vmatpush1.msra.mxu0 0.0
          %918 = vmatprep.subr.mxu0 0.0
          %919 = vmatpush1.msra.mxu0 0.0
          %920 = vmatprep.subr.mxu0 0.0
          %921 = vmatpush1.msra.mxu0 0.0
          %922 = vmatprep.subr.mxu0 0.0
          %923 = vmatpush1.msra.mxu0 0.0
          %924 = vmatprep.mubr.f32.mxu0 0.0
          %925 = vmatmul.mubr.f32.gmra.mrb[0].mxu0 %v775
          %v926 = vpop.f32.mrb[0].mxu0
          %v927 = vadd.f32 %v858, %v926
          %v928 = vpop.f32.mrb[0].mxu0
          %929 = vdwg.mxu0
          %930 = vst.msk [vmem:[#allocation3] sm:$0xff] %vm847, %v927
        $region144: #{tpu_custom_call.1} parent=79 // pred_fallthru
          _
        %s931 = smul.u32 %s46, 8
        %s932 = scalar_lea.vmem %s636, %s931 [#allocation5]
        %v933 = vld [vmem:[%s932] sm:$0xff]
        %v934 = vld [vmem:[%s653] sm:$0xff]
        %v935 = vld [vmem:[%s644] sm:$0x1]
        %vm936 = vcmp.gt.f32.partialorder %v935, 0.5
        %v937 = vsel %vm936, -1e+10, 0.0
        %v938 = vld [vmem:[#allocation11] sm:$0xff]
        %v939 = vld [vmem:[#allocation11 + $0x8] sm:$0xff]
        %v940 = vld [vmem:[#allocation11 + $0x10] sm:$0xff]
        %v941 = vld [vmem:[#allocation11 + $0x18] sm:$0xff]
        %v942 = vld [vmem:[#allocation13] sm:$0x1]
        %v944 = vlaneseq
        %v945 = vshrl.u32 %v944, 7
        %v946 = vsub.s32 0, %v945
        %v947 = vrot.slane %v942, %v946
        %vm949 = vcmask 261120
        %v951 = vsel %vm949, %v933, 0
        %953 = vmatprep.subr.mxu0 0.0
        %954 = vmatpush1.msra.mxu0 %v938
        %955 = vmatprep.subr.mxu0 0.0
        %956 = vmatpush1.msra.mxu0 %v939
        %957 = vmatprep.subr.mxu0 0.0
        %958 = vmatpush1.msra.mxu0 %v940
        %959 = vmatprep.subr.mxu0 0.0
        %960 = vmatpush1.msra.mxu0 %v941
        %961 = vmatprep.subr.mxu0 0.0
        %962 = vmatpush1.msra.mxu0 0.0
        %963 = vmatprep.subr.mxu0 0.0
        %964 = vmatpush1.msra.mxu0 0.0
        %965 = vmatprep.subr.mxu0 0.0
        %966 = vmatpush1.msra.mxu0 0.0
        %967 = vmatprep.subr.mxu0 0.0
        %968 = vmatpush1.msra.mxu0 0.0
        %969 = vmatprep.subr.mxu0 0.0
        %970 = vmatpush1.msra.mxu0 0.0
        %971 = vmatprep.subr.mxu0 0.0
        %972 = vmatpush1.msra.mxu0 0.0
        %973 = vmatprep.subr.mxu0 0.0
        %974 = vmatpush1.msra.mxu0 0.0
        %975 = vmatprep.subr.mxu0 0.0
        %976 = vmatpush1.msra.mxu0 0.0
        %977 = vmatprep.subr.mxu0 0.0
        %978 = vmatpush1.msra.mxu0 0.0
        %979 = vmatprep.subr.mxu0 0.0
        %980 = vmatpush1.msra.mxu0 0.0
        %981 = vmatprep.subr.mxu0 0.0
        %982 = vmatpush1.msra.mxu0 0.0
        %983 = vmatprep.subr.mxu0 0.0
        %984 = vmatpush1.msra.mxu0 0.0
        %985 = vmatprep.subr.mxu0 0.0
        %986 = vmatpush1.msra.mxu0 0.0
        %987 = vmatprep.subr.mxu0 0.0
        %988 = vmatpush1.msra.mxu0 0.0
        %989 = vmatprep.subr.mxu0 0.0
        %990 = vmatpush1.msra.mxu0 0.0
        %991 = vmatprep.subr.mxu0 0.0
        %992 = vmatpush1.msra.mxu0 0.0
        %993 = vmatprep.subr.mxu0 0.0
        %994 = vmatpush1.msra.mxu0 0.0
        %995 = vmatprep.subr.mxu0 0.0
        %996 = vmatpush1.msra.mxu0 0.0
        %997 = vmatprep.subr.mxu0 0.0
        %998 = vmatpush1.msra.mxu0 0.0
        %999 = vmatprep.subr.mxu0 0.0
        %1000 = vmatpush1.msra.mxu0 0.0
        %1001 = vmatprep.subr.mxu0 0.0
        %1002 = vmatpush1.msra.mxu0 0.0
        %1003 = vmatprep.subr.mxu0 0.0
        %1004 = vmatpush1.msra.mxu0 0.0
        %1005 = vmatprep.subr.mxu0 0.0
        %1006 = vmatpush1.msra.mxu0 0.0
        %1007 = vmatprep.subr.mxu0 0.0
        %1008 = vmatpush1.msra.mxu0 0.0
        %1009 = vmatprep.subr.mxu0 0.0
        %1010 = vmatpush1.msra.mxu0 0.0
        %1011 = vmatprep.subr.mxu0 0.0
        %1012 = vmatpush1.msra.mxu0 0.0
        %1013 = vmatprep.subr.mxu0 0.0
        %1014 = vmatpush1.msra.mxu0 0.0
        %1015 = vmatprep.subr.mxu0 0.0
        %1016 = vmatpush1.msra.mxu0 0.0
        %1017 = vmatprep.mubr.f32.mxu0 0.0
        %1018 = vmatmul.mubr.f32.gmra.mrb[0].mxu0 %v951
        %v1019 = vpop.f32.mrb[0].mxu0
        %v1020 = vadd.f32 %v947, %v1019
        %v1021 = vpop.f32.mrb[0].mxu0
        %1022 = vdwg.mxu0
        %v1023 = vld [vmem:[#allocation2] sm:$0xff]
        %v1024 = vld [vmem:[#allocation3] sm:$0xff]
        %v1026 = vlaneseq
        %v1027 = vshrl.u32 %v1026, 7
        %v1028 = vsub.s32 0, %v1027
        %v1029 = vrot.slane %v937, %v1028
        %vm1031 = vcmask 31744
        %v1033 = vsel %vm1031, %v1020, 0
        %v1036 = vsel %vm1031, %v1023, 0
        %1038 = vmatprep.subr.mxu0 0.0
        %1039 = vmatpush1.xpose.msra.mxu0 %v1036
        %1040 = vmatprep.subr.mxu0 0.0
        %1041 = vmatpush1.xpose.msra.mxu0 0.0
        %1042 = vmatprep.subr.mxu0 0.0
        %1043 = vmatpush1.xpose.msra.mxu0 0.0
        %1044 = vmatprep.subr.mxu0 0.0
        %1045 = vmatpush1.xpose.msra.mxu0 0.0
        %1046 = vmatprep.subr.mxu0 0.0
        %1047 = vmatpush1.xpose.msra.mxu0 0.0
        %1048 = vmatprep.subr.mxu0 0.0
        %1049 = vmatpush1.xpose.msra.mxu0 0.0
        %1050 = vmatprep.subr.mxu0 0.0
        %1051 = vmatpush1.xpose.msra.mxu0 0.0
        %1052 = vmatprep.subr.mxu0 0.0
        %1053 = vmatpush1.xpose.msra.mxu0 0.0
        %1054 = vmatprep.subr.mxu0 0.0
        %1055 = vmatpush1.xpose.msra.mxu0 0.0
        %1056 = vmatprep.subr.mxu0 0.0
        %1057 = vmatpush1.xpose.msra.mxu0 0.0
        %1058 = vmatprep.subr.mxu0 0.0
        %1059 = vmatpush1.xpose.msra.mxu0 0.0
        %1060 = vmatprep.subr.mxu0 0.0
        %1061 = vmatpush1.xpose.msra.mxu0 0.0
        %1062 = vmatprep.subr.mxu0 0.0
        %1063 = vmatpush1.xpose.msra.mxu0 0.0
        %1064 = vmatprep.subr.mxu0 0.0
        %1065 = vmatpush1.xpose.msra.mxu0 0.0
        %1066 = vmatprep.subr.mxu0 0.0
        %1067 = vmatpush1.xpose.msra.mxu0 0.0
        %1068 = vmatprep.subr.mxu0 0.0
        %1069 = vmatpush1.xpose.msra.mxu0 0.0
        %1070 = vmatprep.subr.mxu0 0.0
        %1071 = vmatpush1.xpose.msra.mxu0 0.0
        %1072 = vmatprep.subr.mxu0 0.0
        %1073 = vmatpush1.xpose.msra.mxu0 0.0
        %1074 = vmatprep.subr.mxu0 0.0
        %1075 = vmatpush1.xpose.msra.mxu0 0.0
        %1076 = vmatprep.subr.mxu0 0.0
        %1077 = vmatpush1.xpose.msra.mxu0 0.0
        %1078 = vmatprep.subr.mxu0 0.0
        %1079 = vmatpush1.xpose.msra.mxu0 0.0
        %1080 = vmatprep.subr.mxu0 0.0
        %1081 = vmatpush1.xpose.msra.mxu0 0.0
        %1082 = vmatprep.subr.mxu0 0.0
        %1083 = vmatpush1.xpose.msra.mxu0 0.0
        %1084 = vmatprep.subr.mxu0 0.0
        %1085 = vmatpush1.xpose.msra.mxu0 0.0
        %1086 = vmatprep.subr.mxu0 0.0
        %1087 = vmatpush1.xpose.msra.mxu0 0.0
        %1088 = vmatprep.subr.mxu0 0.0
        %1089 = vmatpush1.xpose.msra.mxu0 0.0
        %1090 = vmatprep.subr.mxu0 0.0
        %1091 = vmatpush1.xpose.msra.mxu0 0.0
        %1092 = vmatprep.subr.mxu0 0.0
        %1093 = vmatpush1.xpose.msra.mxu0 0.0
        %1094 = vmatprep.subr.mxu0 0.0
        %1095 = vmatpush1.xpose.msra.mxu0 0.0
        %1096 = vmatprep.subr.mxu0 0.0
        %1097 = vmatpush1.xpose.msra.mxu0 0.0
        %1098 = vmatprep.subr.mxu0 0.0
        %1099 = vmatpush1.xpose.msra.mxu0 0.0
        %1100 = vmatprep.subr.mxu0 0.0
        %1101 = vmatpush1.xpose.msra.mxu0 0.0
        %1102 = vmatprep.mubr.f32.mxu0 0.0
        %1103 = vmatmul.mubr.f32.gmra.mrb[0].mxu0 %v1033
        %v1104 = vpop.f32.mrb[0].mxu0
        %v1105 = vadd.f32 %v1029, %v1104
        %v1106 = vpop.f32.mrb[0].mxu0
        %1107 = vdwg.mxu0
        %vm1108 = vcmask 64512
        %v1109 = vsel %vm1108, %v1105, -inf
        %1110 = vmax.xlane.f32.xlu0 %v1109
        %v1111 = vpop.xlane.xlu0 %1110
        %v1112 = vsub.f32 %v1105, %v1111
        %v1113 = vmul.f32 %v1112, 1.442695
        %v1114 = vpow.pop %v1113
        %v1115 = vsel %vm1108, %v1114, 0.0
        %1116 = vadd.xlane.f32.xlu0 %v1115
        %v1117 = vpop.xlane.xlu0 %1116
        %v1118 = vrcp.pop %v1117
        %v1119 = vmul.f32 %v1114, %v1118
        %v1121 = vsel %vm1108, %v1119, 0
        %1123 = vmatprep.subr.mxu0 0.0
        %1124 = vmatpush1.msra.mxu0 %v1024
        %1125 = vmatprep.subr.mxu0 0.0
        %1126 = vmatpush1.msra.mxu0 0.0
        %1127 = vmatprep.subr.mxu0 0.0
        %1128 = vmatpush1.msra.mxu0 0.0
        %1129 = vmatprep.subr.mxu0 0.0
        %1130 = vmatpush1.msra.mxu0 0.0
        %1131 = vmatprep.subr.mxu0 0.0
        %1132 = vmatpush1.msra.mxu0 0.0
        %1133 = vmatprep.subr.mxu0 0.0
        %1134 = vmatpush1.msra.mxu0 0.0
        %1135 = vmatprep.subr.mxu0 0.0
        %1136 = vmatpush1.msra.mxu0 0.0
        %1137 = vmatprep.subr.mxu0 0.0
        %1138 = vmatpush1.msra.mxu0 0.0
        %1139 = vmatprep.subr.mxu0 0.0
        %1140 = vmatpush1.msra.mxu0 0.0
        %1141 = vmatprep.subr.mxu0 0.0
        %1142 = vmatpush1.msra.mxu0 0.0
        %1143 = vmatprep.subr.mxu0 0.0
        %1144 = vmatpush1.msra.mxu0 0.0
        %1145 = vmatprep.subr.mxu0 0.0
        %1146 = vmatpush1.msra.mxu0 0.0
        %1147 = vmatprep.subr.mxu0 0.0
        %1148 = vmatpush1.msra.mxu0 0.0
        %1149 = vmatprep.subr.mxu0 0.0
        %1150 = vmatpush1.msra.mxu0 0.0
        %1151 = vmatprep.subr.mxu0 0.0
        %1152 = vmatpush1.msra.mxu0 0.0
        %1153 = vmatprep.subr.mxu0 0.0
        %1154 = vmatpush1.msra.mxu0 0.0
        %1155 = vmatprep.subr.mxu0 0.0
        %1156 = vmatpush1.msra.mxu0 0.0
        %1157 = vmatprep.subr.mxu0 0.0
        %1158 = vmatpush1.msra.mxu0 0.0
        %1159 = vmatprep.subr.mxu0 0.0
        %1160 = vmatpush1.msra.mxu0 0.0
        %1161 = vmatprep.subr.mxu0 0.0
        %1162 = vmatpush1.msra.mxu0 0.0
        %1163 = vmatprep.subr.mxu0 0.0
        %1164 = vmatpush1.msra.mxu0 0.0
        %1165 = vmatprep.subr.mxu0 0.0
        %1166 = vmatpush1.msra.mxu0 0.0
        %1167 = vmatprep.subr.mxu0 0.0
        %1168 = vmatpush1.msra.mxu0 0.0
        %1169 = vmatprep.subr.mxu0 0.0
        %1170 = vmatpush1.msra.mxu0 0.0
        %1171 = vmatprep.subr.mxu0 0.0
        %1172 = vmatpush1.msra.mxu0 0.0
        %1173 = vmatprep.subr.mxu0 0.0
        %1174 = vmatpush1.msra.mxu0 0.0
        %1175 = vmatprep.subr.mxu0 0.0
        %1176 = vmatpush1.msra.mxu0 0.0
        %1177 = vmatprep.subr.mxu0 0.0
        %1178 = vmatpush1.msra.mxu0 0.0
        %1179 = vmatprep.subr.mxu0 0.0
        %1180 = vmatpush1.msra.mxu0 0.0
        %1181 = vmatprep.subr.mxu0 0.0
        %1182 = vmatpush1.msra.mxu0 0.0
        %1183 = vmatprep.subr.mxu0 0.0
        %1184 = vmatpush1.msra.mxu0 0.0
        %1185 = vmatprep.subr.mxu0 0.0
        %1186 = vmatpush1.msra.mxu0 0.0
        %1187 = vmatprep.mubr.f32.mxu0 0.0
        %1188 = vmatmul.mubr.f32.gmra.mrb[0].mxu0 %v1121
        %v1189 = vpop.f32.mrb[0].mxu0
        %v1190 = vadd.f32 0.0, %v1189
        %v1191 = vpop.f32.mrb[0].mxu0
        %1192 = vdwg.mxu0
        %1193 = vst.msk [vmem:[#allocation4] sm:$0xff] %vm1031, %v1190
        %1194 = vrot.lane.b32.xlu0 %v1020, 124
        %v1195 = vpop.permute.xlu0 %1194
        %1196 = vrot.lane.b32.xlu0 %v1023, 124
        %v1197 = vpop.permute.xlu0 %1196
        %v1198 = vsel %vm1031, %v1195, 0
        %v1200 = vsel %vm1031, %v1197, 0
        %1202 = vmatprep.subr.mxu0 0.0
        %1203 = vmatpush1.xpose.msra.mxu0 %v1200
        %1204 = vmatprep.subr.mxu0 0.0
        %1205 = vmatpush1.xpose.msra.mxu0 0.0
        %1206 = vmatprep.subr.mxu0 0.0
        %1207 = vmatpush1.xpose.msra.mxu0 0.0
        %1208 = vmatprep.subr.mxu0 0.0
        %1209 = vmatpush1.xpose.msra.mxu0 0.0
        %1210 = vmatprep.subr.mxu0 0.0
        %1211 = vmatpush1.xpose.msra.mxu0 0.0
        %1212 = vmatprep.subr.mxu0 0.0
        %1213 = vmatpush1.xpose.msra.mxu0 0.0
        %1214 = vmatprep.subr.mxu0 0.0
        %1215 = vmatpush1.xpose.msra.mxu0 0.0
        %1216 = vmatprep.subr.mxu0 0.0
        %1217 = vmatpush1.xpose.msra.mxu0 0.0
        %1218 = vmatprep.subr.mxu0 0.0
        %1219 = vmatpush1.xpose.msra.mxu0 0.0
        %1220 = vmatprep.subr.mxu0 0.0
        %1221 = vmatpush1.xpose.msra.mxu0 0.0
        %1222 = vmatprep.subr.mxu0 0.0
        %1223 = vmatpush1.xpose.msra.mxu0 0.0
        %1224 = vmatprep.subr.mxu0 0.0
        %1225 = vmatpush1.xpose.msra.mxu0 0.0
        %1226 = vmatprep.subr.mxu0 0.0
        %1227 = vmatpush1.xpose.msra.mxu0 0.0
        %1228 = vmatprep.subr.mxu0 0.0
        %1229 = vmatpush1.xpose.msra.mxu0 0.0
        %1230 = vmatprep.subr.mxu0 0.0
        %1231 = vmatpush1.xpose.msra.mxu0 0.0
        %1232 = vmatprep.subr.mxu0 0.0
        %1233 = vmatpush1.xpose.msra.mxu0 0.0
        %1234 = vmatprep.subr.mxu0 0.0
        %1235 = vmatpush1.xpose.msra.mxu0 0.0
        %1236 = vmatprep.subr.mxu0 0.0
        %1237 = vmatpush1.xpose.msra.mxu0 0.0
        %1238 = vmatprep.subr.mxu0 0.0
        %1239 = vmatpush1.xpose.msra.mxu0 0.0
        %1240 = vmatprep.subr.mxu0 0.0
        %1241 = vmatpush1.xpose.msra.mxu0 0.0
        %1242 = vmatprep.subr.mxu0 0.0
        %1243 = vmatpush1.xpose.msra.mxu0 0.0
        %1244 = vmatprep.subr.mxu0 0.0
        %1245 = vmatpush1.xpose.msra.mxu0 0.0
        %1246 = vmatprep.subr.mxu0 0.0
        %1247 = vmatpush1.xpose.msra.mxu0 0.0
        %1248 = vmatprep.subr.mxu0 0.0
        %1249 = vmatpush1.xpose.msra.mxu0 0.0
        %1250 = vmatprep.subr.mxu0 0.0
        %1251 = vmatpush1.xpose.msra.mxu0 0.0
        %1252 = vmatprep.subr.mxu0 0.0
        %1253 = vmatpush1.xpose.msra.mxu0 0.0
        %1254 = vmatprep.subr.mxu0 0.0
        %1255 = vmatpush1.xpose.msra.mxu0 0.0
        %1256 = vmatprep.subr.mxu0 0.0
        %1257 = vmatpush1.xpose.msra.mxu0 0.0
        %1258 = vmatprep.subr.mxu0 0.0
        %1259 = vmatpush1.xpose.msra.mxu0 0.0
        %1260 = vmatprep.subr.mxu0 0.0
        %1261 = vmatpush1.xpose.msra.mxu0 0.0
        %1262 = vmatprep.subr.mxu0 0.0
        %1263 = vmatpush1.xpose.msra.mxu0 0.0
        %1264 = vmatprep.subr.mxu0 0.0
        %1265 = vmatpush1.xpose.msra.mxu0 0.0
        %1266 = vmatprep.mubr.f32.mxu0 0.0
        %1267 = vmatmul.mubr.f32.gmra.mrb[0].mxu0 %v1198
        %v1268 = vpop.f32.mrb[0].mxu0
        %v1269 = vadd.f32 %v1029, %v1268
        %v1270 = vpop.f32.mrb[0].mxu0
        %1271 = vdwg.mxu0
        %v1272 = vsel %vm1108, %v1269, -inf
        %1273 = vmax.xlane.f32.xlu0 %v1272
        %v1274 = vpop.xlane.xlu0 %1273
        %v1275 = vsub.f32 %v1269, %v1274
        %v1276 = vmul.f32 %v1275, 1.442695
        %v1277 = vpow.pop %v1276
        %v1278 = vsel %vm1108, %v1277, 0.0
        %1279 = vadd.xlane.f32.xlu0 %v1278
        %v1280 = vpop.xlane.xlu0 %1279
        %v1281 = vrcp.pop %v1280
        %v1282 = vmul.f32 %v1277, %v1281
        %1284 = vrot.lane.b32.xlu0 %v1024, 124
        %v1285 = vpop.permute.xlu0 %1284
        %v1288 = vsel %vm1108, %v1282, 0
        %1290 = vmatprep.subr.mxu0 0.0
        %1291 = vmatpush1.msra.mxu0 %v1285
        %1292 = vmatprep.subr.mxu0 0.0
        %1293 = vmatpush1.msra.mxu0 0.0
        %1294 = vmatprep.subr.mxu0 0.0
        %1295 = vmatpush1.msra.mxu0 0.0
        %1296 = vmatprep.subr.mxu0 0.0
        %1297 = vmatpush1.msra.mxu0 0.0
        %1298 = vmatprep.subr.mxu0 0.0
        %1299 = vmatpush1.msra.mxu0 0.0
        %1300 = vmatprep.subr.mxu0 0.0
        %1301 = vmatpush1.msra.mxu0 0.0
        %1302 = vmatprep.subr.mxu0 0.0
        %1303 = vmatpush1.msra.mxu0 0.0
        %1304 = vmatprep.subr.mxu0 0.0
        %1305 = vmatpush1.msra.mxu0 0.0
        %1306 = vmatprep.subr.mxu0 0.0
        %1307 = vmatpush1.msra.mxu0 0.0
        %1308 = vmatprep.subr.mxu0 0.0
        %1309 = vmatpush1.msra.mxu0 0.0
        %1310 = vmatprep.subr.mxu0 0.0
        %1311 = vmatpush1.msra.mxu0 0.0
        %1312 = vmatprep.subr.mxu0 0.0
        %1313 = vmatpush1.msra.mxu0 0.0
        %1314 = vmatprep.subr.mxu0 0.0
        %1315 = vmatpush1.msra.mxu0 0.0
        %1316 = vmatprep.subr.mxu0 0.0
        %1317 = vmatpush1.msra.mxu0 0.0
        %1318 = vmatprep.subr.mxu0 0.0
        %1319 = vmatpush1.msra.mxu0 0.0
        %1320 = vmatprep.subr.mxu0 0.0
        %1321 = vmatpush1.msra.mxu0 0.0
        %1322 = vmatprep.subr.mxu0 0.0
        %1323 = vmatpush1.msra.mxu0 0.0
        %1324 = vmatprep.subr.mxu0 0.0
        %1325 = vmatpush1.msra.mxu0 0.0
        %1326 = vmatprep.subr.mxu0 0.0
        %1327 = vmatpush1.msra.mxu0 0.0
        %1328 = vmatprep.subr.mxu0 0.0
        %1329 = vmatpush1.msra.mxu0 0.0
        %1330 = vmatprep.subr.mxu0 0.0
        %1331 = vmatpush1.msra.mxu0 0.0
        %1332 = vmatprep.subr.mxu0 0.0
        %1333 = vmatpush1.msra.mxu0 0.0
        %1334 = vmatprep.subr.mxu0 0.0
        %1335 = vmatpush1.msra.mxu0 0.0
        %1336 = vmatprep.subr.mxu0 0.0
        %1337 = vmatpush1.msra.mxu0 0.0
        %1338 = vmatprep.subr.mxu0 0.0
        %1339 = vmatpush1.msra.mxu0 0.0
        %1340 = vmatprep.subr.mxu0 0.0
        %1341 = vmatpush1.msra.mxu0 0.0
        %1342 = vmatprep.subr.mxu0 0.0
        %1343 = vmatpush1.msra.mxu0 0.0
        %1344 = vmatprep.subr.mxu0 0.0
        %1345 = vmatpush1.msra.mxu0 0.0
        %1346 = vmatprep.subr.mxu0 0.0
        %1347 = vmatpush1.msra.mxu0 0.0
        %1348 = vmatprep.subr.mxu0 0.0
        %1349 = vmatpush1.msra.mxu0 0.0
        %1350 = vmatprep.subr.mxu0 0.0
        %1351 = vmatpush1.msra.mxu0 0.0
        %1352 = vmatprep.subr.mxu0 0.0
        %1353 = vmatpush1.msra.mxu0 0.0
        %1354 = vmatprep.mubr.f32.mxu0 0.0
        %1355 = vmatmul.mubr.f32.gmra.mrb[0].mxu0 %v1288
        %v1356 = vpop.f32.mrb[0].mxu0
        %v1357 = vadd.f32 0.0, %v1356
        %v1358 = vpop.f32.mrb[0].mxu0
        %1359 = vdwg.mxu0
        %1361 = vrot.lane.b32.xlu0 %v1357, 4
        %v1362 = vpop.permute.xlu0 %1361
        %vm1364 = vcmask 64544
        %1365 = vst.msk [vmem:[#allocation4] sm:$0xff] %vm1364, %v1362
        %1366 = vrot.lane.b32.xlu0 %v1020, 120
        %v1367 = vpop.permute.xlu0 %1366
        %1368 = vrot.lane.b32.xlu0 %v1023, 120
        %v1369 = vpop.permute.xlu0 %1368
        %v1370 = vsel %vm1031, %v1367, 0
        %v1372 = vsel %vm1031, %v1369, 0
        %1374 = vmatprep.subr.mxu0 0.0
        %1375 = vmatpush1.xpose.msra.mxu0 %v1372
        %1376 = vmatprep.subr.mxu0 0.0
        %1377 = vmatpush1.xpose.msra.mxu0 0.0
        %1378 = vmatprep.subr.mxu0 0.0
        %1379 = vmatpush1.xpose.msra.mxu0 0.0
        %1380 = vmatprep.subr.mxu0 0.0
        %1381 = vmatpush1.xpose.msra.mxu0 0.0
        %1382 = vmatprep.subr.mxu0 0.0
        %1383 = vmatpush1.xpose.msra.mxu0 0.0
        %1384 = vmatprep.subr.mxu0 0.0
        %1385 = vmatpush1.xpose.msra.mxu0 0.0
        %1386 = vmatprep.subr.mxu0 0.0
        %1387 = vmatpush1.xpose.msra.mxu0 0.0
        %1388 = vmatprep.subr.mxu0 0.0
        %1389 = vmatpush1.xpose.msra.mxu0 0.0
        %1390 = vmatprep.subr.mxu0 0.0
        %1391 = vmatpush1.xpose.msra.mxu0 0.0
        %1392 = vmatprep.subr.mxu0 0.0
        %1393 = vmatpush1.xpose.msra.mxu0 0.0
        %1394 = vmatprep.subr.mxu0 0.0
        %1395 = vmatpush1.xpose.msra.mxu0 0.0
        %1396 = vmatprep.subr.mxu0 0.0
        %1397 = vmatpush1.xpose.msra.mxu0 0.0
        %1398 = vmatprep.subr.mxu0 0.0
        %1399 = vmatpush1.xpose.msra.mxu0 0.0
        %1400 = vmatprep.subr.mxu0 0.0
        %1401 = vmatpush1.xpose.msra.mxu0 0.0
        %1402 = vmatprep.subr.mxu0 0.0
        %1403 = vmatpush1.xpose.msra.mxu0 0.0
        %1404 = vmatprep.subr.mxu0 0.0
        %1405 = vmatpush1.xpose.msra.mxu0 0.0
        %1406 = vmatprep.subr.mxu0 0.0
        %1407 = vmatpush1.xpose.msra.mxu0 0.0
        %1408 = vmatprep.subr.mxu0 0.0
        %1409 = vmatpush1.xpose.msra.mxu0 0.0
        %1410 = vmatprep.subr.mxu0 0.0
        %1411 = vmatpush1.xpose.msra.mxu0 0.0
        %1412 = vmatprep.subr.mxu0 0.0
        %1413 = vmatpush1.xpose.msra.mxu0 0.0
        %1414 = vmatprep.subr.mxu0 0.0
        %1415 = vmatpush1.xpose.msra.mxu0 0.0
        %1416 = vmatprep.subr.mxu0 0.0
        %1417 = vmatpush1.xpose.msra.mxu0 0.0
        %1418 = vmatprep.subr.mxu0 0.0
        %1419 = vmatpush1.xpose.msra.mxu0 0.0
        %1420 = vmatprep.subr.mxu0 0.0
        %1421 = vmatpush1.xpose.msra.mxu0 0.0
        %1422 = vmatprep.subr.mxu0 0.0
        %1423 = vmatpush1.xpose.msra.mxu0 0.0
        %1424 = vmatprep.subr.mxu0 0.0
        %1425 = vmatpush1.xpose.msra.mxu0 0.0
        %1426 = vmatprep.subr.mxu0 0.0
        %1427 = vmatpush1.xpose.msra.mxu0 0.0
        %1428 = vmatprep.subr.mxu0 0.0
        %1429 = vmatpush1.xpose.msra.mxu0 0.0
        %1430 = vmatprep.subr.mxu0 0.0
        %1431 = vmatpush1.xpose.msra.mxu0 0.0
        %1432 = vmatprep.subr.mxu0 0.0
        %1433 = vmatpush1.xpose.msra.mxu0 0.0
        %1434 = vmatprep.subr.mxu0 0.0
        %1435 = vmatpush1.xpose.msra.mxu0 0.0
        %1436 = vmatprep.subr.mxu0 0.0
        %1437 = vmatpush1.xpose.msra.mxu0 0.0
        %1438 = vmatprep.mubr.f32.mxu0 0.0
        %1439 = vmatmul.mubr.f32.gmra.mrb[0].mxu0 %v1370
        %v1440 = vpop.f32.mrb[0].mxu0
        %v1441 = vadd.f32 %v1029, %v1440
        %v1442 = vpop.f32.mrb[0].mxu0
        %1443 = vdwg.mxu0
        %v1444 = vsel %vm1108, %v1441, -inf
        %1445 = vmax.xlane.f32.xlu0 %v1444
        %v1446 = vpop.xlane.xlu0 %1445
        %v1447 = vsub.f32 %v1441, %v1446
        %v1448 = vmul.f32 %v1447, 1.442695
        %v1449 = vpow.pop %v1448
        %v1450 = vsel %vm1108, %v1449, 0.0
        %1451 = vadd.xlane.f32.xlu0 %v1450
        %v1452 = vpop.xlane.xlu0 %1451
        %v1453 = vrcp.pop %v1452
        %v1454 = vmul.f32 %v1449, %v1453
        %1455 = vrot.lane.b32.xlu0 %v1024, 120
        %v1456 = vpop.permute.xlu0 %1455
        %v1459 = vsel %vm1108, %v1454, 0
        %1461 = vmatprep.subr.mxu0 0.0
        %1462 = vmatpush1.msra.mxu0 %v1456
        %1463 = vmatprep.subr.mxu0 0.0
        %1464 = vmatpush1.msra.mxu0 0.0
        %1465 = vmatprep.subr.mxu0 0.0
        %1466 = vmatpush1.msra.mxu0 0.0
        %1467 = vmatprep.subr.mxu0 0.0
        %1468 = vmatpush1.msra.mxu0 0.0
        %1469 = vmatprep.subr.mxu0 0.0
        %1470 = vmatpush1.msra.mxu0 0.0
        %1471 = vmatprep.subr.mxu0 0.0
        %1472 = vmatpush1.msra.mxu0 0.0
        %1473 = vmatprep.subr.mxu0 0.0
        %1474 = vmatpush1.msra.mxu0 0.0
        %1475 = vmatprep.subr.mxu0 0.0
        %1476 = vmatpush1.msra.mxu0 0.0
        %1477 = vmatprep.subr.mxu0 0.0
        %1478 = vmatpush1.msra.mxu0 0.0
        %1479 = vmatprep.subr.mxu0 0.0
        %1480 = vmatpush1.msra.mxu0 0.0
        %1481 = vmatprep.subr.mxu0 0.0
        %1482 = vmatpush1.msra.mxu0 0.0
        %1483 = vmatprep.subr.mxu0 0.0
        %1484 = vmatpush1.msra.mxu0 0.0
        %1485 = vmatprep.subr.mxu0 0.0
        %1486 = vmatpush1.msra.mxu0 0.0
        %1487 = vmatprep.subr.mxu0 0.0
        %1488 = vmatpush1.msra.mxu0 0.0
        %1489 = vmatprep.subr.mxu0 0.0
        %1490 = vmatpush1.msra.mxu0 0.0
        %1491 = vmatprep.subr.mxu0 0.0
        %1492 = vmatpush1.msra.mxu0 0.0
        %1493 = vmatprep.subr.mxu0 0.0
        %1494 = vmatpush1.msra.mxu0 0.0
        %1495 = vmatprep.subr.mxu0 0.0
        %1496 = vmatpush1.msra.mxu0 0.0
        %1497 = vmatprep.subr.mxu0 0.0
        %1498 = vmatpush1.msra.mxu0 0.0
        %1499 = vmatprep.subr.mxu0 0.0
        %1500 = vmatpush1.msra.mxu0 0.0
        %1501 = vmatprep.subr.mxu0 0.0
        %1502 = vmatpush1.msra.mxu0 0.0
        %1503 = vmatprep.subr.mxu0 0.0
        %1504 = vmatpush1.msra.mxu0 0.0
        %1505 = vmatprep.subr.mxu0 0.0
        %1506 = vmatpush1.msra.mxu0 0.0
        %1507 = vmatprep.subr.mxu0 0.0
        %1508 = vmatpush1.msra.mxu0 0.0
        %1509 = vmatprep.subr.mxu0 0.0
        %1510 = vmatpush1.msra.mxu0 0.0
        %1511 = vmatprep.subr.mxu0 0.0
        %1512 = vmatpush1.msra.mxu0 0.0
        %1513 = vmatprep.subr.mxu0 0.0
        %1514 = vmatpush1.msra.mxu0 0.0
        %1515 = vmatprep.subr.mxu0 0.0
        %1516 = vmatpush1.msra.mxu0 0.0
        %1517 = vmatprep.subr.mxu0 0.0
        %1518 = vmatpush1.msra.mxu0 0.0
        %1519 = vmatprep.subr.mxu0 0.0
        %1520 = vmatpush1.msra.mxu0 0.0
        %1521 = vmatprep.subr.mxu0 0.0
        %1522 = vmatpush1.msra.mxu0 0.0
        %1523 = vmatprep.subr.mxu0 0.0
        %1524 = vmatpush1.msra.mxu0 0.0
        %1525 = vmatprep.mubr.f32.mxu0 0.0
        %1526 = vmatmul.mubr.f32.gmra.mrb[0].mxu0 %v1459
        %v1527 = vpop.f32.mrb[0].mxu0
        %v1528 = vadd.f32 0.0, %v1527
        %v1529 = vpop.f32.mrb[0].mxu0
        %1530 = vdwg.mxu0
        %1532 = vrot.lane.b32.xlu0 %v1528, 8
        %v1533 = vpop.permute.xlu0 %1532
        %vm1535 = vcmask 97344
        %1536 = vst.msk [vmem:[#allocation4] sm:$0xff] %vm1535, %v1533
        %1537 = vrot.lane.b32.xlu0 %v1020, 116
        %v1538 = vpop.permute.xlu0 %1537
        %1539 = vrot.lane.b32.xlu0 %v1023, 116
        %v1540 = vpop.permute.xlu0 %1539
        %v1541 = vsel %vm1031, %v1538, 0
        %v1543 = vsel %vm1031, %v1540, 0
        %1545 = vmatprep.subr.mxu0 0.0
        %1546 = vmatpush1.xpose.msra.mxu0 %v1543
        %1547 = vmatprep.subr.mxu0 0.0
        %1548 = vmatpush1.xpose.msra.mxu0 0.0
        %1549 = vmatprep.subr.mxu0 0.0
        %1550 = vmatpush1.xpose.msra.mxu0 0.0
        %1551 = vmatprep.subr.mxu0 0.0
        %1552 = vmatpush1.xpose.msra.mxu0 0.0
        %1553 = vmatprep.subr.mxu0 0.0
        %1554 = vmatpush1.xpose.msra.mxu0 0.0
        %1555 = vmatprep.subr.mxu0 0.0
        %1556 = vmatpush1.xpose.msra.mxu0 0.0
        %1557 = vmatprep.subr.mxu0 0.0
        %1558 = vmatpush1.xpose.msra.mxu0 0.0
        %1559 = vmatprep.subr.mxu0 0.0
        %1560 = vmatpush1.xpose.msra.mxu0 0.0
        %1561 = vmatprep.subr.mxu0 0.0
        %1562 = vmatpush1.xpose.msra.mxu0 0.0
        %1563 = vmatprep.subr.mxu0 0.0
        %1564 = vmatpush1.xpose.msra.mxu0 0.0
        %1565 = vmatprep.subr.mxu0 0.0
        %1566 = vmatpush1.xpose.msra.mxu0 0.0
        %1567 = vmatprep.subr.mxu0 0.0
        %1568 = vmatpush1.xpose.msra.mxu0 0.0
        %1569 = vmatprep.subr.mxu0 0.0
        %1570 = vmatpush1.xpose.msra.mxu0 0.0
        %1571 = vmatprep.subr.mxu0 0.0
        %1572 = vmatpush1.xpose.msra.mxu0 0.0
        %1573 = vmatprep.subr.mxu0 0.0
        %1574 = vmatpush1.xpose.msra.mxu0 0.0
        %1575 = vmatprep.subr.mxu0 0.0
        %1576 = vmatpush1.xpose.msra.mxu0 0.0
        %1577 = vmatprep.subr.mxu0 0.0
        %1578 = vmatpush1.xpose.msra.mxu0 0.0
        %1579 = vmatprep.subr.mxu0 0.0
        %1580 = vmatpush1.xpose.msra.mxu0 0.0
        %1581 = vmatprep.subr.mxu0 0.0
        %1582 = vmatpush1.xpose.msra.mxu0 0.0
        %1583 = vmatprep.subr.mxu0 0.0
        %1584 = vmatpush1.xpose.msra.mxu0 0.0
        %1585 = vmatprep.subr.mxu0 0.0
        %1586 = vmatpush1.xpose.msra.mxu0 0.0
        %1587 = vmatprep.subr.mxu0 0.0
        %1588 = vmatpush1.xpose.msra.mxu0 0.0
        %1589 = vmatprep.subr.mxu0 0.0
        %1590 = vmatpush1.xpose.msra.mxu0 0.0
        %1591 = vmatprep.subr.mxu0 0.0
        %1592 = vmatpush1.xpose.msra.mxu0 0.0
        %1593 = vmatprep.subr.mxu0 0.0
        %1594 = vmatpush1.xpose.msra.mxu0 0.0
        %1595 = vmatprep.subr.mxu0 0.0
        %1596 = vmatpush1.xpose.msra.mxu0 0.0
        %1597 = vmatprep.subr.mxu0 0.0
        %1598 = vmatpush1.xpose.msra.mxu0 0.0
        %1599 = vmatprep.subr.mxu0 0.0
        %1600 = vmatpush1.xpose.msra.mxu0 0.0
        %1601 = vmatprep.subr.mxu0 0.0
        %1602 = vmatpush1.xpose.msra.mxu0 0.0
        %1603 = vmatprep.subr.mxu0 0.0
        %1604 = vmatpush1.xpose.msra.mxu0 0.0
        %1605 = vmatprep.subr.mxu0 0.0
        %1606 = vmatpush1.xpose.msra.mxu0 0.0
        %1607 = vmatprep.subr.mxu0 0.0
        %1608 = vmatpush1.xpose.msra.mxu0 0.0
        %1609 = vmatprep.mubr.f32.mxu0 0.0
        %1610 = vmatmul.mubr.f32.gmra.mrb[0].mxu0 %v1541
        %v1611 = vpop.f32.mrb[0].mxu0
        %v1612 = vadd.f32 %v1029, %v1611
        %v1613 = vpop.f32.mrb[0].mxu0
        %1614 = vdwg.mxu0
        %v1615 = vsel %vm1108, %v1612, -inf
        %1616 = vmax.xlane.f32.xlu0 %v1615
        %v1617 = vpop.xlane.xlu0 %1616
        %v1618 = vsub.f32 %v1612, %v1617
        %v1619 = vmul.f32 %v1618, 1.442695
        %v1620 = vpow.pop %v1619
        %v1621 = vsel %vm1108, %v1620, 0.0
        %1622 = vadd.xlane.f32.xlu0 %v1621
        %v1623 = vpop.xlane.xlu0 %1622
        %v1624 = vrcp.pop %v1623
        %v1625 = vmul.f32 %v1620, %v1624
        %1626 = vrot.lane.b32.xlu0 %v1024, 116
        %v1627 = vpop.permute.xlu0 %1626
        %v1630 = vsel %vm1108, %v1625, 0
        %1632 = vmatprep.subr.mxu0 0.0
        %1633 = vmatpush1.msra.mxu0 %v1627
        %1634 = vmatprep.subr.mxu0 0.0
        %1635 = vmatpush1.msra.mxu0 0.0
        %1636 = vmatprep.subr.mxu0 0.0
        %1637 = vmatpush1.msra.mxu0 0.0
        %1638 = vmatprep.subr.mxu0 0.0
        %1639 = vmatpush1.msra.mxu0 0.0
        %1640 = vmatprep.subr.mxu0 0.0
        %1641 = vmatpush1.msra.mxu0 0.0
        %1642 = vmatprep.subr.mxu0 0.0
        %1643 = vmatpush1.msra.mxu0 0.0
        %1644 = vmatprep.subr.mxu0 0.0
        %1645 = vmatpush1.msra.mxu0 0.0
        %1646 = vmatprep.subr.mxu0 0.0
        %1647 = vmatpush1.msra.mxu0 0.0
        %1648 = vmatprep.subr.mxu0 0.0
        %1649 = vmatpush1.msra.mxu0 0.0
        %1650 = vmatprep.subr.mxu0 0.0
        %1651 = vmatpush1.msra.mxu0 0.0
        %1652 = vmatprep.subr.mxu0 0.0
        %1653 = vmatpush1.msra.mxu0 0.0
        %1654 = vmatprep.subr.mxu0 0.0
        %1655 = vmatpush1.msra.mxu0 0.0
        %1656 = vmatprep.subr.mxu0 0.0
        %1657 = vmatpush1.msra.mxu0 0.0
        %1658 = vmatprep.subr.mxu0 0.0
        %1659 = vmatpush1.msra.mxu0 0.0
        %1660 = vmatprep.subr.mxu0 0.0
        %1661 = vmatpush1.msra.mxu0 0.0
        %1662 = vmatprep.subr.mxu0 0.0
        %1663 = vmatpush1.msra.mxu0 0.0
        %1664 = vmatprep.subr.mxu0 0.0
        %1665 = vmatpush1.msra.mxu0 0.0
        %1666 = vmatprep.subr.mxu0 0.0
        %1667 = vmatpush1.msra.mxu0 0.0
        %1668 = vmatprep.subr.mxu0 0.0
        %1669 = vmatpush1.msra.mxu0 0.0
        %1670 = vmatprep.subr.mxu0 0.0
        %1671 = vmatpush1.msra.mxu0 0.0
        %1672 = vmatprep.subr.mxu0 0.0
        %1673 = vmatpush1.msra.mxu0 0.0
        %1674 = vmatprep.subr.mxu0 0.0
        %1675 = vmatpush1.msra.mxu0 0.0
        %1676 = vmatprep.subr.mxu0 0.0
        %1677 = vmatpush1.msra.mxu0 0.0
        %1678 = vmatprep.subr.mxu0 0.0
        %1679 = vmatpush1.msra.mxu0 0.0
        %1680 = vmatprep.subr.mxu0 0.0
        %1681 = vmatpush1.msra.mxu0 0.0
        %1682 = vmatprep.subr.mxu0 0.0
        %1683 = vmatpush1.msra.mxu0 0.0
        %1684 = vmatprep.subr.mxu0 0.0
        %1685 = vmatpush1.msra.mxu0 0.0
        %1686 = vmatprep.subr.mxu0 0.0
        %1687 = vmatpush1.msra.mxu0 0.0
        %1688 = vmatprep.subr.mxu0 0.0
        %1689 = vmatpush1.msra.mxu0 0.0
        %1690 = vmatprep.subr.mxu0 0.0
        %1691 = vmatpush1.msra.mxu0 0.0
        %1692 = vmatprep.subr.mxu0 0.0
        %1693 = vmatpush1.msra.mxu0 0.0
        %1694 = vmatprep.subr.mxu0 0.0
        %1695 = vmatpush1.msra.mxu0 0.0
        %1696 = vmatprep.mubr.f32.mxu0 0.0
        %1697 = vmatmul.mubr.f32.gmra.mrb[0].mxu0 %v1630
        %v1698 = vpop.f32.mrb[0].mxu0
        %v1699 = vadd.f32 0.0, %v1698
        %v1700 = vpop.f32.mrb[0].mxu0
        %1701 = vdwg.mxu0
        %1703 = vrot.lane.b32.xlu0 %v1699, 12
        %v1704 = vpop.permute.xlu0 %1703
        %vm1706 = vcmask 130144
        %1707 = vst.msk [vmem:[#allocation4] sm:$0xff] %vm1706, %v1704
        %1708 = vrot.lane.b32.xlu0 %v1020, 112
        %v1709 = vpop.permute.xlu0 %1708
        %1710 = vrot.lane.b32.xlu0 %v1023, 112
        %v1711 = vpop.permute.xlu0 %1710
        %v1712 = vsel %vm1031, %v1709, 0
        %v1714 = vsel %vm1031, %v1711, 0
        %1716 = vmatprep.subr.mxu0 0.0
        %1717 = vmatpush1.xpose.msra.mxu0 %v1714
        %1718 = vmatprep.subr.mxu0 0.0
        %1719 = vmatpush1.xpose.msra.mxu0 0.0
        %1720 = vmatprep.subr.mxu0 0.0
        %1721 = vmatpush1.xpose.msra.mxu0 0.0
        %1722 = vmatprep.subr.mxu0 0.0
        %1723 = vmatpush1.xpose.msra.mxu0 0.0
        %1724 = vmatprep.subr.mxu0 0.0
        %1725 = vmatpush1.xpose.msra.mxu0 0.0
        %1726 = vmatprep.subr.mxu0 0.0
        %1727 = vmatpush1.xpose.msra.mxu0 0.0
        %1728 = vmatprep.subr.mxu0 0.0
        %1729 = vmatpush1.xpose.msra.mxu0 0.0
        %1730 = vmatprep.subr.mxu0 0.0
        %1731 = vmatpush1.xpose.msra.mxu0 0.0
        %1732 = vmatprep.subr.mxu0 0.0
        %1733 = vmatpush1.xpose.msra.mxu0 0.0
        %1734 = vmatprep.subr.mxu0 0.0
        %1735 = vmatpush1.xpose.msra.mxu0 0.0
        %1736 = vmatprep.subr.mxu0 0.0
        %1737 = vmatpush1.xpose.msra.mxu0 0.0
        %1738 = vmatprep.subr.mxu0 0.0
        %1739 = vmatpush1.xpose.msra.mxu0 0.0
        %1740 = vmatprep.subr.mxu0 0.0
        %1741 = vmatpush1.xpose.msra.mxu0 0.0
        %1742 = vmatprep.subr.mxu0 0.0
        %1743 = vmatpush1.xpose.msra.mxu0 0.0
        %1744 = vmatprep.subr.mxu0 0.0
        %1745 = vmatpush1.xpose.msra.mxu0 0.0
        %1746 = vmatprep.subr.mxu0 0.0
        %1747 = vmatpush1.xpose.msra.mxu0 0.0
        %1748 = vmatprep.subr.mxu0 0.0
        %1749 = vmatpush1.xpose.msra.mxu0 0.0
        %1750 = vmatprep.subr.mxu0 0.0
        %1751 = vmatpush1.xpose.msra.mxu0 0.0
        %1752 = vmatprep.subr.mxu0 0.0
        %1753 = vmatpush1.xpose.msra.mxu0 0.0
        %1754 = vmatprep.subr.mxu0 0.0
        %1755 = vmatpush1.xpose.msra.mxu0 0.0
        %1756 = vmatprep.subr.mxu0 0.0
        %1757 = vmatpush1.xpose.msra.mxu0 0.0
        %1758 = vmatprep.subr.mxu0 0.0
        %1759 = vmatpush1.xpose.msra.mxu0 0.0
        %1760 = vmatprep.subr.mxu0 0.0
        %1761 = vmatpush1.xpose.msra.mxu0 0.0
        %1762 = vmatprep.subr.mxu0 0.0
        %1763 = vmatpush1.xpose.msra.mxu0 0.0
        %1764 = vmatprep.subr.mxu0 0.0
        %1765 = vmatpush1.xpose.msra.mxu0 0.0
        %1766 = vmatprep.subr.mxu0 0.0
        %1767 = vmatpush1.xpose.msra.mxu0 0.0
        %1768 = vmatprep.subr.mxu0 0.0
        %1769 = vmatpush1.xpose.msra.mxu0 0.0
        %1770 = vmatprep.subr.mxu0 0.0
        %1771 = vmatpush1.xpose.msra.mxu0 0.0
        %1772 = vmatprep.subr.mxu0 0.0
        %1773 = vmatpush1.xpose.msra.mxu0 0.0
        %1774 = vmatprep.subr.mxu0 0.0
        %1775 = vmatpush1.xpose.msra.mxu0 0.0
        %1776 = vmatprep.subr.mxu0 0.0
        %1777 = vmatpush1.xpose.msra.mxu0 0.0
        %1778 = vmatprep.subr.mxu0 0.0
        %1779 = vmatpush1.xpose.msra.mxu0 0.0
        %1780 = vmatprep.mubr.f32.mxu0 0.0
        %1781 = vmatmul.mubr.f32.gmra.mrb[0].mxu0 %v1712
        %v1782 = vpop.f32.mrb[0].mxu0
        %v1783 = vadd.f32 %v1029, %v1782
        %v1784 = vpop.f32.mrb[0].mxu0
        %1785 = vdwg.mxu0
        %v1786 = vsel %vm1108, %v1783, -inf
        %1787 = vmax.xlane.f32.xlu0 %v1786
        %v1788 = vpop.xlane.xlu0 %1787
        %v1789 = vsub.f32 %v1783, %v1788
        %v1790 = vmul.f32 %v1789, 1.442695
        %v1791 = vpow.pop %v1790
        %v1792 = vsel %vm1108, %v1791, 0.0
        %1793 = vadd.xlane.f32.xlu0 %v1792
        %v1794 = vpop.xlane.xlu0 %1793
        %v1795 = vrcp.pop %v1794
        %v1796 = vmul.f32 %v1791, %v1795
        %1797 = vrot.lane.b32.xlu0 %v1024, 112
        %v1798 = vpop.permute.xlu0 %1797
        %v1801 = vsel %vm1108, %v1796, 0
        %1803 = vmatprep.subr.mxu0 0.0
        %1804 = vmatpush1.msra.mxu0 %v1798
        %1805 = vmatprep.subr.mxu0 0.0
        %1806 = vmatpush1.msra.mxu0 0.0
        %1807 = vmatprep.subr.mxu0 0.0
        %1808 = vmatpush1.msra.mxu0 0.0
        %1809 = vmatprep.subr.mxu0 0.0
        %1810 = vmatpush1.msra.mxu0 0.0
        %1811 = vmatprep.subr.mxu0 0.0
        %1812 = vmatpush1.msra.mxu0 0.0
        %1813 = vmatprep.subr.mxu0 0.0
        %1814 = vmatpush1.msra.mxu0 0.0
        %1815 = vmatprep.subr.mxu0 0.0
        %1816 = vmatpush1.msra.mxu0 0.0
        %1817 = vmatprep.subr.mxu0 0.0
        %1818 = vmatpush1.msra.mxu0 0.0
        %1819 = vmatprep.subr.mxu0 0.0
        %1820 = vmatpush1.msra.mxu0 0.0
        %1821 = vmatprep.subr.mxu0 0.0
        %1822 = vmatpush1.msra.mxu0 0.0
        %1823 = vmatprep.subr.mxu0 0.0
        %1824 = vmatpush1.msra.mxu0 0.0
        %1825 = vmatprep.subr.mxu0 0.0
        %1826 = vmatpush1.msra.mxu0 0.0
        %1827 = vmatprep.subr.mxu0 0.0
        %1828 = vmatpush1.msra.mxu0 0.0
        %1829 = vmatprep.subr.mxu0 0.0
        %1830 = vmatpush1.msra.mxu0 0.0
        %1831 = vmatprep.subr.mxu0 0.0
        %1832 = vmatpush1.msra.mxu0 0.0
        %1833 = vmatprep.subr.mxu0 0.0
        %1834 = vmatpush1.msra.mxu0 0.0
        %1835 = vmatprep.subr.mxu0 0.0
        %1836 = vmatpush1.msra.mxu0 0.0
        %1837 = vmatprep.subr.mxu0 0.0
        %1838 = vmatpush1.msra.mxu0 0.0
        %1839 = vmatprep.subr.mxu0 0.0
        %1840 = vmatpush1.msra.mxu0 0.0
        %1841 = vmatprep.subr.mxu0 0.0
        %1842 = vmatpush1.msra.mxu0 0.0
        %1843 = vmatprep.subr.mxu0 0.0
        %1844 = vmatpush1.msra.mxu0 0.0
        %1845 = vmatprep.subr.mxu0 0.0
        %1846 = vmatpush1.msra.mxu0 0.0
        %1847 = vmatprep.subr.mxu0 0.0
        %1848 = vmatpush1.msra.mxu0 0.0
        %1849 = vmatprep.subr.mxu0 0.0
        %1850 = vmatpush1.msra.mxu0 0.0
        %1851 = vmatprep.subr.mxu0 0.0
        %1852 = vmatpush1.msra.mxu0 0.0
        %1853 = vmatprep.subr.mxu0 0.0
        %1854 = vmatpush1.msra.mxu0 0.0
        %1855 = vmatprep.subr.mxu0 0.0
        %1856 = vmatpush1.msra.mxu0 0.0
        %1857 = vmatprep.subr.mxu0 0.0
        %1858 = vmatpush1.msra.mxu0 0.0
        %1859 = vmatprep.subr.mxu0 0.0
        %1860 = vmatpush1.msra.mxu0 0.0
        %1861 = vmatprep.subr.mxu0 0.0
        %1862 = vmatpush1.msra.mxu0 0.0
        %1863 = vmatprep.subr.mxu0 0.0
        %1864 = vmatpush1.msra.mxu0 0.0
        %1865 = vmatprep.subr.mxu0 0.0
        %1866 = vmatpush1.msra.mxu0 0.0
        %1867 = vmatprep.mubr.f32.mxu0 0.0
        %1868 = vmatmul.mubr.f32.gmra.mrb[0].mxu0 %v1801
        %v1869 = vpop.f32.mrb[0].mxu0
        %v1870 = vadd.f32 0.0, %v1869
        %v1871 = vpop.f32.mrb[0].mxu0
        %1872 = vdwg.mxu0
        %1874 = vrot.lane.b32.xlu0 %v1870, 16
        %v1875 = vpop.permute.xlu0 %1874
        %vm1877 = vcmask 162944
        %1878 = vst.msk [vmem:[#allocation4] sm:$0xff] %vm1877, %v1875
        %1879 = vrot.lane.b32.xlu0 %v1020, 108
        %v1880 = vpop.permute.xlu0 %1879
        %1881 = vrot.lane.b32.xlu0 %v1023, 108
        %v1882 = vpop.permute.xlu0 %1881
        %v1883 = vsel %vm1031, %v1880, 0
        %v1885 = vsel %vm1031, %v1882, 0
        %1887 = vmatprep.subr.mxu0 0.0
        %1888 = vmatpush1.xpose.msra.mxu0 %v1885
        %1889 = vmatprep.subr.mxu0 0.0
        %1890 = vmatpush1.xpose.msra.mxu0 0.0
        %1891 = vmatprep.subr.mxu0 0.0
        %1892 = vmatpush1.xpose.msra.mxu0 0.0
        %1893 = vmatprep.subr.mxu0 0.0
        %1894 = vmatpush1.xpose.msra.mxu0 0.0
        %1895 = vmatprep.subr.mxu0 0.0
        %1896 = vmatpush1.xpose.msra.mxu0 0.0
        %1897 = vmatprep.subr.mxu0 0.0
        %1898 = vmatpush1.xpose.msra.mxu0 0.0
        %1899 = vmatprep.subr.mxu0 0.0
        %1900 = vmatpush1.xpose.msra.mxu0 0.0
        %1901 = vmatprep.subr.mxu0 0.0
        %1902 = vmatpush1.xpose.msra.mxu0 0.0
        %1903 = vmatprep.subr.mxu0 0.0
        %1904 = vmatpush1.xpose.msra.mxu0 0.0
        %1905 = vmatprep.subr.mxu0 0.0
        %1906 = vmatpush1.xpose.msra.mxu0 0.0
        %1907 = vmatprep.subr.mxu0 0.0
        %1908 = vmatpush1.xpose.msra.mxu0 0.0
        %1909 = vmatprep.subr.mxu0 0.0
        %1910 = vmatpush1.xpose.msra.mxu0 0.0
        %1911 = vmatprep.subr.mxu0 0.0
        %1912 = vmatpush1.xpose.msra.mxu0 0.0
        %1913 = vmatprep.subr.mxu0 0.0
        %1914 = vmatpush1.xpose.msra.mxu0 0.0
        %1915 = vmatprep.subr.mxu0 0.0
        %1916 = vmatpush1.xpose.msra.mxu0 0.0
        %1917 = vmatprep.subr.mxu0 0.0
        %1918 = vmatpush1.xpose.msra.mxu0 0.0
        %1919 = vmatprep.subr.mxu0 0.0
        %1920 = vmatpush1.xpose.msra.mxu0 0.0
        %1921 = vmatprep.subr.mxu0 0.0
        %1922 = vmatpush1.xpose.msra.mxu0 0.0
        %1923 = vmatprep.subr.mxu0 0.0
        %1924 = vmatpush1.xpose.msra.mxu0 0.0
        %1925 = vmatprep.subr.mxu0 0.0
        %1926 = vmatpush1.xpose.msra.mxu0 0.0
        %1927 = vmatprep.subr.mxu0 0.0
        %1928 = vmatpush1.xpose.msra.mxu0 0.0
        %1929 = vmatprep.subr.mxu0 0.0
        %1930 = vmatpush1.xpose.msra.mxu0 0.0
        %1931 = vmatprep.subr.mxu0 0.0
        %1932 = vmatpush1.xpose.msra.mxu0 0.0
        %1933 = vmatprep.subr.mxu0 0.0
        %1934 = vmatpush1.xpose.msra.mxu0 0.0
        %1935 = vmatprep.subr.mxu0 0.0
        %1936 = vmatpush1.xpose.msra.mxu0 0.0
        %1937 = vmatprep.subr.mxu0 0.0
        %1938 = vmatpush1.xpose.msra.mxu0 0.0
        %1939 = vmatprep.subr.mxu0 0.0
        %1940 = vmatpush1.xpose.msra.mxu0 0.0
        %1941 = vmatprep.subr.mxu0 0.0
        %1942 = vmatpush1.xpose.msra.mxu0 0.0
        %1943 = vmatprep.subr.mxu0 0.0
        %1944 = vmatpush1.xpose.msra.mxu0 0.0
        %1945 = vmatprep.subr.mxu0 0.0
        %1946 = vmatpush1.xpose.msra.mxu0 0.0
        %1947 = vmatprep.subr.mxu0 0.0
        %1948 = vmatpush1.xpose.msra.mxu0 0.0
        %1949 = vmatprep.subr.mxu0 0.0
        %1950 = vmatpush1.xpose.msra.mxu0 0.0
        %1951 = vmatprep.mubr.f32.mxu0 0.0
        %1952 = vmatmul.mubr.f32.gmra.mrb[0].mxu0 %v1883
        %v1953 = vpop.f32.mrb[0].mxu0
        %v1954 = vadd.f32 %v1029, %v1953
        %v1955 = vpop.f32.mrb[0].mxu0
        %1956 = vdwg.mxu0
        %v1957 = vsel %vm1108, %v1954, -inf
        %1958 = vmax.xlane.f32.xlu0 %v1957
        %v1959 = vpop.xlane.xlu0 %1958
        %v1960 = vsub.f32 %v1954, %v1959
        %v1961 = vmul.f32 %v1960, 1.442695
        %v1962 = vpow.pop %v1961
        %v1963 = vsel %vm1108, %v1962, 0.0
        %1964 = vadd.xlane.f32.xlu0 %v1963
        %v1965 = vpop.xlane.xlu0 %1964
        %v1966 = vrcp.pop %v1965
        %v1967 = vmul.f32 %v1962, %v1966
        %1968 = vrot.lane.b32.xlu0 %v1024, 108
        %v1969 = vpop.permute.xlu0 %1968
        %v1972 = vsel %vm1108, %v1967, 0
        %1974 = vmatprep.subr.mxu0 0.0
        %1975 = vmatpush1.msra.mxu0 %v1969
        %1976 = vmatprep.subr.mxu0 0.0
        %1977 = vmatpush1.msra.mxu0 0.0
        %1978 = vmatprep.subr.mxu0 0.0
        %1979 = vmatpush1.msra.mxu0 0.0
        %1980 = vmatprep.subr.mxu0 0.0
        %1981 = vmatpush1.msra.mxu0 0.0
        %1982 = vmatprep.subr.mxu0 0.0
        %1983 = vmatpush1.msra.mxu0 0.0
        %1984 = vmatprep.subr.mxu0 0.0
        %1985 = vmatpush1.msra.mxu0 0.0
        %1986 = vmatprep.subr.mxu0 0.0
        %1987 = vmatpush1.msra.mxu0 0.0
        %1988 = vmatprep.subr.mxu0 0.0
        %1989 = vmatpush1.msra.mxu0 0.0
        %1990 = vmatprep.subr.mxu0 0.0
        %1991 = vmatpush1.msra.mxu0 0.0
        %1992 = vmatprep.subr.mxu0 0.0
        %1993 = vmatpush1.msra.mxu0 0.0
        %1994 = vmatprep.subr.mxu0 0.0
        %1995 = vmatpush1.msra.mxu0 0.0
        %1996 = vmatprep.subr.mxu0 0.0
        %1997 = vmatpush1.msra.mxu0 0.0
        %1998 = vmatprep.subr.mxu0 0.0
        %1999 = vmatpush1.msra.mxu0 0.0
        %2000 = vmatprep.subr.mxu0 0.0
        %2001 = vmatpush1.msra.mxu0 0.0
        %2002 = vmatprep.subr.mxu0 0.0
        %2003 = vmatpush1.msra.mxu0 0.0
        %2004 = vmatprep.subr.mxu0 0.0
        %2005 = vmatpush1.msra.mxu0 0.0
        %2006 = vmatprep.subr.mxu0 0.0
        %2007 = vmatpush1.msra.mxu0 0.0
        %2008 = vmatprep.subr.mxu0 0.0
        %2009 = vmatpush1.msra.mxu0 0.0
        %2010 = vmatprep.subr.mxu0 0.0
        %2011 = vmatpush1.msra.mxu0 0.0
        %2012 = vmatprep.subr.mxu0 0.0
        %2013 = vmatpush1.msra.mxu0 0.0
        %2014 = vmatprep.subr.mxu0 0.0
        %2015 = vmatpush1.msra.mxu0 0.0
        %2016 = vmatprep.subr.mxu0 0.0
        %2017 = vmatpush1.msra.mxu0 0.0
        %2018 = vmatprep.subr.mxu0 0.0
        %2019 = vmatpush1.msra.mxu0 0.0
        %2020 = vmatprep.subr.mxu0 0.0
        %2021 = vmatpush1.msra.mxu0 0.0
        %2022 = vmatprep.subr.mxu0 0.0
        %2023 = vmatpush1.msra.mxu0 0.0
        %2024 = vmatprep.subr.mxu0 0.0
        %2025 = vmatpush1.msra.mxu0 0.0
        %2026 = vmatprep.subr.mxu0 0.0
        %2027 = vmatpush1.msra.mxu0 0.0
        %2028 = vmatprep.subr.mxu0 0.0
        %2029 = vmatpush1.msra.mxu0 0.0
        %2030 = vmatprep.subr.mxu0 0.0
        %2031 = vmatpush1.msra.mxu0 0.0
        %2032 = vmatprep.subr.mxu0 0.0
        %2033 = vmatpush1.msra.mxu0 0.0
        %2034 = vmatprep.subr.mxu0 0.0
        %2035 = vmatpush1.msra.mxu0 0.0
        %2036 = vmatprep.subr.mxu0 0.0
        %2037 = vmatpush1.msra.mxu0 0.0
        %2038 = vmatprep.mubr.f32.mxu0 0.0
        %2039 = vmatmul.mubr.f32.gmra.mrb[0].mxu0 %v1972
        %v2040 = vpop.f32.mrb[0].mxu0
        %v2041 = vadd.f32 0.0, %v2040
        %v2042 = vpop.f32.mrb[0].mxu0
        %2043 = vdwg.mxu0
        %2045 = vrot.lane.b32.xlu0 %v2041, 20
        %v2046 = vpop.permute.xlu0 %2045
        %vm2048 = vcmask 195744
        %2049 = vst.msk [vmem:[#allocation4] sm:$0xff] %vm2048, %v2046
        %2050 = vrot.lane.b32.xlu0 %v1020, 104
        %v2051 = vpop.permute.xlu0 %2050
        %2052 = vrot.lane.b32.xlu0 %v1023, 104
        %v2053 = vpop.permute.xlu0 %2052
        %v2054 = vsel %vm1031, %v2051, 0
        %v2056 = vsel %vm1031, %v2053, 0
        %2058 = vmatprep.subr.mxu0 0.0
        %2059 = vmatpush1.xpose.msra.mxu0 %v2056
        %2060 = vmatprep.subr.mxu0 0.0
        %2061 = vmatpush1.xpose.msra.mxu0 0.0
        %2062 = vmatprep.subr.mxu0 0.0
        %2063 = vmatpush1.xpose.msra.mxu0 0.0
        %2064 = vmatprep.subr.mxu0 0.0
        %2065 = vmatpush1.xpose.msra.mxu0 0.0
        %2066 = vmatprep.subr.mxu0 0.0
        %2067 = vmatpush1.xpose.msra.mxu0 0.0
        %2068 = vmatprep.subr.mxu0 0.0
        %2069 = vmatpush1.xpose.msra.mxu0 0.0
        %2070 = vmatprep.subr.mxu0 0.0
        %2071 = vmatpush1.xpose.msra.mxu0 0.0
        %2072 = vmatprep.subr.mxu0 0.0
        %2073 = vmatpush1.xpose.msra.mxu0 0.0
        %2074 = vmatprep.subr.mxu0 0.0
        %2075 = vmatpush1.xpose.msra.mxu0 0.0
        %2076 = vmatprep.subr.mxu0 0.0
        %2077 = vmatpush1.xpose.msra.mxu0 0.0
        %2078 = vmatprep.subr.mxu0 0.0
        %2079 = vmatpush1.xpose.msra.mxu0 0.0
        %2080 = vmatprep.subr.mxu0 0.0
        %2081 = vmatpush1.xpose.msra.mxu0 0.0
        %2082 = vmatprep.subr.mxu0 0.0
        %2083 = vmatpush1.xpose.msra.mxu0 0.0
        %2084 = vmatprep.subr.mxu0 0.0
        %2085 = vmatpush1.xpose.msra.mxu0 0.0
        %2086 = vmatprep.subr.mxu0 0.0
        %2087 = vmatpush1.xpose.msra.mxu0 0.0
        %2088 = vmatprep.subr.mxu0 0.0
        %2089 = vmatpush1.xpose.msra.mxu0 0.0
        %2090 = vmatprep.subr.mxu0 0.0
        %2091 = vmatpush1.xpose.msra.mxu0 0.0
        %2092 = vmatprep.subr.mxu0 0.0
        %2093 = vmatpush1.xpose.msra.mxu0 0.0
        %2094 = vmatprep.subr.mxu0 0.0
        %2095 = vmatpush1.xpose.msra.mxu0 0.0
        %2096 = vmatprep.subr.mxu0 0.0
        %2097 = vmatpush1.xpose.msra.mxu0 0.0
        %2098 = vmatprep.subr.mxu0 0.0
        %2099 = vmatpush1.xpose.msra.mxu0 0.0
        %2100 = vmatprep.subr.mxu0 0.0
        %2101 = vmatpush1.xpose.msra.mxu0 0.0
        %2102 = vmatprep.subr.mxu0 0.0
        %2103 = vmatpush1.xpose.msra.mxu0 0.0
        %2104 = vmatprep.subr.mxu0 0.0
        %2105 = vmatpush1.xpose.msra.mxu0 0.0
        %2106 = vmatprep.subr.mxu0 0.0
        %2107 = vmatpush1.xpose.msra.mxu0 0.0
        %2108 = vmatprep.subr.mxu0 0.0
        %2109 = vmatpush1.xpose.msra.mxu0 0.0
        %2110 = vmatprep.subr.mxu0 0.0
        %2111 = vmatpush1.xpose.msra.mxu0 0.0
        %2112 = vmatprep.subr.mxu0 0.0
        %2113 = vmatpush1.xpose.msra.mxu0 0.0
        %2114 = vmatprep.subr.mxu0 0.0
        %2115 = vmatpush1.xpose.msra.mxu0 0.0
        %2116 = vmatprep.subr.mxu0 0.0
        %2117 = vmatpush1.xpose.msra.mxu0 0.0
        %2118 = vmatprep.subr.mxu0 0.0
        %2119 = vmatpush1.xpose.msra.mxu0 0.0
        %2120 = vmatprep.subr.mxu0 0.0
        %2121 = vmatpush1.xpose.msra.mxu0 0.0
        %2122 = vmatprep.mubr.f32.mxu0 0.0
        %2123 = vmatmul.mubr.f32.gmra.mrb[0].mxu0 %v2054
        %v2124 = vpop.f32.mrb[0].mxu0
        %v2125 = vadd.f32 %v1029, %v2124
        %v2126 = vpop.f32.mrb[0].mxu0
        %2127 = vdwg.mxu0
        %v2128 = vsel %vm1108, %v2125, -inf
        %2129 = vmax.xlane.f32.xlu0 %v2128
        %v2130 = vpop.xlane.xlu0 %2129
        %v2131 = vsub.f32 %v2125, %v2130
        %v2132 = vmul.f32 %v2131, 1.442695
        %v2133 = vpow.pop %v2132
        %v2134 = vsel %vm1108, %v2133, 0.0
        %2135 = vadd.xlane.f32.xlu0 %v2134
        %v2136 = vpop.xlane.xlu0 %2135
        %v2137 = vrcp.pop %v2136
        %v2138 = vmul.f32 %v2133, %v2137
        %2139 = vrot.lane.b32.xlu0 %v1024, 104
        %v2140 = vpop.permute.xlu0 %2139
        %v2143 = vsel %vm1108, %v2138, 0
        %2145 = vmatprep.subr.mxu0 0.0
        %2146 = vmatpush1.msra.mxu0 %v2140
        %2147 = vmatprep.subr.mxu0 0.0
        %2148 = vmatpush1.msra.mxu0 0.0
        %2149 = vmatprep.subr.mxu0 0.0
        %2150 = vmatpush1.msra.mxu0 0.0
        %2151 = vmatprep.subr.mxu0 0.0
        %2152 = vmatpush1.msra.mxu0 0.0
        %2153 = vmatprep.subr.mxu0 0.0
        %2154 = vmatpush1.msra.mxu0 0.0
        %2155 = vmatprep.subr.mxu0 0.0
        %2156 = vmatpush1.msra.mxu0 0.0
        %2157 = vmatprep.subr.mxu0 0.0
        %2158 = vmatpush1.msra.mxu0 0.0
        %2159 = vmatprep.subr.mxu0 0.0
        %2160 = vmatpush1.msra.mxu0 0.0
        %2161 = vmatprep.subr.mxu0 0.0
        %2162 = vmatpush1.msra.mxu0 0.0
        %2163 = vmatprep.subr.mxu0 0.0
        %2164 = vmatpush1.msra.mxu0 0.0
        %2165 = vmatprep.subr.mxu0 0.0
        %2166 = vmatpush1.msra.mxu0 0.0
        %2167 = vmatprep.subr.mxu0 0.0
        %2168 = vmatpush1.msra.mxu0 0.0
        %2169 = vmatprep.subr.mxu0 0.0
        %2170 = vmatpush1.msra.mxu0 0.0
        %2171 = vmatprep.subr.mxu0 0.0
        %2172 = vmatpush1.msra.mxu0 0.0
        %2173 = vmatprep.subr.mxu0 0.0
        %2174 = vmatpush1.msra.mxu0 0.0
        %2175 = vmatprep.subr.mxu0 0.0
        %2176 = vmatpush1.msra.mxu0 0.0
        %2177 = vmatprep.subr.mxu0 0.0
        %2178 = vmatpush1.msra.mxu0 0.0
        %2179 = vmatprep.subr.mxu0 0.0
        %2180 = vmatpush1.msra.mxu0 0.0
        %2181 = vmatprep.subr.mxu0 0.0
        %2182 = vmatpush1.msra.mxu0 0.0
        %2183 = vmatprep.subr.mxu0 0.0
        %2184 = vmatpush1.msra.mxu0 0.0
        %2185 = vmatprep.subr.mxu0 0.0
        %2186 = vmatpush1.msra.mxu0 0.0
        %2187 = vmatprep.subr.mxu0 0.0
        %2188 = vmatpush1.msra.mxu0 0.0
        %2189 = vmatprep.subr.mxu0 0.0
        %2190 = vmatpush1.msra.mxu0 0.0
        %2191 = vmatprep.subr.mxu0 0.0
        %2192 = vmatpush1.msra.mxu0 0.0
        %2193 = vmatprep.subr.mxu0 0.0
        %2194 = vmatpush1.msra.mxu0 0.0
        %2195 = vmatprep.subr.mxu0 0.0
        %2196 = vmatpush1.msra.mxu0 0.0
        %2197 = vmatprep.subr.mxu0 0.0
        %2198 = vmatpush1.msra.mxu0 0.0
        %2199 = vmatprep.subr.mxu0 0.0
        %2200 = vmatpush1.msra.mxu0 0.0
        %2201 = vmatprep.subr.mxu0 0.0
        %2202 = vmatpush1.msra.mxu0 0.0
        %2203 = vmatprep.subr.mxu0 0.0
        %2204 = vmatpush1.msra.mxu0 0.0
        %2205 = vmatprep.subr.mxu0 0.0
        %2206 = vmatpush1.msra.mxu0 0.0
        %2207 = vmatprep.subr.mxu0 0.0
        %2208 = vmatpush1.msra.mxu0 0.0
        %2209 = vmatprep.mubr.f32.mxu0 0.0
        %2210 = vmatmul.mubr.f32.gmra.mrb[0].mxu0 %v2143
        %v2211 = vpop.f32.mrb[0].mxu0
        %v2212 = vadd.f32 0.0, %v2211
        %v2213 = vpop.f32.mrb[0].mxu0
        %2214 = vdwg.mxu0
        %2216 = vrot.lane.b32.xlu0 %v2212, 24
        %v2217 = vpop.permute.xlu0 %2216
        %vm2219 = vcmask 228544
        %2220 = vst.msk [vmem:[#allocation4] sm:$0xff] %vm2219, %v2217
        %2221 = vrot.lane.b32.xlu0 %v1020, 100
        %v2222 = vpop.permute.xlu0 %2221
        %2223 = vrot.lane.b32.xlu0 %v1023, 100
        %v2224 = vpop.permute.xlu0 %2223
        %v2225 = vsel %vm1031, %v2222, 0
        %v2227 = vsel %vm1031, %v2224, 0
        %2229 = vmatprep.subr.mxu0 0.0
        %2230 = vmatpush1.xpose.msra.mxu0 %v2227
        %2231 = vmatprep.subr.mxu0 0.0
        %2232 = vmatpush1.xpose.msra.mxu0 0.0
        %2233 = vmatprep.subr.mxu0 0.0
        %2234 = vmatpush1.xpose.msra.mxu0 0.0
        %2235 = vmatprep.subr.mxu0 0.0
        %2236 = vmatpush1.xpose.msra.mxu0 0.0
        %2237 = vmatprep.subr.mxu0 0.0
        %2238 = vmatpush1.xpose.msra.mxu0 0.0
        %2239 = vmatprep.subr.mxu0 0.0
        %2240 = vmatpush1.xpose.msra.mxu0 0.0
        %2241 = vmatprep.subr.mxu0 0.0
        %2242 = vmatpush1.xpose.msra.mxu0 0.0
        %2243 = vmatprep.subr.mxu0 0.0
        %2244 = vmatpush1.xpose.msra.mxu0 0.0
        %2245 = vmatprep.subr.mxu0 0.0
        %2246 = vmatpush1.xpose.msra.mxu0 0.0
        %2247 = vmatprep.subr.mxu0 0.0
        %2248 = vmatpush1.xpose.msra.mxu0 0.0
        %2249 = vmatprep.subr.mxu0 0.0
        %2250 = vmatpush1.xpose.msra.mxu0 0.0
        %2251 = vmatprep.subr.mxu0 0.0
        %2252 = vmatpush1.xpose.msra.mxu0 0.0
        %2253 = vmatprep.subr.mxu0 0.0
        %2254 = vmatpush1.xpose.msra.mxu0 0.0
        %2255 = vmatprep.subr.mxu0 0.0
        %2256 = vmatpush1.xpose.msra.mxu0 0.0
        %2257 = vmatprep.subr.mxu0 0.0
        %2258 = vmatpush1.xpose.msra.mxu0 0.0
        %2259 = vmatprep.subr.mxu0 0.0
        %2260 = vmatpush1.xpose.msra.mxu0 0.0
        %2261 = vmatprep.subr.mxu0 0.0
        %2262 = vmatpush1.xpose.msra.mxu0 0.0
        %2263 = vmatprep.subr.mxu0 0.0
        %2264 = vmatpush1.xpose.msra.mxu0 0.0
        %2265 = vmatprep.subr.mxu0 0.0
        %2266 = vmatpush1.xpose.msra.mxu0 0.0
        %2267 = vmatprep.subr.mxu0 0.0
        %2268 = vmatpush1.xpose.msra.mxu0 0.0
        %2269 = vmatprep.subr.mxu0 0.0
        %2270 = vmatpush1.xpose.msra.mxu0 0.0
        %2271 = vmatprep.subr.mxu0 0.0
        %2272 = vmatpush1.xpose.msra.mxu0 0.0
        %2273 = vmatprep.subr.mxu0 0.0
        %2274 = vmatpush1.xpose.msra.mxu0 0.0
        %2275 = vmatprep.subr.mxu0 0.0
        %2276 = vmatpush1.xpose.msra.mxu0 0.0
        %2277 = vmatprep.subr.mxu0 0.0
        %2278 = vmatpush1.xpose.msra.mxu0 0.0
        %2279 = vmatprep.subr.mxu0 0.0
        %2280 = vmatpush1.xpose.msra.mxu0 0.0
        %2281 = vmatprep.subr.mxu0 0.0
        %2282 = vmatpush1.xpose.msra.mxu0 0.0
        %2283 = vmatprep.subr.mxu0 0.0
        %2284 = vmatpush1.xpose.msra.mxu0 0.0
        %2285 = vmatprep.subr.mxu0 0.0
        %2286 = vmatpush1.xpose.msra.mxu0 0.0
        %2287 = vmatprep.subr.mxu0 0.0
        %2288 = vmatpush1.xpose.msra.mxu0 0.0
        %2289 = vmatprep.subr.mxu0 0.0
        %2290 = vmatpush1.xpose.msra.mxu0 0.0
        %2291 = vmatprep.subr.mxu0 0.0
        %2292 = vmatpush1.xpose.msra.mxu0 0.0
        %2293 = vmatprep.mubr.f32.mxu0 0.0
        %2294 = vmatmul.mubr.f32.gmra.mrb[0].mxu0 %v2225
        %v2295 = vpop.f32.mrb[0].mxu0
        %v2296 = vadd.f32 %v1029, %v2295
        %v2297 = vpop.f32.mrb[0].mxu0
        %2298 = vdwg.mxu0
        %v2299 = vsel %vm1108, %v2296, -inf
        %2300 = vmax.xlane.f32.xlu0 %v2299
        %v2301 = vpop.xlane.xlu0 %2300
        %v2302 = vsub.f32 %v2296, %v2301
        %v2303 = vmul.f32 %v2302, 1.442695
        %v2304 = vpow.pop %v2303
        %v2305 = vsel %vm1108, %v2304, 0.0
        %2306 = vadd.xlane.f32.xlu0 %v2305
        %v2307 = vpop.xlane.xlu0 %2306
        %v2308 = vrcp.pop %v2307
        %v2309 = vmul.f32 %v2304, %v2308
        %2310 = vrot.lane.b32.xlu0 %v1024, 100
        %v2311 = vpop.permute.xlu0 %2310
        %v2314 = vsel %vm1108, %v2309, 0
        %2316 = vmatprep.subr.mxu0 0.0
        %2317 = vmatpush1.msra.mxu0 %v2311
        %2318 = vmatprep.subr.mxu0 0.0
        %2319 = vmatpush1.msra.mxu0 0.0
        %2320 = vmatprep.subr.mxu0 0.0
        %2321 = vmatpush1.msra.mxu0 0.0
        %2322 = vmatprep.subr.mxu0 0.0
        %2323 = vmatpush1.msra.mxu0 0.0
        %2324 = vmatprep.subr.mxu0 0.0
        %2325 = vmatpush1.msra.mxu0 0.0
        %2326 = vmatprep.subr.mxu0 0.0
        %2327 = vmatpush1.msra.mxu0 0.0
        %2328 = vmatprep.subr.mxu0 0.0
        %2329 = vmatpush1.msra.mxu0 0.0
        %2330 = vmatprep.subr.mxu0 0.0
        %2331 = vmatpush1.msra.mxu0 0.0
        %2332 = vmatprep.subr.mxu0 0.0
        %2333 = vmatpush1.msra.mxu0 0.0
        %2334 = vmatprep.subr.mxu0 0.0
        %2335 = vmatpush1.msra.mxu0 0.0
        %2336 = vmatprep.subr.mxu0 0.0
        %2337 = vmatpush1.msra.mxu0 0.0
        %2338 = vmatprep.subr.mxu0 0.0
        %2339 = vmatpush1.msra.mxu0 0.0
        %2340 = vmatprep.subr.mxu0 0.0
        %2341 = vmatpush1.msra.mxu0 0.0
        %2342 = vmatprep.subr.mxu0 0.0
        %2343 = vmatpush1.msra.mxu0 0.0
        %2344 = vmatprep.subr.mxu0 0.0
        %2345 = vmatpush1.msra.mxu0 0.0
        %2346 = vmatprep.subr.mxu0 0.0
        %2347 = vmatpush1.msra.mxu0 0.0
        %2348 = vmatprep.subr.mxu0 0.0
        %2349 = vmatpush1.msra.mxu0 0.0
        %2350 = vmatprep.subr.mxu0 0.0
        %2351 = vmatpush1.msra.mxu0 0.0
        %2352 = vmatprep.subr.mxu0 0.0
        %2353 = vmatpush1.msra.mxu0 0.0
        %2354 = vmatprep.subr.mxu0 0.0
        %2355 = vmatpush1.msra.mxu0 0.0
        %2356 = vmatprep.subr.mxu0 0.0
        %2357 = vmatpush1.msra.mxu0 0.0
        %2358 = vmatprep.subr.mxu0 0.0
        %2359 = vmatpush1.msra.mxu0 0.0
        %2360 = vmatprep.subr.mxu0 0.0
        %2361 = vmatpush1.msra.mxu0 0.0
        %2362 = vmatprep.subr.mxu0 0.0
        %2363 = vmatpush1.msra.mxu0 0.0
        %2364 = vmatprep.subr.mxu0 0.0
        %2365 = vmatpush1.msra.mxu0 0.0
        %2366 = vmatprep.subr.mxu0 0.0
        %2367 = vmatpush1.msra.mxu0 0.0
        %2368 = vmatprep.subr.mxu0 0.0
        %2369 = vmatpush1.msra.mxu0 0.0
        %2370 = vmatprep.subr.mxu0 0.0
        %2371 = vmatpush1.msra.mxu0 0.0
        %2372 = vmatprep.subr.mxu0 0.0
        %2373 = vmatpush1.msra.mxu0 0.0
        %2374 = vmatprep.subr.mxu0 0.0
        %2375 = vmatpush1.msra.mxu0 0.0
        %2376 = vmatprep.subr.mxu0 0.0
        %2377 = vmatpush1.msra.mxu0 0.0
        %2378 = vmatprep.subr.mxu0 0.0
        %2379 = vmatpush1.msra.mxu0 0.0
        %2380 = vmatprep.mubr.f32.mxu0 0.0
        %2381 = vmatmul.mubr.f32.gmra.mrb[0].mxu0 %v2314
        %v2382 = vpop.f32.mrb[0].mxu0
        %v2383 = vadd.f32 0.0, %v2382
        %v2384 = vpop.f32.mrb[0].mxu0
        %2385 = vdwg.mxu0
        %2387 = vrot.lane.b32.xlu0 %v2383, 28
        %v2388 = vpop.permute.xlu0 %2387
        %vm2390 = vcmask 261344
        %2391 = vst.msk [vmem:[#allocation4] sm:$0xff] %vm2390, %v2388
        %2392 = vrot.lane.b32.xlu0 %v1020, 96
        %v2393 = vpop.permute.xlu0 %2392
        %2394 = vrot.lane.b32.xlu0 %v1023, 96
        %v2395 = vpop.permute.xlu0 %2394
        %v2396 = vsel %vm1031, %v2393, 0
        %v2398 = vsel %vm1031, %v2395, 0
        %2400 = vmatprep.subr.mxu0 0.0
        %2401 = vmatpush1.xpose.msra.mxu0 %v2398
        %2402 = vmatprep.subr.mxu0 0.0
        %2403 = vmatpush1.xpose.msra.mxu0 0.0
        %2404 = vmatprep.subr.mxu0 0.0
        %2405 = vmatpush1.xpose.msra.mxu0 0.0
        %2406 = vmatprep.subr.mxu0 0.0
        %2407 = vmatpush1.xpose.msra.mxu0 0.0
        %2408 = vmatprep.subr.mxu0 0.0
        %2409 = vmatpush1.xpose.msra.mxu0 0.0
        %2410 = vmatprep.subr.mxu0 0.0
        %2411 = vmatpush1.xpose.msra.mxu0 0.0
        %2412 = vmatprep.subr.mxu0 0.0
        %2413 = vmatpush1.xpose.msra.mxu0 0.0
        %2414 = vmatprep.subr.mxu0 0.0
        %2415 = vmatpush1.xpose.msra.mxu0 0.0
        %2416 = vmatprep.subr.mxu0 0.0
        %2417 = vmatpush1.xpose.msra.mxu0 0.0
        %2418 = vmatprep.subr.mxu0 0.0
        %2419 = vmatpush1.xpose.msra.mxu0 0.0
        %2420 = vmatprep.subr.mxu0 0.0
        %2421 = vmatpush1.xpose.msra.mxu0 0.0
        %2422 = vmatprep.subr.mxu0 0.0
        %2423 = vmatpush1.xpose.msra.mxu0 0.0
        %2424 = vmatprep.subr.mxu0 0.0
        %2425 = vmatpush1.xpose.msra.mxu0 0.0
        %2426 = vmatprep.subr.mxu0 0.0
        %2427 = vmatpush1.xpose.msra.mxu0 0.0
        %2428 = vmatprep.subr.mxu0 0.0
        %2429 = vmatpush1.xpose.msra.mxu0 0.0
        %2430 = vmatprep.subr.mxu0 0.0
        %2431 = vmatpush1.xpose.msra.mxu0 0.0
        %2432 = vmatprep.subr.mxu0 0.0
        %2433 = vmatpush1.xpose.msra.mxu0 0.0
        %2434 = vmatprep.subr.mxu0 0.0
        %2435 = vmatpush1.xpose.msra.mxu0 0.0
        %2436 = vmatprep.subr.mxu0 0.0
        %2437 = vmatpush1.xpose.msra.mxu0 0.0
        %2438 = vmatprep.subr.mxu0 0.0
        %2439 = vmatpush1.xpose.msra.mxu0 0.0
        %2440 = vmatprep.subr.mxu0 0.0
        %2441 = vmatpush1.xpose.msra.mxu0 0.0
        %2442 = vmatprep.subr.mxu0 0.0
        %2443 = vmatpush1.xpose.msra.mxu0 0.0
        %2444 = vmatprep.subr.mxu0 0.0
        %2445 = vmatpush1.xpose.msra.mxu0 0.0
        %2446 = vmatprep.subr.mxu0 0.0
        %2447 = vmatpush1.xpose.msra.mxu0 0.0
        %2448 = vmatprep.subr.mxu0 0.0
        %2449 = vmatpush1.xpose.msra.mxu0 0.0
        %2450 = vmatprep.subr.mxu0 0.0
        %2451 = vmatpush1.xpose.msra.mxu0 0.0
        %2452 = vmatprep.subr.mxu0 0.0
        %2453 = vmatpush1.xpose.msra.mxu0 0.0
        %2454 = vmatprep.subr.mxu0 0.0
        %2455 = vmatpush1.xpose.msra.mxu0 0.0
        %2456 = vmatprep.subr.mxu0 0.0
        %2457 = vmatpush1.xpose.msra.mxu0 0.0
        %2458 = vmatprep.subr.mxu0 0.0
        %2459 = vmatpush1.xpose.msra.mxu0 0.0
        %2460 = vmatprep.subr.mxu0 0.0
        %2461 = vmatpush1.xpose.msra.mxu0 0.0
        %2462 = vmatprep.subr.mxu0 0.0
        %2463 = vmatpush1.xpose.msra.mxu0 0.0
        %2464 = vmatprep.mubr.f32.mxu0 0.0
        %2465 = vmatmul.mubr.f32.gmra.mrb[0].mxu0 %v2396
        %v2466 = vpop.f32.mrb[0].mxu0
        %v2467 = vadd.f32 %v1029, %v2466
        %v2468 = vpop.f32.mrb[0].mxu0
        %2469 = vdwg.mxu0
        %v2470 = vsel %vm1108, %v2467, -inf
        %2471 = vmax.xlane.f32.xlu0 %v2470
        %v2472 = vpop.xlane.xlu0 %2471
        %v2473 = vsub.f32 %v2467, %v2472
        %v2474 = vmul.f32 %v2473, 1.442695
        %v2475 = vpow.pop %v2474
        %v2476 = vsel %vm1108, %v2475, 0.0
        %2477 = vadd.xlane.f32.xlu0 %v2476
        %v2478 = vpop.xlane.xlu0 %2477
        %v2479 = vrcp.pop %v2478
        %v2480 = vmul.f32 %v2475, %v2479
        %2481 = vrot.lane.b32.xlu0 %v1024, 96
        %v2482 = vpop.permute.xlu0 %2481
        %v2485 = vsel %vm1108, %v2480, 0
        %2487 = vmatprep.subr.mxu0 0.0
        %2488 = vmatpush1.msra.mxu0 %v2482
        %2489 = vmatprep.subr.mxu0 0.0
        %2490 = vmatpush1.msra.mxu0 0.0
        %2491 = vmatprep.subr.mxu0 0.0
        %2492 = vmatpush1.msra.mxu0 0.0
        %2493 = vmatprep.subr.mxu0 0.0
        %2494 = vmatpush1.msra.mxu0 0.0
        %2495 = vmatprep.subr.mxu0 0.0
        %2496 = vmatpush1.msra.mxu0 0.0
        %2497 = vmatprep.subr.mxu0 0.0
        %2498 = vmatpush1.msra.mxu0 0.0
        %2499 = vmatprep.subr.mxu0 0.0
        %2500 = vmatpush1.msra.mxu0 0.0
        %2501 = vmatprep.subr.mxu0 0.0
        %2502 = vmatpush1.msra.mxu0 0.0
        %2503 = vmatprep.subr.mxu0 0.0
        %2504 = vmatpush1.msra.mxu0 0.0
        %2505 = vmatprep.subr.mxu0 0.0
        %2506 = vmatpush1.msra.mxu0 0.0
        %2507 = vmatprep.subr.mxu0 0.0
        %2508 = vmatpush1.msra.mxu0 0.0
        %2509 = vmatprep.subr.mxu0 0.0
        %2510 = vmatpush1.msra.mxu0 0.0
        %2511 = vmatprep.subr.mxu0 0.0
        %2512 = vmatpush1.msra.mxu0 0.0
        %2513 = vmatprep.subr.mxu0 0.0
        %2514 = vmatpush1.msra.mxu0 0.0
        %2515 = vmatprep.subr.mxu0 0.0
        %2516 = vmatpush1.msra.mxu0 0.0
        %2517 = vmatprep.subr.mxu0 0.0
        %2518 = vmatpush1.msra.mxu0 0.0
        %2519 = vmatprep.subr.mxu0 0.0
        %2520 = vmatpush1.msra.mxu0 0.0
        %2521 = vmatprep.subr.mxu0 0.0
        %2522 = vmatpush1.msra.mxu0 0.0
        %2523 = vmatprep.subr.mxu0 0.0
        %2524 = vmatpush1.msra.mxu0 0.0
        %2525 = vmatprep.subr.mxu0 0.0
        %2526 = vmatpush1.msra.mxu0 0.0
        %2527 = vmatprep.subr.mxu0 0.0
        %2528 = vmatpush1.msra.mxu0 0.0
        %2529 = vmatprep.subr.mxu0 0.0
        %2530 = vmatpush1.msra.mxu0 0.0
        %2531 = vmatprep.subr.mxu0 0.0
        %2532 = vmatpush1.msra.mxu0 0.0
        %2533 = vmatprep.subr.mxu0 0.0
        %2534 = vmatpush1.msra.mxu0 0.0
        %2535 = vmatprep.subr.mxu0 0.0
        %2536 = vmatpush1.msra.mxu0 0.0
        %2537 = vmatprep.subr.mxu0 0.0
        %2538 = vmatpush1.msra.mxu0 0.0
        %2539 = vmatprep.subr.mxu0 0.0
        %2540 = vmatpush1.msra.mxu0 0.0
        %2541 = vmatprep.subr.mxu0 0.0
        %2542 = vmatpush1.msra.mxu0 0.0
        %2543 = vmatprep.subr.mxu0 0.0
        %2544 = vmatpush1.msra.mxu0 0.0
        %2545 = vmatprep.subr.mxu0 0.0
        %2546 = vmatpush1.msra.mxu0 0.0
        %2547 = vmatprep.subr.mxu0 0.0
        %2548 = vmatpush1.msra.mxu0 0.0
        %2549 = vmatprep.subr.mxu0 0.0
        %2550 = vmatpush1.msra.mxu0 0.0
        %2551 = vmatprep.mubr.f32.mxu0 0.0
        %2552 = vmatmul.mubr.f32.gmra.mrb[0].mxu0 %v2485
        %v2553 = vpop.f32.mrb[0].mxu0
        %v2554 = vadd.f32 0.0, %v2553
        %v2555 = vpop.f32.mrb[0].mxu0
        %2556 = vdwg.mxu0
        %2558 = vrot.lane.b32.xlu0 %v2554, 32
        %v2559 = vpop.permute.xlu0 %2558
        %vm2561 = vcmask 294144
        %2562 = vst.msk [vmem:[#allocation4] sm:$0xff] %vm2561, %v2559
        %2563 = vrot.lane.b32.xlu0 %v1020, 92
        %v2564 = vpop.permute.xlu0 %2563
        %2565 = vrot.lane.b32.xlu0 %v1023, 92
        %v2566 = vpop.permute.xlu0 %2565
        %v2567 = vsel %vm1031, %v2564, 0
        %v2569 = vsel %vm1031, %v2566, 0
        %2571 = vmatprep.subr.mxu0 0.0
        %2572 = vmatpush1.xpose.msra.mxu0 %v2569
        %2573 = vmatprep.subr.mxu0 0.0
        %2574 = vmatpush1.xpose.msra.mxu0 0.0
        %2575 = vmatprep.subr.mxu0 0.0
        %2576 = vmatpush1.xpose.msra.mxu0 0.0
        %2577 = vmatprep.subr.mxu0 0.0
        %2578 = vmatpush1.xpose.msra.mxu0 0.0
        %2579 = vmatprep.subr.mxu0 0.0
        %2580 = vmatpush1.xpose.msra.mxu0 0.0
        %2581 = vmatprep.subr.mxu0 0.0
        %2582 = vmatpush1.xpose.msra.mxu0 0.0
        %2583 = vmatprep.subr.mxu0 0.0
        %2584 = vmatpush1.xpose.msra.mxu0 0.0
        %2585 = vmatprep.subr.mxu0 0.0
        %2586 = vmatpush1.xpose.msra.mxu0 0.0
        %2587 = vmatprep.subr.mxu0 0.0
        %2588 = vmatpush1.xpose.msra.mxu0 0.0
        %2589 = vmatprep.subr.mxu0 0.0
        %2590 = vmatpush1.xpose.msra.mxu0 0.0
        %2591 = vmatprep.subr.mxu0 0.0
        %2592 = vmatpush1.xpose.msra.mxu0 0.0
        %2593 = vmatprep.subr.mxu0 0.0
        %2594 = vmatpush1.xpose.msra.mxu0 0.0
        %2595 = vmatprep.subr.mxu0 0.0
        %2596 = vmatpush1.xpose.msra.mxu0 0.0
        %2597 = vmatprep.subr.mxu0 0.0
        %2598 = vmatpush1.xpose.msra.mxu0 0.0
        %2599 = vmatprep.subr.mxu0 0.0
        %2600 = vmatpush1.xpose.msra.mxu0 0.0
        %2601 = vmatprep.subr.mxu0 0.0
        %2602 = vmatpush1.xpose.msra.mxu0 0.0
        %2603 = vmatprep.subr.mxu0 0.0
        %2604 = vmatpush1.xpose.msra.mxu0 0.0
        %2605 = vmatprep.subr.mxu0 0.0
        %2606 = vmatpush1.xpose.msra.mxu0 0.0
        %2607 = vmatprep.subr.mxu0 0.0
        %2608 = vmatpush1.xpose.msra.mxu0 0.0
        %2609 = vmatprep.subr.mxu0 0.0
        %2610 = vmatpush1.xpose.msra.mxu0 0.0
        %2611 = vmatprep.subr.mxu0 0.0
        %2612 = vmatpush1.xpose.msra.mxu0 0.0
        %2613 = vmatprep.subr.mxu0 0.0
        %2614 = vmatpush1.xpose.msra.mxu0 0.0
        %2615 = vmatprep.subr.mxu0 0.0
        %2616 = vmatpush1.xpose.msra.mxu0 0.0
        %2617 = vmatprep.subr.mxu0 0.0
        %2618 = vmatpush1.xpose.msra.mxu0 0.0
        %2619 = vmatprep.subr.mxu0 0.0
        %2620 = vmatpush1.xpose.msra.mxu0 0.0
        %2621 = vmatprep.subr.mxu0 0.0
        %2622 = vmatpush1.xpose.msra.mxu0 0.0
        %2623 = vmatprep.subr.mxu0 0.0
        %2624 = vmatpush1.xpose.msra.mxu0 0.0
        %2625 = vmatprep.subr.mxu0 0.0
        %2626 = vmatpush1.xpose.msra.mxu0 0.0
        %2627 = vmatprep.subr.mxu0 0.0
        %2628 = vmatpush1.xpose.msra.mxu0 0.0
        %2629 = vmatprep.subr.mxu0 0.0
        %2630 = vmatpush1.xpose.msra.mxu0 0.0
        %2631 = vmatprep.subr.mxu0 0.0
        %2632 = vmatpush1.xpose.msra.mxu0 0.0
        %2633 = vmatprep.subr.mxu0 0.0
        %2634 = vmatpush1.xpose.msra.mxu0 0.0
        %2635 = vmatprep.mubr.f32.mxu0 0.0
        %2636 = vmatmul.mubr.f32.gmra.mrb[0].mxu0 %v2567
        %v2637 = vpop.f32.mrb[0].mxu0
        %v2638 = vadd.f32 %v1029, %v2637
        %v2639 = vpop.f32.mrb[0].mxu0
        %2640 = vdwg.mxu0
        %v2641 = vsel %vm1108, %v2638, -inf
        %2642 = vmax.xlane.f32.xlu0 %v2641
        %v2643 = vpop.xlane.xlu0 %2642
        %v2644 = vsub.f32 %v2638, %v2643
        %v2645 = vmul.f32 %v2644, 1.442695
        %v2646 = vpow.pop %v2645
        %v2647 = vsel %vm1108, %v2646, 0.0
        %2648 = vadd.xlane.f32.xlu0 %v2647
        %v2649 = vpop.xlane.xlu0 %2648
        %v2650 = vrcp.pop %v2649
        %v2651 = vmul.f32 %v2646, %v2650
        %2652 = vrot.lane.b32.xlu0 %v1024, 92
        %v2653 = vpop.permute.xlu0 %2652
        %v2656 = vsel %vm1108, %v2651, 0
        %2658 = vmatprep.subr.mxu0 0.0
        %2659 = vmatpush1.msra.mxu0 %v2653
        %2660 = vmatprep.subr.mxu0 0.0
        %2661 = vmatpush1.msra.mxu0 0.0
        %2662 = vmatprep.subr.mxu0 0.0
        %2663 = vmatpush1.msra.mxu0 0.0
        %2664 = vmatprep.subr.mxu0 0.0
        %2665 = vmatpush1.msra.mxu0 0.0
        %2666 = vmatprep.subr.mxu0 0.0
        %2667 = vmatpush1.msra.mxu0 0.0
        %2668 = vmatprep.subr.mxu0 0.0
        %2669 = vmatpush1.msra.mxu0 0.0
        %2670 = vmatprep.subr.mxu0 0.0
        %2671 = vmatpush1.msra.mxu0 0.0
        %2672 = vmatprep.subr.mxu0 0.0
        %2673 = vmatpush1.msra.mxu0 0.0
        %2674 = vmatprep.subr.mxu0 0.0
        %2675 = vmatpush1.msra.mxu0 0.0
        %2676 = vmatprep.subr.mxu0 0.0
        %2677 = vmatpush1.msra.mxu0 0.0
        %2678 = vmatprep.subr.mxu0 0.0
        %2679 = vmatpush1.msra.mxu0 0.0
        %2680 = vmatprep.subr.mxu0 0.0
        %2681 = vmatpush1.msra.mxu0 0.0
        %2682 = vmatprep.subr.mxu0 0.0
        %2683 = vmatpush1.msra.mxu0 0.0
        %2684 = vmatprep.subr.mxu0 0.0
        %2685 = vmatpush1.msra.mxu0 0.0
        %2686 = vmatprep.subr.mxu0 0.0
        %2687 = vmatpush1.msra.mxu0 0.0
        %2688 = vmatprep.subr.mxu0 0.0
        %2689 = vmatpush1.msra.mxu0 0.0
        %2690 = vmatprep.subr.mxu0 0.0
        %2691 = vmatpush1.msra.mxu0 0.0
        %2692 = vmatprep.subr.mxu0 0.0
        %2693 = vmatpush1.msra.mxu0 0.0
        %2694 = vmatprep.subr.mxu0 0.0
        %2695 = vmatpush1.msra.mxu0 0.0
        %2696 = vmatprep.subr.mxu0 0.0
        %2697 = vmatpush1.msra.mxu0 0.0
        %2698 = vmatprep.subr.mxu0 0.0
        %2699 = vmatpush1.msra.mxu0 0.0
        %2700 = vmatprep.subr.mxu0 0.0
        %2701 = vmatpush1.msra.mxu0 0.0
        %2702 = vmatprep.subr.mxu0 0.0
        %2703 = vmatpush1.msra.mxu0 0.0
        %2704 = vmatprep.subr.mxu0 0.0
        %2705 = vmatpush1.msra.mxu0 0.0
        %2706 = vmatprep.subr.mxu0 0.0
        %2707 = vmatpush1.msra.mxu0 0.0
        %2708 = vmatprep.subr.mxu0 0.0
        %2709 = vmatpush1.msra.mxu0 0.0
        %2710 = vmatprep.subr.mxu0 0.0
        %2711 = vmatpush1.msra.mxu0 0.0
        %2712 = vmatprep.subr.mxu0 0.0
        %2713 = vmatpush1.msra.mxu0 0.0
        %2714 = vmatprep.subr.mxu0 0.0
        %2715 = vmatpush1.msra.mxu0 0.0
        %2716 = vmatprep.subr.mxu0 0.0
        %2717 = vmatpush1.msra.mxu0 0.0
        %2718 = vmatprep.subr.mxu0 0.0
        %2719 = vmatpush1.msra.mxu0 0.0
        %2720 = vmatprep.subr.mxu0 0.0
        %2721 = vmatpush1.msra.mxu0 0.0
        %2722 = vmatprep.mubr.f32.mxu0 0.0
        %2723 = vmatmul.mubr.f32.gmra.mrb[0].mxu0 %v2656
        %v2724 = vpop.f32.mrb[0].mxu0
        %v2725 = vadd.f32 0.0, %v2724
        %v2726 = vpop.f32.mrb[0].mxu0
        %2727 = vdwg.mxu0
        %2729 = vrot.lane.b32.xlu0 %v2725, 36
        %v2730 = vpop.permute.xlu0 %2729
        %vm2732 = vcmask 326944
        %2733 = vst.msk [vmem:[#allocation4] sm:$0xff] %vm2732, %v2730
        %2734 = vrot.lane.b32.xlu0 %v1020, 88
        %v2735 = vpop.permute.xlu0 %2734
        %2736 = vrot.lane.b32.xlu0 %v1023, 88
        %v2737 = vpop.permute.xlu0 %2736
        %v2738 = vsel %vm1031, %v2735, 0
        %v2740 = vsel %vm1031, %v2737, 0
        %2742 = vmatprep.subr.mxu0 0.0
        %2743 = vmatpush1.xpose.msra.mxu0 %v2740
        %2744 = vmatprep.subr.mxu0 0.0
        %2745 = vmatpush1.xpose.msra.mxu0 0.0
        %2746 = vmatprep.subr.mxu0 0.0
        %2747 = vmatpush1.xpose.msra.mxu0 0.0
        %2748 = vmatprep.subr.mxu0 0.0
        %2749 = vmatpush1.xpose.msra.mxu0 0.0
        %2750 = vmatprep.subr.mxu0 0.0
        %2751 = vmatpush1.xpose.msra.mxu0 0.0
        %2752 = vmatprep.subr.mxu0 0.0
        %2753 = vmatpush1.xpose.msra.mxu0 0.0
        %2754 = vmatprep.subr.mxu0 0.0
        %2755 = vmatpush1.xpose.msra.mxu0 0.0
        %2756 = vmatprep.subr.mxu0 0.0
        %2757 = vmatpush1.xpose.msra.mxu0 0.0
        %2758 = vmatprep.subr.mxu0 0.0
        %2759 = vmatpush1.xpose.msra.mxu0 0.0
        %2760 = vmatprep.subr.mxu0 0.0
        %2761 = vmatpush1.xpose.msra.mxu0 0.0
        %2762 = vmatprep.subr.mxu0 0.0
        %2763 = vmatpush1.xpose.msra.mxu0 0.0
        %2764 = vmatprep.subr.mxu0 0.0
        %2765 = vmatpush1.xpose.msra.mxu0 0.0
        %2766 = vmatprep.subr.mxu0 0.0
        %2767 = vmatpush1.xpose.msra.mxu0 0.0
        %2768 = vmatprep.subr.mxu0 0.0
        %2769 = vmatpush1.xpose.msra.mxu0 0.0
        %2770 = vmatprep.subr.mxu0 0.0
        %2771 = vmatpush1.xpose.msra.mxu0 0.0
        %2772 = vmatprep.subr.mxu0 0.0
        %2773 = vmatpush1.xpose.msra.mxu0 0.0
        %2774 = vmatprep.subr.mxu0 0.0
        %2775 = vmatpush1.xpose.msra.mxu0 0.0
        %2776 = vmatprep.subr.mxu0 0.0
        %2777 = vmatpush1.xpose.msra.mxu0 0.0
        %2778 = vmatprep.subr.mxu0 0.0
        %2779 = vmatpush1.xpose.msra.mxu0 0.0
        %2780 = vmatprep.subr.mxu0 0.0
        %2781 = vmatpush1.xpose.msra.mxu0 0.0
        %2782 = vmatprep.subr.mxu0 0.0
        %2783 = vmatpush1.xpose.msra.mxu0 0.0
        %2784 = vmatprep.subr.mxu0 0.0
        %2785 = vmatpush1.xpose.msra.mxu0 0.0
        %2786 = vmatprep.subr.mxu0 0.0
        %2787 = vmatpush1.xpose.msra.mxu0 0.0
        %2788 = vmatprep.subr.mxu0 0.0
        %2789 = vmatpush1.xpose.msra.mxu0 0.0
        %2790 = vmatprep.subr.mxu0 0.0
        %2791 = vmatpush1.xpose.msra.mxu0 0.0
        %2792 = vmatprep.subr.mxu0 0.0
        %2793 = vmatpush1.xpose.msra.mxu0 0.0
        %2794 = vmatprep.subr.mxu0 0.0
        %2795 = vmatpush1.xpose.msra.mxu0 0.0
        %2796 = vmatprep.subr.mxu0 0.0
        %2797 = vmatpush1.xpose.msra.mxu0 0.0
        %2798 = vmatprep.subr.mxu0 0.0
        %2799 = vmatpush1.xpose.msra.mxu0 0.0
        %2800 = vmatprep.subr.mxu0 0.0
        %2801 = vmatpush1.xpose.msra.mxu0 0.0
        %2802 = vmatprep.subr.mxu0 0.0
        %2803 = vmatpush1.xpose.msra.mxu0 0.0
        %2804 = vmatprep.subr.mxu0 0.0
        %2805 = vmatpush1.xpose.msra.mxu0 0.0
        %2806 = vmatprep.mubr.f32.mxu0 0.0
        %2807 = vmatmul.mubr.f32.gmra.mrb[0].mxu0 %v2738
        %v2808 = vpop.f32.mrb[0].mxu0
        %v2809 = vadd.f32 %v1029, %v2808
        %v2810 = vpop.f32.mrb[0].mxu0
        %2811 = vdwg.mxu0
        %v2812 = vsel %vm1108, %v2809, -inf
        %2813 = vmax.xlane.f32.xlu0 %v2812
        %v2814 = vpop.xlane.xlu0 %2813
        %v2815 = vsub.f32 %v2809, %v2814
        %v2816 = vmul.f32 %v2815, 1.442695
        %v2817 = vpow.pop %v2816
        %v2818 = vsel %vm1108, %v2817, 0.0
        %2819 = vadd.xlane.f32.xlu0 %v2818
        %v2820 = vpop.xlane.xlu0 %2819
        %v2821 = vrcp.pop %v2820
        %v2822 = vmul.f32 %v2817, %v2821
        %2823 = vrot.lane.b32.xlu0 %v1024, 88
        %v2824 = vpop.permute.xlu0 %2823
        %v2827 = vsel %vm1108, %v2822, 0
        %2829 = vmatprep.subr.mxu0 0.0
        %2830 = vmatpush1.msra.mxu0 %v2824
        %2831 = vmatprep.subr.mxu0 0.0
        %2832 = vmatpush1.msra.mxu0 0.0
        %2833 = vmatprep.subr.mxu0 0.0
        %2834 = vmatpush1.msra.mxu0 0.0
        %2835 = vmatprep.subr.mxu0 0.0
        %2836 = vmatpush1.msra.mxu0 0.0
        %2837 = vmatprep.subr.mxu0 0.0
        %2838 = vmatpush1.msra.mxu0 0.0
        %2839 = vmatprep.subr.mxu0 0.0
        %2840 = vmatpush1.msra.mxu0 0.0
        %2841 = vmatprep.subr.mxu0 0.0
        %2842 = vmatpush1.msra.mxu0 0.0
        %2843 = vmatprep.subr.mxu0 0.0
        %2844 = vmatpush1.msra.mxu0 0.0
        %2845 = vmatprep.subr.mxu0 0.0
        %2846 = vmatpush1.msra.mxu0 0.0
        %2847 = vmatprep.subr.mxu0 0.0
        %2848 = vmatpush1.msra.mxu0 0.0
        %2849 = vmatprep.subr.mxu0 0.0
        %2850 = vmatpush1.msra.mxu0 0.0
        %2851 = vmatprep.subr.mxu0 0.0
        %2852 = vmatpush1.msra.mxu0 0.0
        %2853 = vmatprep.subr.mxu0 0.0
        %2854 = vmatpush1.msra.mxu0 0.0
        %2855 = vmatprep.subr.mxu0 0.0
        %2856 = vmatpush1.msra.mxu0 0.0
        %2857 = vmatprep.subr.mxu0 0.0
        %2858 = vmatpush1.msra.mxu0 0.0
        %2859 = vmatprep.subr.mxu0 0.0
        %2860 = vmatpush1.msra.mxu0 0.0
        %2861 = vmatprep.subr.mxu0 0.0
        %2862 = vmatpush1.msra.mxu0 0.0
        %2863 = vmatprep.subr.mxu0 0.0
        %2864 = vmatpush1.msra.mxu0 0.0
        %2865 = vmatprep.subr.mxu0 0.0
        %2866 = vmatpush1.msra.mxu0 0.0
        %2867 = vmatprep.subr.mxu0 0.0
        %2868 = vmatpush1.msra.mxu0 0.0
        %2869 = vmatprep.subr.mxu0 0.0
        %2870 = vmatpush1.msra.mxu0 0.0
        %2871 = vmatprep.subr.mxu0 0.0
        %2872 = vmatpush1.msra.mxu0 0.0
        %2873 = vmatprep.subr.mxu0 0.0
        %2874 = vmatpush1.msra.mxu0 0.0
        %2875 = vmatprep.subr.mxu0 0.0
        %2876 = vmatpush1.msra.mxu0 0.0
        %2877 = vmatprep.subr.mxu0 0.0
        %2878 = vmatpush1.msra.mxu0 0.0
        %2879 = vmatprep.subr.mxu0 0.0
        %2880 = vmatpush1.msra.mxu0 0.0
        %2881 = vmatprep.subr.mxu0 0.0
        %2882 = vmatpush1.msra.mxu0 0.0
        %2883 = vmatprep.subr.mxu0 0.0
        %2884 = vmatpush1.msra.mxu0 0.0
        %2885 = vmatprep.subr.mxu0 0.0
        %2886 = vmatpush1.msra.mxu0 0.0
        %2887 = vmatprep.subr.mxu0 0.0
        %2888 = vmatpush1.msra.mxu0 0.0
        %2889 = vmatprep.subr.mxu0 0.0
        %2890 = vmatpush1.msra.mxu0 0.0
        %2891 = vmatprep.subr.mxu0 0.0
        %2892 = vmatpush1.msra.mxu0 0.0
        %2893 = vmatprep.mubr.f32.mxu0 0.0
        %2894 = vmatmul.mubr.f32.gmra.mrb[0].mxu0 %v2827
        %v2895 = vpop.f32.mrb[0].mxu0
        %v2896 = vadd.f32 0.0, %v2895
        %v2897 = vpop.f32.mrb[0].mxu0
        %2898 = vdwg.mxu0
        %2900 = vrot.lane.b32.xlu0 %v2896, 40
        %v2901 = vpop.permute.xlu0 %2900
        %vm2903 = vcmask 359744
        %2904 = vst.msk [vmem:[#allocation4] sm:$0xff] %vm2903, %v2901
        %2905 = vrot.lane.b32.xlu0 %v1020, 84
        %v2906 = vpop.permute.xlu0 %2905
        %2907 = vrot.lane.b32.xlu0 %v1023, 84
        %v2908 = vpop.permute.xlu0 %2907
        %v2909 = vsel %vm1031, %v2906, 0
        %v2911 = vsel %vm1031, %v2908, 0
        %2913 = vmatprep.subr.mxu0 0.0
        %2914 = vmatpush1.xpose.msra.mxu0 %v2911
        %2915 = vmatprep.subr.mxu0 0.0
        %2916 = vmatpush1.xpose.msra.mxu0 0.0
        %2917 = vmatprep.subr.mxu0 0.0
        %2918 = vmatpush1.xpose.msra.mxu0 0.0
        %2919 = vmatprep.subr.mxu0 0.0
        %2920 = vmatpush1.xpose.msra.mxu0 0.0
        %2921 = vmatprep.subr.mxu0 0.0
        %2922 = vmatpush1.xpose.msra.mxu0 0.0
        %2923 = vmatprep.subr.mxu0 0.0
        %2924 = vmatpush1.xpose.msra.mxu0 0.0
        %2925 = vmatprep.subr.mxu0 0.0
        %2926 = vmatpush1.xpose.msra.mxu0 0.0
        %2927 = vmatprep.subr.mxu0 0.0
        %2928 = vmatpush1.xpose.msra.mxu0 0.0
        %2929 = vmatprep.subr.mxu0 0.0
        %2930 = vmatpush1.xpose.msra.mxu0 0.0
        %2931 = vmatprep.subr.mxu0 0.0
        %2932 = vmatpush1.xpose.msra.mxu0 0.0
        %2933 = vmatprep.subr.mxu0 0.0
        %2934 = vmatpush1.xpose.msra.mxu0 0.0
        %2935 = vmatprep.subr.mxu0 0.0
        %2936 = vmatpush1.xpose.msra.mxu0 0.0
        %2937 = vmatprep.subr.mxu0 0.0
        %2938 = vmatpush1.xpose.msra.mxu0 0.0
        %2939 = vmatprep.subr.mxu0 0.0
        %2940 = vmatpush1.xpose.msra.mxu0 0.0
        %2941 = vmatprep.subr.mxu0 0.0
        %2942 = vmatpush1.xpose.msra.mxu0 0.0
        %2943 = vmatprep.subr.mxu0 0.0
        %2944 = vmatpush1.xpose.msra.mxu0 0.0
        %2945 = vmatprep.subr.mxu0 0.0
        %2946 = vmatpush1.xpose.msra.mxu0 0.0
        %2947 = vmatprep.subr.mxu0 0.0
        %2948 = vmatpush1.xpose.msra.mxu0 0.0
        %2949 = vmatprep.subr.mxu0 0.0
        %2950 = vmatpush1.xpose.msra.mxu0 0.0
        %2951 = vmatprep.subr.mxu0 0.0
        %2952 = vmatpush1.xpose.msra.mxu0 0.0
        %2953 = vmatprep.subr.mxu0 0.0
        %2954 = vmatpush1.xpose.msra.mxu0 0.0
        %2955 = vmatprep.subr.mxu0 0.0
        %2956 = vmatpush1.xpose.msra.mxu0 0.0
        %2957 = vmatprep.subr.mxu0 0.0
        %2958 = vmatpush1.xpose.msra.mxu0 0.0
        %2959 = vmatprep.subr.mxu0 0.0
        %2960 = vmatpush1.xpose.msra.mxu0 0.0
        %2961 = vmatprep.subr.mxu0 0.0
        %2962 = vmatpush1.xpose.msra.mxu0 0.0
        %2963 = vmatprep.subr.mxu0 0.0
        %2964 = vmatpush1.xpose.msra.mxu0 0.0
        %2965 = vmatprep.subr.mxu0 0.0
        %2966 = vmatpush1.xpose.msra.mxu0 0.0
        %2967 = vmatprep.subr.mxu0 0.0
        %2968 = vmatpush1.xpose.msra.mxu0 0.0
        %2969 = vmatprep.subr.mxu0 0.0
        %2970 = vmatpush1.xpose.msra.mxu0 0.0
        %2971 = vmatprep.subr.mxu0 0.0
        %2972 = vmatpush1.xpose.msra.mxu0 0.0
        %2973 = vmatprep.subr.mxu0 0.0
        %2974 = vmatpush1.xpose.msra.mxu0 0.0
        %2975 = vmatprep.subr.mxu0 0.0
        %2976 = vmatpush1.xpose.msra.mxu0 0.0
        %2977 = vmatprep.mubr.f32.mxu0 0.0
        %2978 = vmatmul.mubr.f32.gmra.mrb[0].mxu0 %v2909
        %v2979 = vpop.f32.mrb[0].mxu0
        %v2980 = vadd.f32 %v1029, %v2979
        %v2981 = vpop.f32.mrb[0].mxu0
        %2982 = vdwg.mxu0
        %v2983 = vsel %vm1108, %v2980, -inf
        %2984 = vmax.xlane.f32.xlu0 %v2983
        %v2985 = vpop.xlane.xlu0 %2984
        %v2986 = vsub.f32 %v2980, %v2985
        %v2987 = vmul.f32 %v2986, 1.442695
        %v2988 = vpow.pop %v2987
        %v2989 = vsel %vm1108, %v2988, 0.0
        %2990 = vadd.xlane.f32.xlu0 %v2989
        %v2991 = vpop.xlane.xlu0 %2990
        %v2992 = vrcp.pop %v2991
        %v2993 = vmul.f32 %v2988, %v2992
        %2994 = vrot.lane.b32.xlu0 %v1024, 84
        %v2995 = vpop.permute.xlu0 %2994
        %v2998 = vsel %vm1108, %v2993, 0
        %3000 = vmatprep.subr.mxu0 0.0
        %3001 = vmatpush1.msra.mxu0 %v2995
        %3002 = vmatprep.subr.mxu0 0.0
        %3003 = vmatpush1.msra.mxu0 0.0
        %3004 = vmatprep.subr.mxu0 0.0
        %3005 = vmatpush1.msra.mxu0 0.0
        %3006 = vmatprep.subr.mxu0 0.0
        %3007 = vmatpush1.msra.mxu0 0.0
        %3008 = vmatprep.subr.mxu0 0.0
        %3009 = vmatpush1.msra.mxu0 0.0
        %3010 = vmatprep.subr.mxu0 0.0
        %3011 = vmatpush1.msra.mxu0 0.0
        %3012 = vmatprep.subr.mxu0 0.0
        %3013 = vmatpush1.msra.mxu0 0.0
        %3014 = vmatprep.subr.mxu0 0.0
        %3015 = vmatpush1.msra.mxu0 0.0
        %3016 = vmatprep.subr.mxu0 0.0
        %3017 = vmatpush1.msra.mxu0 0.0
        %3018 = vmatprep.subr.mxu0 0.0
        %3019 = vmatpush1.msra.mxu0 0.0
        %3020 = vmatprep.subr.mxu0 0.0
        %3021 = vmatpush1.msra.mxu0 0.0
        %3022 = vmatprep.subr.mxu0 0.0
        %3023 = vmatpush1.msra.mxu0 0.0
        %3024 = vmatprep.subr.mxu0 0.0
        %3025 = vmatpush1.msra.mxu0 0.0
        %3026 = vmatprep.subr.mxu0 0.0
        %3027 = vmatpush1.msra.mxu0 0.0
        %3028 = vmatprep.subr.mxu0 0.0
        %3029 = vmatpush1.msra.mxu0 0.0
        %3030 = vmatprep.subr.mxu0 0.0
        %3031 = vmatpush1.msra.mxu0 0.0
        %3032 = vmatprep.subr.mxu0 0.0
        %3033 = vmatpush1.msra.mxu0 0.0
        %3034 = vmatprep.subr.mxu0 0.0
        %3035 = vmatpush1.msra.mxu0 0.0
        %3036 = vmatprep.subr.mxu0 0.0
        %3037 = vmatpush1.msra.mxu0 0.0
        %3038 = vmatprep.subr.mxu0 0.0
        %3039 = vmatpush1.msra.mxu0 0.0
        %3040 = vmatprep.subr.mxu0 0.0
        %3041 = vmatpush1.msra.mxu0 0.0
        %3042 = vmatprep.subr.mxu0 0.0
        %3043 = vmatpush1.msra.mxu0 0.0
        %3044 = vmatprep.subr.mxu0 0.0
        %3045 = vmatpush1.msra.mxu0 0.0
        %3046 = vmatprep.subr.mxu0 0.0
        %3047 = vmatpush1.msra.mxu0 0.0
        %3048 = vmatprep.subr.mxu0 0.0
        %3049 = vmatpush1.msra.mxu0 0.0
        %3050 = vmatprep.subr.mxu0 0.0
        %3051 = vmatpush1.msra.mxu0 0.0
        %3052 = vmatprep.subr.mxu0 0.0
        %3053 = vmatpush1.msra.mxu0 0.0
        %3054 = vmatprep.subr.mxu0 0.0
        %3055 = vmatpush1.msra.mxu0 0.0
        %3056 = vmatprep.subr.mxu0 0.0
        %3057 = vmatpush1.msra.mxu0 0.0
        %3058 = vmatprep.subr.mxu0 0.0
        %3059 = vmatpush1.msra.mxu0 0.0
        %3060 = vmatprep.subr.mxu0 0.0
        %3061 = vmatpush1.msra.mxu0 0.0
        %3062 = vmatprep.subr.mxu0 0.0
        %3063 = vmatpush1.msra.mxu0 0.0
        %3064 = vmatprep.mubr.f32.mxu0 0.0
        %3065 = vmatmul.mubr.f32.gmra.mrb[0].mxu0 %v2998
        %v3066 = vpop.f32.mrb[0].mxu0
        %v3067 = vadd.f32 0.0, %v3066
        %v3068 = vpop.f32.mrb[0].mxu0
        %3069 = vdwg.mxu0
        %3071 = vrot.lane.b32.xlu0 %v3067, 44
        %v3072 = vpop.permute.xlu0 %3071
        %vm3074 = vcmask 392544
        %3075 = vst.msk [vmem:[#allocation4] sm:$0xff] %vm3074, %v3072
        %v3076 = vld [vmem:[#allocation4] sm:$0xff]
        %v3077 = vld [vmem:[#allocation20] sm:$0xff]
        %v3078 = vld [vmem:[#allocation20 + $0x8] sm:$0xff]
        %v3079 = vld [vmem:[#allocation20 + $0x10] sm:$0xff]
        %v3080 = vld [vmem:[#allocation20 + $0x18] sm:$0xff]
        %v3081 = vld [vmem:[#allocation20 + $0x20] sm:$0xff]
        %v3082 = vld [vmem:[#allocation20 + $0x28] sm:$0xff]
        %v3083 = vld [vmem:[#allocation22] sm:$0x1]
        %v3085 = vlaneseq
        %v3086 = vshrl.u32 %v3085, 7
        %v3087 = vsub.s32 0, %v3086
        %v3088 = vrot.slane %v3083, %v3087
        %vm3090 = vcmask 392192
        %v3092 = vsel %vm3090, %v3076, 0
        %3094 = vmatprep.subr.mxu0 0.0
        %3095 = vmatpush1.msra.mxu0 %v3077
        %3096 = vmatprep.subr.mxu0 0.0
        %3097 = vmatpush1.msra.mxu0 %v3078
        %3098 = vmatprep.subr.mxu0 0.0
        %3099 = vmatpush1.msra.mxu0 %v3079
        %3100 = vmatprep.subr.mxu0 0.0
        %3101 = vmatpush1.msra.mxu0 %v3080
        %3102 = vmatprep.subr.mxu0 0.0
        %3103 = vmatpush1.msra.mxu0 %v3081
        %3104 = vmatprep.subr.mxu0 0.0
        %3105 = vmatpush1.msra.mxu0 %v3082
        %3106 = vmatprep.subr.mxu0 0.0
        %3107 = vmatpush1.msra.mxu0 0.0
        %3108 = vmatprep.subr.mxu0 0.0
        %3109 = vmatpush1.msra.mxu0 0.0
        %3110 = vmatprep.subr.mxu0 0.0
        %3111 = vmatpush1.msra.mxu0 0.0
        %3112 = vmatprep.subr.mxu0 0.0
        %3113 = vmatpush1.msra.mxu0 0.0
        %3114 = vmatprep.subr.mxu0 0.0
        %3115 = vmatpush1.msra.mxu0 0.0
        %3116 = vmatprep.subr.mxu0 0.0
        %3117 = vmatpush1.msra.mxu0 0.0
        %3118 = vmatprep.subr.mxu0 0.0
        %3119 = vmatpush1.msra.mxu0 0.0
        %3120 = vmatprep.subr.mxu0 0.0
        %3121 = vmatpush1.msra.mxu0 0.0
        %3122 = vmatprep.subr.mxu0 0.0
        %3123 = vmatpush1.msra.mxu0 0.0
        %3124 = vmatprep.subr.mxu0 0.0
        %3125 = vmatpush1.msra.mxu0 0.0
        %3126 = vmatprep.subr.mxu0 0.0
        %3127 = vmatpush1.msra.mxu0 0.0
        %3128 = vmatprep.subr.mxu0 0.0
        %3129 = vmatpush1.msra.mxu0 0.0
        %3130 = vmatprep.subr.mxu0 0.0
        %3131 = vmatpush1.msra.mxu0 0.0
        %3132 = vmatprep.subr.mxu0 0.0
        %3133 = vmatpush1.msra.mxu0 0.0
        %3134 = vmatprep.subr.mxu0 0.0
        %3135 = vmatpush1.msra.mxu0 0.0
        %3136 = vmatprep.subr.mxu0 0.0
        %3137 = vmatpush1.msra.mxu0 0.0
        %3138 = vmatprep.subr.mxu0 0.0
        %3139 = vmatpush1.msra.mxu0 0.0
        %3140 = vmatprep.subr.mxu0 0.0
        %3141 = vmatpush1.msra.mxu0 0.0
        %3142 = vmatprep.subr.mxu0 0.0
        %3143 = vmatpush1.msra.mxu0 0.0
        %3144 = vmatprep.subr.mxu0 0.0
        %3145 = vmatpush1.msra.mxu0 0.0
        %3146 = vmatprep.subr.mxu0 0.0
        %3147 = vmatpush1.msra.mxu0 0.0
        %3148 = vmatprep.subr.mxu0 0.0
        %3149 = vmatpush1.msra.mxu0 0.0
        %3150 = vmatprep.subr.mxu0 0.0
        %3151 = vmatpush1.msra.mxu0 0.0
        %3152 = vmatprep.subr.mxu0 0.0
        %3153 = vmatpush1.msra.mxu0 0.0
        %3154 = vmatprep.subr.mxu0 0.0
        %3155 = vmatpush1.msra.mxu0 0.0
        %3156 = vmatprep.subr.mxu0 0.0
        %3157 = vmatpush1.msra.mxu0 0.0
        %3158 = vmatprep.mubr.f32.mxu0 0.0
        %3159 = vmatmul.mubr.f32.gmra.mrb[0].mxu0 %v3092
        %v3160 = vpop.f32.mrb[0].mxu0
        %v3161 = vadd.f32 %v3088, %v3160
        %v3162 = vpop.f32.mrb[0].mxu0
        %3163 = vdwg.mxu0
        %v3164 = vadd.f32 %v3161, %v933
        %v3165 = vsel %vm949, %v3164, 0.0
        %3166 = vadd.xlane.f32.xlu0 %v3165
        %v3167 = vpop.xlane.xlu0 %3166
        %v3168 = vrcp.pop 32.0
        %v3169 = vmul.f32 %v3167, %v3168
        %v3170 = vsub.f32 %v3164, %v3169
        %v3171 = vmul.f32 %v3170, %v3170
        %v3172 = vsel %vm949, %v3171, 0.0
        %3173 = vadd.xlane.f32.xlu0 %v3172
        %v3174 = vpop.xlane.xlu0 %3173
        %v3175 = vmul.f32 %v3174, 0.032258064
        %v3176 = vadd.f32 %v3175, 1e-08
        %v3177 = vrsqrt.pop %v3176
        %v3178 = vmul.f32 %v3170, %v3177
        %3180 = vset.pattern.permute.xlu0 0
        %3181 = vperm.xlu0 %3180, %v934
        %v3182 = vpop.permute.xlu0 %3181
        %v3184 = vmul.f32 %v3178, %v3182
        %v3185 = vld [vmem:[#allocation23] sm:$0xff]
        %v3186 = vld [vmem:[#allocation23 + $0x8] sm:$0xff]
        %v3187 = vld [vmem:[#allocation23 + $0x10] sm:$0xff]
        %v3188 = vld [vmem:[#allocation23 + $0x18] sm:$0xff]
        %v3189 = vld [vmem:[#allocation25] sm:$0x1]
        %v3191 = vlaneseq
        %v3192 = vshrl.u32 %v3191, 7
        %v3193 = vsub.s32 0, %v3192
        %v3194 = vrot.slane %v3189, %v3193
        %v3197 = vsel %vm949, %v3184, 0
        %3199 = vmatprep.subr.mxu0 0.0
        %3200 = vmatpush1.msra.mxu0 %v3185
        %3201 = vmatprep.subr.mxu0 0.0
        %3202 = vmatpush1.msra.mxu0 %v3186
        %3203 = vmatprep.subr.mxu0 0.0
        %3204 = vmatpush1.msra.mxu0 %v3187
        %3205 = vmatprep.subr.mxu0 0.0
        %3206 = vmatpush1.msra.mxu0 %v3188
        %3207 = vmatprep.subr.mxu0 0.0
        %3208 = vmatpush1.msra.mxu0 0.0
        %3209 = vmatprep.subr.mxu0 0.0
        %3210 = vmatpush1.msra.mxu0 0.0
        %3211 = vmatprep.subr.mxu0 0.0
        %3212 = vmatpush1.msra.mxu0 0.0
        %3213 = vmatprep.subr.mxu0 0.0
        %3214 = vmatpush1.msra.mxu0 0.0
        %3215 = vmatprep.subr.mxu0 0.0
        %3216 = vmatpush1.msra.mxu0 0.0
        %3217 = vmatprep.subr.mxu0 0.0
        %3218 = vmatpush1.msra.mxu0 0.0
        %3219 = vmatprep.subr.mxu0 0.0
        %3220 = vmatpush1.msra.mxu0 0.0
        %3221 = vmatprep.subr.mxu0 0.0
        %3222 = vmatpush1.msra.mxu0 0.0
        %3223 = vmatprep.subr.mxu0 0.0
        %3224 = vmatpush1.msra.mxu0 0.0
        %3225 = vmatprep.subr.mxu0 0.0
        %3226 = vmatpush1.msra.mxu0 0.0
        %3227 = vmatprep.subr.mxu0 0.0
        %3228 = vmatpush1.msra.mxu0 0.0
        %3229 = vmatprep.subr.mxu0 0.0
        %3230 = vmatpush1.msra.mxu0 0.0
        %3231 = vmatprep.subr.mxu0 0.0
        %3232 = vmatpush1.msra.mxu0 0.0
        %3233 = vmatprep.subr.mxu0 0.0
        %3234 = vmatpush1.msra.mxu0 0.0
        %3235 = vmatprep.subr.mxu0 0.0
        %3236 = vmatpush1.msra.mxu0 0.0
        %3237 = vmatprep.subr.mxu0 0.0
        %3238 = vmatpush1.msra.mxu0 0.0
        %3239 = vmatprep.subr.mxu0 0.0
        %3240 = vmatpush1.msra.mxu0 0.0
        %3241 = vmatprep.subr.mxu0 0.0
        %3242 = vmatpush1.msra.mxu0 0.0
        %3243 = vmatprep.subr.mxu0 0.0
        %3244 = vmatpush1.msra.mxu0 0.0
        %3245 = vmatprep.subr.mxu0 0.0
        %3246 = vmatpush1.msra.mxu0 0.0
        %3247 = vmatprep.subr.mxu0 0.0
        %3248 = vmatpush1.msra.mxu0 0.0
        %3249 = vmatprep.subr.mxu0 0.0
        %3250 = vmatpush1.msra.mxu0 0.0
        %3251 = vmatprep.subr.mxu0 0.0
        %3252 = vmatpush1.msra.mxu0 0.0
        %3253 = vmatprep.subr.mxu0 0.0
        %3254 = vmatpush1.msra.mxu0 0.0
        %3255 = vmatprep.subr.mxu0 0.0
        %3256 = vmatpush1.msra.mxu0 0.0
        %3257 = vmatprep.subr.mxu0 0.0
        %3258 = vmatpush1.msra.mxu0 0.0
        %3259 = vmatprep.subr.mxu0 0.0
        %3260 = vmatpush1.msra.mxu0 0.0
        %3261 = vmatprep.subr.mxu0 0.0
        %3262 = vmatpush1.msra.mxu0 0.0
        %3263 = vmatprep.mubr.f32.mxu0 0.0
        %3264 = vmatmul.mubr.f32.gmra.mrb[0].mxu0 %v3197
        %v3265 = vpop.f32.mrb[0].mxu0
        %v3266 = vadd.f32 %v3194, %v3265
        %v3267 = vpop.f32.mrb[0].mxu0
        %3268 = vdwg.mxu0
        %v3269 = vmul.f32 %v3266, 0.5
        %v3270 = vmul.f32 %v3266, 0.044715
        %v3271 = vmul.f32 %v3270, %v3266
        %v3272 = vmul.f32 %v3271, %v3266
        %v3273 = vadd.f32 %v3266, %v3272
        %v3274 = vmul.f32 %v3273, 0.7978846
        %v3275 = vtanh.pop %v3274
        %v3276 = vadd.f32 %v3275, 1.0
        %v3277 = vmul.f32 %v3269, %v3276
        %v3278 = vld [vmem:[#allocation26] sm:$0xff]
        %v3279 = vld [vmem:[#allocation26 + $0x8] sm:$0xff]
        %v3280 = vld [vmem:[#allocation26 + $0x10] sm:$0xff]
        %v3281 = vld [vmem:[#allocation26 + $0x18] sm:$0xff]
        %v3282 = vld [vmem:[#allocation26 + $0x20] sm:$0xff]
        %v3283 = vld [vmem:[#allocation26 + $0x28] sm:$0xff]
        %v3284 = vld [vmem:[#allocation26 + $0x30] sm:$0xff]
        %v3285 = vld [vmem:[#allocation26 + $0x38] sm:$0xff]
        %v3286 = vld [vmem:[#allocation26 + $0x40] sm:$0xff]
        %v3287 = vld [vmem:[#allocation26 + $0x48] sm:$0xff]
        %v3288 = vld [vmem:[#allocation26 + $0x50] sm:$0xff]
        %v3289 = vld [vmem:[#allocation26 + $0x58] sm:$0xff]
        %v3290 = vld [vmem:[#allocation26 + $0x60] sm:$0xff]
        %v3291 = vld [vmem:[#allocation26 + $0x68] sm:$0xff]
        %v3292 = vld [vmem:[#allocation26 + $0x70] sm:$0xff]
        %v3293 = vld [vmem:[#allocation26 + $0x78] sm:$0xff]
        %v3294 = vld [vmem:[#allocation28] sm:$0x1]
        %v3296 = vlaneseq
        %v3297 = vshrl.u32 %v3296, 7
        %v3298 = vsub.s32 0, %v3297
        %v3299 = vrot.slane %v3294, %v3298
        %3301 = vmatprep.subr.mxu0 0.0
        %3302 = vmatpush1.msra.mxu0 %v3278
        %3303 = vmatprep.subr.mxu0 0.0
        %3304 = vmatpush1.msra.mxu0 %v3279
        %3305 = vmatprep.subr.mxu0 0.0
        %3306 = vmatpush1.msra.mxu0 %v3280
        %3307 = vmatprep.subr.mxu0 0.0
        %3308 = vmatpush1.msra.mxu0 %v3281
        %3309 = vmatprep.subr.mxu0 0.0
        %3310 = vmatpush1.msra.mxu0 %v3282
        %3311 = vmatprep.subr.mxu0 0.0
        %3312 = vmatpush1.msra.mxu0 %v3283
        %3313 = vmatprep.subr.mxu0 0.0
        %3314 = vmatpush1.msra.mxu0 %v3284
        %3315 = vmatprep.subr.mxu0 0.0
        %3316 = vmatpush1.msra.mxu0 %v3285
        %3317 = vmatprep.subr.mxu0 0.0
        %3318 = vmatpush1.msra.mxu0 %v3286
        %3319 = vmatprep.subr.mxu0 0.0
        %3320 = vmatpush1.msra.mxu0 %v3287
        %3321 = vmatprep.subr.mxu0 0.0
        %3322 = vmatpush1.msra.mxu0 %v3288
        %3323 = vmatprep.subr.mxu0 0.0
        %3324 = vmatpush1.msra.mxu0 %v3289
        %3325 = vmatprep.subr.mxu0 0.0
        %3326 = vmatpush1.msra.mxu0 %v3290
        %3327 = vmatprep.subr.mxu0 0.0
        %3328 = vmatpush1.msra.mxu0 %v3291
        %3329 = vmatprep.subr.mxu0 0.0
        %3330 = vmatpush1.msra.mxu0 %v3292
        %3331 = vmatprep.subr.mxu0 0.0
        %3332 = vmatpush1.msra.mxu0 %v3293
        %3333 = vmatprep.subr.mxu0 0.0
        %3334 = vmatpush1.msra.mxu0 0.0
        %3335 = vmatprep.subr.mxu0 0.0
        %3336 = vmatpush1.msra.mxu0 0.0
        %3337 = vmatprep.subr.mxu0 0.0
        %3338 = vmatpush1.msra.mxu0 0.0
        %3339 = vmatprep.subr.mxu0 0.0
        %3340 = vmatpush1.msra.mxu0 0.0
        %3341 = vmatprep.subr.mxu0 0.0
        %3342 = vmatpush1.msra.mxu0 0.0
        %3343 = vmatprep.subr.mxu0 0.0
        %3344 = vmatpush1.msra.mxu0 0.0
        %3345 = vmatprep.subr.mxu0 0.0
        %3346 = vmatpush1.msra.mxu0 0.0
        %3347 = vmatprep.subr.mxu0 0.0
        %3348 = vmatpush1.msra.mxu0 0.0
        %3349 = vmatprep.subr.mxu0 0.0
        %3350 = vmatpush1.msra.mxu0 0.0
        %3351 = vmatprep.subr.mxu0 0.0
        %3352 = vmatpush1.msra.mxu0 0.0
        %3353 = vmatprep.subr.mxu0 0.0
        %3354 = vmatpush1.msra.mxu0 0.0
        %3355 = vmatprep.subr.mxu0 0.0
        %3356 = vmatpush1.msra.mxu0 0.0
        %3357 = vmatprep.subr.mxu0 0.0
        %3358 = vmatpush1.msra.mxu0 0.0
        %3359 = vmatprep.subr.mxu0 0.0
        %3360 = vmatpush1.msra.mxu0 0.0
        %3361 = vmatprep.subr.mxu0 0.0
        %3362 = vmatpush1.msra.mxu0 0.0
        %3363 = vmatprep.subr.mxu0 0.0
        %3364 = vmatpush1.msra.mxu0 0.0
        %3365 = vmatprep.mubr.f32.mxu0 0.0
        %3366 = vmatmul.mubr.f32.gmra.mrb[0].mxu0 %v3277
        %v3367 = vpop.f32.mrb[0].mxu0
        %v3368 = vadd.f32 %v3299, %v3367
        %v3369 = vpop.f32.mrb[0].mxu0
        %3370 = vdwg.mxu0
        %v3371 = vadd.f32 %v3368, %v3184
        %v3372 = vsel %vm949, %v3371, 0.0
        %3373 = vadd.xlane.f32.xlu0 %v3372
        %v3374 = vpop.xlane.xlu0 %3373
        %v3375 = vmul.f32 %v3374, %v3168
        %v3376 = vsub.f32 %v3371, %v3375
        %v3377 = vmul.f32 %v3376, %v3376
        %v3378 = vsel %vm949, %v3377, 0.0
        %3379 = vadd.xlane.f32.xlu0 %v3378
        %v3380 = vpop.xlane.xlu0 %3379
        %v3381 = vmul.f32 %v3380, 0.032258064
        %v3382 = vadd.f32 %v3381, 1e-08
        %v3383 = vrsqrt.pop %v3382
        %v3384 = vmul.f32 %v3376, %v3383
        %v3385 = vmul.f32 %v3384, %v3182
        %3386 = vst.msk [vmem:[%s756] sm:$0xff] %vm949, %v3385
        %s3387 = sand.u32 %s395, 1
        %s3388 = scalar_lea.sflag [#allocation7], %s3387
        %s3389 = sand.u32 %s395, 1
        %s3390 = smul.addr %s3389, 8
        %s3391 = scalar_lea.vmem [#allocation29], %s3390
        // Predicated region
        $region145: #{tpu_custom_call.1} parent=79 // pred_check
          %p3392 = pneg %p405
        $region146: #{tpu_custom_call.1} parent=79 // pred_check_branch
          %3394 = sbr.rel (%p3392) target = $region148
        $region147: #{tpu_custom_call.1} parent=79 // pred_region
          %s3396 = ssub.s32 128, 128
          %3397 = vsyncadd %s3388, %s3396
          %s3398 = sadd.s32 %s46, %s45
          %s3399 = smul.addr %s3398, 128
          %s3400 = scalar_lea.hbm %s15, %s3399
          %s3402 = sshll.u32 %s3391, 4
          %s3403 = int_to_ptr.vmem [resolvable:$true] %s3402
          %3405 = dma.vmem_to_hbm [thread:$0]  %s3403, 128, %s3400, %s3388
        $region148: #{tpu_custom_call.1} parent=79 // pred_fallthru
          _
      $region80: #{tpu_custom_call.1} parent=5 // pred_fallthru
        _
      %p3406 = scmp.le.s32.totalorder 2, %s36
      // Predicated region
      $region149: #{tpu_custom_call.1} parent=5 // pred_check
        %p3407 = pneg %p3406
      $region150: #{tpu_custom_call.1} parent=5 // pred_check_branch
        %3409 = sbr.rel (%p3407) target = $region152
      $region151: #{tpu_custom_call.1} parent=5 // pred_region
        %s3410 = ssub.s32 %s36, 2
        // Predicated region
        $region153: #{tpu_custom_call.1} parent=151 // pred_check
          %p3411 = pneg %p411
        $region154: #{tpu_custom_call.1} parent=151 // pred_check_branch
          %3413 = sbr.rel (%p3411) target = $region156
        $region155: #{tpu_custom_call.1} parent=151 // pred_region
          %s3414 = sand.u32 %s396, 1
          %s3415 = scalar_lea.sflag [#allocation7], %s3414
          %s3416 = sand.u32 %s396, 1
          %s3417 = smul.addr %s3416, 8
          %s3418 = scalar_lea.vmem [#allocation29], %s3417
          %3419 = dma.done %s3415, 128
        $region156: #{tpu_custom_call.1} parent=151 // pred_fallthru
          _
      $region152: #{tpu_custom_call.1} parent=5 // pred_fallthru
        _
    $region6: #{tpu_custom_call.1} parent=1 // loop_footer
      %s40 = sadd.s32 1, %s36
    $region7: #{tpu_custom_call.1} parent=1 // loop_footer_branch
      %35 = sbr.rel target = $region3
    $region8: #{tpu_custom_call.1} parent=1 // loop_exit
      _
    %3420 = vsyncpa [#allocation6], 1
    %s3421 = scalar_lea.sflag [#allocation6], 1
    %3422 = vsyncpa %s3421, 1
    %3423 = vsyncpa [#allocation9], 1
    %s3424 = scalar_lea.sflag [#allocation9], 1
    %3425 = vsyncpa %s3424, 1
    %3426 = vsyncpa [#allocation12], 1
    %3427 = vsyncpa [#allocation15], 1
    %3428 = vsyncpa [#allocation18], 1
    %3429 = vsyncpa [#allocation21], 1
    %3430 = vsyncpa [#allocation24], 1
    %3431 = vsyncpa [#allocation27], 1
    %3432 = vsyncpa [#allocation7], 1
    %s3433 = scalar_lea.sflag [#allocation7], 1
    %3434 = vsyncpa %s3433, 1

// kernel: tpu_custom_call.1
$region0: #{tpu_custom_call.1}
  #allocation0 [shape = 'u32[]', space=smem, size = 0x4, offset = 0x4, fixed_abs, tag = 'smem constant byte address 0x4 - core index']
  #allocation1 [shape = 'u32[144,128]{1,0:T(1,128)}', space=vmem, size = 0x12000, scoped, tag = 'internal scratch']
  #allocation2 [shape = 'f32[8,48]{1,0:T(8,128)}', space=vmem, size = 0x1000, scoped, tag = 'scratch operand']
  #allocation3 [shape = 'f32[8,48]{1,0:T(8,128)}', space=vmem, size = 0x1000, scoped, tag = 'scratch operand']
  #allocation4 [shape = 'f32[8,48]{1,0:T(8,128)}', space=vmem, size = 0x1000, scoped, tag = 'scratch operand']
  %s0 = inlined_call_operand.hbm [shape: f32[2,8,32], index: 0, kind: input, shape index: {}]
  %s1 = inlined_call_operand.hbm [shape: f32[2,1,8], index: 1, kind: input, shape index: {}]
  %s2 = inlined_call_operand.hbm [shape: f32[2,8,1], index: 2, kind: input, shape index: {}]
  %s3 = inlined_call_operand.hbm [shape: f32[32,48], index: 3, kind: input, shape index: {}]
  %s4 = inlined_call_operand.hbm [shape: f32[1,48], index: 4, kind: input, shape index: {}]
  %s5 = inlined_call_operand.hbm [shape: f32[32,48], index: 5, kind: input, shape index: {}]
  %s6 = inlined_call_operand.hbm [shape: f32[1,48], index: 6, kind: input, shape index: {}]
  %s7 = inlined_call_operand.hbm [shape: f32[32,48], index: 7, kind: input, shape index: {}]
  %s8 = inlined_call_operand.hbm [shape: f32[1,48], index: 8, kind: input, shape index: {}]
  %s9 = inlined_call_operand.hbm [shape: f32[48,32], index: 9, kind: input, shape index: {}]
  %s10 = inlined_call_operand.hbm [shape: f32[1,32], index: 10, kind: input, shape index: {}]
  %s11 = inlined_call_operand.hbm [shape: f32[32,128], index: 11, kind: input, shape index: {}]
  %s12 = inlined_call_operand.hbm [shape: f32[1,128], index: 12, kind: input, shape index: {}]
  %s13 = inlined_call_operand.hbm [shape: f32[128,32], index: 13, kind: input, shape index: {}]
  %s14 = inlined_call_operand.hbm [shape: f32[1,32], index: 14, kind: input, shape index: {}]
  %s15 = inlined_call_operand.hbm [shape: f32[2,8,32], index: 15, kind: output, shape index: {}]
  %s16 = sld [smem:[#allocation0]]
  $region157: #{tpu_custom_call.1} parent=0
    _
  %s18 = ssub.s32 1, %s16
  %s19 = scalar_select 0, %s18, %s16
  $region1: #{tpu_custom_call.1} parent=0
    #allocation5 [shape = 'u8[8192]{0}', space=vmem, size = 0x2000, scoped, tag = 'input window, operand 0']
    #allocation6 [shape = 's32[2]{0}', space=sflag, size = 0x8, scoped, tag = 'scoped memory for tpu_custom_call.1']
    #allocation7 [shape = 's32[2]{0}', space=sflag, size = 0x8, scoped, tag = 'scoped memory for tpu_custom_call.1']
    #allocation8 [shape = 'u8[1024]{0}', space=vmem, size = 0x400, scoped, tag = 'input window, operand 1']
    #allocation9 [shape = 's32[2]{0}', space=sflag, size = 0x8, scoped, tag = 'scoped memory for tpu_custom_call.1']
    #allocation10 [shape = 'u8[8192]{0}', space=vmem, size = 0x2000, scoped, tag = 'input window, operand 2']
    #allocation11 [shape = 'u8[16384]{0}', space=vmem, size = 0x4000, scoped, tag = 'input window, operand 3, single buffered']
    #allocation12 [shape = 's32[1]{0}', space=sflag, size = 0x4, scoped, tag = 'scoped memory for tpu_custom_call.1']
    #allocation13 [shape = 'u8[512]{0}', space=vmem, size = 0x400, scoped, tag = 'input window, operand 4, single buffered']
    #allocation14 [shape = 'u8[16384]{0}', space=vmem, size = 0x4000, scoped, tag = 'input window, operand 5, single buffered']
    #allocation15 [shape = 's32[1]{0}', space=sflag, size = 0x4, scoped, tag = 'scoped memory for tpu_custom_call.1']
    #allocation16 [shape = 'u8[512]{0}', space=vmem, size = 0x400, scoped, tag = 'input window, operand 6, single buffered']
    #allocation17 [shape = 'u8[16384]{0}', space=vmem, size = 0x4000, scoped, tag = 'input window, operand 7, single buffered']
    #allocation18 [shape = 's32[1]{0}', space=sflag, size = 0x4, scoped, tag = 'scoped memory for tpu_custom_call.1']
    #allocation19 [shape = 'u8[512]{0}', space=vmem, size = 0x400, scoped, tag = 'input window, operand 8, single buffered']
    #allocation20 [shape = 'u8[24576]{0}', space=vmem, size = 0x6000, scoped, tag = 'input window, operand 9, single buffered']
    #allocation21 [shape = 's32[1]{0}', space=sflag, size = 0x4, scoped, tag = 'scoped memory for tpu_custom_call.1']
    #allocation22 [shape = 'u8[512]{0}', space=vmem, size = 0x400, scoped, tag = 'input window, operand 10, single buffered']
    #allocation23 [shape = 'u8[16384]{0}', space=vmem, size = 0x4000, scoped, tag = 'input window, operand 11, single buffered']
    #allocation24 [shape = 's32[1]{0}', space=sflag, size = 0x4, scoped, tag = 'scoped memory for tpu_custom_call.1']
    #allocation25 [shape = 'u8[512]{0}', space=vmem, size = 0x400, scoped, tag = 'input window, operand 12, single buffered']
    #allocation26 [shape = 'u8[65536]{0}', space=vmem, size = 0x10000, scoped, tag = 'input window, operand 13, single buffered']
    #allocation27 [shape = 's32[1]{0}', space=sflag, size = 0x4, scoped, tag = 'scoped memory for tpu_custom_call.1']
    #allocation28 [shape = 'u8[512]{0}', space=vmem, size = 0x400, scoped, tag = 'input window, operand 14, single buffered']
    #allocation29 [shape = 'u8[8192]{0}', space=vmem, size = 0x2000, scoped, tag = 'output window, operand 0']
    %20 = vsyncpa [#allocation6], 0
    %s21 = scalar_lea.sflag [#allocation6], 1
    %22 = vsyncpa %s21, 0
    %23 = vsyncpa [#allocation9], 0
    %s24 = scalar_lea.sflag [#allocation9], 1
    %25 = vsyncpa %s24, 0
    %26 = vsyncpa [#allocation12], 0
    %27 = vsyncpa [#allocation15], 0
    %28 = vsyncpa [#allocation18], 0
    %29 = vsyncpa [#allocation21], 0
    %30 = vsyncpa [#allocation24], 0
    %31 = vsyncpa [#allocation27], 0
    %32 = vsyncpa [#allocation7], 0
    %s33 = scalar_lea.sflag [#allocation7], 1
    %34 = vsyncpa %s33, 0
    loop: start=0, step=1, limit=4
    $region2: #{tpu_custom_call.1} parent=1 // loop_pre_header
      _
    $region3: #{tpu_custom_call.1} parent=1 // loop_header
      %s36 = sphi 0, %s40
      %p37 = scmp.ge.s32.totalorder %s36, 4
      %s43 = sphi 0, %s55
      %s44 = sphi 0, %s51
      %s45 = sphi 0, %s43
      %s46 = sphi 0, %s44
      %s47 = sphi 0, %s45
      %s48 = sphi 0, %s46
      %s58 = sphi 0, %s60
      %s61 = sphi 0, %s58
      %s62 = sphi 0, %s61
      %s78 = sphi 0, %s62
      %s84 = sphi 0, %s86
      %s87 = sphi 0, %s84
      %s88 = sphi 0, %s87
      %s104 = sphi 0, %s88
      %s112 = sphi 0, %s114
      %s115 = sphi 0, %s112
      %s116 = sphi 0, %s115
      %s132 = sphi 0, %s116
      %s136 = sphi 0, %s136
      %s138 = sphi 0, %s136
      %s139 = sphi 0, %s138
      %s153 = sphi 0, %s139
      %s157 = sphi 0, %s157
      %s159 = sphi 0, %s157
      %s160 = sphi 0, %s159
      %s174 = sphi 0, %s160
      %s178 = sphi 0, %s178
      %s180 = sphi 0, %s178
      %s181 = sphi 0, %s180
      %s195 = sphi 0, %s181
      %s199 = sphi 0, %s199
      %s201 = sphi 0, %s199
      %s202 = sphi 0, %s201
      %s216 = sphi 0, %s202
      %s220 = sphi 0, %s220
      %s222 = sphi 0, %s220
      %s223 = sphi 0, %s222
      %s237 = sphi 0, %s223
      %s241 = sphi 0, %s241
      %s243 = sphi 0, %s241
      %s244 = sphi 0, %s243
      %s258 = sphi 0, %s244
      %s262 = sphi 0, %s262
      %s264 = sphi 0, %s262
      %s265 = sphi 0, %s264
      %s279 = sphi 0, %s265
      %s283 = sphi 0, %s283
      %s285 = sphi 0, %s283
      %s286 = sphi 0, %s285
      %s300 = sphi 0, %s286
      %s304 = sphi 0, %s304
      %s306 = sphi 0, %s304
      %s307 = sphi 0, %s306
      %s321 = sphi 0, %s307
      %s325 = sphi 0, %s325
      %s327 = sphi 0, %s325
      %s328 = sphi 0, %s327
      %s342 = sphi 0, %s328
      %s346 = sphi 0, %s346
      %s348 = sphi 0, %s346
      %s349 = sphi 0, %s348
      %s363 = sphi 0, %s349
      %s367 = sphi 0, %s367
      %s369 = sphi 0, %s367
      %s370 = sphi 0, %s369
      %s384 = sphi 0, %s370
      %s392 = sphi 0, %s394
      %s395 = sphi 0, %s392
      %s396 = sphi 0, %s395
      %s412 = sphi 0, %s396
    $region4: #{tpu_custom_call.1} parent=1 // loop_header_branch
      %39 = sbr.rel (%p37) target = $region8
    $region5: #{tpu_custom_call.1} parent=1 // loop_body
      %s41 = ssub.s32 %s36, 1
      %s42 = ssub.s32 %s36, 2
      %s49 = sadd.s32 1, %s44
      %p50 = scmp.ge.s32.totalorder %s49, 1
      %s51 = scalar_select %p50, 0, %s49
      %s52 = sadd.s32 1, %s43
      %s53 = scalar_select %p50, %s52, %s43
      %p54 = scmp.ge.s32.totalorder %s53, 2
      %s55 = scalar_select %p54, 0, %s53
      %s56 = ssub.s32 %s43, %s55
      %p57 = scmp.eq.s32.totalorder %s56, 0
      %s59 = sadd.s32 %s58, 1
      %s60 = scalar_select %p57, %s58, %s59
      %p63 = pneg %p57
      %p64 = scmp.eq.s32.totalorder %s36, 1
      %p65 = por %p63, %p64
      %p66 = scmp.ne.s32.totalorder %s58, %s61
      %p67 = scmp.eq.s32.totalorder %s36, 0
      %p68 = por %p66, %p67
      %p69 = scmp.ne.s32.totalorder %s58, %s61
      %p70 = scmp.eq.s32.totalorder %s41, 1
      %p71 = por %p69, %p70
      %p72 = scmp.ne.s32.totalorder %s61, %s62
      %p73 = scmp.eq.s32.totalorder %s41, 0
      %p74 = por %p72, %p73
      %p75 = scmp.ne.s32.totalorder %s61, %s62
      %p76 = scmp.eq.s32.totalorder %s42, 1
      %p77 = por %p75, %p76
      %p79 = scmp.ne.s32.totalorder %s62, %s78
      %p80 = scmp.eq.s32.totalorder %s42, 0
      %p81 = por %p79, %p80
      %s82 = ssub.s32 %s43, %s55
      %p83 = scmp.eq.s32.totalorder %s82, 0
      %s85 = sadd.s32 %s84, 1
      %s86 = scalar_select %p83, %s84, %s85
      %p89 = pneg %p83
      %p90 = scmp.eq.s32.totalorder %s36, 1
      %p91 = por %p89, %p90
      %p92 = scmp.ne.s32.totalorder %s84, %s87
      %p93 = scmp.eq.s32.totalorder %s36, 0
      %p94 = por %p92, %p93
      %p95 = scmp.ne.s32.totalorder %s84, %s87
      %p96 = scmp.eq.s32.totalorder %s41, 1
      %p97 = por %p95, %p96
      %p98 = scmp.ne.s32.totalorder %s87, %s88
      %p99 = scmp.eq.s32.totalorder %s41, 0
      %p100 = por %p98, %p99
      %p101 = scmp.ne.s32.totalorder %s87, %s88
      %p102 = scmp.eq.s32.totalorder %s42, 1
      %p103 = por %p101, %p102
      %p105 = scmp.ne.s32.totalorder %s88, %s104
      %p106 = scmp.eq.s32.totalorder %s42, 0
      %p107 = por %p105, %p106
      %s108 = ssub.s32 %s43, %s55
      %s109 = ssub.s32 %s44, %s51
      %s110 = sor.u32 %s108, %s109
      %p111 = scmp.eq.s32.totalorder %s110, 0
      %s113 = sadd.s32 %s112, 1
      %s114 = scalar_select %p111, %s112, %s113
      %p117 = pneg %p111
      %p118 = scmp.eq.s32.totalorder %s36, 1
      %p119 = por %p117, %p118
      %p120 = scmp.ne.s32.totalorder %s112, %s115
      %p121 = scmp.eq.s32.totalorder %s36, 0
      %p122 = por %p120, %p121
      %p123 = scmp.ne.s32.totalorder %s112, %s115
      %p124 = scmp.eq.s32.totalorder %s41, 1
      %p125 = por %p123, %p124
      %p126 = scmp.ne.s32.totalorder %s115, %s116
      %p127 = scmp.eq.s32.totalorder %s41, 0
      %p128 = por %p126, %p127
      %p129 = scmp.ne.s32.totalorder %s115, %s116
      %p130 = scmp.eq.s32.totalorder %s42, 1
      %p131 = por %p129, %p130
      %p133 = scmp.ne.s32.totalorder %s116, %s132
      %p134 = scmp.eq.s32.totalorder %s42, 0
      %p135 = por %p133, %p134
      %s137 = sadd.s32 %s136, 1
      %p140 = scmp.eq.s32.totalorder %s36, 1
      %p141 = scmp.ne.s32.totalorder %s136, %s138
      %p142 = scmp.eq.s32.totalorder %s36, 0
      %p143 = por %p141, %p142
      %p144 = scmp.ne.s32.totalorder %s136, %s138
      %p145 = scmp.eq.s32.totalorder %s41, 1
      %p146 = por %p144, %p145
      %p147 = scmp.ne.s32.totalorder %s138, %s139
      %p148 = scmp.eq.s32.totalorder %s41, 0
      %p149 = por %p147, %p148
      %p150 = scmp.ne.s32.totalorder %s138, %s139
      %p151 = scmp.eq.s32.totalorder %s42, 1
      %p152 = por %p150, %p151
      %p154 = scmp.ne.s32.totalorder %s139, %s153
      %p155 = scmp.eq.s32.totalorder %s42, 0
      %p156 = por %p154, %p155
      %s158 = sadd.s32 %s157, 1
      %p161 = scmp.eq.s32.totalorder %s36, 1
      %p162 = scmp.ne.s32.totalorder %s157, %s159
      %p163 = scmp.eq.s32.totalorder %s36, 0
      %p164 = por %p162, %p163
      %p165 = scmp.ne.s32.totalorder %s157, %s159
      %p166 = scmp.eq.s32.totalorder %s41, 1
      %p167 = por %p165, %p166
      %p168 = scmp.ne.s32.totalorder %s159, %s160
      %p169 = scmp.eq.s32.totalorder %s41, 0
      %p170 = por %p168, %p169
      %p171 = scmp.ne.s32.totalorder %s159, %s160
      %p172 = scmp.eq.s32.totalorder %s42, 1
      %p173 = por %p171, %p172
      %p175 = scmp.ne.s32.totalorder %s160, %s174
      %p176 = scmp.eq.s32.totalorder %s42, 0
      %p177 = por %p175, %p176
      %s179 = sadd.s32 %s178, 1
      %p182 = scmp.eq.s32.totalorder %s36, 1
      %p183 = scmp.ne.s32.totalorder %s178, %s180
      %p184 = scmp.eq.s32.totalorder %s36, 0
      %p185 = por %p183, %p184
      %p186 = scmp.ne.s32.totalorder %s178, %s180
      %p187 = scmp.eq.s32.totalorder %s41, 1
      %p188 = por %p186, %p187
      %p189 = scmp.ne.s32.totalorder %s180, %s181
      %p190 = scmp.eq.s32.totalorder %s41, 0
      %p191 = por %p189, %p190
      %p192 = scmp.ne.s32.totalorder %s180, %s181
      %p193 = scmp.eq.s32.totalorder %s42, 1
      %p194 = por %p192, %p193
      %p196 = scmp.ne.s32.totalorder %s181, %s195
      %p197 = scmp.eq.s32.totalorder %s42, 0
      %p198 = por %p196, %p197
      %s200 = sadd.s32 %s199, 1
      %p203 = scmp.eq.s32.totalorder %s36, 1
      %p204 = scmp.ne.s32.totalorder %s199, %s201
      %p205 = scmp.eq.s32.totalorder %s36, 0
      %p206 = por %p204, %p205
      %p207 = scmp.ne.s32.totalorder %s199, %s201
      %p208 = scmp.eq.s32.totalorder %s41, 1
      %p209 = por %p207, %p208
      %p210 = scmp.ne.s32.totalorder %s201, %s202
      %p211 = scmp.eq.s32.totalorder %s41, 0
      %p212 = por %p210, %p211
      %p213 = scmp.ne.s32.totalorder %s201, %s202
      %p214 = scmp.eq.s32.totalorder %s42, 1
      %p215 = por %p213, %p214
      %p217 = scmp.ne.s32.totalorder %s202, %s216
      %p218 = scmp.eq.s32.totalorder %s42, 0
      %p219 = por %p217, %p218
      %s221 = sadd.s32 %s220, 1
      %p224 = scmp.eq.s32.totalorder %s36, 1
      %p225 = scmp.ne.s32.totalorder %s220, %s222
      %p226 = scmp.eq.s32.totalorder %s36, 0
      %p227 = por %p225, %p226
      %p228 = scmp.ne.s32.totalorder %s220, %s222
      %p229 = scmp.eq.s32.totalorder %s41, 1
      %p230 = por %p228, %p229
      %p231 = scmp.ne.s32.totalorder %s222, %s223
      %p232 = scmp.eq.s32.totalorder %s41, 0
      %p233 = por %p231, %p232
      %p234 = scmp.ne.s32.totalorder %s222, %s223
      %p235 = scmp.eq.s32.totalorder %s42, 1
      %p236 = por %p234, %p235
      %p238 = scmp.ne.s32.totalorder %s223, %s237
      %p239 = scmp.eq.s32.totalorder %s42, 0
      %p240 = por %p238, %p239
      %s242 = sadd.s32 %s241, 1
      %p245 = scmp.eq.s32.totalorder %s36, 1
      %p246 = scmp.ne.s32.totalorder %s241, %s243
      %p247 = scmp.eq.s32.totalorder %s36, 0
      %p248 = por %p246, %p247
      %p249 = scmp.ne.s32.totalorder %s241, %s243
      %p250 = scmp.eq.s32.totalorder %s41, 1
      %p251 = por %p249, %p250
      %p252 = scmp.ne.s32.totalorder %s243, %s244
      %p253 = scmp.eq.s32.totalorder %s41, 0
      %p254 = por %p252, %p253
      %p255 = scmp.ne.s32.totalorder %s243, %s244
      %p256 = scmp.eq.s32.totalorder %s42, 1
      %p257 = por %p255, %p256
      %p259 = scmp.ne.s32.totalorder %s244, %s258
      %p260 = scmp.eq.s32.totalorder %s42, 0
      %p261 = por %p259, %p260
      %s263 = sadd.s32 %s262, 1
      %p266 = scmp.eq.s32.totalorder %s36, 1
      %p267 = scmp.ne.s32.totalorder %s262, %s264
      %p268 = scmp.eq.s32.totalorder %s36, 0
      %p269 = por %p267, %p268
      %p270 = scmp.ne.s32.totalorder %s262, %s264
      %p271 = scmp.eq.s32.totalorder %s41, 1
      %p272 = por %p270, %p271
      %p273 = scmp.ne.s32.totalorder %s264, %s265
      %p274 = scmp.eq.s32.totalorder %s41, 0
      %p275 = por %p273, %p274
      %p276 = scmp.ne.s32.totalorder %s264, %s265
      %p277 = scmp.eq.s32.totalorder %s42, 1
      %p278 = por %p276, %p277
      %p280 = scmp.ne.s32.totalorder %s265, %s279
      %p281 = scmp.eq.s32.totalorder %s42, 0
      %p282 = por %p280, %p281
      %s284 = sadd.s32 %s283, 1
      %p287 = scmp.eq.s32.totalorder %s36, 1
      %p288 = scmp.ne.s32.totalorder %s283, %s285
      %p289 = scmp.eq.s32.totalorder %s36, 0
      %p290 = por %p288, %p289
      %p291 = scmp.ne.s32.totalorder %s283, %s285
      %p292 = scmp.eq.s32.totalorder %s41, 1
      %p293 = por %p291, %p292
      %p294 = scmp.ne.s32.totalorder %s285, %s286
      %p295 = scmp.eq.s32.totalorder %s41, 0
      %p296 = por %p294, %p295
      %p297 = scmp.ne.s32.totalorder %s285, %s286
      %p298 = scmp.eq.s32.totalorder %s42, 1
      %p299 = por %p297, %p298
      %p301 = scmp.ne.s32.totalorder %s286, %s300
      %p302 = scmp.eq.s32.totalorder %s42, 0
      %p303 = por %p301, %p302
      %s305 = sadd.s32 %s304, 1
      %p308 = scmp.eq.s32.totalorder %s36, 1
      %p309 = scmp.ne.s32.totalorder %s304, %s306
      %p310 = scmp.eq.s32.totalorder %s36, 0
      %p311 = por %p309, %p310
      %p312 = scmp.ne.s32.totalorder %s304, %s306
      %p313 = scmp.eq.s32.totalorder %s41, 1
      %p314 = por %p312, %p313
      %p315 = scmp.ne.s32.totalorder %s306, %s307
      %p316 = scmp.eq.s32.totalorder %s41, 0
      %p317 = por %p315, %p316
      %p318 = scmp.ne.s32.totalorder %s306, %s307
      %p319 = scmp.eq.s32.totalorder %s42, 1
      %p320 = por %p318, %p319
      %p322 = scmp.ne.s32.totalorder %s307, %s321
      %p323 = scmp.eq.s32.totalorder %s42, 0
      %p324 = por %p322, %p323
      %s326 = sadd.s32 %s325, 1
      %p329 = scmp.eq.s32.totalorder %s36, 1
      %p330 = scmp.ne.s32.totalorder %s325, %s327
      %p331 = scmp.eq.s32.totalorder %s36, 0
      %p332 = por %p330, %p331
      %p333 = scmp.ne.s32.totalorder %s325, %s327
      %p334 = scmp.eq.s32.totalorder %s41, 1
      %p335 = por %p333, %p334
      %p336 = scmp.ne.s32.totalorder %s327, %s328
      %p337 = scmp.eq.s32.totalorder %s41, 0
      %p338 = por %p336, %p337
      %p339 = scmp.ne.s32.totalorder %s327, %s328
      %p340 = scmp.eq.s32.totalorder %s42, 1
      %p341 = por %p339, %p340
      %p343 = scmp.ne.s32.totalorder %s328, %s342
      %p344 = scmp.eq.s32.totalorder %s42, 0
      %p345 = por %p343, %p344
      %s347 = sadd.s32 %s346, 1
      %p350 = scmp.eq.s32.totalorder %s36, 1
      %p351 = scmp.ne.s32.totalorder %s346, %s348
      %p352 = scmp.eq.s32.totalorder %s36, 0
      %p353 = por %p351, %p352
      %p354 = scmp.ne.s32.totalorder %s346, %s348
      %p355 = scmp.eq.s32.totalorder %s41, 1
      %p356 = por %p354, %p355
      %p357 = scmp.ne.s32.totalorder %s348, %s349
      %p358 = scmp.eq.s32.totalorder %s41, 0
      %p359 = por %p357, %p358
      %p360 = scmp.ne.s32.totalorder %s348, %s349
      %p361 = scmp.eq.s32.totalorder %s42, 1
      %p362 = por %p360, %p361
      %p364 = scmp.ne.s32.totalorder %s349, %s363
      %p365 = scmp.eq.s32.totalorder %s42, 0
      %p366 = por %p364, %p365
      %s368 = sadd.s32 %s367, 1
      %p371 = scmp.eq.s32.totalorder %s36, 1
      %p372 = scmp.ne.s32.totalorder %s367, %s369
      %p373 = scmp.eq.s32.totalorder %s36, 0
      %p374 = por %p372, %p373
      %p375 = scmp.ne.s32.totalorder %s367, %s369
      %p376 = scmp.eq.s32.totalorder %s41, 1
      %p377 = por %p375, %p376
      %p378 = scmp.ne.s32.totalorder %s369, %s370
      %p379 = scmp.eq.s32.totalorder %s41, 0
      %p380 = por %p378, %p379
      %p381 = scmp.ne.s32.totalorder %s369, %s370
      %p382 = scmp.eq.s32.totalorder %s42, 1
      %p383 = por %p381, %p382
      %p385 = scmp.ne.s32.totalorder %s370, %s384
      %p386 = scmp.eq.s32.totalorder %s42, 0
      %p387 = por %p385, %p386
      %s388 = ssub.s32 %s43, %s55
      %s389 = ssub.s32 %s44, %s51
      %s390 = sor.u32 %s388, %s389
      %p391 = scmp.eq.s32.totalorder %s390, 0
      %s393 = sadd.s32 %s392, 1
      %s394 = scalar_select %p391, %s392, %s393
      %p397 = pneg %p391
      %p398 = scmp.eq.s32.totalorder %s36, 1
      %p399 = por %p397, %p398
      %p400 = scmp.ne.s32.totalorder %s392, %s395
      %p401 = scmp.eq.s32.totalorder %s36, 0
      %p402 = por %p400, %p401
      %p403 = scmp.ne.s32.totalorder %s392, %s395
      %p404 = scmp.eq.s32.totalorder %s41, 1
      %p405 = por %p403, %p404
      %p406 = scmp.ne.s32.totalorder %s395, %s396
      %p407 = scmp.eq.s32.totalorder %s41, 0
      %p408 = por %p406, %p407
      %p409 = scmp.ne.s32.totalorder %s395, %s396
      %p410 = scmp.eq.s32.totalorder %s42, 1
      %p411 = por %p409, %p410
      %p413 = scmp.ne.s32.totalorder %s396, %s412
      %p414 = scmp.eq.s32.totalorder %s42, 0
      %p415 = por %p413, %p414
      %p416 = scmp.le.s32.totalorder 1, %s36
      %p417 = scmp.lt.s32.totalorder %s36, 3
      %p418 = pnand %p416, %p417
      %p419 = pneg %p418
      // Predicated region
      $region9: #{tpu_custom_call.1} parent=5 // pred_check
        _
      $region10: #{tpu_custom_call.1} parent=5 // pred_check_branch
        %421 = sbr.rel (%p418) target = $region12
      $region11: #{tpu_custom_call.1} parent=5 // pred_region
        %s422 = ssub.s32 %s36, 1
        // Predicated region
        $region13: #{tpu_custom_call.1} parent=11 // pred_check
          %p423 = pneg %p149
        $region14: #{tpu_custom_call.1} parent=11 // pred_check_branch
          %425 = sbr.rel (%p423) target = $region16
        $region15: #{tpu_custom_call.1} parent=11 // pred_region
          %s427 = ssub.s32 512, 512
          %428 = vsyncadd [#allocation12], %s427
          %s429 = sshll.u32 [#allocation11], 4
          %s430 = int_to_ptr.vmem [resolvable:$true] %s429
          %435 = dma.hbm_to_vmem [thread:$0]  %s3, 512, %s430, [#allocation12], 128, 128, 8
        $region16: #{tpu_custom_call.1} parent=11 // pred_fallthru
          _
        // Predicated region
        $region17: #{tpu_custom_call.1} parent=11 // pred_check
          %p436 = pneg %p170
        $region18: #{tpu_custom_call.1} parent=11 // pred_check_branch
          %438 = sbr.rel (%p436) target = $region20
        $region19: #{tpu_custom_call.1} parent=11 // pred_region
          %s440 = ssub.s32 16, 16
          %441 = vsyncadd [#allocation12], %s440
          %s443 = sshll.u32 [#allocation13], 4
          %s444 = int_to_ptr.vmem [resolvable:$true] %s443
          %446 = dma.hbm_to_vmem [thread:$0]  %s4, 16, %s444, [#allocation12]
        $region20: #{tpu_custom_call.1} parent=11 // pred_fallthru
          _
        // Predicated region
        $region21: #{tpu_custom_call.1} parent=11 // pred_check
          %p447 = pneg %p191
        $region22: #{tpu_custom_call.1} parent=11 // pred_check_branch
          %449 = sbr.rel (%p447) target = $region24
        $region23: #{tpu_custom_call.1} parent=11 // pred_region
          %s451 = ssub.s32 512, 512
          %452 = vsyncadd [#allocation15], %s451
          %s453 = sshll.u32 [#allocation14], 4
          %s454 = int_to_ptr.vmem [resolvable:$true] %s453
          %459 = dma.hbm_to_vmem [thread:$0]  %s5, 512, %s454, [#allocation15], 128, 128, 8
        $region24: #{tpu_custom_call.1} parent=11 // pred_fallthru
          _
        // Predicated region
        $region25: #{tpu_custom_call.1} parent=11 // pred_check
          %p460 = pneg %p212
        $region26: #{tpu_custom_call.1} parent=11 // pred_check_branch
          %462 = sbr.rel (%p460) target = $region28
        $region27: #{tpu_custom_call.1} parent=11 // pred_region
          %s464 = ssub.s32 16, 16
          %465 = vsyncadd [#allocation15], %s464
          %s467 = sshll.u32 [#allocation16], 4
          %s468 = int_to_ptr.vmem [resolvable:$true] %s467
          %470 = dma.hbm_to_vmem [thread:$0]  %s6, 16, %s468, [#allocation15]
        $region28: #{tpu_custom_call.1} parent=11 // pred_fallthru
          _
        // Predicated region
        $region29: #{tpu_custom_call.1} parent=11 // pred_check
          %p471 = pneg %p233
        $region30: #{tpu_custom_call.1} parent=11 // pred_check_branch
          %473 = sbr.rel (%p471) target = $region32
        $region31: #{tpu_custom_call.1} parent=11 // pred_region
          %s475 = ssub.s32 512, 512
          %476 = vsyncadd [#allocation18], %s475
          %s477 = sshll.u32 [#allocation17], 4
          %s478 = int_to_ptr.vmem [resolvable:$true] %s477
          %483 = dma.hbm_to_vmem [thread:$0]  %s7, 512, %s478, [#allocation18], 128, 128, 8
        $region32: #{tpu_custom_call.1} parent=11 // pred_fallthru
          _
        // Predicated region
        $region33: #{tpu_custom_call.1} parent=11 // pred_check
          %p484 = pneg %p254
        $region34: #{tpu_custom_call.1} parent=11 // pred_check_branch
          %486 = sbr.rel (%p484) target = $region36
        $region35: #{tpu_custom_call.1} parent=11 // pred_region
          %s488 = ssub.s32 16, 16
          %489 = vsyncadd [#allocation18], %s488
          %s491 = sshll.u32 [#allocation19], 4
          %s492 = int_to_ptr.vmem [resolvable:$true] %s491
          %494 = dma.hbm_to_vmem [thread:$0]  %s8, 16, %s492, [#allocation18]
        $region36: #{tpu_custom_call.1} parent=11 // pred_fallthru
          _
        // Predicated region
        $region37: #{tpu_custom_call.1} parent=11 // pred_check
          %p495 = pneg %p275
        $region38: #{tpu_custom_call.1} parent=11 // pred_check_branch
          %497 = sbr.rel (%p495) target = $region40
        $region39: #{tpu_custom_call.1} parent=11 // pred_region
          %s499 = ssub.s32 768, 768
          %500 = vsyncadd [#allocation21], %s499
          %s501 = sshll.u32 [#allocation20], 4
          %s502 = int_to_ptr.vmem [resolvable:$true] %s501
          %507 = dma.hbm_to_vmem [thread:$0]  %s9, 768, %s502, [#allocation21], 128, 128, 8
        $region40: #{tpu_custom_call.1} parent=11 // pred_fallthru
          _
        // Predicated region
        $region41: #{tpu_custom_call.1} parent=11 // pred_check
          %p508 = pneg %p296
        $region42: #{tpu_custom_call.1} parent=11 // pred_check_branch
          %510 = sbr.rel (%p508) target = $region44
        $region43: #{tpu_custom_call.1} parent=11 // pred_region
          %s512 = ssub.s32 16, 16
          %513 = vsyncadd [#allocation21], %s512
          %s515 = sshll.u32 [#allocation22], 4
          %s516 = int_to_ptr.vmem [resolvable:$true] %s515
          %518 = dma.hbm_to_vmem [thread:$0]  %s10, 16, %s516, [#allocation21]
        $region44: #{tpu_custom_call.1} parent=11 // pred_fallthru
          _
        // Predicated region
        $region45: #{tpu_custom_call.1} parent=11 // pred_check
          %p519 = pneg %p317
        $region46: #{tpu_custom_call.1} parent=11 // pred_check_branch
          %521 = sbr.rel (%p519) target = $region48
        $region47: #{tpu_custom_call.1} parent=11 // pred_region
          %s523 = ssub.s32 512, 512
          %524 = vsyncadd [#allocation24], %s523
          %s525 = sshll.u32 [#allocation23], 4
          %s526 = int_to_ptr.vmem [resolvable:$true] %s525
          %531 = dma.hbm_to_vmem [thread:$0]  %s11, 512, %s526, [#allocation24], 128, 128, 8
        $region48: #{tpu_custom_call.1} parent=11 // pred_fallthru
          _
        // Predicated region
        $region49: #{tpu_custom_call.1} parent=11 // pred_check
          %p532 = pneg %p338
        $region50: #{tpu_custom_call.1} parent=11 // pred_check_branch
          %534 = sbr.rel (%p532) target = $region52
        $region51: #{tpu_custom_call.1} parent=11 // pred_region
          %s536 = ssub.s32 16, 16
          %537 = vsyncadd [#allocation24], %s536
          %s539 = sshll.u32 [#allocation25], 4
          %s540 = int_to_ptr.vmem [resolvable:$true] %s539
          %542 = dma.hbm_to_vmem [thread:$0]  %s12, 16, %s540, [#allocation24]
        $region52: #{tpu_custom_call.1} parent=11 // pred_fallthru
          _
        // Predicated region
        $region53: #{tpu_custom_call.1} parent=11 // pred_check
          %p543 = pneg %p359
        $region54: #{tpu_custom_call.1} parent=11 // pred_check_branch
          %545 = sbr.rel (%p543) target = $region56
        $region55: #{tpu_custom_call.1} parent=11 // pred_region
          %s547 = ssub.s32 2048, 2048
          %548 = vsyncadd [#allocation27], %s547
          %s549 = sshll.u32 [#allocation26], 4
          %s550 = int_to_ptr.vmem [resolvable:$true] %s549
          %555 = dma.hbm_to_vmem [thread:$0]  %s13, 2048, %s550, [#allocation27], 128, 128, 8
        $region56: #{tpu_custom_call.1} parent=11 // pred_fallthru
          _
        // Predicated region
        $region57: #{tpu_custom_call.1} parent=11 // pred_check
          %p556 = pneg %p380
        $region58: #{tpu_custom_call.1} parent=11 // pred_check_branch
          %558 = sbr.rel (%p556) target = $region60
        $region59: #{tpu_custom_call.1} parent=11 // pred_region
          %s560 = ssub.s32 16, 16
          %561 = vsyncadd [#allocation27], %s560
          %s563 = sshll.u32 [#allocation28], 4
          %s564 = int_to_ptr.vmem [resolvable:$true] %s563
          %566 = dma.hbm_to_vmem [thread:$0]  %s14, 16, %s564, [#allocation27]
        $region60: #{tpu_custom_call.1} parent=11 // pred_fallthru
          _
      $region12: #{tpu_custom_call.1} parent=5 // pred_fallthru
        _
      %p567 = scmp.lt.s32.totalorder %s36, 2
      // Predicated region
      $region61: #{tpu_custom_call.1} parent=5 // pred_check
        %p568 = pneg %p567
      $region62: #{tpu_custom_call.1} parent=5 // pred_check_branch
        %570 = sbr.rel (%p568) target = $region64
      $region63: #{tpu_custom_call.1} parent=5 // pred_region
        // Predicated region
        $region65: #{tpu_custom_call.1} parent=63 // pred_check
          %p571 = pneg %p68
        $region66: #{tpu_custom_call.1} parent=63 // pred_check_branch
          %573 = sbr.rel (%p571) target = $region68
        $region67: #{tpu_custom_call.1} parent=63 // pred_region
          %s574 = sand.u32 %s58, 1
          %s575 = scalar_lea.sflag [#allocation6], %s574
          %s576 = sand.u32 %s58, 1
          %s577 = smul.addr %s576, 8
          %s578 = scalar_lea.vmem [#allocation5], %s577
          %s580 = ssub.s32 128, 128
          %581 = vsyncadd %s575, %s580
          %s582 = smul.addr %s43, 128
          %s583 = scalar_lea.hbm %s0, %s582
          %s585 = sshll.u32 %s578, 4
          %s586 = int_to_ptr.vmem [resolvable:$true] %s585
          %588 = dma.hbm_to_vmem [thread:$0]  %s583, 128, %s586, %s575
        $region68: #{tpu_custom_call.1} parent=63 // pred_fallthru
          _
        // Predicated region
        $region69: #{tpu_custom_call.1} parent=63 // pred_check
          %p589 = pneg %p94
        $region70: #{tpu_custom_call.1} parent=63 // pred_check_branch
          %591 = sbr.rel (%p589) target = $region72
        $region71: #{tpu_custom_call.1} parent=63 // pred_region
          %s592 = sand.u32 %s36, 1
          %s593 = scalar_lea.sflag [#allocation9], %s592
          %s594 = sand.u32 %s84, 1
          %s595 = scalar_lea.vmem [#allocation8], %s594
          %s597 = ssub.s32 16, 16
          %598 = vsyncadd %s593, %s597
          %s599 = smul.addr %s43, 16
          %s600 = scalar_lea.hbm %s1, %s599
          %s602 = sshll.u32 %s595, 4
          %s603 = int_to_ptr.vmem [resolvable:$true] %s602
          %605 = dma.hbm_to_vmem [thread:$0]  %s600, 16, %s603, %s593
        $region72: #{tpu_custom_call.1} parent=63 // pred_fallthru
          _
        // Predicated region
        $region73: #{tpu_custom_call.1} parent=63 // pred_check
          %p606 = pneg %p122
        $region74: #{tpu_custom_call.1} parent=63 // pred_check_branch
          %608 = sbr.rel (%p606) target = $region76
        $region75: #{tpu_custom_call.1} parent=63 // pred_region
          %s609 = sand.u32 %s36, 1
          %s610 = scalar_lea.sflag [#allocation9], %s609
          %s611 = sand.u32 %s112, 1
          %s612 = smul.addr %s611, 8
          %s613 = scalar_lea.vmem [#allocation10], %s612
          %s615 = ssub.s32 128, 128
          %616 = vsyncadd %s610, %s615
          %s617 = sadd.s32 %s44, %s43
          %s618 = smul.addr %s617, 128
          %s619 = scalar_lea.hbm %s2, %s618
          %s621 = sshll.u32 %s613, 4
          %s622 = int_to_ptr.vmem [resolvable:$true] %s621
          %624 = dma.hbm_to_vmem [thread:$0]  %s619, 128, %s622, %s610
        $region76: #{tpu_custom_call.1} parent=63 // pred_fallthru
          _
      $region64: #{tpu_custom_call.1} parent=5 // pred_fallthru
        _
      %p625 = scmp.le.s32.totalorder 1, %s36
      %p626 = scmp.lt.s32.totalorder %s36, 3
      %p627 = pnand %p625, %p626
      %p628 = pneg %p627
      // Predicated region
      $region77: #{tpu_custom_call.1} parent=5 // pred_check
        _
      $region78: #{tpu_custom_call.1} parent=5 // pred_check_branch
        %630 = sbr.rel (%p627) target = $region80
      $region79: #{tpu_custom_call.1} parent=5 // pred_region
        %s631 = ssub.s32 %s36, 1
        %s632 = sand.u32 %s61, 1
        %s633 = scalar_lea.sflag [#allocation6], %s632
        %s634 = sand.u32 %s61, 1
        %s635 = smul.addr %s634, 8
        %s636 = scalar_lea.vmem [#allocation5], %s635
        // Predicated region
        $region81: #{tpu_custom_call.1} parent=79 // pred_check
          %p637 = pneg %p74
        $region82: #{tpu_custom_call.1} parent=79 // pred_check_branch
          %639 = sbr.rel (%p637) target = $region84
        $region83: #{tpu_custom_call.1} parent=79 // pred_region
          %640 = dma.done %s633, 128
        $region84: #{tpu_custom_call.1} parent=79 // pred_fallthru
          _
        %s641 = sand.u32 %s41, 1
        %s642 = scalar_lea.sflag [#allocation9], %s641
        %s643 = sand.u32 %s87, 1
        %s644 = scalar_lea.vmem [#allocation8], %s643
        // Predicated region
        $region85: #{tpu_custom_call.1} parent=79 // pred_check
          %p645 = pneg %p100
        $region86: #{tpu_custom_call.1} parent=79 // pred_check_branch
          %647 = sbr.rel (%p645) target = $region88
        $region87: #{tpu_custom_call.1} parent=79 // pred_region
          %648 = dma.done %s642, 16
        $region88: #{tpu_custom_call.1} parent=79 // pred_fallthru
          _
        %s649 = sand.u32 %s41, 1
        %s650 = scalar_lea.sflag [#allocation9], %s649
        %s651 = sand.u32 %s115, 1
        %s652 = smul.addr %s651, 8
        %s653 = scalar_lea.vmem [#allocation10], %s652
        // Predicated region
        $region89: #{tpu_custom_call.1} parent=79 // pred_check
          %p654 = pneg %p128
        $region90: #{tpu_custom_call.1} parent=79 // pred_check_branch
          %656 = sbr.rel (%p654) target = $region92
        $region91: #{tpu_custom_call.1} parent=79 // pred_region
          %657 = dma.done %s650, 128
        $region92: #{tpu_custom_call.1} parent=79 // pred_fallthru
          _
        // Predicated region
        $region93: #{tpu_custom_call.1} parent=79 // pred_check
          %p658 = pneg %p149
        $region94: #{tpu_custom_call.1} parent=79 // pred_check_branch
          %660 = sbr.rel (%p658) target = $region96
        $region95: #{tpu_custom_call.1} parent=79 // pred_region
          %661 = dma.done [#allocation12], 512
        $region96: #{tpu_custom_call.1} parent=79 // pred_fallthru
          _
        // Predicated region
        $region97: #{tpu_custom_call.1} parent=79 // pred_check
          %p662 = pneg %p170
        $region98: #{tpu_custom_call.1} parent=79 // pred_check_branch
          %664 = sbr.rel (%p662) target = $region100
        $region99: #{tpu_custom_call.1} parent=79 // pred_region
          %665 = dma.done [#allocation12], 16
        $region100: #{tpu_custom_call.1} parent=79 // pred_fallthru
          _
        // Predicated region
        $region101: #{tpu_custom_call.1} parent=79 // pred_check
          %p666 = pneg %p191
        $region102: #{tpu_custom_call.1} parent=79 // pred_check_branch
          %668 = sbr.rel (%p666) target = $region104
        $region103: #{tpu_custom_call.1} parent=79 // pred_region
          %669 = dma.done [#allocation15], 512
        $region104: #{tpu_custom_call.1} parent=79 // pred_fallthru
          _
        // Predicated region
        $region105: #{tpu_custom_call.1} parent=79 // pred_check
          %p670 = pneg %p212
        $region106: #{tpu_custom_call.1} parent=79 // pred_check_branch
          %672 = sbr.rel (%p670) target = $region108
        $region107: #{tpu_custom_call.1} parent=79 // pred_region
          %673 = dma.done [#allocation15], 16
        $region108: #{tpu_custom_call.1} parent=79 // pred_fallthru
          _
        // Predicated region
        $region109: #{tpu_custom_call.1} parent=79 // pred_check
          %p674 = pneg %p233
        $region110: #{tpu_custom_call.1} parent=79 // pred_check_branch
          %676 = sbr.rel (%p674) target = $region112
        $region111: #{tpu_custom_call.1} parent=79 // pred_region
          %677 = dma.done [#allocation18], 512
        $region112: #{tpu_custom_call.1} parent=79 // pred_fallthru
          _
        // Predicated region
        $region113: #{tpu_custom_call.1} parent=79 // pred_check
          %p678 = pneg %p254
        $region114: #{tpu_custom_call.1} parent=79 // pred_check_branch
          %680 = sbr.rel (%p678) target = $region116
        $region115: #{tpu_custom_call.1} parent=79 // pred_region
          %681 = dma.done [#allocation18], 16
        $region116: #{tpu_custom_call.1} parent=79 // pred_fallthru
          _
        // Predicated region
        $region117: #{tpu_custom_call.1} parent=79 // pred_check
          %p682 = pneg %p275
        $region118: #{tpu_custom_call.1} parent=79 // pred_check_branch
          %684 = sbr.rel (%p682) target = $region120
        $region119: #{tpu_custom_call.1} parent=79 // pred_region
          %685 = dma.done [#allocation21], 768
        $region120: #{tpu_custom_call.1} parent=79 // pred_fallthru
          _
        // Predicated region
        $region121: #{tpu_custom_call.1} parent=79 // pred_check
          %p686 = pneg %p296
        $region122: #{tpu_custom_call.1} parent=79 // pred_check_branch
          %688 = sbr.rel (%p686) target = $region124
        $region123: #{tpu_custom_call.1} parent=79 // pred_region
          %689 = dma.done [#allocation21], 16
        $region124: #{tpu_custom_call.1} parent=79 // pred_fallthru
          _
        // Predicated region
        $region125: #{tpu_custom_call.1} parent=79 // pred_check
          %p690 = pneg %p317
        $region126: #{tpu_custom_call.1} parent=79 // pred_check_branch
          %692 = sbr.rel (%p690) target = $region128
        $region127: #{tpu_custom_call.1} parent=79 // pred_region
          %693 = dma.done [#allocation24], 512
        $region128: #{tpu_custom_call.1} parent=79 // pred_fallthru
          _
        // Predicated region
        $region129: #{tpu_custom_call.1} parent=79 // pred_check
          %p694 = pneg %p338
        $region130: #{tpu_custom_call.1} parent=79 // pred_check_branch
          %696 = sbr.rel (%p694) target = $region132
        $region131: #{tpu_custom_call.1} parent=79 // pred_region
          %697 = dma.done [#allocation24], 16
        $region132: #{tpu_custom_call.1} parent=79 // pred_fallthru
          _
        // Predicated region
        $region133: #{tpu_custom_call.1} parent=79 // pred_check
          %p698 = pneg %p359
        $region134: #{tpu_custom_call.1} parent=79 // pred_check_branch
          %700 = sbr.rel (%p698) target = $region136
        $region135: #{tpu_custom_call.1} parent=79 // pred_region
          %701 = dma.done [#allocation27], 2048
        $region136: #{tpu_custom_call.1} parent=79 // pred_fallthru
          _
        // Predicated region
        $region137: #{tpu_custom_call.1} parent=79 // pred_check
          %p702 = pneg %p380
        $region138: #{tpu_custom_call.1} parent=79 // pred_check_branch
          %704 = sbr.rel (%p702) target = $region140
        $region139: #{tpu_custom_call.1} parent=79 // pred_region
          %705 = dma.done [#allocation27], 16
        $region140: #{tpu_custom_call.1} parent=79 // pred_fallthru
          _
        %s706 = sand.u32 %s61, 1
        %s707 = scalar_lea.sflag [#allocation6], %s706
        %s708 = sand.u32 %s61, 1
        %s709 = smul.addr %s708, 8
        %s710 = scalar_lea.vmem [#allocation5], %s709
        %p711 = pneg %p74
        %p712 = pneg %p71
        %s713 = sand.u32 %s41, 1
        %s714 = scalar_lea.sflag [#allocation9], %s713
        %s715 = sand.u32 %s87, 1
        %s716 = scalar_lea.vmem [#allocation8], %s715
        %p717 = pneg %p100
        %p718 = pneg %p97
        %s719 = sand.u32 %s41, 1
        %s720 = scalar_lea.sflag [#allocation9], %s719
        %s721 = sand.u32 %s115, 1
        %s722 = smul.addr %s721, 8
        %s723 = scalar_lea.vmem [#allocation10], %s722
        %p724 = pneg %p128
        %p725 = pneg %p125
        %p726 = pneg %p149
        %p727 = pneg %p146
        %p728 = pneg %p170
        %p729 = pneg %p167
        %p730 = pneg %p191
        %p731 = pneg %p188
        %p732 = pneg %p212
        %p733 = pneg %p209
        %p734 = pneg %p233
        %p735 = pneg %p230
        %p736 = pneg %p254
        %p737 = pneg %p251
        %p738 = pneg %p275
        %p739 = pneg %p272
        %p740 = pneg %p296
        %p741 = pneg %p293
        %p742 = pneg %p317
        %p743 = pneg %p314
        %p744 = pneg %p338
        %p745 = pneg %p335
        %p746 = pneg %p359
        %p747 = pneg %p356
        %p748 = pneg %p380
        %p749 = pneg %p377
        %p750 = pneg %p408
        %p751 = pneg %p405
        %s752 = sand.u32 %s395, 1
        %s753 = scalar_lea.sflag [#allocation7], %s752
        %s754 = sand.u32 %s395, 1
        %s755 = smul.addr %s754, 8
        %s756 = scalar_lea.vmem [#allocation29], %s755
        %p757 = scmp.eq.s32.totalorder %s46, 0
        // Predicated region
        $region141: #{tpu_custom_call.1} parent=79 // pred_check
          %p758 = pneg %p757
        $region142: #{tpu_custom_call.1} parent=79 // pred_check_branch
          %760 = sbr.rel (%p758) target = $region144
        $region143: #{tpu_custom_call.1} parent=79 // pred_region
          %v761 = vld [vmem:[%s636] sm:$0xff]
          %v762 = vld [vmem:[#allocation14] sm:$0xff]
          %v763 = vld [vmem:[#allocation14 + $0x8] sm:$0xff]
          %v764 = vld [vmem:[#allocation14 + $0x10] sm:$0xff]
          %v765 = vld [vmem:[#allocation14 + $0x18] sm:$0xff]
          %v766 = vld [vmem:[#allocation16] sm:$0x1]
          %v768 = vlaneseq
          %v769 = vshrl.u32 %v768, 7
          %v770 = vsub.s32 0, %v769
          %v771 = vrot.slane %v766, %v770
          %vm773 = vcmask 261120
          %v775 = vsel %vm773, %v761, 0
          %777 = vmatprep.subr.mxu0 0.0
          %778 = vmatpush1.msra.mxu0 %v762
          %779 = vmatprep.subr.mxu0 0.0
          %780 = vmatpush1.msra.mxu0 %v763
          %781 = vmatprep.subr.mxu0 0.0
          %782 = vmatpush1.msra.mxu0 %v764
          %783 = vmatprep.subr.mxu0 0.0
          %784 = vmatpush1.msra.mxu0 %v765
          %785 = vmatprep.subr.mxu0 0.0
          %786 = vmatpush1.msra.mxu0 0.0
          %787 = vmatprep.subr.mxu0 0.0
          %788 = vmatpush1.msra.mxu0 0.0
          %789 = vmatprep.subr.mxu0 0.0
          %790 = vmatpush1.msra.mxu0 0.0
          %791 = vmatprep.subr.mxu0 0.0
          %792 = vmatpush1.msra.mxu0 0.0
          %793 = vmatprep.subr.mxu0 0.0
          %794 = vmatpush1.msra.mxu0 0.0
          %795 = vmatprep.subr.mxu0 0.0
          %796 = vmatpush1.msra.mxu0 0.0
          %797 = vmatprep.subr.mxu0 0.0
          %798 = vmatpush1.msra.mxu0 0.0
          %799 = vmatprep.subr.mxu0 0.0
          %800 = vmatpush1.msra.mxu0 0.0
          %801 = vmatprep.subr.mxu0 0.0
          %802 = vmatpush1.msra.mxu0 0.0
          %803 = vmatprep.subr.mxu0 0.0
          %804 = vmatpush1.msra.mxu0 0.0
          %805 = vmatprep.subr.mxu0 0.0
          %806 = vmatpush1.msra.mxu0 0.0
          %807 = vmatprep.subr.mxu0 0.0
          %808 = vmatpush1.msra.mxu0 0.0
          %809 = vmatprep.subr.mxu0 0.0
          %810 = vmatpush1.msra.mxu0 0.0
          %811 = vmatprep.subr.mxu0 0.0
          %812 = vmatpush1.msra.mxu0 0.0
          %813 = vmatprep.subr.mxu0 0.0
          %814 = vmatpush1.msra.mxu0 0.0
          %815 = vmatprep.subr.mxu0 0.0
          %816 = vmatpush1.msra.mxu0 0.0
          %817 = vmatprep.subr.mxu0 0.0
          %818 = vmatpush1.msra.mxu0 0.0
          %819 = vmatprep.subr.mxu0 0.0
          %820 = vmatpush1.msra.mxu0 0.0
          %821 = vmatprep.subr.mxu0 0.0
          %822 = vmatpush1.msra.mxu0 0.0
          %823 = vmatprep.subr.mxu0 0.0
          %824 = vmatpush1.msra.mxu0 0.0
          %825 = vmatprep.subr.mxu0 0.0
          %826 = vmatpush1.msra.mxu0 0.0
          %827 = vmatprep.subr.mxu0 0.0
          %828 = vmatpush1.msra.mxu0 0.0
          %829 = vmatprep.subr.mxu0 0.0
          %830 = vmatpush1.msra.mxu0 0.0
          %831 = vmatprep.subr.mxu0 0.0
          %832 = vmatpush1.msra.mxu0 0.0
          %833 = vmatprep.subr.mxu0 0.0
          %834 = vmatpush1.msra.mxu0 0.0
          %835 = vmatprep.subr.mxu0 0.0
          %836 = vmatpush1.msra.mxu0 0.0
          %837 = vmatprep.subr.mxu0 0.0
          %838 = vmatpush1.msra.mxu0 0.0
          %839 = vmatprep.subr.mxu0 0.0
          %840 = vmatpush1.msra.mxu0 0.0
          %841 = vmatprep.mubr.f32.mxu0 0.0
          %842 = vmatmul.mubr.f32.gmra.mrb[0].mxu0 %v775
          %v843 = vpop.f32.mrb[0].mxu0
          %v844 = vadd.f32 %v771, %v843
          %v845 = vpop.f32.mrb[0].mxu0
          %846 = vdwg.mxu0
          %vm847 = vcmask 392192
          %848 = vst.msk [vmem:[#allocation2] sm:$0xff] %vm847, %v844
          %v849 = vld [vmem:[#allocation17] sm:$0xff]
          %v850 = vld [vmem:[#allocation17 + $0x8] sm:$0xff]
          %v851 = vld [vmem:[#allocation17 + $0x10] sm:$0xff]
          %v852 = vld [vmem:[#allocation17 + $0x18] sm:$0xff]
          %v853 = vld [vmem:[#allocation19] sm:$0x1]
          %v855 = vlaneseq
          %v856 = vshrl.u32 %v855, 7
          %v857 = vsub.s32 0, %v856
          %v858 = vrot.slane %v853, %v857
          %860 = vmatprep.subr.mxu0 0.0
          %861 = vmatpush1.msra.mxu0 %v849
          %862 = vmatprep.subr.mxu0 0.0
          %863 = vmatpush1.msra.mxu0 %v850
          %864 = vmatprep.subr.mxu0 0.0
          %865 = vmatpush1.msra.mxu0 %v851
          %866 = vmatprep.subr.mxu0 0.0
          %867 = vmatpush1.msra.mxu0 %v852
          %868 = vmatprep.subr.mxu0 0.0
          %869 = vmatpush1.msra.mxu0 0.0
          %870 = vmatprep.subr.mxu0 0.0
          %871 = vmatpush1.msra.mxu0 0.0
          %872 = vmatprep.subr.mxu0 0.0
          %873 = vmatpush1.msra.mxu0 0.0
          %874 = vmatprep.subr.mxu0 0.0
          %875 = vmatpush1.msra.mxu0 0.0
          %876 = vmatprep.subr.mxu0 0.0
          %877 = vmatpush1.msra.mxu0 0.0
          %878 = vmatprep.subr.mxu0 0.0
          %879 = vmatpush1.msra.mxu0 0.0
          %880 = vmatprep.subr.mxu0 0.0
          %881 = vmatpush1.msra.mxu0 0.0
          %882 = vmatprep.subr.mxu0 0.0
          %883 = vmatpush1.msra.mxu0 0.0
          %884 = vmatprep.subr.mxu0 0.0
          %885 = vmatpush1.msra.mxu0 0.0
          %886 = vmatprep.subr.mxu0 0.0
          %887 = vmatpush1.msra.mxu0 0.0
          %888 = vmatprep.subr.mxu0 0.0
          %889 = vmatpush1.msra.mxu0 0.0
          %890 = vmatprep.subr.mxu0 0.0
          %891 = vmatpush1.msra.mxu0 0.0
          %892 = vmatprep.subr.mxu0 0.0
          %893 = vmatpush1.msra.mxu0 0.0
          %894 = vmatprep.subr.mxu0 0.0
          %895 = vmatpush1.msra.mxu0 0.0
          %896 = vmatprep.subr.mxu0 0.0
          %897 = vmatpush1.msra.mxu0 0.0
          %898 = vmatprep.subr.mxu0 0.0
          %899 = vmatpush1.msra.mxu0 0.0
          %900 = vmatprep.subr.mxu0 0.0
          %901 = vmatpush1.msra.mxu0 0.0
          %902 = vmatprep.subr.mxu0 0.0
          %903 = vmatpush1.msra.mxu0 0.0
          %904 = vmatprep.subr.mxu0 0.0
          %905 = vmatpush1.msra.mxu0 0.0
          %906 = vmatprep.subr.mxu0 0.0
          %907 = vmatpush1.msra.mxu0 0.0
          %908 = vmatprep.subr.mxu0 0.0
          %909 = vmatpush1.msra.mxu0 0.0
          %910 = vmatprep.subr.mxu0 0.0
          %911 = vmatpush1.msra.mxu0 0.0
          %912 = vmatprep.subr.mxu0 0.0
          %913 = vmatpush1.msra.mxu0 0.0
          %914 = vmatprep.subr.mxu0 0.0
          %915 = vmatpush1.msra.mxu0 0.0
          %916 = vmatprep.subr.mxu0 0.0
          %917 = vmatpush1.msra.mxu0 0.0
          %918 = vmatprep.subr.mxu0 0.0
          %919 = vmatpush1.msra.mxu0 0.0
          %920 = vmatprep.subr.mxu0 0.0
          %921 = vmatpush1.msra.mxu0 0.0
          %922 = vmatprep.subr.mxu0 0.0
          %923 = vmatpush1.msra.mxu0 0.0
          %924 = vmatprep.mubr.f32.mxu0 0.0
          %925 = vmatmul.mubr.f32.gmra.mrb[0].mxu0 %v775
          %v926 = vpop.f32.mrb[0].mxu0
          %v927 = vadd.f32 %v858, %v926
          %v928 = vpop.f32.mrb[0].mxu0
          %929 = vdwg.mxu0
          %930 = vst.msk [vmem:[#allocation3] sm:$0xff] %vm847, %v927
        $region144: #{tpu_custom_call.1} parent=79 // pred_fallthru
          _
        %s931 = smul.u32 %s46, 8
        %s932 = scalar_lea.vmem %s636, %s931 [#allocation5]
        %v933 = vld [vmem:[%s932] sm:$0xff]
        %v934 = vld [vmem:[%s653] sm:$0xff]
        %v935 = vld [vmem:[%s644] sm:$0x1]
        %vm936 = vcmp.gt.f32.partialorder %v935, 0.5
        %v937 = vsel %vm936, -1e+10, 0.0
        %v938 = vld [vmem:[#allocation11] sm:$0xff]
        %v939 = vld [vmem:[#allocation11 + $0x8] sm:$0xff]
        %v940 = vld [vmem:[#allocation11 + $0x10] sm:$0xff]
        %v941 = vld [vmem:[#allocation11 + $0x18] sm:$0xff]
        %v942 = vld [vmem:[#allocation13] sm:$0x1]
        %v944 = vlaneseq
        %v945 = vshrl.u32 %v944, 7
        %v946 = vsub.s32 0, %v945
        %v947 = vrot.slane %v942, %v946
        %vm949 = vcmask 261120
        %v951 = vsel %vm949, %v933, 0
        %953 = vmatprep.subr.mxu0 0.0
        %954 = vmatpush1.msra.mxu0 %v938
        %955 = vmatprep.subr.mxu0 0.0
        %956 = vmatpush1.msra.mxu0 %v939
        %957 = vmatprep.subr.mxu0 0.0
        %958 = vmatpush1.msra.mxu0 %v940
        %959 = vmatprep.subr.mxu0 0.0
        %960 = vmatpush1.msra.mxu0 %v941
        %961 = vmatprep.subr.mxu0 0.0
        %962 = vmatpush1.msra.mxu0 0.0
        %963 = vmatprep.subr.mxu0 0.0
        %964 = vmatpush1.msra.mxu0 0.0
        %965 = vmatprep.subr.mxu0 0.0
        %966 = vmatpush1.msra.mxu0 0.0
        %967 = vmatprep.subr.mxu0 0.0
        %968 = vmatpush1.msra.mxu0 0.0
        %969 = vmatprep.subr.mxu0 0.0
        %970 = vmatpush1.msra.mxu0 0.0
        %971 = vmatprep.subr.mxu0 0.0
        %972 = vmatpush1.msra.mxu0 0.0
        %973 = vmatprep.subr.mxu0 0.0
        %974 = vmatpush1.msra.mxu0 0.0
        %975 = vmatprep.subr.mxu0 0.0
        %976 = vmatpush1.msra.mxu0 0.0
        %977 = vmatprep.subr.mxu0 0.0
        %978 = vmatpush1.msra.mxu0 0.0
        %979 = vmatprep.subr.mxu0 0.0
        %980 = vmatpush1.msra.mxu0 0.0
        %981 = vmatprep.subr.mxu0 0.0
        %982 = vmatpush1.msra.mxu0 0.0
        %983 = vmatprep.subr.mxu0 0.0
        %984 = vmatpush1.msra.mxu0 0.0
        %985 = vmatprep.subr.mxu0 0.0
        %986 = vmatpush1.msra.mxu0 0.0
        %987 = vmatprep.subr.mxu0 0.0
        %988 = vmatpush1.msra.mxu0 0.0
        %989 = vmatprep.subr.mxu0 0.0
        %990 = vmatpush1.msra.mxu0 0.0
        %991 = vmatprep.subr.mxu0 0.0
        %992 = vmatpush1.msra.mxu0 0.0
        %993 = vmatprep.subr.mxu0 0.0
        %994 = vmatpush1.msra.mxu0 0.0
        %995 = vmatprep.subr.mxu0 0.0
        %996 = vmatpush1.msra.mxu0 0.0
        %997 = vmatprep.subr.mxu0 0.0
        %998 = vmatpush1.msra.mxu0 0.0
        %999 = vmatprep.subr.mxu0 0.0
        %1000 = vmatpush1.msra.mxu0 0.0
        %1001 = vmatprep.subr.mxu0 0.0
        %1002 = vmatpush1.msra.mxu0 0.0
        %1003 = vmatprep.subr.mxu0 0.0
        %1004 = vmatpush1.msra.mxu0 0.0
        %1005 = vmatprep.subr.mxu0 0.0
        %1006 = vmatpush1.msra.mxu0 0.0
        %1007 = vmatprep.subr.mxu0 0.0
        %1008 = vmatpush1.msra.mxu0 0.0
        %1009 = vmatprep.subr.mxu0 0.0
        %1010 = vmatpush1.msra.mxu0 0.0
        %1011 = vmatprep.subr.mxu0 0.0
        %1012 = vmatpush1.msra.mxu0 0.0
        %1013 = vmatprep.subr.mxu0 0.0
        %1014 = vmatpush1.msra.mxu0 0.0
        %1015 = vmatprep.subr.mxu0 0.0
        %1016 = vmatpush1.msra.mxu0 0.0
        %1017 = vmatprep.mubr.f32.mxu0 0.0
        %1018 = vmatmul.mubr.f32.gmra.mrb[0].mxu0 %v951
        %v1019 = vpop.f32.mrb[0].mxu0
        %v1020 = vadd.f32 %v947, %v1019
        %v1021 = vpop.f32.mrb[0].mxu0
        %1022 = vdwg.mxu0
        %v1023 = vld [vmem:[#allocation2] sm:$0xff]
        %v1024 = vld [vmem:[#allocation3] sm:$0xff]
        %v1026 = vlaneseq
        %v1027 = vshrl.u32 %v1026, 7
        %v1028 = vsub.s32 0, %v1027
        %v1029 = vrot.slane %v937, %v1028
        %vm1031 = vcmask 31744
        %v1033 = vsel %vm1031, %v1020, 0
        %v1036 = vsel %vm1031, %v1023, 0
        %1038 = vmatprep.subr.mxu0 0.0
        %1039 = vmatpush1.xpose.msra.mxu0 %v1036
        %1040 = vmatprep.subr.mxu0 0.0
        %1041 = vmatpush1.xpose.msra.mxu0 0.0
        %1042 = vmatprep.subr.mxu0 0.0
        %1043 = vmatpush1.xpose.msra.mxu0 0.0
        %1044 = vmatprep.subr.mxu0 0.0
        %1045 = vmatpush1.xpose.msra.mxu0 0.0
        %1046 = vmatprep.subr.mxu0 0.0
        %1047 = vmatpush1.xpose.msra.mxu0 0.0
        %1048 = vmatprep.subr.mxu0 0.0
        %1049 = vmatpush1.xpose.msra.mxu0 0.0
        %1050 = vmatprep.subr.mxu0 0.0
        %1051 = vmatpush1.xpose.msra.mxu0 0.0
        %1052 = vmatprep.subr.mxu0 0.0
        %1053 = vmatpush1.xpose.msra.mxu0 0.0
        %1054 = vmatprep.subr.mxu0 0.0
        %1055 = vmatpush1.xpose.msra.mxu0 0.0
        %1056 = vmatprep.subr.mxu0 0.0
        %1057 = vmatpush1.xpose.msra.mxu0 0.0
        %1058 = vmatprep.subr.mxu0 0.0
        %1059 = vmatpush1.xpose.msra.mxu0 0.0
        %1060 = vmatprep.subr.mxu0 0.0
        %1061 = vmatpush1.xpose.msra.mxu0 0.0
        %1062 = vmatprep.subr.mxu0 0.0
        %1063 = vmatpush1.xpose.msra.mxu0 0.0
        %1064 = vmatprep.subr.mxu0 0.0
        %1065 = vmatpush1.xpose.msra.mxu0 0.0
        %1066 = vmatprep.subr.mxu0 0.0
        %1067 = vmatpush1.xpose.msra.mxu0 0.0
        %1068 = vmatprep.subr.mxu0 0.0
        %1069 = vmatpush1.xpose.msra.mxu0 0.0
        %1070 = vmatprep.subr.mxu0 0.0
        %1071 = vmatpush1.xpose.msra.mxu0 0.0
        %1072 = vmatprep.subr.mxu0 0.0
        %1073 = vmatpush1.xpose.msra.mxu0 0.0
        %1074 = vmatprep.subr.mxu0 0.0
        %1075 = vmatpush1.xpose.msra.mxu0 0.0
        %1076 = vmatprep.subr.mxu0 0.0
        %1077 = vmatpush1.xpose.msra.mxu0 0.0
        %1078 = vmatprep.subr.mxu0 0.0
        %1079 = vmatpush1.xpose.msra.mxu0 0.0
        %1080 = vmatprep.subr.mxu0 0.0
        %1081 = vmatpush1.xpose.msra.mxu0 0.0
        %1082 = vmatprep.subr.mxu0 0.0
        %1083 = vmatpush1.xpose.msra.mxu0 0.0
        %1084 = vmatprep.subr.mxu0 0.0
        %1085 = vmatpush1.xpose.msra.mxu0 0.0
        %1086 = vmatprep.subr.mxu0 0.0
        %1087 = vmatpush1.xpose.msra.mxu0 0.0
        %1088 = vmatprep.subr.mxu0 0.0
        %1089 = vmatpush1.xpose.msra.mxu0 0.0
        %1090 = vmatprep.subr.mxu0 0.0
        %1091 = vmatpush1.xpose.msra.mxu0 0.0
        %1092 = vmatprep.subr.mxu0 0.0
        %1093 = vmatpush1.xpose.msra.mxu0 0.0
        %1094 = vmatprep.subr.mxu0 0.0
        %1095 = vmatpush1.xpose.msra.mxu0 0.0
        %1096 = vmatprep.subr.mxu0 0.0
        %1097 = vmatpush1.xpose.msra.mxu0 0.0
        %1098 = vmatprep.subr.mxu0 0.0
        %1099 = vmatpush1.xpose.msra.mxu0 0.0
        %1100 = vmatprep.subr.mxu0 0.0
        %1101 = vmatpush1.xpose.msra.mxu0 0.0
        %1102 = vmatprep.mubr.f32.mxu0 0.0
        %1103 = vmatmul.mubr.f32.gmra.mrb[0].mxu0 %v1033
        %v1104 = vpop.f32.mrb[0].mxu0
        %v1105 = vadd.f32 %v1029, %v1104
        %v1106 = vpop.f32.mrb[0].mxu0
        %1107 = vdwg.mxu0
        %vm1108 = vcmask 64512
        %v1109 = vsel %vm1108, %v1105, -inf
        %1110 = vmax.xlane.f32.xlu0 %v1109
        %v1111 = vpop.xlane.xlu0 %1110
        %v1112 = vsub.f32 %v1105, %v1111
        %v1113 = vmul.f32 %v1112, 1.442695
        %v1114 = vpow.pop %v1113
        %v1115 = vsel %vm1108, %v1114, 0.0
        %1116 = vadd.xlane.f32.xlu0 %v1115
        %v1117 = vpop.xlane.xlu0 %1116
        %v1118 = vrcp.pop %v1117
        %v1119 = vmul.f32 %v1114, %v1118
        %v1121 = vsel %vm1108, %v1119, 0
        %1123 = vmatprep.subr.mxu0 0.0
        %1124 = vmatpush1.msra.mxu0 %v1024
        %1125 = vmatprep.subr.mxu0 0.0
        %1126 = vmatpush1.msra.mxu0 0.0
        %1127 = vmatprep.subr.mxu0 0.0
        %1128 = vmatpush1.msra.mxu0 0.0
        %1129 = vmatprep.subr.mxu0 0.0
        %1130 = vmatpush1.msra.mxu0 0.0
        %1131 = vmatprep.subr.mxu0 0.0
        %1132 = vmatpush1.msra.mxu0 0.0
        %1133 = vmatprep.subr.mxu0 0.0
        %1134 = vmatpush1.msra.mxu0 0.0
        %1135 = vmatprep.subr.mxu0 0.0
        %1136 = vmatpush1.msra.mxu0 0.0
        %1137 = vmatprep.subr.mxu0 0.0
        %1138 = vmatpush1.msra.mxu0 0.0
        %1139 = vmatprep.subr.mxu0 0.0
        %1140 = vmatpush1.msra.mxu0 0.0
        %1141 = vmatprep.subr.mxu0 0.0
        %1142 = vmatpush1.msra.mxu0 0.0
        %1143 = vmatprep.subr.mxu0 0.0
        %1144 = vmatpush1.msra.mxu0 0.0
        %1145 = vmatprep.subr.mxu0 0.0
        %1146 = vmatpush1.msra.mxu0 0.0
        %1147 = vmatprep.subr.mxu0 0.0
        %1148 = vmatpush1.msra.mxu0 0.0
        %1149 = vmatprep.subr.mxu0 0.0
        %1150 = vmatpush1.msra.mxu0 0.0
        %1151 = vmatprep.subr.mxu0 0.0
        %1152 = vmatpush1.msra.mxu0 0.0
        %1153 = vmatprep.subr.mxu0 0.0
        %1154 = vmatpush1.msra.mxu0 0.0
        %1155 = vmatprep.subr.mxu0 0.0
        %1156 = vmatpush1.msra.mxu0 0.0
        %1157 = vmatprep.subr.mxu0 0.0
        %1158 = vmatpush1.msra.mxu0 0.0
        %1159 = vmatprep.subr.mxu0 0.0
        %1160 = vmatpush1.msra.mxu0 0.0
        %1161 = vmatprep.subr.mxu0 0.0
        %1162 = vmatpush1.msra.mxu0 0.0
        %1163 = vmatprep.subr.mxu0 0.0
        %1164 = vmatpush1.msra.mxu0 0.0
        %1165 = vmatprep.subr.mxu0 0.0
        %1166 = vmatpush1.msra.mxu0 0.0
        %1167 = vmatprep.subr.mxu0 0.0
        %1168 = vmatpush1.msra.mxu0 0.0
        %1169 = vmatprep.subr.mxu0 0.0
        %1170 = vmatpush1.msra.mxu0 0.0
        %1171 = vmatprep.subr.mxu0 0.0
        %1172 = vmatpush1.msra.mxu0 0.0
        %1173 = vmatprep.subr.mxu0 0.0
        %1174 = vmatpush1.msra.mxu0 0.0
        %1175 = vmatprep.subr.mxu0 0.0
        %1176 = vmatpush1.msra.mxu0 0.0
        %1177 = vmatprep.subr.mxu0 0.0
        %1178 = vmatpush1.msra.mxu0 0.0
        %1179 = vmatprep.subr.mxu0 0.0
        %1180 = vmatpush1.msra.mxu0 0.0
        %1181 = vmatprep.subr.mxu0 0.0
        %1182 = vmatpush1.msra.mxu0 0.0
        %1183 = vmatprep.subr.mxu0 0.0
        %1184 = vmatpush1.msra.mxu0 0.0
        %1185 = vmatprep.subr.mxu0 0.0
        %1186 = vmatpush1.msra.mxu0 0.0
        %1187 = vmatprep.mubr.f32.mxu0 0.0
        %1188 = vmatmul.mubr.f32.gmra.mrb[0].mxu0 %v1121
        %v1189 = vpop.f32.mrb[0].mxu0
        %v1190 = vadd.f32 0.0, %v1189
        %v1191 = vpop.f32.mrb[0].mxu0
        %1192 = vdwg.mxu0
        %1193 = vst.msk [vmem:[#allocation4] sm:$0xff] %vm1031, %v1190
        %1194 = vrot.lane.b32.xlu0 %v1020, 124
        %v1195 = vpop.permute.xlu0 %1194
        %1196 = vrot.lane.b32.xlu0 %v1023, 124
        %v1197 = vpop.permute.xlu0 %1196
        %v1198 = vsel %vm1031, %v1195, 0
        %v1200 = vsel %vm1031, %v1197, 0
        %1202 = vmatprep.subr.mxu0 0.0
        %1203 = vmatpush1.xpose.msra.mxu0 %v1200
        %1204 = vmatprep.subr.mxu0 0.0
        %1205 = vmatpush1.xpose.msra.mxu0 0.0
        %1206 = vmatprep.subr.mxu0 0.0
        %1207 = vmatpush1.xpose.msra.mxu0 0.0
        %1208 = vmatprep.subr.mxu0 0.0
        %1209 = vmatpush1.xpose.msra.mxu0 0.0
        %1210 = vmatprep.subr.mxu0 0.0
        %1211 = vmatpush1.xpose.msra.mxu0 0.0
        %1212 = vmatprep.subr.mxu0 0.0
        %1213 = vmatpush1.xpose.msra.mxu0 0.0
        %1214 = vmatprep.subr.mxu0 0.0
        %1215 = vmatpush1.xpose.msra.mxu0 0.0
        %1216 = vmatprep.subr.mxu0 0.0
        %1217 = vmatpush1.xpose.msra.mxu0 0.0
        %1218 = vmatprep.subr.mxu0 0.0
        %1219 = vmatpush1.xpose.msra.mxu0 0.0
        %1220 = vmatprep.subr.mxu0 0.0
        %1221 = vmatpush1.xpose.msra.mxu0 0.0
        %1222 = vmatprep.subr.mxu0 0.0
        %1223 = vmatpush1.xpose.msra.mxu0 0.0
        %1224 = vmatprep.subr.mxu0 0.0
        %1225 = vmatpush1.xpose.msra.mxu0 0.0
        %1226 = vmatprep.subr.mxu0 0.0
        %1227 = vmatpush1.xpose.msra.mxu0 0.0
        %1228 = vmatprep.subr.mxu0 0.0
        %1229 = vmatpush1.xpose.msra.mxu0 0.0
        %1230 = vmatprep.subr.mxu0 0.0
        %1231 = vmatpush1.xpose.msra.mxu0 0.0
        %1232 = vmatprep.subr.mxu0 0.0
        %1233 = vmatpush1.xpose.msra.mxu0 0.0
        %1234 = vmatprep.subr.mxu0 0.0
        %1235 = vmatpush1.xpose.msra.mxu0 0.0
        %1236 = vmatprep.subr.mxu0 0.0
        %1237 = vmatpush1.xpose.msra.mxu0 0.0
        %1238 = vmatprep.subr.mxu0 0.0
        %1239 = vmatpush1.xpose.msra.mxu0 0.0
        %1240 = vmatprep.subr.mxu0 0.0
        %1241 = vmatpush1.xpose.msra.mxu0 0.0
        %1242 = vmatprep.subr.mxu0 0.0
        %1243 = vmatpush1.xpose.msra.mxu0 0.0
        %1244 = vmatprep.subr.mxu0 0.0
        %1245 = vmatpush1.xpose.msra.mxu0 0.0
        %1246 = vmatprep.subr.mxu0 0.0
        %1247 = vmatpush1.xpose.msra.mxu0 0.0
        %1248 = vmatprep.subr.mxu0 0.0
        %1249 = vmatpush1.xpose.msra.mxu0 0.0
        %1250 = vmatprep.subr.mxu0 0.0
        %1251 = vmatpush1.xpose.msra.mxu0 0.0
        %1252 = vmatprep.subr.mxu0 0.0
        %1253 = vmatpush1.xpose.msra.mxu0 0.0
        %1254 = vmatprep.subr.mxu0 0.0
        %1255 = vmatpush1.xpose.msra.mxu0 0.0
        %1256 = vmatprep.subr.mxu0 0.0
        %1257 = vmatpush1.xpose.msra.mxu0 0.0
        %1258 = vmatprep.subr.mxu0 0.0
        %1259 = vmatpush1.xpose.msra.mxu0 0.0
        %1260 = vmatprep.subr.mxu0 0.0
        %1261 = vmatpush1.xpose.msra.mxu0 0.0
        %1262 = vmatprep.subr.mxu0 0.0
        %1263 = vmatpush1.xpose.msra.mxu0 0.0
        %1264 = vmatprep.subr.mxu0 0.0
        %1265 = vmatpush1.xpose.msra.mxu0 0.0
        %1266 = vmatprep.mubr.f32.mxu0 0.0
        %1267 = vmatmul.mubr.f32.gmra.mrb[0].mxu0 %v1198
        %v1268 = vpop.f32.mrb[0].mxu0
        %v1269 = vadd.f32 %v1029, %v1268
        %v1270 = vpop.f32.mrb[0].mxu0
        %1271 = vdwg.mxu0
        %v1272 = vsel %vm1108, %v1269, -inf
        %1273 = vmax.xlane.f32.xlu0 %v1272
        %v1274 = vpop.xlane.xlu0 %1273
        %v1275 = vsub.f32 %v1269, %v1274
        %v1276 = vmul.f32 %v1275, 1.442695
        %v1277 = vpow.pop %v1276
        %v1278 = vsel %vm1108, %v1277, 0.0
        %1279 = vadd.xlane.f32.xlu0 %v1278
        %v1280 = vpop.xlane.xlu0 %1279
        %v1281 = vrcp.pop %v1280
        %v1282 = vmul.f32 %v1277, %v1281
        %1284 = vrot.lane.b32.xlu0 %v1024, 124
        %v1285 = vpop.permute.xlu0 %1284
        %v1288 = vsel %vm1108, %v1282, 0
        %1290 = vmatprep.subr.mxu0 0.0
        %1291 = vmatpush1.msra.mxu0 %v1285
        %1292 = vmatprep.subr.mxu0 0.0
        %1293 = vmatpush1.msra.mxu0 0.0
        %1294 = vmatprep.subr.mxu0 0.0
        %1295 = vmatpush1.msra.mxu0 0.0
        %1296 = vmatprep.subr.mxu0 0.0
        %1297 = vmatpush1.msra.mxu0 0.0
        %1298 = vmatprep.subr.mxu0 0.0
        %1299 = vmatpush1.msra.mxu0 0.0
        %1300 = vmatprep.subr.mxu0 0.0
        %1301 = vmatpush1.msra.mxu0 0.0
        %1302 = vmatprep.subr.mxu0 0.0
        %1303 = vmatpush1.msra.mxu0 0.0
        %1304 = vmatprep.subr.mxu0 0.0
        %1305 = vmatpush1.msra.mxu0 0.0
        %1306 = vmatprep.subr.mxu0 0.0
        %1307 = vmatpush1.msra.mxu0 0.0
        %1308 = vmatprep.subr.mxu0 0.0
        %1309 = vmatpush1.msra.mxu0 0.0
        %1310 = vmatprep.subr.mxu0 0.0
        %1311 = vmatpush1.msra.mxu0 0.0
        %1312 = vmatprep.subr.mxu0 0.0
        %1313 = vmatpush1.msra.mxu0 0.0
        %1314 = vmatprep.subr.mxu0 0.0
        %1315 = vmatpush1.msra.mxu0 0.0
        %1316 = vmatprep.subr.mxu0 0.0
        %1317 = vmatpush1.msra.mxu0 0.0
        %1318 = vmatprep.subr.mxu0 0.0
        %1319 = vmatpush1.msra.mxu0 0.0
        %1320 = vmatprep.subr.mxu0 0.0
        %1321 = vmatpush1.msra.mxu0 0.0
        %1322 = vmatprep.subr.mxu0 0.0
        %1323 = vmatpush1.msra.mxu0 0.0
        %1324 = vmatprep.subr.mxu0 0.0
        %1325 = vmatpush1.msra.mxu0 0.0
        %1326 = vmatprep.subr.mxu0 0.0
        %1327 = vmatpush1.msra.mxu0 0.0
        %1328 = vmatprep.subr.mxu0 0.0
        %1329 = vmatpush1.msra.mxu0 0.0
        %1330 = vmatprep.subr.mxu0 0.0
        %1331 = vmatpush1.msra.mxu0 0.0
        %1332 = vmatprep.subr.mxu0 0.0
        %1333 = vmatpush1.msra.mxu0 0.0
        %1334 = vmatprep.subr.mxu0 0.0
        %1335 = vmatpush1.msra.mxu0 0.0
        %1336 = vmatprep.subr.mxu0 0.0
        %1337 = vmatpush1.msra.mxu0 0.0
        %1338 = vmatprep.subr.mxu0 0.0
        %1339 = vmatpush1.msra.mxu0 0.0
        %1340 = vmatprep.subr.mxu0 0.0
        %1341 = vmatpush1.msra.mxu0 0.0
        %1342 = vmatprep.subr.mxu0 0.0
        %1343 = vmatpush1.msra.mxu0 0.0
        %1344 = vmatprep.subr.mxu0 0.0
        %1345 = vmatpush1.msra.mxu0 0.0
        %1346 = vmatprep.subr.mxu0 0.0
        %1347 = vmatpush1.msra.mxu0 0.0
        %1348 = vmatprep.subr.mxu0 0.0
        %1349 = vmatpush1.msra.mxu0 0.0
        %1350 = vmatprep.subr.mxu0 0.0
        %1351 = vmatpush1.msra.mxu0 0.0
        %1352 = vmatprep.subr.mxu0 0.0
        %1353 = vmatpush1.msra.mxu0 0.0
        %1354 = vmatprep.mubr.f32.mxu0 0.0
        %1355 = vmatmul.mubr.f32.gmra.mrb[0].mxu0 %v1288
        %v1356 = vpop.f32.mrb[0].mxu0
        %v1357 = vadd.f32 0.0, %v1356
        %v1358 = vpop.f32.mrb[0].mxu0
        %1359 = vdwg.mxu0
        %1361 = vrot.lane.b32.xlu0 %v1357, 4
        %v1362 = vpop.permute.xlu0 %1361
        %vm1364 = vcmask 64544
        %1365 = vst.msk [vmem:[#allocation4] sm:$0xff] %vm1364, %v1362
        %1366 = vrot.lane.b32.xlu0 %v1020, 120
        %v1367 = vpop.permute.xlu0 %1366
        %1368 = vrot.lane.b32.xlu0 %v1023, 120
        %v1369 = vpop.permute.xlu0 %1368
        %v1370 = vsel %vm1031, %v1367, 0
        %v1372 = vsel %vm1031, %v1369, 0
        %1374 = vmatprep.subr.mxu0 0.0
        %1375 = vmatpush1.xpose.msra.mxu0 %v1372
        %1376 = vmatprep.subr.mxu0 0.0
        %1377 = vmatpush1.xpose.msra.mxu0 0.0
        %1378 = vmatprep.subr.mxu0 0.0
        %1379 = vmatpush1.xpose.msra.mxu0 0.0
        %1380 = vmatprep.subr.mxu0 0.0
        %1381 = vmatpush1.xpose.msra.mxu0 0.0
        %1382 = vmatprep.subr.mxu0 0.0
        %1383 = vmatpush1.xpose.msra.mxu0 0.0
        %1384 = vmatprep.subr.mxu0 0.0
        %1385 = vmatpush1.xpose.msra.mxu0 0.0
        %1386 = vmatprep.subr.mxu0 0.0
        %1387 = vmatpush1.xpose.msra.mxu0 0.0
        %1388 = vmatprep.subr.mxu0 0.0
        %1389 = vmatpush1.xpose.msra.mxu0 0.0
        %1390 = vmatprep.subr.mxu0 0.0
        %1391 = vmatpush1.xpose.msra.mxu0 0.0
        %1392 = vmatprep.subr.mxu0 0.0
        %1393 = vmatpush1.xpose.msra.mxu0 0.0
        %1394 = vmatprep.subr.mxu0 0.0
        %1395 = vmatpush1.xpose.msra.mxu0 0.0
        %1396 = vmatprep.subr.mxu0 0.0
        %1397 = vmatpush1.xpose.msra.mxu0 0.0
        %1398 = vmatprep.subr.mxu0 0.0
        %1399 = vmatpush1.xpose.msra.mxu0 0.0
        %1400 = vmatprep.subr.mxu0 0.0
        %1401 = vmatpush1.xpose.msra.mxu0 0.0
        %1402 = vmatprep.subr.mxu0 0.0
        %1403 = vmatpush1.xpose.msra.mxu0 0.0
        %1404 = vmatprep.subr.mxu0 0.0
        %1405 = vmatpush1.xpose.msra.mxu0 0.0
        %1406 = vmatprep.subr.mxu0 0.0
        %1407 = vmatpush1.xpose.msra.mxu0 0.0
        %1408 = vmatprep.subr.mxu0 0.0
        %1409 = vmatpush1.xpose.msra.mxu0 0.0
        %1410 = vmatprep.subr.mxu0 0.0
        %1411 = vmatpush1.xpose.msra.mxu0 0.0
        %1412 = vmatprep.subr.mxu0 0.0
        %1413 = vmatpush1.xpose.msra.mxu0 0.0
        %1414 = vmatprep.subr.mxu0 0.0
        %1415 = vmatpush1.xpose.msra.mxu0 0.0
        %1416 = vmatprep.subr.mxu0 0.0
        %1417 = vmatpush1.xpose.msra.mxu0 0.0
        %1418 = vmatprep.subr.mxu0 0.0
        %1419 = vmatpush1.xpose.msra.mxu0 0.0
        %1420 = vmatprep.subr.mxu0 0.0
        %1421 = vmatpush1.xpose.msra.mxu0 0.0
        %1422 = vmatprep.subr.mxu0 0.0
        %1423 = vmatpush1.xpose.msra.mxu0 0.0
        %1424 = vmatprep.subr.mxu0 0.0
        %1425 = vmatpush1.xpose.msra.mxu0 0.0
        %1426 = vmatprep.subr.mxu0 0.0
        %1427 = vmatpush1.xpose.msra.mxu0 0.0
        %1428 = vmatprep.subr.mxu0 0.0
        %1429 = vmatpush1.xpose.msra.mxu0 0.0
        %1430 = vmatprep.subr.mxu0 0.0
        %1431 = vmatpush1.xpose.msra.mxu0 0.0
        %1432 = vmatprep.subr.mxu0 0.0
        %1433 = vmatpush1.xpose.msra.mxu0 0.0
        %1434 = vmatprep.subr.mxu0 0.0
        %1435 = vmatpush1.xpose.msra.mxu0 0.0
        %1436 = vmatprep.subr.mxu0 0.0
        %1437 = vmatpush1.xpose.msra.mxu0 0.0
        %1438 = vmatprep.mubr.f32.mxu0 0.0
        %1439 = vmatmul.mubr.f32.gmra.mrb[0].mxu0 %v1370
        %v1440 = vpop.f32.mrb[0].mxu0
        %v1441 = vadd.f32 %v1029, %v1440
        %v1442 = vpop.f32.mrb[0].mxu0
        %1443 = vdwg.mxu0
        %v1444 = vsel %vm1108, %v1441, -inf
        %1445 = vmax.xlane.f32.xlu0 %v1444
        %v1446 = vpop.xlane.xlu0 %1445
        %v1447 = vsub.f32 %v1441, %v1446
        %v1448 = vmul.f32 %v1447, 1.442695
        %v1449 = vpow.pop %v1448
        %v1450 = vsel %vm1108, %v1449, 0.0
        %1451 = vadd.xlane.f32.xlu0 %v1450
        %v1452 = vpop.xlane.xlu0 %1451
        %v1453 = vrcp.pop %v1452
        %v1454 = vmul.f32 %v1449, %v1453
        %1455 = vrot.lane.b32.xlu0 %v1024, 120
        %v1456 = vpop.permute.xlu0 %1455
        %v1459 = vsel %vm1108, %v1454, 0
        %1461 = vmatprep.subr.mxu0 0.0
        %1462 = vmatpush1.msra.mxu0 %v1456
        %1463 = vmatprep.subr.mxu0 0.0
        %1464 = vmatpush1.msra.mxu0 0.0
        %1465 = vmatprep.subr.mxu0 0.0
        %1466 = vmatpush1.msra.mxu0 0.0
        %1467 = vmatprep.subr.mxu0 0.0
        %1468 = vmatpush1.msra.mxu0 0.0
        %1469 = vmatprep.subr.mxu0 0.0
        %1470 = vmatpush1.msra.mxu0 0.0
        %1471 = vmatprep.subr.mxu0 0.0
        %1472 = vmatpush1.msra.mxu0 0.0
        %1473 = vmatprep.subr.mxu0 0.0
        %1474 = vmatpush1.msra.mxu0 0.0
        %1475 = vmatprep.subr.mxu0 0.0
        %1476 = vmatpush1.msra.mxu0 0.0
        %1477 = vmatprep.subr.mxu0 0.0
        %1478 = vmatpush1.msra.mxu0 0.0
        %1479 = vmatprep.subr.mxu0 0.0
        %1480 = vmatpush1.msra.mxu0 0.0
        %1481 = vmatprep.subr.mxu0 0.0
        %1482 = vmatpush1.msra.mxu0 0.0
        %1483 = vmatprep.subr.mxu0 0.0
        %1484 = vmatpush1.msra.mxu0 0.0
        %1485 = vmatprep.subr.mxu0 0.0
        %1486 = vmatpush1.msra.mxu0 0.0
        %1487 = vmatprep.subr.mxu0 0.0
        %1488 = vmatpush1.msra.mxu0 0.0
        %1489 = vmatprep.subr.mxu0 0.0
        %1490 = vmatpush1.msra.mxu0 0.0
        %1491 = vmatprep.subr.mxu0 0.0
        %1492 = vmatpush1.msra.mxu0 0.0
        %1493 = vmatprep.subr.mxu0 0.0
        %1494 = vmatpush1.msra.mxu0 0.0
        %1495 = vmatprep.subr.mxu0 0.0
        %1496 = vmatpush1.msra.mxu0 0.0
        %1497 = vmatprep.subr.mxu0 0.0
        %1498 = vmatpush1.msra.mxu0 0.0
        %1499 = vmatprep.subr.mxu0 0.0
        %1500 = vmatpush1.msra.mxu0 0.0
        %1501 = vmatprep.subr.mxu0 0.0
        %1502 = vmatpush1.msra.mxu0 0.0
        %1503 = vmatprep.subr.mxu0 0.0
        %1504 = vmatpush1.msra.mxu0 0.0
        %1505 = vmatprep.subr.mxu0 0.0
        %1506 = vmatpush1.msra.mxu0 0.0
        %1507 = vmatprep.subr.mxu0 0.0
        %1508 = vmatpush1.msra.mxu0 0.0
        %1509 = vmatprep.subr.mxu0 0.0
        %1510 = vmatpush1.msra.mxu0 0.0
        %1511 = vmatprep.subr.mxu0 0.0
        %1512 = vmatpush1.msra.mxu0 0.0
        %1513 = vmatprep.subr.mxu0 0.0
        %1514 = vmatpush1.msra.mxu0 0.0
        %1515 = vmatprep.subr.mxu0 0.0
        %1516 = vmatpush1.msra.mxu0 0.0
        %1517 = vmatprep.subr.mxu0 0.0
        %1518 = vmatpush1.msra.mxu0 0.0
        %1519 = vmatprep.subr.mxu0 0.0
        %1520 = vmatpush1.msra.mxu0 0.0
        %1521 = vmatprep.subr.mxu0 0.0
        %1522 = vmatpush1.msra.mxu0 0.0
        %1523 = vmatprep.subr.mxu0 0.0
        %1524 = vmatpush1.msra.mxu0 0.0
        %1525 = vmatprep.mubr.f32.mxu0 0.0
        %1526 = vmatmul.mubr.f32.gmra.mrb[0].mxu0 %v1459
        %v1527 = vpop.f32.mrb[0].mxu0
        %v1528 = vadd.f32 0.0, %v1527
        %v1529 = vpop.f32.mrb[0].mxu0
        %1530 = vdwg.mxu0
        %1532 = vrot.lane.b32.xlu0 %v1528, 8
        %v1533 = vpop.permute.xlu0 %1532
        %vm1535 = vcmask 97344
        %1536 = vst.msk [vmem:[#allocation4] sm:$0xff] %vm1535, %v1533
        %1537 = vrot.lane.b32.xlu0 %v1020, 116
        %v1538 = vpop.permute.xlu0 %1537
        %1539 = vrot.lane.b32.xlu0 %v1023, 116
        %v1540 = vpop.permute.xlu0 %1539
        %v1541 = vsel %vm1031, %v1538, 0
        %v1543 = vsel %vm1031, %v1540, 0
        %1545 = vmatprep.subr.mxu0 0.0
        %1546 = vmatpush1.xpose.msra.mxu0 %v1543
        %1547 = vmatprep.subr.mxu0 0.0
        %1548 = vmatpush1.xpose.msra.mxu0 0.0
        %1549 = vmatprep.subr.mxu0 0.0
        %1550 = vmatpush1.xpose.msra.mxu0 0.0
        %1551 = vmatprep.subr.mxu0 0.0
        %1552 = vmatpush1.xpose.msra.mxu0 0.0
        %1553 = vmatprep.subr.mxu0 0.0
        %1554 = vmatpush1.xpose.msra.mxu0 0.0
        %1555 = vmatprep.subr.mxu0 0.0
        %1556 = vmatpush1.xpose.msra.mxu0 0.0
        %1557 = vmatprep.subr.mxu0 0.0
        %1558 = vmatpush1.xpose.msra.mxu0 0.0
        %1559 = vmatprep.subr.mxu0 0.0
        %1560 = vmatpush1.xpose.msra.mxu0 0.0
        %1561 = vmatprep.subr.mxu0 0.0
        %1562 = vmatpush1.xpose.msra.mxu0 0.0
        %1563 = vmatprep.subr.mxu0 0.0
        %1564 = vmatpush1.xpose.msra.mxu0 0.0
        %1565 = vmatprep.subr.mxu0 0.0
        %1566 = vmatpush1.xpose.msra.mxu0 0.0
        %1567 = vmatprep.subr.mxu0 0.0
        %1568 = vmatpush1.xpose.msra.mxu0 0.0
        %1569 = vmatprep.subr.mxu0 0.0
        %1570 = vmatpush1.xpose.msra.mxu0 0.0
        %1571 = vmatprep.subr.mxu0 0.0
        %1572 = vmatpush1.xpose.msra.mxu0 0.0
        %1573 = vmatprep.subr.mxu0 0.0
        %1574 = vmatpush1.xpose.msra.mxu0 0.0
        %1575 = vmatprep.subr.mxu0 0.0
        %1576 = vmatpush1.xpose.msra.mxu0 0.0
        %1577 = vmatprep.subr.mxu0 0.0
        %1578 = vmatpush1.xpose.msra.mxu0 0.0
        %1579 = vmatprep.subr.mxu0 0.0
        %1580 = vmatpush1.xpose.msra.mxu0 0.0
        %1581 = vmatprep.subr.mxu0 0.0
        %1582 = vmatpush1.xpose.msra.mxu0 0.0
        %1583 = vmatprep.subr.mxu0 0.0
        %1584 = vmatpush1.xpose.msra.mxu0 0.0
        %1585 = vmatprep.subr.mxu0 0.0
        %1586 = vmatpush1.xpose.msra.mxu0 0.0
        %1587 = vmatprep.subr.mxu0 0.0
        %1588 = vmatpush1.xpose.msra.mxu0 0.0
        %1589 = vmatprep.subr.mxu0 0.0
        %1590 = vmatpush1.xpose.msra.mxu0 0.0
        %1591 = vmatprep.subr.mxu0 0.0
        %1592 = vmatpush1.xpose.msra.mxu0 0.0
        %1593 = vmatprep.subr.mxu0 0.0
        %1594 = vmatpush1.xpose.msra.mxu0 0.0
        %1595 = vmatprep.subr.mxu0 0.0
        %1596 = vmatpush1.xpose.msra.mxu0 0.0
        %1597 = vmatprep.subr.mxu0 0.0
        %1598 = vmatpush1.xpose.msra.mxu0 0.0
        %1599 = vmatprep.subr.mxu0 0.0
        %1600 = vmatpush1.xpose.msra.mxu0 0.0
        %1601 = vmatprep.subr.mxu0 0.0
        %1602 = vmatpush1.xpose.msra.mxu0 0.0
        %1603 = vmatprep.subr.mxu0 0.0
        %1604 = vmatpush1.xpose.msra.mxu0 0.0
        %1605 = vmatprep.subr.mxu0 0.0
        %1606 = vmatpush1.xpose.msra.mxu0 0.0
        %1607 = vmatprep.subr.mxu0 0.0
        %1608 = vmatpush1.xpose.msra.mxu0 0.0
        %1609 = vmatprep.mubr.f32.mxu0 0.0
        %1610 = vmatmul.mubr.f32.gmra.mrb[0].mxu0 %v1541
        %v1611 = vpop.f32.mrb[0].mxu0
        %v1612 = vadd.f32 %v1029, %v1611
        %v1613 = vpop.f32.mrb[0].mxu0
        %1614 = vdwg.mxu0
        %v1615 = vsel %vm1108, %v1612, -inf
        %1616 = vmax.xlane.f32.xlu0 %v1615
        %v1617 = vpop.xlane.xlu0 %1616
        %v1618 = vsub.f32 %v1612, %v1617
        %v1619 = vmul.f32 %v1618, 1.442695
        %v1620 = vpow.pop %v1619
        %v1621 = vsel %vm1108, %v1620, 0.0
        %1622 = vadd.xlane.f32.xlu0 %v1621
        %v1623 = vpop.xlane.xlu0 %1622
        %v1624 = vrcp.pop %v1623
        %v1625 = vmul.f32 %v1620, %v1624
        %1626 = vrot.lane.b32.xlu0 %v1024, 116
        %v1627 = vpop.permute.xlu0 %1626
        %v1630 = vsel %vm1108, %v1625, 0
        %1632 = vmatprep.subr.mxu0 0.0
        %1633 = vmatpush1.msra.mxu0 %v1627
        %1634 = vmatprep.subr.mxu0 0.0
        %1635 = vmatpush1.msra.mxu0 0.0
        %1636 = vmatprep.subr.mxu0 0.0
        %1637 = vmatpush1.msra.mxu0 0.0
        %1638 = vmatprep.subr.mxu0 0.0
        %1639 = vmatpush1.msra.mxu0 0.0
        %1640 = vmatprep.subr.mxu0 0.0
        %1641 = vmatpush1.msra.mxu0 0.0
        %1642 = vmatprep.subr.mxu0 0.0
        %1643 = vmatpush1.msra.mxu0 0.0
        %1644 = vmatprep.subr.mxu0 0.0
        %1645 = vmatpush1.msra.mxu0 0.0
        %1646 = vmatprep.subr.mxu0 0.0
        %1647 = vmatpush1.msra.mxu0 0.0
        %1648 = vmatprep.subr.mxu0 0.0
        %1649 = vmatpush1.msra.mxu0 0.0
        %1650 = vmatprep.subr.mxu0 0.0
        %1651 = vmatpush1.msra.mxu0 0.0
        %1652 = vmatprep.subr.mxu0 0.0
        %1653 = vmatpush1.msra.mxu0 0.0
        %1654 = vmatprep.subr.mxu0 0.0
        %1655 = vmatpush1.msra.mxu0 0.0
        %1656 = vmatprep.subr.mxu0 0.0
        %1657 = vmatpush1.msra.mxu0 0.0
        %1658 = vmatprep.subr.mxu0 0.0
        %1659 = vmatpush1.msra.mxu0 0.0
        %1660 = vmatprep.subr.mxu0 0.0
        %1661 = vmatpush1.msra.mxu0 0.0
        %1662 = vmatprep.subr.mxu0 0.0
        %1663 = vmatpush1.msra.mxu0 0.0
        %1664 = vmatprep.subr.mxu0 0.0
        %1665 = vmatpush1.msra.mxu0 0.0
        %1666 = vmatprep.subr.mxu0 0.0
        %1667 = vmatpush1.msra.mxu0 0.0
        %1668 = vmatprep.subr.mxu0 0.0
        %1669 = vmatpush1.msra.mxu0 0.0
        %1670 = vmatprep.subr.mxu0 0.0
        %1671 = vmatpush1.msra.mxu0 0.0
        %1672 = vmatprep.subr.mxu0 0.0
        %1673 = vmatpush1.msra.mxu0 0.0
        %1674 = vmatprep.subr.mxu0 0.0
        %1675 = vmatpush1.msra.mxu0 0.0
        %1676 = vmatprep.subr.mxu0 0.0
        %1677 = vmatpush1.msra.mxu0 0.0
        %1678 = vmatprep.subr.mxu0 0.0
        %1679 = vmatpush1.msra.mxu0 0.0
        %1680 = vmatprep.subr.mxu0 0.0
        %1681 = vmatpush1.msra.mxu0 0.0
        %1682 = vmatprep.subr.mxu0 0.0
        %1683 = vmatpush1.msra.mxu0 0.0
        %1684 = vmatprep.subr.mxu0 0.0
        %1685 = vmatpush1.msra.mxu0 0.0
        %1686 = vmatprep.subr.mxu0 0.0
        %1687 = vmatpush1.msra.mxu0 0.0
        %1688 = vmatprep.subr.mxu0 0.0
        %1689 = vmatpush1.msra.mxu0 0.0
        %1690 = vmatprep.subr.mxu0 0.0
        %1691 = vmatpush1.msra.mxu0 0.0
        %1692 = vmatprep.subr.mxu0 0.0
        %1693 = vmatpush1.msra.mxu0 0.0
        %1694 = vmatprep.subr.mxu0 0.0
        %1695 = vmatpush1.msra.mxu0 0.0
        %1696 = vmatprep.mubr.f32.mxu0 0.0
        %1697 = vmatmul.mubr.f32.gmra.mrb[0].mxu0 %v1630
        %v1698 = vpop.f32.mrb[0].mxu0
        %v1699 = vadd.f32 0.0, %v1698
        %v1700 = vpop.f32.mrb[0].mxu0
        %1701 = vdwg.mxu0
        %1703 = vrot.lane.b32.xlu0 %v1699, 12
        %v1704 = vpop.permute.xlu0 %1703
        %vm1706 = vcmask 130144
        %1707 = vst.msk [vmem:[#allocation4] sm:$0xff] %vm1706, %v1704
        %1708 = vrot.lane.b32.xlu0 %v1020, 112
        %v1709 = vpop.permute.xlu0 %1708
        %1710 = vrot.lane.b32.xlu0 %v1023, 112
        %v1711 = vpop.permute.xlu0 %1710
        %v1712 = vsel %vm1031, %v1709, 0
        %v1714 = vsel %vm1031, %v1711, 0
        %1716 = vmatprep.subr.mxu0 0.0
        %1717 = vmatpush1.xpose.msra.mxu0 %v1714
        %1718 = vmatprep.subr.mxu0 0.0
        %1719 = vmatpush1.xpose.msra.mxu0 0.0
        %1720 = vmatprep.subr.mxu0 0.0
        %1721 = vmatpush1.xpose.msra.mxu0 0.0
        %1722 = vmatprep.subr.mxu0 0.0
        %1723 = vmatpush1.xpose.msra.mxu0 0.0
        %1724 = vmatprep.subr.mxu0 0.0
        %1725 = vmatpush1.xpose.msra.mxu0 0.0
        %1726 = vmatprep.subr.mxu0 0.0
        %1727 = vmatpush1.xpose.msra.mxu0 0.0
        %1728 = vmatprep.subr.mxu0 0.0
        %1729 = vmatpush1.xpose.msra.mxu0 0.0
        %1730 = vmatprep.subr.mxu0 0.0
        %1731 = vmatpush1.xpose.msra.mxu0 0.0
        %1732 = vmatprep.subr.mxu0 0.0
        %1733 = vmatpush1.xpose.msra.mxu0 0.0
        %1734 = vmatprep.subr.mxu0 0.0
        %1735 = vmatpush1.xpose.msra.mxu0 0.0
        %1736 = vmatprep.subr.mxu0 0.0
        %1737 = vmatpush1.xpose.msra.mxu0 0.0
        %1738 = vmatprep.subr.mxu0 0.0
        %1739 = vmatpush1.xpose.msra.mxu0 0.0
        %1740 = vmatprep.subr.mxu0 0.0
        %1741 = vmatpush1.xpose.msra.mxu0 0.0
        %1742 = vmatprep.subr.mxu0 0.0
        %1743 = vmatpush1.xpose.msra.mxu0 0.0
        %1744 = vmatprep.subr.mxu0 0.0
        %1745 = vmatpush1.xpose.msra.mxu0 0.0
        %1746 = vmatprep.subr.mxu0 0.0
        %1747 = vmatpush1.xpose.msra.mxu0 0.0
        %1748 = vmatprep.subr.mxu0 0.0
        %1749 = vmatpush1.xpose.msra.mxu0 0.0
        %1750 = vmatprep.subr.mxu0 0.0
        %1751 = vmatpush1.xpose.msra.mxu0 0.0
        %1752 = vmatprep.subr.mxu0 0.0
        %1753 = vmatpush1.xpose.msra.mxu0 0.0
        %1754 = vmatprep.subr.mxu0 0.0
        %1755 = vmatpush1.xpose.msra.mxu0 0.0
        %1756 = vmatprep.subr.mxu0 0.0
        %1757 = vmatpush1.xpose.msra.mxu0 0.0
        %1758 = vmatprep.subr.mxu0 0.0
        %1759 = vmatpush1.xpose.msra.mxu0 0.0
        %1760 = vmatprep.subr.mxu0 0.0
        %1761 = vmatpush1.xpose.msra.mxu0 0.0
        %1762 = vmatprep.subr.mxu0 0.0
        %1763 = vmatpush1.xpose.msra.mxu0 0.0
        %1764 = vmatprep.subr.mxu0 0.0
        %1765 = vmatpush1.xpose.msra.mxu0 0.0
        %1766 = vmatprep.subr.mxu0 0.0
        %1767 = vmatpush1.xpose.msra.mxu0 0.0
        %1768 = vmatprep.subr.mxu0 0.0
        %1769 = vmatpush1.xpose.msra.mxu0 0.0
        %1770 = vmatprep.subr.mxu0 0.0
        %1771 = vmatpush1.xpose.msra.mxu0 0.0
        %1772 = vmatprep.subr.mxu0 0.0
        %1773 = vmatpush1.xpose.msra.mxu0 0.0
        %1774 = vmatprep.subr.mxu0 0.0
        %1775 = vmatpush1.xpose.msra.mxu0 0.0
        %1776 = vmatprep.subr.mxu0 0.0
        %1777 = vmatpush1.xpose.msra.mxu0 0.0
        %1778 = vmatprep.subr.mxu0 0.0
        %1779 = vmatpush1.xpose.msra.mxu0 0.0
        %1780 = vmatprep.mubr.f32.mxu0 0.0
        %1781 = vmatmul.mubr.f32.gmra.mrb[0].mxu0 %v1712
        %v1782 = vpop.f32.mrb[0].mxu0
        %v1783 = vadd.f32 %v1029, %v1782
        %v1784 = vpop.f32.mrb[0].mxu0
        %1785 = vdwg.mxu0
        %v1786 = vsel %vm1108, %v1783, -inf
        %1787 = vmax.xlane.f32.xlu0 %v1786
        %v1788 = vpop.xlane.xlu0 %1787
        %v1789 = vsub.f32 %v1783, %v1788
        %v1790 = vmul.f32 %v1789, 1.442695
        %v1791 = vpow.pop %v1790
        %v1792 = vsel %vm1108, %v1791, 0.0
        %1793 = vadd.xlane.f32.xlu0 %v1792
        %v1794 = vpop.xlane.xlu0 %1793
        %v1795 = vrcp.pop %v1794
        %v1796 = vmul.f32 %v1791, %v1795
        %1797 = vrot.lane.b32.xlu0 %v1024, 112
        %v1798 = vpop.permute.xlu0 %1797
        %v1801 = vsel %vm1108, %v1796, 0
        %1803 = vmatprep.subr.mxu0 0.0
        %1804 = vmatpush1.msra.mxu0 %v1798
        %1805 = vmatprep.subr.mxu0 0.0
        %1806 = vmatpush1.msra.mxu0 0.0
        %1807 = vmatprep.subr.mxu0 0.0
        %1808 = vmatpush1.msra.mxu0 0.0
        %1809 = vmatprep.subr.mxu0 0.0
        %1810 = vmatpush1.msra.mxu0 0.0
        %1811 = vmatprep.subr.mxu0 0.0
        %1812 = vmatpush1.msra.mxu0 0.0
        %1813 = vmatprep.subr.mxu0 0.0
        %1814 = vmatpush1.msra.mxu0 0.0
        %1815 = vmatprep.subr.mxu0 0.0
        %1816 = vmatpush1.msra.mxu0 0.0
        %1817 = vmatprep.subr.mxu0 0.0
        %1818 = vmatpush1.msra.mxu0 0.0
        %1819 = vmatprep.subr.mxu0 0.0
        %1820 = vmatpush1.msra.mxu0 0.0
        %1821 = vmatprep.subr.mxu0 0.0
        %1822 = vmatpush1.msra.mxu0 0.0
        %1823 = vmatprep.subr.mxu0 0.0
        %1824 = vmatpush1.msra.mxu0 0.0
        %1825 = vmatprep.subr.mxu0 0.0
        %1826 = vmatpush1.msra.mxu0 0.0
        %1827 = vmatprep.subr.mxu0 0.0
        %1828 = vmatpush1.msra.mxu0 0.0
        %1829 = vmatprep.subr.mxu0 0.0
        %1830 = vmatpush1.msra.mxu0 0.0
        %1831 = vmatprep.subr.mxu0 0.0
        %1832 = vmatpush1.msra.mxu0 0.0
        %1833 = vmatprep.subr.mxu0 0.0
        %1834 = vmatpush1.msra.mxu0 0.0
        %1835 = vmatprep.subr.mxu0 0.0
        %1836 = vmatpush1.msra.mxu0 0.0
        %1837 = vmatprep.subr.mxu0 0.0
        %1838 = vmatpush1.msra.mxu0 0.0
        %1839 = vmatprep.subr.mxu0 0.0
        %1840 = vmatpush1.msra.mxu0 0.0
        %1841 = vmatprep.subr.mxu0 0.0
        %1842 = vmatpush1.msra.mxu0 0.0
        %1843 = vmatprep.subr.mxu0 0.0
        %1844 = vmatpush1.msra.mxu0 0.0
        %1845 = vmatprep.subr.mxu0 0.0
        %1846 = vmatpush1.msra.mxu0 0.0
        %1847 = vmatprep.subr.mxu0 0.0
        %1848 = vmatpush1.msra.mxu0 0.0
        %1849 = vmatprep.subr.mxu0 0.0
        %1850 = vmatpush1.msra.mxu0 0.0
        %1851 = vmatprep.subr.mxu0 0.0
        %1852 = vmatpush1.msra.mxu0 0.0
        %1853 = vmatprep.subr.mxu0 0.0
        %1854 = vmatpush1.msra.mxu0 0.0
        %1855 = vmatprep.subr.mxu0 0.0
        %1856 = vmatpush1.msra.mxu0 0.0
        %1857 = vmatprep.subr.mxu0 0.0
        %1858 = vmatpush1.msra.mxu0 0.0
        %1859 = vmatprep.subr.mxu0 0.0
        %1860 = vmatpush1.msra.mxu0 0.0
        %1861 = vmatprep.subr.mxu0 0.0
        %1862 = vmatpush1.msra.mxu0 0.0
        %1863 = vmatprep.subr.mxu0 0.0
        %1864 = vmatpush1.msra.mxu0 0.0
        %1865 = vmatprep.subr.mxu0 0.0
        %1866 = vmatpush1.msra.mxu0 0.0
        %1867 = vmatprep.mubr.f32.mxu0 0.0
        %1868 = vmatmul.mubr.f32.gmra.mrb[0].mxu0 %v1801
        %v1869 = vpop.f32.mrb[0].mxu0
        %v1870 = vadd.f32 0.0, %v1869
        %v1871 = vpop.f32.mrb[0].mxu0
        %1872 = vdwg.mxu0
        %1874 = vrot.lane.b32.xlu0 %v1870, 16
        %v1875 = vpop.permute.xlu0 %1874
        %vm1877 = vcmask 162944
        %1878 = vst.msk [vmem:[#allocation4] sm:$0xff] %vm1877, %v1875
        %1879 = vrot.lane.b32.xlu0 %v1020, 108
        %v1880 = vpop.permute.xlu0 %1879
        %1881 = vrot.lane.b32.xlu0 %v1023, 108
        %v1882 = vpop.permute.xlu0 %1881
        %v1883 = vsel %vm1031, %v1880, 0
        %v1885 = vsel %vm1031, %v1882, 0
        %1887 = vmatprep.subr.mxu0 0.0
        %1888 = vmatpush1.xpose.msra.mxu0 %v1885
        %1889 = vmatprep.subr.mxu0 0.0
        %1890 = vmatpush1.xpose.msra.mxu0 0.0
        %1891 = vmatprep.subr.mxu0 0.0
        %1892 = vmatpush1.xpose.msra.mxu0 0.0
        %1893 = vmatprep.subr.mxu0 0.0
        %1894 = vmatpush1.xpose.msra.mxu0 0.0
        %1895 = vmatprep.subr.mxu0 0.0
        %1896 = vmatpush1.xpose.msra.mxu0 0.0
        %1897 = vmatprep.subr.mxu0 0.0
        %1898 = vmatpush1.xpose.msra.mxu0 0.0
        %1899 = vmatprep.subr.mxu0 0.0
        %1900 = vmatpush1.xpose.msra.mxu0 0.0
        %1901 = vmatprep.subr.mxu0 0.0
        %1902 = vmatpush1.xpose.msra.mxu0 0.0
        %1903 = vmatprep.subr.mxu0 0.0
        %1904 = vmatpush1.xpose.msra.mxu0 0.0
        %1905 = vmatprep.subr.mxu0 0.0
        %1906 = vmatpush1.xpose.msra.mxu0 0.0
        %1907 = vmatprep.subr.mxu0 0.0
        %1908 = vmatpush1.xpose.msra.mxu0 0.0
        %1909 = vmatprep.subr.mxu0 0.0
        %1910 = vmatpush1.xpose.msra.mxu0 0.0
        %1911 = vmatprep.subr.mxu0 0.0
        %1912 = vmatpush1.xpose.msra.mxu0 0.0
        %1913 = vmatprep.subr.mxu0 0.0
        %1914 = vmatpush1.xpose.msra.mxu0 0.0
        %1915 = vmatprep.subr.mxu0 0.0
        %1916 = vmatpush1.xpose.msra.mxu0 0.0
        %1917 = vmatprep.subr.mxu0 0.0
        %1918 = vmatpush1.xpose.msra.mxu0 0.0
        %1919 = vmatprep.subr.mxu0 0.0
        %1920 = vmatpush1.xpose.msra.mxu0 0.0
        %1921 = vmatprep.subr.mxu0 0.0
        %1922 = vmatpush1.xpose.msra.mxu0 0.0
        %1923 = vmatprep.subr.mxu0 0.0
        %1924 = vmatpush1.xpose.msra.mxu0 0.0
        %1925 = vmatprep.subr.mxu0 0.0
        %1926 = vmatpush1.xpose.msra.mxu0 0.0
        %1927 = vmatprep.subr.mxu0 0.0
        %1928 = vmatpush1.xpose.msra.mxu0 0.0
        %1929 = vmatprep.subr.mxu0 0.0
        %1930 = vmatpush1.xpose.msra.mxu0 0.0
        %1931 = vmatprep.subr.mxu0 0.0
        %1932 = vmatpush1.xpose.msra.mxu0 0.0
        %1933 = vmatprep.subr.mxu0 0.0
        %1934 = vmatpush1.xpose.msra.mxu0 0.0
        %1935 = vmatprep.subr.mxu0 0.0
        %1936 = vmatpush1.xpose.msra.mxu0 0.0
        %1937 = vmatprep.subr.mxu0 0.0
        %1938 = vmatpush1.xpose.msra.mxu0 0.0
        %1939 = vmatprep.subr.mxu0 0.0
        %1940 = vmatpush1.xpose.msra.mxu0 0.0
        %1941 = vmatprep.subr.mxu0 0.0
        %1942 = vmatpush1.xpose.msra.mxu0 0.0
        %1943 = vmatprep.subr.mxu0 0.0
        %1944 = vmatpush1.xpose.msra.mxu0 0.0
        %1945 = vmatprep.subr.mxu0 0.0
        %1946 = vmatpush1.xpose.msra.mxu0 0.0
        %1947 = vmatprep.subr.mxu0 0.0
        %1948 = vmatpush1.xpose.msra.mxu0 0.0
        %1949 = vmatprep.subr.mxu0 0.0
        %1950 = vmatpush1.xpose.msra.mxu0 0.0
        %1951 = vmatprep.mubr.f32.mxu0 0.0
        %1952 = vmatmul.mubr.f32.gmra.mrb[0].mxu0 %v1883
        %v1953 = vpop.f32.mrb[0].mxu0
        %v1954 = vadd.f32 %v1029, %v1953
        %v1955 = vpop.f32.mrb[0].mxu0
        %1956 = vdwg.mxu0
        %v1957 = vsel %vm1108, %v1954, -inf
        %1958 = vmax.xlane.f32.xlu0 %v1957
        %v1959 = vpop.xlane.xlu0 %1958
        %v1960 = vsub.f32 %v1954, %v1959
        %v1961 = vmul.f32 %v1960, 1.442695
        %v1962 = vpow.pop %v1961
        %v1963 = vsel %vm1108, %v1962, 0.0
        %1964 = vadd.xlane.f32.xlu0 %v1963
        %v1965 = vpop.xlane.xlu0 %1964
        %v1966 = vrcp.pop %v1965
        %v1967 = vmul.f32 %v1962, %v1966
        %1968 = vrot.lane.b32.xlu0 %v1024, 108
        %v1969 = vpop.permute.xlu0 %1968
        %v1972 = vsel %vm1108, %v1967, 0
        %1974 = vmatprep.subr.mxu0 0.0
        %1975 = vmatpush1.msra.mxu0 %v1969
        %1976 = vmatprep.subr.mxu0 0.0
        %1977 = vmatpush1.msra.mxu0 0.0
        %1978 = vmatprep.subr.mxu0 0.0
        %1979 = vmatpush1.msra.mxu0 0.0
        %1980 = vmatprep.subr.mxu0 0.0
        %1981 = vmatpush1.msra.mxu0 0.0
        %1982 = vmatprep.subr.mxu0 0.0
        %1983 = vmatpush1.msra.mxu0 0.0
        %1984 = vmatprep.subr.mxu0 0.0
        %1985 = vmatpush1.msra.mxu0 0.0
        %1986 = vmatprep.subr.mxu0 0.0
        %1987 = vmatpush1.msra.mxu0 0.0
        %1988 = vmatprep.subr.mxu0 0.0
        %1989 = vmatpush1.msra.mxu0 0.0
        %1990 = vmatprep.subr.mxu0 0.0
        %1991 = vmatpush1.msra.mxu0 0.0
        %1992 = vmatprep.subr.mxu0 0.0
        %1993 = vmatpush1.msra.mxu0 0.0
        %1994 = vmatprep.subr.mxu0 0.0
        %1995 = vmatpush1.msra.mxu0 0.0
        %1996 = vmatprep.subr.mxu0 0.0
        %1997 = vmatpush1.msra.mxu0 0.0
        %1998 = vmatprep.subr.mxu0 0.0
        %1999 = vmatpush1.msra.mxu0 0.0
        %2000 = vmatprep.subr.mxu0 0.0
        %2001 = vmatpush1.msra.mxu0 0.0
        %2002 = vmatprep.subr.mxu0 0.0
        %2003 = vmatpush1.msra.mxu0 0.0
        %2004 = vmatprep.subr.mxu0 0.0
        %2005 = vmatpush1.msra.mxu0 0.0
        %2006 = vmatprep.subr.mxu0 0.0
        %2007 = vmatpush1.msra.mxu0 0.0
        %2008 = vmatprep.subr.mxu0 0.0
        %2009 = vmatpush1.msra.mxu0 0.0
        %2010 = vmatprep.subr.mxu0 0.0
        %2011 = vmatpush1.msra.mxu0 0.0
        %2012 = vmatprep.subr.mxu0 0.0
        %2013 = vmatpush1.msra.mxu0 0.0
        %2014 = vmatprep.subr.mxu0 0.0
        %2015 = vmatpush1.msra.mxu0 0.0
        %2016 = vmatprep.subr.mxu0 0.0
        %2017 = vmatpush1.msra.mxu0 0.0
        %2018 = vmatprep.subr.mxu0 0.0
        %2019 = vmatpush1.msra.mxu0 0.0
        %2020 = vmatprep.subr.mxu0 0.0
        %2021 = vmatpush1.msra.mxu0 0.0
        %2022 = vmatprep.subr.mxu0 0.0
        %2023 = vmatpush1.msra.mxu0 0.0
        %2024 = vmatprep.subr.mxu0 0.0
        %2025 = vmatpush1.msra.mxu0 0.0
        %2026 = vmatprep.subr.mxu0 0.0
        %2027 = vmatpush1.msra.mxu0 0.0
        %2028 = vmatprep.subr.mxu0 0.0
        %2029 = vmatpush1.msra.mxu0 0.0
        %2030 = vmatprep.subr.mxu0 0.0
        %2031 = vmatpush1.msra.mxu0 0.0
        %2032 = vmatprep.subr.mxu0 0.0
        %2033 = vmatpush1.msra.mxu0 0.0
        %2034 = vmatprep.subr.mxu0 0.0
        %2035 = vmatpush1.msra.mxu0 0.0
        %2036 = vmatprep.subr.mxu0 0.0
        %2037 = vmatpush1.msra.mxu0 0.0
        %2038 = vmatprep.mubr.f32.mxu0 0.0
        %2039 = vmatmul.mubr.f32.gmra.mrb[0].mxu0 %v1972
        %v2040 = vpop.f32.mrb[0].mxu0
        %v2041 = vadd.f32 0.0, %v2040
        %v2042 = vpop.f32.mrb[0].mxu0
        %2043 = vdwg.mxu0
        %2045 = vrot.lane.b32.xlu0 %v2041, 20
        %v2046 = vpop.permute.xlu0 %2045
        %vm2048 = vcmask 195744
        %2049 = vst.msk [vmem:[#allocation4] sm:$0xff] %vm2048, %v2046
        %2050 = vrot.lane.b32.xlu0 %v1020, 104
        %v2051 = vpop.permute.xlu0 %2050
        %2052 = vrot.lane.b32.xlu0 %v1023, 104
        %v2053 = vpop.permute.xlu0 %2052
        %v2054 = vsel %vm1031, %v2051, 0
        %v2056 = vsel %vm1031, %v2053, 0
        %2058 = vmatprep.subr.mxu0 0.0
        %2059 = vmatpush1.xpose.msra.mxu0 %v2056
        %2060 = vmatprep.subr.mxu0 0.0
        %2061 = vmatpush1.xpose.msra.mxu0 0.0
        %2062 = vmatprep.subr.mxu0 0.0
        %2063 = vmatpush1.xpose.msra.mxu0 0.0
        %2064 = vmatprep.subr.mxu0 0.0
        %2065 = vmatpush1.xpose.msra.mxu0 0.0
        %2066 = vmatprep.subr.mxu0 0.0
        %2067 = vmatpush1.xpose.msra.mxu0 0.0
        %2068 = vmatprep.subr.mxu0 0.0
        %2069 = vmatpush1.xpose.msra.mxu0 0.0
        %2070 = vmatprep.subr.mxu0 0.0
        %2071 = vmatpush1.xpose.msra.mxu0 0.0
        %2072 = vmatprep.subr.mxu0 0.0
        %2073 = vmatpush1.xpose.msra.mxu0 0.0
        %2074 = vmatprep.subr.mxu0 0.0
        %2075 = vmatpush1.xpose.msra.mxu0 0.0
        %2076 = vmatprep.subr.mxu0 0.0
        %2077 = vmatpush1.xpose.msra.mxu0 0.0
        %2078 = vmatprep.subr.mxu0 0.0
        %2079 = vmatpush1.xpose.msra.mxu0 0.0
        %2080 = vmatprep.subr.mxu0 0.0
        %2081 = vmatpush1.xpose.msra.mxu0 0.0
        %2082 = vmatprep.subr.mxu0 0.0
        %2083 = vmatpush1.xpose.msra.mxu0 0.0
        %2084 = vmatprep.subr.mxu0 0.0
        %2085 = vmatpush1.xpose.msra.mxu0 0.0
        %2086 = vmatprep.subr.mxu0 0.0
        %2087 = vmatpush1.xpose.msra.mxu0 0.0
        %2088 = vmatprep.subr.mxu0 0.0
        %2089 = vmatpush1.xpose.msra.mxu0 0.0
        %2090 = vmatprep.subr.mxu0 0.0
        %2091 = vmatpush1.xpose.msra.mxu0 0.0
        %2092 = vmatprep.subr.mxu0 0.0
        %2093 = vmatpush1.xpose.msra.mxu0 0.0
        %2094 = vmatprep.subr.mxu0 0.0
        %2095 = vmatpush1.xpose.msra.mxu0 0.0
        %2096 = vmatprep.subr.mxu0 0.0
        %2097 = vmatpush1.xpose.msra.mxu0 0.0
        %2098 = vmatprep.subr.mxu0 0.0
        %2099 = vmatpush1.xpose.msra.mxu0 0.0
        %2100 = vmatprep.subr.mxu0 0.0
        %2101 = vmatpush1.xpose.msra.mxu0 0.0
        %2102 = vmatprep.subr.mxu0 0.0
        %2103 = vmatpush1.xpose.msra.mxu0 0.0
        %2104 = vmatprep.subr.mxu0 0.0
        %2105 = vmatpush1.xpose.msra.mxu0 0.0
        %2106 = vmatprep.subr.mxu0 0.0
        %2107 = vmatpush1.xpose.msra.mxu0 0.0
        %2108 = vmatprep.subr.mxu0 0.0
        %2109 = vmatpush1.xpose.msra.mxu0 0.0
        %2110 = vmatprep.subr.mxu0 0.0
        %2111 = vmatpush1.xpose.msra.mxu0 0.0
        %2112 = vmatprep.subr.mxu0 0.0
        %2113 = vmatpush1.xpose.msra.mxu0 0.0
        %2114 = vmatprep.subr.mxu0 0.0
        %2115 = vmatpush1.xpose.msra.mxu0 0.0
        %2116 = vmatprep.subr.mxu0 0.0
        %2117 = vmatpush1.xpose.msra.mxu0 0.0
        %2118 = vmatprep.subr.mxu0 0.0
        %2119 = vmatpush1.xpose.msra.mxu0 0.0
        %2120 = vmatprep.subr.mxu0 0.0
        %2121 = vmatpush1.xpose.msra.mxu0 0.0
        %2122 = vmatprep.mubr.f32.mxu0 0.0
        %2123 = vmatmul.mubr.f32.gmra.mrb[0].mxu0 %v2054
        %v2124 = vpop.f32.mrb[0].mxu0
        %v2125 = vadd.f32 %v1029, %v2124
        %v2126 = vpop.f32.mrb[0].mxu0
        %2127 = vdwg.mxu0
        %v2128 = vsel %vm1108, %v2125, -inf
        %2129 = vmax.xlane.f32.xlu0 %v2128
        %v2130 = vpop.xlane.xlu0 %2129
        %v2131 = vsub.f32 %v2125, %v2130
        %v2132 = vmul.f32 %v2131, 1.442695
        %v2133 = vpow.pop %v2132
        %v2134 = vsel %vm1108, %v2133, 0.0
        %2135 = vadd.xlane.f32.xlu0 %v2134
        %v2136 = vpop.xlane.xlu0 %2135
        %v2137 = vrcp.pop %v2136
        %v2138 = vmul.f32 %v2133, %v2137
        %2139 = vrot.lane.b32.xlu0 %v1024, 104
        %v2140 = vpop.permute.xlu0 %2139
        %v2143 = vsel %vm1108, %v2138, 0
        %2145 = vmatprep.subr.mxu0 0.0
        %2146 = vmatpush1.msra.mxu0 %v2140
        %2147 = vmatprep.subr.mxu0 0.0
        %2148 = vmatpush1.msra.mxu0 0.0
        %2149 = vmatprep.subr.mxu0 0.0
        %2150 = vmatpush1.msra.mxu0 0.0
        %2151 = vmatprep.subr.mxu0 0.0
        %2152 = vmatpush1.msra.mxu0 0.0
        %2153 = vmatprep.subr.mxu0 0.0
        %2154 = vmatpush1.msra.mxu0 0.0
        %2155 = vmatprep.subr.mxu0 0.0
        %2156 = vmatpush1.msra.mxu0 0.0
        %2157 = vmatprep.subr.mxu0 0.0
        %2158 = vmatpush1.msra.mxu0 0.0
        %2159 = vmatprep.subr.mxu0 0.0
        %2160 = vmatpush1.msra.mxu0 0.0
        %2161 = vmatprep.subr.mxu0 0.0
        %2162 = vmatpush1.msra.mxu0 0.0
        %2163 = vmatprep.subr.mxu0 0.0
        %2164 = vmatpush1.msra.mxu0 0.0
        %2165 = vmatprep.subr.mxu0 0.0
        %2166 = vmatpush1.msra.mxu0 0.0
        %2167 = vmatprep.subr.mxu0 0.0
        %2168 = vmatpush1.msra.mxu0 0.0
        %2169 = vmatprep.subr.mxu0 0.0
        %2170 = vmatpush1.msra.mxu0 0.0
        %2171 = vmatprep.subr.mxu0 0.0
        %2172 = vmatpush1.msra.mxu0 0.0
        %2173 = vmatprep.subr.mxu0 0.0
        %2174 = vmatpush1.msra.mxu0 0.0
        %2175 = vmatprep.subr.mxu0 0.0
        %2176 = vmatpush1.msra.mxu0 0.0
        %2177 = vmatprep.subr.mxu0 0.0
        %2178 = vmatpush1.msra.mxu0 0.0
        %2179 = vmatprep.subr.mxu0 0.0
        %2180 = vmatpush1.msra.mxu0 0.0
        %2181 = vmatprep.subr.mxu0 0.0
        %2182 = vmatpush1.msra.mxu0 0.0
        %2183 = vmatprep.subr.mxu0 0.0
        %2184 = vmatpush1.msra.mxu0 0.0
        %2185 = vmatprep.subr.mxu0 0.0
        %2186 = vmatpush1.msra.mxu0 0.0
        %2187 = vmatprep.subr.mxu0 0.0
        %2188 = vmatpush1.msra.mxu0 0.0
        %2189 = vmatprep.subr.mxu0 0.0
        %2190 = vmatpush1.msra.mxu0 0.0
        %2191 = vmatprep.subr.mxu0 0.0
        %2192 = vmatpush1.msra.mxu0 0.0
        %2193 = vmatprep.subr.mxu0 0.0
        %2194 = vmatpush1.msra.mxu0 0.0
        %2195 = vmatprep.subr.mxu0 0.0
        %2196 = vmatpush1.msra.mxu0 0.0
        %2197 = vmatprep.subr.mxu0 0.0
        %2198 = vmatpush1.msra.mxu0 0.0
        %2199 = vmatprep.subr.mxu0 0.0
        %2200 = vmatpush1.msra.mxu0 0.0
        %2201 = vmatprep.subr.mxu0 0.0
        %2202 = vmatpush1.msra.mxu0 0.0
        %2203 = vmatprep.subr.mxu0 0.0
        %2204 = vmatpush1.msra.mxu0 0.0
        %2205 = vmatprep.subr.mxu0 0.0
        %2206 = vmatpush1.msra.mxu0 0.0
        %2207 = vmatprep.subr.mxu0 0.0
        %2208 = vmatpush1.msra.mxu0 0.0
        %2209 = vmatprep.mubr.f32.mxu0 0.0
        %2210 = vmatmul.mubr.f32.gmra.mrb[0].mxu0 %v2143
        %v2211 = vpop.f32.mrb[0].mxu0
        %v2212 = vadd.f32 0.0, %v2211
        %v2213 = vpop.f32.mrb[0].mxu0
        %2214 = vdwg.mxu0
        %2216 = vrot.lane.b32.xlu0 %v2212, 24
        %v2217 = vpop.permute.xlu0 %2216
        %vm2219 = vcmask 228544
        %2220 = vst.msk [vmem:[#allocation4] sm:$0xff] %vm2219, %v2217
        %2221 = vrot.lane.b32.xlu0 %v1020, 100
        %v2222 = vpop.permute.xlu0 %2221
        %2223 = vrot.lane.b32.xlu0 %v1023, 100
        %v2224 = vpop.permute.xlu0 %2223
        %v2225 = vsel %vm1031, %v2222, 0
        %v2227 = vsel %vm1031, %v2224, 0
        %2229 = vmatprep.subr.mxu0 0.0
        %2230 = vmatpush1.xpose.msra.mxu0 %v2227
        %2231 = vmatprep.subr.mxu0 0.0
        %2232 = vmatpush1.xpose.msra.mxu0 0.0
        %2233 = vmatprep.subr.mxu0 0.0
        %2234 = vmatpush1.xpose.msra.mxu0 0.0
        %2235 = vmatprep.subr.mxu0 0.0
        %2236 = vmatpush1.xpose.msra.mxu0 0.0
        %2237 = vmatprep.subr.mxu0 0.0
        %2238 = vmatpush1.xpose.msra.mxu0 0.0
        %2239 = vmatprep.subr.mxu0 0.0
        %2240 = vmatpush1.xpose.msra.mxu0 0.0
        %2241 = vmatprep.subr.mxu0 0.0
        %2242 = vmatpush1.xpose.msra.mxu0 0.0
        %2243 = vmatprep.subr.mxu0 0.0
        %2244 = vmatpush1.xpose.msra.mxu0 0.0
        %2245 = vmatprep.subr.mxu0 0.0
        %2246 = vmatpush1.xpose.msra.mxu0 0.0
        %2247 = vmatprep.subr.mxu0 0.0
        %2248 = vmatpush1.xpose.msra.mxu0 0.0
        %2249 = vmatprep.subr.mxu0 0.0
        %2250 = vmatpush1.xpose.msra.mxu0 0.0
        %2251 = vmatprep.subr.mxu0 0.0
        %2252 = vmatpush1.xpose.msra.mxu0 0.0
        %2253 = vmatprep.subr.mxu0 0.0
        %2254 = vmatpush1.xpose.msra.mxu0 0.0
        %2255 = vmatprep.subr.mxu0 0.0
        %2256 = vmatpush1.xpose.msra.mxu0 0.0
        %2257 = vmatprep.subr.mxu0 0.0
        %2258 = vmatpush1.xpose.msra.mxu0 0.0
        %2259 = vmatprep.subr.mxu0 0.0
        %2260 = vmatpush1.xpose.msra.mxu0 0.0
        %2261 = vmatprep.subr.mxu0 0.0
        %2262 = vmatpush1.xpose.msra.mxu0 0.0
        %2263 = vmatprep.subr.mxu0 0.0
        %2264 = vmatpush1.xpose.msra.mxu0 0.0
        %2265 = vmatprep.subr.mxu0 0.0
        %2266 = vmatpush1.xpose.msra.mxu0 0.0
        %2267 = vmatprep.subr.mxu0 0.0
        %2268 = vmatpush1.xpose.msra.mxu0 0.0
        %2269 = vmatprep.subr.mxu0 0.0
        %2270 = vmatpush1.xpose.msra.mxu0 0.0
        %2271 = vmatprep.subr.mxu0 0.0
        %2272 = vmatpush1.xpose.msra.mxu0 0.0
        %2273 = vmatprep.subr.mxu0 0.0
        %2274 = vmatpush1.xpose.msra.mxu0 0.0
        %2275 = vmatprep.subr.mxu0 0.0
        %2276 = vmatpush1.xpose.msra.mxu0 0.0
        %2277 = vmatprep.subr.mxu0 0.0
        %2278 = vmatpush1.xpose.msra.mxu0 0.0
        %2279 = vmatprep.subr.mxu0 0.0
        %2280 = vmatpush1.xpose.msra.mxu0 0.0
        %2281 = vmatprep.subr.mxu0 0.0
        %2282 = vmatpush1.xpose.msra.mxu0 0.0
        %2283 = vmatprep.subr.mxu0 0.0
        %2284 = vmatpush1.xpose.msra.mxu0 0.0
        %2285 = vmatprep.subr.mxu0 0.0
        %2286 = vmatpush1.xpose.msra.mxu0 0.0
        %2287 = vmatprep.subr.mxu0 0.0
        %2288 = vmatpush1.xpose.msra.mxu0 0.0
        %2289 = vmatprep.subr.mxu0 0.0
        %2290 = vmatpush1.xpose.msra.mxu0 0.0
        %2291 = vmatprep.subr.mxu0 0.0
        %2292 = vmatpush1.xpose.msra.mxu0 0.0
        %2293 = vmatprep.mubr.f32.mxu0 0.0
        %2294 = vmatmul.mubr.f32.gmra.mrb[0].mxu0 %v2225
        %v2295 = vpop.f32.mrb[0].mxu0
        %v2296 = vadd.f32 %v1029, %v2295
        %v2297 = vpop.f32.mrb[0].mxu0
        %2298 = vdwg.mxu0
        %v2299 = vsel %vm1108, %v2296, -inf
        %2300 = vmax.xlane.f32.xlu0 %v2299
        %v2301 = vpop.xlane.xlu0 %2300
        %v2302 = vsub.f32 %v2296, %v2301
        %v2303 = vmul.f32 %v2302, 1.442695
        %v2304 = vpow.pop %v2303
        %v2305 = vsel %vm1108, %v2304, 0.0
        %2306 = vadd.xlane.f32.xlu0 %v2305
        %v2307 = vpop.xlane.xlu0 %2306
        %v2308 = vrcp.pop %v2307
        %v2309 = vmul.f32 %v2304, %v2308
        %2310 = vrot.lane.b32.xlu0 %v1024, 100
        %v2311 = vpop.permute.xlu0 %2310
        %v2314 = vsel %vm1108, %v2309, 0
        %2316 = vmatprep.subr.mxu0 0.0
        %2317 = vmatpush1.msra.mxu0 %v2311
        %2318 = vmatprep.subr.mxu0 0.0
        %2319 = vmatpush1.msra.mxu0 0.0
        %2320 = vmatprep.subr.mxu0 0.0
        %2321 = vmatpush1.msra.mxu0 0.0
        %2322 = vmatprep.subr.mxu0 0.0
        %2323 = vmatpush1.msra.mxu0 0.0
        %2324 = vmatprep.subr.mxu0 0.0
        %2325 = vmatpush1.msra.mxu0 0.0
        %2326 = vmatprep.subr.mxu0 0.0
        %2327 = vmatpush1.msra.mxu0 0.0
        %2328 = vmatprep.subr.mxu0 0.0
        %2329 = vmatpush1.msra.mxu0 0.0
        %2330 = vmatprep.subr.mxu0 0.0
        %2331 = vmatpush1.msra.mxu0 0.0
        %2332 = vmatprep.subr.mxu0 0.0
        %2333 = vmatpush1.msra.mxu0 0.0
        %2334 = vmatprep.subr.mxu0 0.0
        %2335 = vmatpush1.msra.mxu0 0.0
        %2336 = vmatprep.subr.mxu0 0.0
        %2337 = vmatpush1.msra.mxu0 0.0
        %2338 = vmatprep.subr.mxu0 0.0
        %2339 = vmatpush1.msra.mxu0 0.0
        %2340 = vmatprep.subr.mxu0 0.0
        %2341 = vmatpush1.msra.mxu0 0.0
        %2342 = vmatprep.subr.mxu0 0.0
        %2343 = vmatpush1.msra.mxu0 0.0
        %2344 = vmatprep.subr.mxu0 0.0
        %2345 = vmatpush1.msra.mxu0 0.0
        %2346 = vmatprep.subr.mxu0 0.0
        %2347 = vmatpush1.msra.mxu0 0.0
        %2348 = vmatprep.subr.mxu0 0.0
        %2349 = vmatpush1.msra.mxu0 0.0
        %2350 = vmatprep.subr.mxu0 0.0
        %2351 = vmatpush1.msra.mxu0 0.0
        %2352 = vmatprep.subr.mxu0 0.0
        %2353 = vmatpush1.msra.mxu0 0.0
        %2354 = vmatprep.subr.mxu0 0.0
        %2355 = vmatpush1.msra.mxu0 0.0
        %2356 = vmatprep.subr.mxu0 0.0
        %2357 = vmatpush1.msra.mxu0 0.0
        %2358 = vmatprep.subr.mxu0 0.0
        %2359 = vmatpush1.msra.mxu0 0.0
        %2360 = vmatprep.subr.mxu0 0.0
        %2361 = vmatpush1.msra.mxu0 0.0
        %2362 = vmatprep.subr.mxu0 0.0
        %2363 = vmatpush1.msra.mxu0 0.0
        %2364 = vmatprep.subr.mxu0 0.0
        %2365 = vmatpush1.msra.mxu0 0.0
        %2366 = vmatprep.subr.mxu0 0.0
        %2367 = vmatpush1.msra.mxu0 0.0
        %2368 = vmatprep.subr.mxu0 0.0
        %2369 = vmatpush1.msra.mxu0 0.0
        %2370 = vmatprep.subr.mxu0 0.0
        %2371 = vmatpush1.msra.mxu0 0.0
        %2372 = vmatprep.subr.mxu0 0.0
        %2373 = vmatpush1.msra.mxu0 0.0
        %2374 = vmatprep.subr.mxu0 0.0
        %2375 = vmatpush1.msra.mxu0 0.0
        %2376 = vmatprep.subr.mxu0 0.0
        %2377 = vmatpush1.msra.mxu0 0.0
        %2378 = vmatprep.subr.mxu0 0.0
        %2379 = vmatpush1.msra.mxu0 0.0
        %2380 = vmatprep.mubr.f32.mxu0 0.0
        %2381 = vmatmul.mubr.f32.gmra.mrb[0].mxu0 %v2314
        %v2382 = vpop.f32.mrb[0].mxu0
        %v2383 = vadd.f32 0.0, %v2382
        %v2384 = vpop.f32.mrb[0].mxu0
        %2385 = vdwg.mxu0
        %2387 = vrot.lane.b32.xlu0 %v2383, 28
        %v2388 = vpop.permute.xlu0 %2387
        %vm2390 = vcmask 261344
        %2391 = vst.msk [vmem:[#allocation4] sm:$0xff] %vm2390, %v2388
        %2392 = vrot.lane.b32.xlu0 %v1020, 96
        %v2393 = vpop.permute.xlu0 %2392
        %2394 = vrot.lane.b32.xlu0 %v1023, 96
        %v2395 = vpop.permute.xlu0 %2394
        %v2396 = vsel %vm1031, %v2393, 0
        %v2398 = vsel %vm1031, %v2395, 0
        %2400 = vmatprep.subr.mxu0 0.0
        %2401 = vmatpush1.xpose.msra.mxu0 %v2398
        %2402 = vmatprep.subr.mxu0 0.0
        %2403 = vmatpush1.xpose.msra.mxu0 0.0
        %2404 = vmatprep.subr.mxu0 0.0
        %2405 = vmatpush1.xpose.msra.mxu0 0.0
        %2406 = vmatprep.subr.mxu0 0.0
        %2407 = vmatpush1.xpose.msra.mxu0 0.0
        %2408 = vmatprep.subr.mxu0 0.0
        %2409 = vmatpush1.xpose.msra.mxu0 0.0
        %2410 = vmatprep.subr.mxu0 0.0
        %2411 = vmatpush1.xpose.msra.mxu0 0.0
        %2412 = vmatprep.subr.mxu0 0.0
        %2413 = vmatpush1.xpose.msra.mxu0 0.0
        %2414 = vmatprep.subr.mxu0 0.0
        %2415 = vmatpush1.xpose.msra.mxu0 0.0
        %2416 = vmatprep.subr.mxu0 0.0
        %2417 = vmatpush1.xpose.msra.mxu0 0.0
        %2418 = vmatprep.subr.mxu0 0.0
        %2419 = vmatpush1.xpose.msra.mxu0 0.0
        %2420 = vmatprep.subr.mxu0 0.0
        %2421 = vmatpush1.xpose.msra.mxu0 0.0
        %2422 = vmatprep.subr.mxu0 0.0
        %2423 = vmatpush1.xpose.msra.mxu0 0.0
        %2424 = vmatprep.subr.mxu0 0.0
        %2425 = vmatpush1.xpose.msra.mxu0 0.0
        %2426 = vmatprep.subr.mxu0 0.0
        %2427 = vmatpush1.xpose.msra.mxu0 0.0
        %2428 = vmatprep.subr.mxu0 0.0
        %2429 = vmatpush1.xpose.msra.mxu0 0.0
        %2430 = vmatprep.subr.mxu0 0.0
        %2431 = vmatpush1.xpose.msra.mxu0 0.0
        %2432 = vmatprep.subr.mxu0 0.0
        %2433 = vmatpush1.xpose.msra.mxu0 0.0
        %2434 = vmatprep.subr.mxu0 0.0
        %2435 = vmatpush1.xpose.msra.mxu0 0.0
        %2436 = vmatprep.subr.mxu0 0.0
        %2437 = vmatpush1.xpose.msra.mxu0 0.0
        %2438 = vmatprep.subr.mxu0 0.0
        %2439 = vmatpush1.xpose.msra.mxu0 0.0
        %2440 = vmatprep.subr.mxu0 0.0
        %2441 = vmatpush1.xpose.msra.mxu0 0.0
        %2442 = vmatprep.subr.mxu0 0.0
        %2443 = vmatpush1.xpose.msra.mxu0 0.0
        %2444 = vmatprep.subr.mxu0 0.0
        %2445 = vmatpush1.xpose.msra.mxu0 0.0
        %2446 = vmatprep.subr.mxu0 0.0
        %2447 = vmatpush1.xpose.msra.mxu0 0.0
        %2448 = vmatprep.subr.mxu0 0.0
        %2449 = vmatpush1.xpose.msra.mxu0 0.0
        %2450 = vmatprep.subr.mxu0 0.0
        %2451 = vmatpush1.xpose.msra.mxu0 0.0
        %2452 = vmatprep.subr.mxu0 0.0
        %2453 = vmatpush1.xpose.msra.mxu0 0.0
        %2454 = vmatprep.subr.mxu0 0.0
        %2455 = vmatpush1.xpose.msra.mxu0 0.0
        %2456 = vmatprep.subr.mxu0 0.0
        %2457 = vmatpush1.xpose.msra.mxu0 0.0
        %2458 = vmatprep.subr.mxu0 0.0
        %2459 = vmatpush1.xpose.msra.mxu0 0.0
        %2460 = vmatprep.subr.mxu0 0.0
        %2461 = vmatpush1.xpose.msra.mxu0 0.0
        %2462 = vmatprep.subr.mxu0 0.0
        %2463 = vmatpush1.xpose.msra.mxu0 0.0
        %2464 = vmatprep.mubr.f32.mxu0 0.0
        %2465 = vmatmul.mubr.f32.gmra.mrb[0].mxu0 %v2396
        %v2466 = vpop.f32.mrb[0].mxu0
        %v2467 = vadd.f32 %v1029, %v2466
        %v2468 = vpop.f32.mrb[0].mxu0
        %2469 = vdwg.mxu0
        %v2470 = vsel %vm1108, %v2467, -inf
        %2471 = vmax.xlane.f32.xlu0 %v2470
        %v2472 = vpop.xlane.xlu0 %2471
        %v2473 = vsub.f32 %v2467, %v2472
        %v2474 = vmul.f32 %v2473, 1.442695
        %v2475 = vpow.pop %v2474
        %v2476 = vsel %vm1108, %v2475, 0.0
        %2477 = vadd.xlane.f32.xlu0 %v2476
        %v2478 = vpop.xlane.xlu0 %2477
        %v2479 = vrcp.pop %v2478
        %v2480 = vmul.f32 %v2475, %v2479
        %2481 = vrot.lane.b32.xlu0 %v1024, 96
        %v2482 = vpop.permute.xlu0 %2481
        %v2485 = vsel %vm1108, %v2480, 0
        %2487 = vmatprep.subr.mxu0 0.0
        %2488 = vmatpush1.msra.mxu0 %v2482
        %2489 = vmatprep.subr.mxu0 0.0
        %2490 = vmatpush1.msra.mxu0 0.0
        %2491 = vmatprep.subr.mxu0 0.0
        %2492 = vmatpush1.msra.mxu0 0.0
        %2493 = vmatprep.subr.mxu0 0.0
        %2494 = vmatpush1.msra.mxu0 0.0
        %2495 = vmatprep.subr.mxu0 0.0
        %2496 = vmatpush1.msra.mxu0 0.0
        %2497 = vmatprep.subr.mxu0 0.0
        %2498 = vmatpush1.msra.mxu0 0.0
        %2499 = vmatprep.subr.mxu0 0.0
        %2500 = vmatpush1.msra.mxu0 0.0
        %2501 = vmatprep.subr.mxu0 0.0
        %2502 = vmatpush1.msra.mxu0 0.0
        %2503 = vmatprep.subr.mxu0 0.0
        %2504 = vmatpush1.msra.mxu0 0.0
        %2505 = vmatprep.subr.mxu0 0.0
        %2506 = vmatpush1.msra.mxu0 0.0
        %2507 = vmatprep.subr.mxu0 0.0
        %2508 = vmatpush1.msra.mxu0 0.0
        %2509 = vmatprep.subr.mxu0 0.0
        %2510 = vmatpush1.msra.mxu0 0.0
        %2511 = vmatprep.subr.mxu0 0.0
        %2512 = vmatpush1.msra.mxu0 0.0
        %2513 = vmatprep.subr.mxu0 0.0
        %2514 = vmatpush1.msra.mxu0 0.0
        %2515 = vmatprep.subr.mxu0 0.0
        %2516 = vmatpush1.msra.mxu0 0.0
        %2517 = vmatprep.subr.mxu0 0.0
        %2518 = vmatpush1.msra.mxu0 0.0
        %2519 = vmatprep.subr.mxu0 0.0
        %2520 = vmatpush1.msra.mxu0 0.0
        %2521 = vmatprep.subr.mxu0 0.0
        %2522 = vmatpush1.msra.mxu0 0.0
        %2523 = vmatprep.subr.mxu0 0.0
        %2524 = vmatpush1.msra.mxu0 0.0
        %2525 = vmatprep.subr.mxu0 0.0
        %2526 = vmatpush1.msra.mxu0 0.0
        %2527 = vmatprep.subr.mxu0 0.0
        %2528 = vmatpush1.msra.mxu0 0.0
        %2529 = vmatprep.subr.mxu0 0.0
        %2530 = vmatpush1.msra.mxu0 0.0
        %2531 = vmatprep.subr.mxu0 0.0
        %2532 = vmatpush1.msra.mxu0 0.0
        %2533 = vmatprep.subr.mxu0 0.0
        %2534 = vmatpush1.msra.mxu0 0.0
        %2535 = vmatprep.subr.mxu0 0.0
        %2536 = vmatpush1.msra.mxu0 0.0
        %2537 = vmatprep.subr.mxu0 0.0
        %2538 = vmatpush1.msra.mxu0 0.0
        %2539 = vmatprep.subr.mxu0 0.0
        %2540 = vmatpush1.msra.mxu0 0.0
        %2541 = vmatprep.subr.mxu0 0.0
        %2542 = vmatpush1.msra.mxu0 0.0
        %2543 = vmatprep.subr.mxu0 0.0
        %2544 = vmatpush1.msra.mxu0 0.0
        %2545 = vmatprep.subr.mxu0 0.0
        %2546 = vmatpush1.msra.mxu0 0.0
        %2547 = vmatprep.subr.mxu0 0.0
        %2548 = vmatpush1.msra.mxu0 0.0
        %2549 = vmatprep.subr.mxu0 0.0
        %2550 = vmatpush1.msra.mxu0 0.0
        %2551 = vmatprep.mubr.f32.mxu0 0.0
        %2552 = vmatmul.mubr.f32.gmra.mrb[0].mxu0 %v2485
        %v2553 = vpop.f32.mrb[0].mxu0
        %v2554 = vadd.f32 0.0, %v2553
        %v2555 = vpop.f32.mrb[0].mxu0
        %2556 = vdwg.mxu0
        %2558 = vrot.lane.b32.xlu0 %v2554, 32
        %v2559 = vpop.permute.xlu0 %2558
        %vm2561 = vcmask 294144
        %2562 = vst.msk [vmem:[#allocation4] sm:$0xff] %vm2561, %v2559
        %2563 = vrot.lane.b32.xlu0 %v1020, 92
        %v2564 = vpop.permute.xlu0 %2563
        %2565 = vrot.lane.b32.xlu0 %v1023, 92
        %v2566 = vpop.permute.xlu0 %2565
        %v2567 = vsel %vm1031, %v2564, 0
        %v2569 = vsel %vm1031, %v2566, 0
        %2571 = vmatprep.subr.mxu0 0.0
        %2572 = vmatpush1.xpose.msra.mxu0 %v2569
        %2573 = vmatprep.subr.mxu0 0.0
        %2574 = vmatpush1.xpose.msra.mxu0 0.0
        %2575 = vmatprep.subr.mxu0 0.0
        %2576 = vmatpush1.xpose.msra.mxu0 0.0
        %2577 = vmatprep.subr.mxu0 0.0
        %2578 = vmatpush1.xpose.msra.mxu0 0.0
        %2579 = vmatprep.subr.mxu0 0.0
        %2580 = vmatpush1.xpose.msra.mxu0 0.0
        %2581 = vmatprep.subr.mxu0 0.0
        %2582 = vmatpush1.xpose.msra.mxu0 0.0
        %2583 = vmatprep.subr.mxu0 0.0
        %2584 = vmatpush1.xpose.msra.mxu0 0.0
        %2585 = vmatprep.subr.mxu0 0.0
        %2586 = vmatpush1.xpose.msra.mxu0 0.0
        %2587 = vmatprep.subr.mxu0 0.0
        %2588 = vmatpush1.xpose.msra.mxu0 0.0
        %2589 = vmatprep.subr.mxu0 0.0
        %2590 = vmatpush1.xpose.msra.mxu0 0.0
        %2591 = vmatprep.subr.mxu0 0.0
        %2592 = vmatpush1.xpose.msra.mxu0 0.0
        %2593 = vmatprep.subr.mxu0 0.0
        %2594 = vmatpush1.xpose.msra.mxu0 0.0
        %2595 = vmatprep.subr.mxu0 0.0
        %2596 = vmatpush1.xpose.msra.mxu0 0.0
        %2597 = vmatprep.subr.mxu0 0.0
        %2598 = vmatpush1.xpose.msra.mxu0 0.0
        %2599 = vmatprep.subr.mxu0 0.0
        %2600 = vmatpush1.xpose.msra.mxu0 0.0
        %2601 = vmatprep.subr.mxu0 0.0
        %2602 = vmatpush1.xpose.msra.mxu0 0.0
        %2603 = vmatprep.subr.mxu0 0.0
        %2604 = vmatpush1.xpose.msra.mxu0 0.0
        %2605 = vmatprep.subr.mxu0 0.0
        %2606 = vmatpush1.xpose.msra.mxu0 0.0
        %2607 = vmatprep.subr.mxu0 0.0
        %2608 = vmatpush1.xpose.msra.mxu0 0.0
        %2609 = vmatprep.subr.mxu0 0.0
        %2610 = vmatpush1.xpose.msra.mxu0 0.0
        %2611 = vmatprep.subr.mxu0 0.0
        %2612 = vmatpush1.xpose.msra.mxu0 0.0
        %2613 = vmatprep.subr.mxu0 0.0
        %2614 = vmatpush1.xpose.msra.mxu0 0.0
        %2615 = vmatprep.subr.mxu0 0.0
        %2616 = vmatpush1.xpose.msra.mxu0 0.0
        %2617 = vmatprep.subr.mxu0 0.0
        %2618 = vmatpush1.xpose.msra.mxu0 0.0
        %2619 = vmatprep.subr.mxu0 0.0
        %2620 = vmatpush1.xpose.msra.mxu0 0.0
        %2621 = vmatprep.subr.mxu0 0.0
        %2622 = vmatpush1.xpose.msra.mxu0 0.0
        %2623 = vmatprep.subr.mxu0 0.0
        %2624 = vmatpush1.xpose.msra.mxu0 0.0
        %2625 = vmatprep.subr.mxu0 0.0
        %2626 = vmatpush1.xpose.msra.mxu0 0.0
        %2627 = vmatprep.subr.mxu0 0.0
        %2628 = vmatpush1.xpose.msra.mxu0 0.0
        %2629 = vmatprep.subr.mxu0 0.0
        %2630 = vmatpush1.xpose.msra.mxu0 0.0
        %2631 = vmatprep.subr.mxu0 0.0
        %2632 = vmatpush1.xpose.msra.mxu0 0.0
        %2633 = vmatprep.subr.mxu0 0.0
        %2634 = vmatpush1.xpose.msra.mxu0 0.0
        %2635 = vmatprep.mubr.f32.mxu0 0.0
        %2636 = vmatmul.mubr.f32.gmra.mrb[0].mxu0 %v2567
        %v2637 = vpop.f32.mrb[0].mxu0
        %v2638 = vadd.f32 %v1029, %v2637
        %v2639 = vpop.f32.mrb[0].mxu0
        %2640 = vdwg.mxu0
        %v2641 = vsel %vm1108, %v2638, -inf
        %2642 = vmax.xlane.f32.xlu0 %v2641
        %v2643 = vpop.xlane.xlu0 %2642
        %v2644 = vsub.f32 %v2638, %v2643
        %v2645 = vmul.f32 %v2644, 1.442695
        %v2646 = vpow.pop %v2645
        %v2647 = vsel %vm1108, %v2646, 0.0
        %2648 = vadd.xlane.f32.xlu0 %v2647
        %v2649 = vpop.xlane.xlu0 %2648
        %v2650 = vrcp.pop %v2649
        %v2651 = vmul.f32 %v2646, %v2650
        %2652 = vrot.lane.b32.xlu0 %v1024, 92
        %v2653 = vpop.permute.xlu0 %2652
        %v2656 = vsel %vm1108, %v2651, 0
        %2658 = vmatprep.subr.mxu0 0.0
        %2659 = vmatpush1.msra.mxu0 %v2653
        %2660 = vmatprep.subr.mxu0 0.0
        %2661 = vmatpush1.msra.mxu0 0.0
        %2662 = vmatprep.subr.mxu0 0.0
        %2663 = vmatpush1.msra.mxu0 0.0
        %2664 = vmatprep.subr.mxu0 0.0
        %2665 = vmatpush1.msra.mxu0 0.0
        %2666 = vmatprep.subr.mxu0 0.0
        %2667 = vmatpush1.msra.mxu0 0.0
        %2668 = vmatprep.subr.mxu0 0.0
        %2669 = vmatpush1.msra.mxu0 0.0
        %2670 = vmatprep.subr.mxu0 0.0
        %2671 = vmatpush1.msra.mxu0 0.0
        %2672 = vmatprep.subr.mxu0 0.0
        %2673 = vmatpush1.msra.mxu0 0.0
        %2674 = vmatprep.subr.mxu0 0.0
        %2675 = vmatpush1.msra.mxu0 0.0
        %2676 = vmatprep.subr.mxu0 0.0
        %2677 = vmatpush1.msra.mxu0 0.0
        %2678 = vmatprep.subr.mxu0 0.0
        %2679 = vmatpush1.msra.mxu0 0.0
        %2680 = vmatprep.subr.mxu0 0.0
        %2681 = vmatpush1.msra.mxu0 0.0
        %2682 = vmatprep.subr.mxu0 0.0
        %2683 = vmatpush1.msra.mxu0 0.0
        %2684 = vmatprep.subr.mxu0 0.0
        %2685 = vmatpush1.msra.mxu0 0.0
        %2686 = vmatprep.subr.mxu0 0.0
        %2687 = vmatpush1.msra.mxu0 0.0
        %2688 = vmatprep.subr.mxu0 0.0
        %2689 = vmatpush1.msra.mxu0 0.0
        %2690 = vmatprep.subr.mxu0 0.0
        %2691 = vmatpush1.msra.mxu0 0.0
        %2692 = vmatprep.subr.mxu0 0.0
        %2693 = vmatpush1.msra.mxu0 0.0
        %2694 = vmatprep.subr.mxu0 0.0
        %2695 = vmatpush1.msra.mxu0 0.0
        %2696 = vmatprep.subr.mxu0 0.0
        %2697 = vmatpush1.msra.mxu0 0.0
        %2698 = vmatprep.subr.mxu0 0.0
        %2699 = vmatpush1.msra.mxu0 0.0
        %2700 = vmatprep.subr.mxu0 0.0
        %2701 = vmatpush1.msra.mxu0 0.0
        %2702 = vmatprep.subr.mxu0 0.0
        %2703 = vmatpush1.msra.mxu0 0.0
        %2704 = vmatprep.subr.mxu0 0.0
        %2705 = vmatpush1.msra.mxu0 0.0
        %2706 = vmatprep.subr.mxu0 0.0
        %2707 = vmatpush1.msra.mxu0 0.0
        %2708 = vmatprep.subr.mxu0 0.0
        %2709 = vmatpush1.msra.mxu0 0.0
        %2710 = vmatprep.subr.mxu0 0.0
        %2711 = vmatpush1.msra.mxu0 0.0
        %2712 = vmatprep.subr.mxu0 0.0
        %2713 = vmatpush1.msra.mxu0 0.0
        %2714 = vmatprep.subr.mxu0 0.0
        %2715 = vmatpush1.msra.mxu0 0.0
        %2716 = vmatprep.subr.mxu0 0.0
        %2717 = vmatpush1.msra.mxu0 0.0
        %2718 = vmatprep.subr.mxu0 0.0
        %2719 = vmatpush1.msra.mxu0 0.0
        %2720 = vmatprep.subr.mxu0 0.0
        %2721 = vmatpush1.msra.mxu0 0.0
        %2722 = vmatprep.mubr.f32.mxu0 0.0
        %2723 = vmatmul.mubr.f32.gmra.mrb[0].mxu0 %v2656
        %v2724 = vpop.f32.mrb[0].mxu0
        %v2725 = vadd.f32 0.0, %v2724
        %v2726 = vpop.f32.mrb[0].mxu0
        %2727 = vdwg.mxu0
        %2729 = vrot.lane.b32.xlu0 %v2725, 36
        %v2730 = vpop.permute.xlu0 %2729
        %vm2732 = vcmask 326944
        %2733 = vst.msk [vmem:[#allocation4] sm:$0xff] %vm2732, %v2730
        %2734 = vrot.lane.b32.xlu0 %v1020, 88
        %v2735 = vpop.permute.xlu0 %2734
        %2736 = vrot.lane.b32.xlu0 %v1023, 88
        %v2737 = vpop.permute.xlu0 %2736
        %v2738 = vsel %vm1031, %v2735, 0
        %v2740 = vsel %vm1031, %v2737, 0
        %2742 = vmatprep.subr.mxu0 0.0
        %2743 = vmatpush1.xpose.msra.mxu0 %v2740
        %2744 = vmatprep.subr.mxu0 0.0
        %2745 = vmatpush1.xpose.msra.mxu0 0.0
        %2746 = vmatprep.subr.mxu0 0.0
        %2747 = vmatpush1.xpose.msra.mxu0 0.0
        %2748 = vmatprep.subr.mxu0 0.0
        %2749 = vmatpush1.xpose.msra.mxu0 0.0
        %2750 = vmatprep.subr.mxu0 0.0
        %2751 = vmatpush1.xpose.msra.mxu0 0.0
        %2752 = vmatprep.subr.mxu0 0.0
        %2753 = vmatpush1.xpose.msra.mxu0 0.0
        %2754 = vmatprep.subr.mxu0 0.0
        %2755 = vmatpush1.xpose.msra.mxu0 0.0
        %2756 = vmatprep.subr.mxu0 0.0
        %2757 = vmatpush1.xpose.msra.mxu0 0.0
        %2758 = vmatprep.subr.mxu0 0.0
        %2759 = vmatpush1.xpose.msra.mxu0 0.0
        %2760 = vmatprep.subr.mxu0 0.0
        %2761 = vmatpush1.xpose.msra.mxu0 0.0
        %2762 = vmatprep.subr.mxu0 0.0
        %2763 = vmatpush1.xpose.msra.mxu0 0.0
        %2764 = vmatprep.subr.mxu0 0.0
        %2765 = vmatpush1.xpose.msra.mxu0 0.0
        %2766 = vmatprep.subr.mxu0 0.0
        %2767 = vmatpush1.xpose.msra.mxu0 0.0
        %2768 = vmatprep.subr.mxu0 0.0
        %2769 = vmatpush1.xpose.msra.mxu0 0.0
        %2770 = vmatprep.subr.mxu0 0.0
        %2771 = vmatpush1.xpose.msra.mxu0 0.0
        %2772 = vmatprep.subr.mxu0 0.0
        %2773 = vmatpush1.xpose.msra.mxu0 0.0
        %2774 = vmatprep.subr.mxu0 0.0
        %2775 = vmatpush1.xpose.msra.mxu0 0.0
        %2776 = vmatprep.subr.mxu0 0.0
        %2777 = vmatpush1.xpose.msra.mxu0 0.0
        %2778 = vmatprep.subr.mxu0 0.0
        %2779 = vmatpush1.xpose.msra.mxu0 0.0
        %2780 = vmatprep.subr.mxu0 0.0
        %2781 = vmatpush1.xpose.msra.mxu0 0.0
        %2782 = vmatprep.subr.mxu0 0.0
        %2783 = vmatpush1.xpose.msra.mxu0 0.0
        %2784 = vmatprep.subr.mxu0 0.0
        %2785 = vmatpush1.xpose.msra.mxu0 0.0
        %2786 = vmatprep.subr.mxu0 0.0
        %2787 = vmatpush1.xpose.msra.mxu0 0.0
        %2788 = vmatprep.subr.mxu0 0.0
        %2789 = vmatpush1.xpose.msra.mxu0 0.0
        %2790 = vmatprep.subr.mxu0 0.0
        %2791 = vmatpush1.xpose.msra.mxu0 0.0
        %2792 = vmatprep.subr.mxu0 0.0
        %2793 = vmatpush1.xpose.msra.mxu0 0.0
        %2794 = vmatprep.subr.mxu0 0.0
        %2795 = vmatpush1.xpose.msra.mxu0 0.0
        %2796 = vmatprep.subr.mxu0 0.0
        %2797 = vmatpush1.xpose.msra.mxu0 0.0
        %2798 = vmatprep.subr.mxu0 0.0
        %2799 = vmatpush1.xpose.msra.mxu0 0.0
        %2800 = vmatprep.subr.mxu0 0.0
        %2801 = vmatpush1.xpose.msra.mxu0 0.0
        %2802 = vmatprep.subr.mxu0 0.0
        %2803 = vmatpush1.xpose.msra.mxu0 0.0
        %2804 = vmatprep.subr.mxu0 0.0
        %2805 = vmatpush1.xpose.msra.mxu0 0.0
        %2806 = vmatprep.mubr.f32.mxu0 0.0
        %2807 = vmatmul.mubr.f32.gmra.mrb[0].mxu0 %v2738
        %v2808 = vpop.f32.mrb[0].mxu0
        %v2809 = vadd.f32 %v1029, %v2808
        %v2810 = vpop.f32.mrb[0].mxu0
        %2811 = vdwg.mxu0
        %v2812 = vsel %vm1108, %v2809, -inf
        %2813 = vmax.xlane.f32.xlu0 %v2812
        %v2814 = vpop.xlane.xlu0 %2813
        %v2815 = vsub.f32 %v2809, %v2814
        %v2816 = vmul.f32 %v2815, 1.442695
        %v2817 = vpow.pop %v2816
        %v2818 = vsel %vm1108, %v2817, 0.0
        %2819 = vadd.xlane.f32.xlu0 %v2818
        %v2820 = vpop.xlane.xlu0 %2819
        %v2821 = vrcp.pop %v2820
        %v2822 = vmul.f32 %v2817, %v2821
        %2823 = vrot.lane.b32.xlu0 %v1024, 88
        %v2824 = vpop.permute.xlu0 %2823
        %v2827 = vsel %vm1108, %v2822, 0
        %2829 = vmatprep.subr.mxu0 0.0
        %2830 = vmatpush1.msra.mxu0 %v2824
        %2831 = vmatprep.subr.mxu0 0.0
        %2832 = vmatpush1.msra.mxu0 0.0
        %2833 = vmatprep.subr.mxu0 0.0
        %2834 = vmatpush1.msra.mxu0 0.0
        %2835 = vmatprep.subr.mxu0 0.0
        %2836 = vmatpush1.msra.mxu0 0.0
        %2837 = vmatprep.subr.mxu0 0.0
        %2838 = vmatpush1.msra.mxu0 0.0
        %2839 = vmatprep.subr.mxu0 0.0
        %2840 = vmatpush1.msra.mxu0 0.0
        %2841 = vmatprep.subr.mxu0 0.0
        %2842 = vmatpush1.msra.mxu0 0.0
        %2843 = vmatprep.subr.mxu0 0.0
        %2844 = vmatpush1.msra.mxu0 0.0
        %2845 = vmatprep.subr.mxu0 0.0
        %2846 = vmatpush1.msra.mxu0 0.0
        %2847 = vmatprep.subr.mxu0 0.0
        %2848 = vmatpush1.msra.mxu0 0.0
        %2849 = vmatprep.subr.mxu0 0.0
        %2850 = vmatpush1.msra.mxu0 0.0
        %2851 = vmatprep.subr.mxu0 0.0
        %2852 = vmatpush1.msra.mxu0 0.0
        %2853 = vmatprep.subr.mxu0 0.0
        %2854 = vmatpush1.msra.mxu0 0.0
        %2855 = vmatprep.subr.mxu0 0.0
        %2856 = vmatpush1.msra.mxu0 0.0
        %2857 = vmatprep.subr.mxu0 0.0
        %2858 = vmatpush1.msra.mxu0 0.0
        %2859 = vmatprep.subr.mxu0 0.0
        %2860 = vmatpush1.msra.mxu0 0.0
        %2861 = vmatprep.subr.mxu0 0.0
        %2862 = vmatpush1.msra.mxu0 0.0
        %2863 = vmatprep.subr.mxu0 0.0
        %2864 = vmatpush1.msra.mxu0 0.0
        %2865 = vmatprep.subr.mxu0 0.0
        %2866 = vmatpush1.msra.mxu0 0.0
        %2867 = vmatprep.subr.mxu0 0.0
        %2868 = vmatpush1.msra.mxu0 0.0
        %2869 = vmatprep.subr.mxu0 0.0
        %2870 = vmatpush1.msra.mxu0 0.0
        %2871 = vmatprep.subr.mxu0 0.0
        %2872 = vmatpush1.msra.mxu0 0.0
        %2873 = vmatprep.subr.mxu0 0.0
        %2874 = vmatpush1.msra.mxu0 0.0
        %2875 = vmatprep.subr.mxu0 0.0
        %2876 = vmatpush1.msra.mxu0 0.0
        %2877 = vmatprep.subr.mxu0 0.0
        %2878 = vmatpush1.msra.mxu0 0.0
        %2879 = vmatprep.subr.mxu0 0.0
        %2880 = vmatpush1.msra.mxu0 0.0
        %2881 = vmatprep.subr.mxu0 0.0
        %2882 = vmatpush1.msra.mxu0 0.0
        %2883 = vmatprep.subr.mxu0 0.0
        %2884 = vmatpush1.msra.mxu0 0.0
        %2885 = vmatprep.subr.mxu0 0.0
        %2886 = vmatpush1.msra.mxu0 0.0
        %2887 = vmatprep.subr.mxu0 0.0
        %2888 = vmatpush1.msra.mxu0 0.0
        %2889 = vmatprep.subr.mxu0 0.0
        %2890 = vmatpush1.msra.mxu0 0.0
        %2891 = vmatprep.subr.mxu0 0.0
        %2892 = vmatpush1.msra.mxu0 0.0
        %2893 = vmatprep.mubr.f32.mxu0 0.0
        %2894 = vmatmul.mubr.f32.gmra.mrb[0].mxu0 %v2827
        %v2895 = vpop.f32.mrb[0].mxu0
        %v2896 = vadd.f32 0.0, %v2895
        %v2897 = vpop.f32.mrb[0].mxu0
        %2898 = vdwg.mxu0
        %2900 = vrot.lane.b32.xlu0 %v2896, 40
        %v2901 = vpop.permute.xlu0 %2900
        %vm2903 = vcmask 359744
        %2904 = vst.msk [vmem:[#allocation4] sm:$0xff] %vm2903, %v2901
        %2905 = vrot.lane.b32.xlu0 %v1020, 84
        %v2906 = vpop.permute.xlu0 %2905
        %2907 = vrot.lane.b32.xlu0 %v1023, 84
        %v2908 = vpop.permute.xlu0 %2907
        %v2909 = vsel %vm1031, %v2906, 0
        %v2911 = vsel %vm1031, %v2908, 0
        %2913 = vmatprep.subr.mxu0 0.0
        %2914 = vmatpush1.xpose.msra.mxu0 %v2911
        %2915 = vmatprep.subr.mxu0 0.0
        %2916 = vmatpush1.xpose.msra.mxu0 0.0
        %2917 = vmatprep.subr.mxu0 0.0
        %2918 = vmatpush1.xpose.msra.mxu0 0.0
        %2919 = vmatprep.subr.mxu0 0.0
        %2920 = vmatpush1.xpose.msra.mxu0 0.0
        %2921 = vmatprep.subr.mxu0 0.0
        %2922 = vmatpush1.xpose.msra.mxu0 0.0
        %2923 = vmatprep.subr.mxu0 0.0
        %2924 = vmatpush1.xpose.msra.mxu0 0.0
        %2925 = vmatprep.subr.mxu0 0.0
        %2926 = vmatpush1.xpose.msra.mxu0 0.0
        %2927 = vmatprep.subr.mxu0 0.0
        %2928 = vmatpush1.xpose.msra.mxu0 0.0
        %2929 = vmatprep.subr.mxu0 0.0
        %2930 = vmatpush1.xpose.msra.mxu0 0.0
        %2931 = vmatprep.subr.mxu0 0.0
        %2932 = vmatpush1.xpose.msra.mxu0 0.0
        %2933 = vmatprep.subr.mxu0 0.0
        %2934 = vmatpush1.xpose.msra.mxu0 0.0
        %2935 = vmatprep.subr.mxu0 0.0
        %2936 = vmatpush1.xpose.msra.mxu0 0.0
        %2937 = vmatprep.subr.mxu0 0.0
        %2938 = vmatpush1.xpose.msra.mxu0 0.0
        %2939 = vmatprep.subr.mxu0 0.0
        %2940 = vmatpush1.xpose.msra.mxu0 0.0
        %2941 = vmatprep.subr.mxu0 0.0
        %2942 = vmatpush1.xpose.msra.mxu0 0.0
        %2943 = vmatprep.subr.mxu0 0.0
        %2944 = vmatpush1.xpose.msra.mxu0 0.0
        %2945 = vmatprep.subr.mxu0 0.0
        %2946 = vmatpush1.xpose.msra.mxu0 0.0
        %2947 = vmatprep.subr.mxu0 0.0
        %2948 = vmatpush1.xpose.msra.mxu0 0.0
        %2949 = vmatprep.subr.mxu0 0.0
        %2950 = vmatpush1.xpose.msra.mxu0 0.0
        %2951 = vmatprep.subr.mxu0 0.0
        %2952 = vmatpush1.xpose.msra.mxu0 0.0
        %2953 = vmatprep.subr.mxu0 0.0
        %2954 = vmatpush1.xpose.msra.mxu0 0.0
        %2955 = vmatprep.subr.mxu0 0.0
        %2956 = vmatpush1.xpose.msra.mxu0 0.0
        %2957 = vmatprep.subr.mxu0 0.0
        %2958 = vmatpush1.xpose.msra.mxu0 0.0
        %2959 = vmatprep.subr.mxu0 0.0
        %2960 = vmatpush1.xpose.msra.mxu0 0.0
        %2961 = vmatprep.subr.mxu0 0.0
        %2962 = vmatpush1.xpose.msra.mxu0 0.0
        %2963 = vmatprep.subr.mxu0 0.0
        %2964 = vmatpush1.xpose.msra.mxu0 0.0
        %2965 = vmatprep.subr.mxu0 0.0
        %2966 = vmatpush1.xpose.msra.mxu0 0.0
        %2967 = vmatprep.subr.mxu0 0.0
        %2968 = vmatpush1.xpose.msra.mxu0 0.0
        %2969 = vmatprep.subr.mxu0 0.0
        %2970 = vmatpush1.xpose.msra.mxu0 0.0
        %2971 = vmatprep.subr.mxu0 0.0
        %2972 = vmatpush1.xpose.msra.mxu0 0.0
        %2973 = vmatprep.subr.mxu0 0.0
        %2974 = vmatpush1.xpose.msra.mxu0 0.0
        %2975 = vmatprep.subr.mxu0 0.0
        %2976 = vmatpush1.xpose.msra.mxu0 0.0
        %2977 = vmatprep.mubr.f32.mxu0 0.0
        %2978 = vmatmul.mubr.f32.gmra.mrb[0].mxu0 %v2909
        %v2979 = vpop.f32.mrb[0].mxu0
        %v2980 = vadd.f32 %v1029, %v2979
        %v2981 = vpop.f32.mrb[0].mxu0
        %2982 = vdwg.mxu0
        %v2983 = vsel %vm1108, %v2980, -inf
        %2984 = vmax.xlane.f32.xlu0 %v2983
        %v2985 = vpop.xlane.xlu0 %2984
        %v2986 = vsub.f32 %v2980, %v2985
        %v2987 = vmul.f32 %v2986, 1.442695
        %v2988 = vpow.pop %v2987
        %v2989 = vsel %vm1108, %v2988, 0.0
        %2990 = vadd.xlane.f32.xlu0 %v2989
        %v2991 = vpop.xlane.xlu0 %2990
        %v2992 = vrcp.pop %v2991
        %v2993 = vmul.f32 %v2988, %v2992
        %2994 = vrot.lane.b32.xlu0 %v1024, 84
        %v2995 = vpop.permute.xlu0 %2994
        %v2998 = vsel %vm1108, %v2993, 0
        %3000 = vmatprep.subr.mxu0 0.0
        %3001 = vmatpush1.msra.mxu0 %v2995
        %3002 = vmatprep.subr.mxu0 0.0
        %3003 = vmatpush1.msra.mxu0 0.0
        %3004 = vmatprep.subr.mxu0 0.0
        %3005 = vmatpush1.msra.mxu0 0.0
        %3006 = vmatprep.subr.mxu0 0.0
        %3007 = vmatpush1.msra.mxu0 0.0
        %3008 = vmatprep.subr.mxu0 0.0
        %3009 = vmatpush1.msra.mxu0 0.0
        %3010 = vmatprep.subr.mxu0 0.0
        %3011 = vmatpush1.msra.mxu0 0.0
        %3012 = vmatprep.subr.mxu0 0.0
        %3013 = vmatpush1.msra.mxu0 0.0
        %3014 = vmatprep.subr.mxu0 0.0
        %3015 = vmatpush1.msra.mxu0 0.0
        %3016 = vmatprep.subr.mxu0 0.0
        %3017 = vmatpush1.msra.mxu0 0.0
        %3018 = vmatprep.subr.mxu0 0.0
        %3019 = vmatpush1.msra.mxu0 0.0
        %3020 = vmatprep.subr.mxu0 0.0
        %3021 = vmatpush1.msra.mxu0 0.0
        %3022 = vmatprep.subr.mxu0 0.0
        %3023 = vmatpush1.msra.mxu0 0.0
        %3024 = vmatprep.subr.mxu0 0.0
        %3025 = vmatpush1.msra.mxu0 0.0
        %3026 = vmatprep.subr.mxu0 0.0
        %3027 = vmatpush1.msra.mxu0 0.0
        %3028 = vmatprep.subr.mxu0 0.0
        %3029 = vmatpush1.msra.mxu0 0.0
        %3030 = vmatprep.subr.mxu0 0.0
        %3031 = vmatpush1.msra.mxu0 0.0
        %3032 = vmatprep.subr.mxu0 0.0
        %3033 = vmatpush1.msra.mxu0 0.0
        %3034 = vmatprep.subr.mxu0 0.0
        %3035 = vmatpush1.msra.mxu0 0.0
        %3036 = vmatprep.subr.mxu0 0.0
        %3037 = vmatpush1.msra.mxu0 0.0
        %3038 = vmatprep.subr.mxu0 0.0
        %3039 = vmatpush1.msra.mxu0 0.0
        %3040 = vmatprep.subr.mxu0 0.0
        %3041 = vmatpush1.msra.mxu0 0.0
        %3042 = vmatprep.subr.mxu0 0.0
        %3043 = vmatpush1.msra.mxu0 0.0
        %3044 = vmatprep.subr.mxu0 0.0
        %3045 = vmatpush1.msra.mxu0 0.0
        %3046 = vmatprep.subr.mxu0 0.0
        %3047 = vmatpush1.msra.mxu0 0.0
        %3048 = vmatprep.subr.mxu0 0.0
        %3049 = vmatpush1.msra.mxu0 0.0
        %3050 = vmatprep.subr.mxu0 0.0
        %3051 = vmatpush1.msra.mxu0 0.0
        %3052 = vmatprep.subr.mxu0 0.0
        %3053 = vmatpush1.msra.mxu0 0.0
        %3054 = vmatprep.subr.mxu0 0.0
        %3055 = vmatpush1.msra.mxu0 0.0
        %3056 = vmatprep.subr.mxu0 0.0
        %3057 = vmatpush1.msra.mxu0 0.0
        %3058 = vmatprep.subr.mxu0 0.0
        %3059 = vmatpush1.msra.mxu0 0.0
        %3060 = vmatprep.subr.mxu0 0.0
        %3061 = vmatpush1.msra.mxu0 0.0
        %3062 = vmatprep.subr.mxu0 0.0
        %3063 = vmatpush1.msra.mxu0 0.0
        %3064 = vmatprep.mubr.f32.mxu0 0.0
        %3065 = vmatmul.mubr.f32.gmra.mrb[0].mxu0 %v2998
        %v3066 = vpop.f32.mrb[0].mxu0
        %v3067 = vadd.f32 0.0, %v3066
        %v3068 = vpop.f32.mrb[0].mxu0
        %3069 = vdwg.mxu0
        %3071 = vrot.lane.b32.xlu0 %v3067, 44
        %v3072 = vpop.permute.xlu0 %3071
        %vm3074 = vcmask 392544
        %3075 = vst.msk [vmem:[#allocation4] sm:$0xff] %vm3074, %v3072
        %v3076 = vld [vmem:[#allocation4] sm:$0xff]
        %v3077 = vld [vmem:[#allocation20] sm:$0xff]
        %v3078 = vld [vmem:[#allocation20 + $0x8] sm:$0xff]
        %v3079 = vld [vmem:[#allocation20 + $0x10] sm:$0xff]
        %v3080 = vld [vmem:[#allocation20 + $0x18] sm:$0xff]
        %v3081 = vld [vmem:[#allocation20 + $0x20] sm:$0xff]
        %v3082 = vld [vmem:[#allocation20 + $0x28] sm:$0xff]
        %v3083 = vld [vmem:[#allocation22] sm:$0x1]
        %v3085 = vlaneseq
        %v3086 = vshrl.u32 %v3085, 7
        %v3087 = vsub.s32 0, %v3086
        %v3088 = vrot.slane %v3083, %v3087
        %vm3090 = vcmask 392192
        %v3092 = vsel %vm3090, %v3076, 0
        %3094 = vmatprep.subr.mxu0 0.0
        %3095 = vmatpush1.msra.mxu0 %v3077
        %3096 = vmatprep.subr.mxu0 0.0
        %3097 = vmatpush1.msra.mxu0 %v3078
        %3098 = vmatprep.subr.mxu0 0.0
        %3099 = vmatpush1.msra.mxu0 %v3079
        %3100 = vmatprep.subr.mxu0 0.0
        %3101 = vmatpush1.msra.mxu0 %v3080
        %3102 = vmatprep.subr.mxu0 0.0
        %3103 = vmatpush1.msra.mxu0 %v3081
        %3104 = vmatprep.subr.mxu0 0.0
        %3105 = vmatpush1.msra.mxu0 %v3082
        %3106 = vmatprep.subr.mxu0 0.0
        %3107 = vmatpush1.msra.mxu0 0.0
        %3108 = vmatprep.subr.mxu0 0.0
        %3109 = vmatpush1.msra.mxu0 0.0
        %3110 = vmatprep.subr.mxu0 0.0
        %3111 = vmatpush1.msra.mxu0 0.0
        %3112 = vmatprep.subr.mxu0 0.0
        %3113 = vmatpush1.msra.mxu0 0.0
        %3114 = vmatprep.subr.mxu0 0.0
        %3115 = vmatpush1.msra.mxu0 0.0
        %3116 = vmatprep.subr.mxu0 0.0
        %3117 = vmatpush1.msra.mxu0 0.0
        %3118 = vmatprep.subr.mxu0 0.0
        %3119 = vmatpush1.msra.mxu0 0.0
        %3120 = vmatprep.subr.mxu0 0.0
        %3121 = vmatpush1.msra.mxu0 0.0
        %3122 = vmatprep.subr.mxu0 0.0
        %3123 = vmatpush1.msra.mxu0 0.0
        %3124 = vmatprep.subr.mxu0 0.0
        %3125 = vmatpush1.msra.mxu0 0.0
        %3126 = vmatprep.subr.mxu0 0.0
        %3127 = vmatpush1.msra.mxu0 0.0
        %3128 = vmatprep.subr.mxu0 0.0
        %3129 = vmatpush1.msra.mxu0 0.0
        %3130 = vmatprep.subr.mxu0 0.0
        %3131 = vmatpush1.msra.mxu0 0.0
        %3132 = vmatprep.subr.mxu0 0.0
        %3133 = vmatpush1.msra.mxu0 0.0
        %3134 = vmatprep.subr.mxu0 0.0
        %3135 = vmatpush1.msra.mxu0 0.0
        %3136 = vmatprep.subr.mxu0 0.0
        %3137 = vmatpush1.msra.mxu0 0.0
        %3138 = vmatprep.subr.mxu0 0.0
        %3139 = vmatpush1.msra.mxu0 0.0
        %3140 = vmatprep.subr.mxu0 0.0
        %3141 = vmatpush1.msra.mxu0 0.0
        %3142 = vmatprep.subr.mxu0 0.0
        %3143 = vmatpush1.msra.mxu0 0.0
        %3144 = vmatprep.subr.mxu0 0.0
        %3145 = vmatpush1.msra.mxu0 0.0
        %3146 = vmatprep.subr.mxu0 0.0
        %3147 = vmatpush1.msra.mxu0 0.0
        %3148 = vmatprep.subr.mxu0 0.0
        %3149 = vmatpush1.msra.mxu0 0.0
        %3150 = vmatprep.subr.mxu0 0.0
        %3151 = vmatpush1.msra.mxu0 0.0
        %3152 = vmatprep.subr.mxu0 0.0
        %3153 = vmatpush1.msra.mxu0 0.0
        %3154 = vmatprep.subr.mxu0 0.0
        %3155 = vmatpush1.msra.mxu0 0.0
        %3156 = vmatprep.subr.mxu0 0.0
        %3157 = vmatpush1.msra.mxu0 0.0
        %3158 = vmatprep.mubr.f32.mxu0 0.0
        %3159 = vmatmul.mubr.f32.gmra.mrb[0].mxu0 %v3092
        %v3160 = vpop.f32.mrb[0].mxu0
        %v3161 = vadd.f32 %v3088, %v3160
        %v3162 = vpop.f32.mrb[0].mxu0
        %3163 = vdwg.mxu0
        %v3164 = vadd.f32 %v3161, %v933
        %v3165 = vsel %vm949, %v3164, 0.0
        %3166 = vadd.xlane.f32.xlu0 %v3165
        %v3167 = vpop.xlane.xlu0 %3166
        %v3168 = vrcp.pop 32.0
        %v3169 = vmul.f32 %v3167, %v3168
        %v3170 = vsub.f32 %v3164, %v3169
        %v3171 = vmul.f32 %v3170, %v3170
        %v3172 = vsel %vm949, %v3171, 0.0
        %3173 = vadd.xlane.f32.xlu0 %v3172
        %v3174 = vpop.xlane.xlu0 %3173
        %v3175 = vmul.f32 %v3174, 0.032258064
        %v3176 = vadd.f32 %v3175, 1e-08
        %v3177 = vrsqrt.pop %v3176
        %v3178 = vmul.f32 %v3170, %v3177
        %3180 = vset.pattern.permute.xlu0 0
        %3181 = vperm.xlu0 %3180, %v934
        %v3182 = vpop.permute.xlu0 %3181
        %v3184 = vmul.f32 %v3178, %v3182
        %v3185 = vld [vmem:[#allocation23] sm:$0xff]
        %v3186 = vld [vmem:[#allocation23 + $0x8] sm:$0xff]
        %v3187 = vld [vmem:[#allocation23 + $0x10] sm:$0xff]
        %v3188 = vld [vmem:[#allocation23 + $0x18] sm:$0xff]
        %v3189 = vld [vmem:[#allocation25] sm:$0x1]
        %v3191 = vlaneseq
        %v3192 = vshrl.u32 %v3191, 7
        %v3193 = vsub.s32 0, %v3192
        %v3194 = vrot.slane %v3189, %v3193
        %v3197 = vsel %vm949, %v3184, 0
        %3199 = vmatprep.subr.mxu0 0.0
        %3200 = vmatpush1.msra.mxu0 %v3185
        %3201 = vmatprep.subr.mxu0 0.0
        %3202 = vmatpush1.msra.mxu0 %v3186
        %3203 = vmatprep.subr.mxu0 0.0
        %3204 = vmatpush1.msra.mxu0 %v3187
        %3205 = vmatprep.subr.mxu0 0.0
        %3206 = vmatpush1.msra.mxu0 %v3188
        %3207 = vmatprep.subr.mxu0 0.0
        %3208 = vmatpush1.msra.mxu0 0.0
        %3209 = vmatprep.subr.mxu0 0.0
        %3210 = vmatpush1.msra.mxu0 0.0
        %3211 = vmatprep.subr.mxu0 0.0
        %3212 = vmatpush1.msra.mxu0 0.0
        %3213 = vmatprep.subr.mxu0 0.0
        %3214 = vmatpush1.msra.mxu0 0.0
        %3215 = vmatprep.subr.mxu0 0.0
        %3216 = vmatpush1.msra.mxu0 0.0
        %3217 = vmatprep.subr.mxu0 0.0
        %3218 = vmatpush1.msra.mxu0 0.0
        %3219 = vmatprep.subr.mxu0 0.0
        %3220 = vmatpush1.msra.mxu0 0.0
        %3221 = vmatprep.subr.mxu0 0.0
        %3222 = vmatpush1.msra.mxu0 0.0
        %3223 = vmatprep.subr.mxu0 0.0
        %3224 = vmatpush1.msra.mxu0 0.0
        %3225 = vmatprep.subr.mxu0 0.0
        %3226 = vmatpush1.msra.mxu0 0.0
        %3227 = vmatprep.subr.mxu0 0.0
        %3228 = vmatpush1.msra.mxu0 0.0
        %3229 = vmatprep.subr.mxu0 0.0
        %3230 = vmatpush1.msra.mxu0 0.0
        %3231 = vmatprep.subr.mxu0 0.0
        %3232 = vmatpush1.msra.mxu0 0.0
        %3233 = vmatprep.subr.mxu0 0.0
        %3234 = vmatpush1.msra.mxu0 0.0
        %3235 = vmatprep.subr.mxu0 0.0
        %3236 = vmatpush1.msra.mxu0 0.0
        %3237 = vmatprep.subr.mxu0 0.0
        %3238 = vmatpush1.msra.mxu0 0.0
        %3239 = vmatprep.subr.mxu0 0.0
        %3240 = vmatpush1.msra.mxu0 0.0
        %3241 = vmatprep.subr.mxu0 0.0
        %3242 = vmatpush1.msra.mxu0 0.0
        %3243 = vmatprep.subr.mxu0 0.0
        %3244 = vmatpush1.msra.mxu0 0.0
        %3245 = vmatprep.subr.mxu0 0.0
        %3246 = vmatpush1.msra.mxu0 0.0
        %3247 = vmatprep.subr.mxu0 0.0
        %3248 = vmatpush1.msra.mxu0 0.0
        %3249 = vmatprep.subr.mxu0 0.0
        %3250 = vmatpush1.msra.mxu0 0.0
        %3251 = vmatprep.subr.mxu0 0.0
        %3252 = vmatpush1.msra.mxu0 0.0
        %3253 = vmatprep.subr.mxu0 0.0
        %3254 = vmatpush1.msra.mxu0 0.0
        %3255 = vmatprep.subr.mxu0 0.0
        %3256 = vmatpush1.msra.mxu0 0.0
        %3257 = vmatprep.subr.mxu0 0.0
        %3258 = vmatpush1.msra.mxu0 0.0
        %3259 = vmatprep.subr.mxu0 0.0
        %3260 = vmatpush1.msra.mxu0 0.0
        %3261 = vmatprep.subr.mxu0 0.0
        %3262 = vmatpush1.msra.mxu0 0.0
        %3263 = vmatprep.mubr.f32.mxu0 0.0
        %3264 = vmatmul.mubr.f32.gmra.mrb[0].mxu0 %v3197
        %v3265 = vpop.f32.mrb[0].mxu0
        %v3266 = vadd.f32 %v3194, %v3265
        %v3267 = vpop.f32.mrb[0].mxu0
        %3268 = vdwg.mxu0
        %v3269 = vmul.f32 %v3266, 0.5
        %v3270 = vmul.f32 %v3266, 0.044715
        %v3271 = vmul.f32 %v3270, %v3266
        %v3272 = vmul.f32 %v3271, %v3266
        %v3273 = vadd.f32 %v3266, %v3272
        %v3274 = vmul.f32 %v3273, 0.7978846
        %v3275 = vtanh.pop %v3274
        %v3276 = vadd.f32 %v3275, 1.0
        %v3277 = vmul.f32 %v3269, %v3276
        %v3278 = vld [vmem:[#allocation26] sm:$0xff]
        %v3279 = vld [vmem:[#allocation26 + $0x8] sm:$0xff]
        %v3280 = vld [vmem:[#allocation26 + $0x10] sm:$0xff]
        %v3281 = vld [vmem:[#allocation26 + $0x18] sm:$0xff]
        %v3282 = vld [vmem:[#allocation26 + $0x20] sm:$0xff]
        %v3283 = vld [vmem:[#allocation26 + $0x28] sm:$0xff]
        %v3284 = vld [vmem:[#allocation26 + $0x30] sm:$0xff]
        %v3285 = vld [vmem:[#allocation26 + $0x38] sm:$0xff]
        %v3286 = vld [vmem:[#allocation26 + $0x40] sm:$0xff]
        %v3287 = vld [vmem:[#allocation26 + $0x48] sm:$0xff]
        %v3288 = vld [vmem:[#allocation26 + $0x50] sm:$0xff]
        %v3289 = vld [vmem:[#allocation26 + $0x58] sm:$0xff]
        %v3290 = vld [vmem:[#allocation26 + $0x60] sm:$0xff]
        %v3291 = vld [vmem:[#allocation26 + $0x68] sm:$0xff]
        %v3292 = vld [vmem:[#allocation26 + $0x70] sm:$0xff]
        %v3293 = vld [vmem:[#allocation26 + $0x78] sm:$0xff]
        %v3294 = vld [vmem:[#allocation28] sm:$0x1]
        %v3296 = vlaneseq
        %v3297 = vshrl.u32 %v3296, 7
        %v3298 = vsub.s32 0, %v3297
        %v3299 = vrot.slane %v3294, %v3298
        %3301 = vmatprep.subr.mxu0 0.0
        %3302 = vmatpush1.msra.mxu0 %v3278
        %3303 = vmatprep.subr.mxu0 0.0
        %3304 = vmatpush1.msra.mxu0 %v3279
        %3305 = vmatprep.subr.mxu0 0.0
        %3306 = vmatpush1.msra.mxu0 %v3280
        %3307 = vmatprep.subr.mxu0 0.0
        %3308 = vmatpush1.msra.mxu0 %v3281
        %3309 = vmatprep.subr.mxu0 0.0
        %3310 = vmatpush1.msra.mxu0 %v3282
        %3311 = vmatprep.subr.mxu0 0.0
        %3312 = vmatpush1.msra.mxu0 %v3283
        %3313 = vmatprep.subr.mxu0 0.0
        %3314 = vmatpush1.msra.mxu0 %v3284
        %3315 = vmatprep.subr.mxu0 0.0
        %3316 = vmatpush1.msra.mxu0 %v3285
        %3317 = vmatprep.subr.mxu0 0.0
        %3318 = vmatpush1.msra.mxu0 %v3286
        %3319 = vmatprep.subr.mxu0 0.0
        %3320 = vmatpush1.msra.mxu0 %v3287
        %3321 = vmatprep.subr.mxu0 0.0
        %3322 = vmatpush1.msra.mxu0 %v3288
        %3323 = vmatprep.subr.mxu0 0.0
        %3324 = vmatpush1.msra.mxu0 %v3289
        %3325 = vmatprep.subr.mxu0 0.0
        %3326 = vmatpush1.msra.mxu0 %v3290
        %3327 = vmatprep.subr.mxu0 0.0
        %3328 = vmatpush1.msra.mxu0 %v3291
        %3329 = vmatprep.subr.mxu0 0.0
        %3330 = vmatpush1.msra.mxu0 %v3292
        %3331 = vmatprep.subr.mxu0 0.0
        %3332 = vmatpush1.msra.mxu0 %v3293
        %3333 = vmatprep.subr.mxu0 0.0
        %3334 = vmatpush1.msra.mxu0 0.0
        %3335 = vmatprep.subr.mxu0 0.0
        %3336 = vmatpush1.msra.mxu0 0.0
        %3337 = vmatprep.subr.mxu0 0.0
        %3338 = vmatpush1.msra.mxu0 0.0
        %3339 = vmatprep.subr.mxu0 0.0
        %3340 = vmatpush1.msra.mxu0 0.0
        %3341 = vmatprep.subr.mxu0 0.0
        %3342 = vmatpush1.msra.mxu0 0.0
        %3343 = vmatprep.subr.mxu0 0.0
        %3344 = vmatpush1.msra.mxu0 0.0
        %3345 = vmatprep.subr.mxu0 0.0
        %3346 = vmatpush1.msra.mxu0 0.0
        %3347 = vmatprep.subr.mxu0 0.0
        %3348 = vmatpush1.msra.mxu0 0.0
        %3349 = vmatprep.subr.mxu0 0.0
        %3350 = vmatpush1.msra.mxu0 0.0
        %3351 = vmatprep.subr.mxu0 0.0
        %3352 = vmatpush1.msra.mxu0 0.0
        %3353 = vmatprep.subr.mxu0 0.0
        %3354 = vmatpush1.msra.mxu0 0.0
        %3355 = vmatprep.subr.mxu0 0.0
        %3356 = vmatpush1.msra.mxu0 0.0
        %3357 = vmatprep.subr.mxu0 0.0
        %3358 = vmatpush1.msra.mxu0 0.0
        %3359 = vmatprep.subr.mxu0 0.0
        %3360 = vmatpush1.msra.mxu0 0.0
        %3361 = vmatprep.subr.mxu0 0.0
        %3362 = vmatpush1.msra.mxu0 0.0
        %3363 = vmatprep.subr.mxu0 0.0
        %3364 = vmatpush1.msra.mxu0 0.0
        %3365 = vmatprep.mubr.f32.mxu0 0.0
        %3366 = vmatmul.mubr.f32.gmra.mrb[0].mxu0 %v3277
        %v3367 = vpop.f32.mrb[0].mxu0
        %v3368 = vadd.f32 %v3299, %v3367
        %v3369 = vpop.f32.mrb[0].mxu0
        %3370 = vdwg.mxu0
        %v3371 = vadd.f32 %v3368, %v3184
        %v3372 = vsel %vm949, %v3371, 0.0
        %3373 = vadd.xlane.f32.xlu0 %v3372
        %v3374 = vpop.xlane.xlu0 %3373
        %v3375 = vmul.f32 %v3374, %v3168
        %v3376 = vsub.f32 %v3371, %v3375
        %v3377 = vmul.f32 %v3376, %v3376
        %v3378 = vsel %vm949, %v3377, 0.0
        %3379 = vadd.xlane.f32.xlu0 %v3378
        %v3380 = vpop.xlane.xlu0 %3379
        %v3381 = vmul.f32 %v3380, 0.032258064
        %v3382 = vadd.f32 %v3381, 1e-08
        %v3383 = vrsqrt.pop %v3382
        %v3384 = vmul.f32 %v3376, %v3383
        %v3385 = vmul.f32 %v3384, %v3182
        %3386 = vst.msk [vmem:[%s756] sm:$0xff] %vm949, %v3385
        %s3387 = sand.u32 %s395, 1
        %s3388 = scalar_lea.sflag [#allocation7], %s3387
        %s3389 = sand.u32 %s395, 1
        %s3390 = smul.addr %s3389, 8
        %s3391 = scalar_lea.vmem [#allocation29], %s3390
        // Predicated region
        $region145: #{tpu_custom_call.1} parent=79 // pred_check
          %p3392 = pneg %p405
        $region146: #{tpu_custom_call.1} parent=79 // pred_check_branch
          %3394 = sbr.rel (%p3392) target = $region148
        $region147: #{tpu_custom_call.1} parent=79 // pred_region
          %s3396 = ssub.s32 128, 128
          %3397 = vsyncadd %s3388, %s3396
          %s3398 = sadd.s32 %s46, %s45
          %s3399 = smul.addr %s3398, 128
          %s3400 = scalar_lea.hbm %s15, %s3399
          %s3402 = sshll.u32 %s3391, 4
          %s3403 = int_to_ptr.vmem [resolvable:$true] %s3402
          %3405 = dma.vmem_to_hbm [thread:$0]  %s3403, 128, %s3400, %s3388
        $region148: #{tpu_custom_call.1} parent=79 // pred_fallthru
          _
      $region80: #{tpu_custom_call.1} parent=5 // pred_fallthru
        _
      %p3406 = scmp.le.s32.totalorder 2, %s36
      // Predicated region
      $region149: #{tpu_custom_call.1} parent=5 // pred_check
        %p3407 = pneg %p3406
      $region150: #{tpu_custom_call.1} parent=5 // pred_check_branch
        %3409 = sbr.rel (%p3407) target = $region152
      $region151: #{tpu_custom_call.1} parent=5 // pred_region
        %s3410 = ssub.s32 %s36, 2
        // Predicated region
        $region153: #{tpu_custom_call.1} parent=151 // pred_check
          %p3411 = pneg %p411
        $region154: #{tpu_custom_call.1} parent=151 // pred_check_branch
          %3413 = sbr.rel (%p3411) target = $region156
        $region155: #{tpu_custom_call.1} parent=151 // pred_region
          %s3414 = sand.u32 %s396, 1
          %s3415 = scalar_lea.sflag [#allocation7], %s3414
          %s3416 = sand.u32 %s396, 1
          %s3417 = smul.addr %s3416, 8
          %s3418 = scalar_lea.vmem [#allocation29], %s3417
          %3419 = dma.done %s3415, 128
        $region156: #{tpu_custom_call.1} parent=151 // pred_fallthru
          _
      $region152: #{tpu_custom_call.1} parent=5 // pred_fallthru
        _
    $region6: #{tpu_custom_call.1} parent=1 // loop_footer
      %s40 = sadd.s32 1, %s36
    $region7: #{tpu_custom_call.1} parent=1 // loop_footer_branch
      %35 = sbr.rel target = $region3
    $region8: #{tpu_custom_call.1} parent=1 // loop_exit
      _
    %3420 = vsyncpa [#allocation6], 1
    %s3421 = scalar_lea.sflag [#allocation6], 1
    %3422 = vsyncpa %s3421, 1
    %3423 = vsyncpa [#allocation9], 1
    %s3424 = scalar_lea.sflag [#allocation9], 1
    %3425 = vsyncpa %s3424, 1
    %3426 = vsyncpa [#allocation12], 1
    %3427 = vsyncpa [#allocation15], 1
    %3428 = vsyncpa [#allocation18], 1
    %3429 = vsyncpa [#allocation21], 1
    %3430 = vsyncpa [#allocation24], 1
    %3431 = vsyncpa [#allocation27], 1
    %3432 = vsyncpa [#allocation7], 1
    %s3433 = scalar_lea.sflag [#allocation7], 1
    %3434 = vsyncpa %s3433, 1

</llo_original>
